<compile_context>
chip_gen: v5e
topology: v5e:2x2
jax: 0.10.0
libtpu: 0.0.40
codegen_flags: <defaults>
</compile_context>

<pallas_src>
import math
import functools

import jax
import jax.numpy as jnp
from jax import lax
from jax.experimental import pallas as pl
from jax.experimental.pallas import tpu as pltpu


# ----------------------------------------------------------------------------
# Pallas kernel: serial GRU recurrence for one (direction, time-chunk) cell.
# ----------------------------------------------------------------------------
def _gru_recurrent_kernel(gi_ref, whh_ref, bhn_ref, out_ref, hlast_ref,
                          h_scratch, *, chunk):
    """gi_ref:    (Tc, 3, B, H) bf16  precomputed x@W_ih + folded biases
    whh_ref:   (3, H, H)     bf16  per-gate hidden->hidden weights
    bhn_ref:   (1, H)        f32   b_hn (the only bias that cannot be folded)
    out_ref:   (Tc, B, H)          per-timestep hidden output (this direction)
    hlast_ref: (B, H)        f32   final hidden state of this direction
    h_scratch: (B, H)        f32   running hidden state (persists across the
                                   "arbitrary" time-chunk axis; reset at c==0)
    """
    Tc = chunk
    d = pl.program_id(0)           # direction (0 = forward, 1 = backward)
    c = pl.program_id(1)           # time-chunk index (grid order)
    nc = pl.num_programs(1)

    @pl.when(c == 0)
    def _():
        # nn.GRU default h0 = zeros; reset at the start of each direction.
        h_scratch[...] = jnp.zeros_like(h_scratch)

    # Hoisted once per grid step (NOT per timestep).
    w_r = whh_ref[0]               # (H, H) bf16
    w_z = whh_ref[1]
    w_n = whh_ref[2]
    b_hn = jnp.broadcast_to(bhn_ref[...], h_scratch.shape).astype(jnp.float32)

    def run(reverse):
        h = h_scratch[...]                         # (B, H) f32
        for i in range(Tc):                        # static positions
            pos = (Tc - 1 - i) if reverse else i
            gi_r = gi_ref[pos, 0].astype(jnp.float32)
            gi_z = gi_ref[pos, 1].astype(jnp.float32)
            gi_n = gi_ref[pos, 2].astype(jnp.float32)
            h_b = h.astype(jnp.bfloat16)
            gh_r = jnp.dot(h_b, w_r, preferred_element_type=jnp.float32)
            gh_z = jnp.dot(h_b, w_z, preferred_element_type=jnp.float32)
            gh_n = jnp.dot(h_b, w_n, preferred_element_type=jnp.float32)
            r = jax.nn.sigmoid(gi_r + gh_r)
            z = jax.nn.sigmoid(gi_z + gh_z)
            n = jnp.tanh(gi_n + r * (gh_n + b_hn))
            h = n + z * (h - n)                    # == (1-z)*n + z*h
            out_ref[pos] = h.astype(out_ref.dtype)
        h_scratch[...] = h

    # Direction branch lifted out of the per-step index math: static slices.
    @pl.when(d == 0)
    def _fwd():
        run(False)

    @pl.when(d == 1)
    def _bwd():
        run(True)

    @pl.when(c == nc - 1)
    def _():
        hlast_ref[...] = h_scratch[...].astype(hlast_ref.dtype)


# ----------------------------------------------------------------------------
# Per-layer wrapper around pallas_call.
# ----------------------------------------------------------------------------
def _gru_layer(gi, whh, bhn, out_dtype, hlast_dtype, chunk, vmem_limit):
    """gi: (D, Tpad, 3, B, H) bf16, whh: (D, 3, H, H) bf16, bhn: (D, 1, H) f32.
    Returns (out (D, Tpad, B, H), h_last (D, B, H))."""
    D, Tpad, _, B, H = gi.shape
    Tc = chunk
    nc = Tpad // Tc

    def gi_map(d, c):
        cc = c + d * (nc - 1 - 2 * c)      # fwd: c ; bwd: nc-1-c
        return (d, cc, 0, 0, 0)

    def out_map(d, c):
        cc = c + d * (nc - 1 - 2 * c)
        return (d, cc, 0, 0)

    kernel = functools.partial(_gru_recurrent_kernel, chunk=Tc)

    flops = 2 * D * Tpad * B * H * 3 * H                   # hidden matmuls
    transcendentals = 3 * D * Tpad * B * H                 # 2 sigmoid + 1 tanh
    bytes_accessed = (gi.size * gi.dtype.itemsize
                      + D * Tpad * B * H * jnp.dtype(out_dtype).itemsize
                      + whh.size * whh.dtype.itemsize
                      + bhn.size * bhn.dtype.itemsize
                      + D * B * H * jnp.dtype(hlast_dtype).itemsize)

    out, h_last = pl.pallas_call(
        kernel,
        out_shape=(
            jax.ShapeDtypeStruct((D, Tpad, B, H), out_dtype),
            jax.ShapeDtypeStruct((D, B, H), hlast_dtype),
        ),
        grid_spec=pltpu.PrefetchScalarGridSpec(
            num_scalar_prefetch=0,
            grid=(D, nc),
            in_specs=[
                pl.BlockSpec((None, Tc, 3, B, H), gi_map),                  # gi
                pl.BlockSpec((None, 3, H, H), lambda d, c: (d, 0, 0, 0)),   # W_hh
                pl.BlockSpec((None, 1, H), lambda d, c: (d, 0, 0)),         # b_hn
            ],
            out_specs=(
                pl.BlockSpec((None, Tc, B, H), out_map),                    # out
                pl.BlockSpec((None, B, H), lambda d, c: (d, 0, 0)),         # h_n
            ),
            scratch_shapes=[pltpu.VMEM((B, H), jnp.float32)],
        ),
        compiler_params=pltpu.CompilerParams(
            # Direction axis is independent -> one TensorCore per direction on
            # v7x (megacore); the single-TC v5e/v6e just iterate it serially.
            # The state-carrying time-chunk axis is "arbitrary" (serial).
            dimension_semantics=("parallel", "arbitrary"),
            vmem_limit_bytes=int(vmem_limit),
        ),
        cost_estimate=pl.CostEstimate(flops=int(flops),
                                      transcendentals=int(transcendentals),
                                      bytes_accessed=int(bytes_accessed)),
    )(gi, whh, bhn)
    return out, h_last


# ----------------------------------------------------------------------------
# Generation-aware sizing helpers.
# ----------------------------------------------------------------------------
def _vmem_capacity_bytes():
    try:
        cap = int(pltpu.get_tpu_info().vmem_capacity_bytes)
        if cap > 0:
            return cap
    except Exception:
        pass
    return 64 * 1024 * 1024      # conservative default (v7x per-TensorCore)


def _plan_time_chunks(T, B, H, out_itemsize, vmem_cap, chunk_cap=None):
    """Pick a time-chunk Tc from the VMEM budget (double-buffered gi + out
    chunks + weights) and the padded length Tpad = ceil(T/Tc)*Tc (balanced so
    padding stays minimal, e.g. prime T never degrades to Tc=1)."""
    per_step = B * H * (2 * 3 * 2 + 2 * out_itemsize)   # 2x gi(bf16) + 2x out
    fixed = 3 * H * H * 2 * 2 + 2 * H * 4 + B * H * 4   # weights + bias + scratch
    budget = int(vmem_cap * 0.4)
    tc_budget = max(1, (budget - fixed) // max(per_step, 1))
    cap = 32 if chunk_cap is None else max(1, int(chunk_cap))  # also bounds unroll
    cap = max(1, min(cap, tc_budget))
    nc = -(-T // cap)            # ceil
    Tc = -(-T // nc)             # balanced chunk <= cap
    Tpad = nc * Tc
    return Tc, Tpad


# ----------------------------------------------------------------------------
# Parameters (nn.GRU-shaped, pre-transposed, stacked over directions).
# ----------------------------------------------------------------------------
def init_gru_params(key, input_dim, hidden_dim, num_layers, bidirectional,
                    dtype=jnp.float32):
    D = 2 if bidirectional else 1
    k = 1.0 / math.sqrt(hidden_dim)
    params = []
    for layer in range(num_layers):
        in_dim = input_dim if layer == 0 else hidden_dim * D
        key, k1, k2, k3, k4 = jax.random.split(key, 5)
        params.append(dict(
            w_ih=jax.random.uniform(k1, (D, in_dim, 3 * hidden_dim), dtype, -k, k),
            w_hh=jax.random.uniform(k2, (D, hidden_dim, 3 * hidden_dim), dtype, -k, k),
            b_ih=jax.random.uniform(k3, (D, 3 * hidden_dim), dtype, -k, k),
            b_hh=jax.random.uniform(k4, (D, 1, 3 * hidden_dim), dtype, -k, k),
        ))
    return params


# ----------------------------------------------------------------------------
# Encoder.forward equivalent -> (output, h_n) like nn.GRU(batch_first=True).
# ----------------------------------------------------------------------------
def encoder_forward(acoustic_input, params, hidden_dim, num_layers,
                    bidirectional, chunk_cap=None):
    del num_layers                      # implied by len(params)
    D = 2 if bidirectional else 1
    B, T, _ = acoustic_input.shape
    H = hidden_dim
    final_dtype = acoustic_input.dtype

    vmem_cap = _vmem_capacity_bytes()
    vmem_limit = max(32 * 1024 * 1024,
                     min(int(vmem_cap * 0.75), 100 * 1024 * 1024))
    Tc, Tpad = _plan_time_chunks(T, B, H, 4, vmem_cap, chunk_cap)

    # Time-major with a leading "source direction" axis (size 1 for layer 0).
    prev = jnp.transpose(acoustic_input, (1, 0, 2))[None]     # (1, T, B, I)
    h_n_parts = []
    n_layers = len(params)
    for li, p in enumerate(params):
        P, _, _, Fin = prev.shape
        # -- Hoisted input projection: one big parallel bf16 matmul (f32 acc),
        #    folding the previous layer's [fwd|bwd] concat into the contraction
        #    and producing a lane-dense gate-major layout (D, T, 3, B, H).
        w_ih = p["w_ih"].reshape(D, P, Fin, 3, H)
        gi = jnp.einsum("ptbf,dpfgh->dtgbh",
                        prev.astype(jnp.bfloat16),
                        w_ih.astype(jnp.bfloat16),
                        preferred_element_type=jnp.float32)   # (D, T, 3, B, H)
        # Fold b_ih and the r/z parts of b_hh; only b_hn stays in-kernel.
        b_hh = p["b_hh"].reshape(D, 3, H).astype(jnp.float32)
        fold = p["b_ih"].reshape(D, 3, H).astype(jnp.float32) + b_hh.at[:, 2, :].set(0.0)
        gi = gi + fold[:, None, :, None, :]
        # Pad time with identity GRU steps: z pre-activation = +1e4 => z = 1
        # => h' = h, so h_n (fwd) and all backward outputs remain correct.
        if Tpad > T:
            pad = jnp.zeros((D, Tpad - T, 3, B, H), jnp.float32).at[:, :, 1].set(1.0e4)
            gi = jnp.concatenate([gi, pad], axis=1)
        gi = gi.astype(jnp.bfloat16)                          # halve the HBM stream

        whh = p["w_hh"].reshape(D, H, 3, H).transpose(0, 2, 1, 3).astype(jnp.bfloat16)
        b_hn = b_hh[:, 2:3, :]                                # (D, 1, H) f32

        is_last = (li == n_layers - 1)
        out_dtype = final_dtype if is_last else jnp.bfloat16  # bf16 between layers
        out, h_last = _gru_layer(gi, whh, b_hn, out_dtype, final_dtype, Tc, vmem_limit)
        h_n_parts.append(h_last)
        prev = out[:, :T]                                     # (D, T, B, H)
        # TODO(synk): inter-layer dropout (train-mode only in PyTorch) omitted.

    # (D, T, B, H) -> batch_first (B, T, D*H), matching torch's [fwd|bwd] concat.
    output = jnp.transpose(prev.astype(final_dtype), (2, 1, 0, 3)).reshape(B, T, D * H)
    h_n = jnp.concatenate(h_n_parts, axis=0)                  # (L*D, B, H)
    return output, h_n


# ----------------------------------------------------------------------------
# Pure-JAX float32 reference (same math as torch.nn.GRU) for parity checking.
# ----------------------------------------------------------------------------
def _gru_reference(x, params, hidden_dim, bidirectional):
    D = 2 if bidirectional else 1
    B, T, _ = x.shape
    H = hidden_dim
    prev = x.astype(jnp.float32)
    h_n = []
    for p in params:
        outs = []
        for d in range(D):
            w_ih = p["w_ih"][d].astype(jnp.float32)
            w_hh = p["w_hh"][d].astype(jnp.float32)
            b_ih = p["b_ih"][d].astype(jnp.float32)
            b_hh = p["b_hh"][d, 0].astype(jnp.float32)
            xs = prev if d == 0 else prev[:, ::-1]
            xs_t = jnp.transpose(xs, (1, 0, 2))

            def step(h, x_t, w_ih=w_ih, w_hh=w_hh, b_ih=b_ih, b_hh=b_hh):
                gx = x_t @ w_ih + b_ih
                gh = h @ w_hh + b_hh
                r = jax.nn.sigmoid(gx[:, :H] + gh[:, :H])
                z = jax.nn.sigmoid(gx[:, H:2 * H] + gh[:, H:2 * H])
                n = jnp.tanh(gx[:, 2 * H:] + r * gh[:, 2 * H:])
                h_new = (1.0 - z) * n + z * h
                return h_new, h_new

            h_last, ys = lax.scan(step, jnp.zeros((B, H), jnp.float32), xs_t)
            ys = jnp.transpose(ys, (1, 0, 2))
            if d == 1:
                ys = ys[:, ::-1]
            outs.append(ys)
            h_n.append(h_last)
        prev = jnp.concatenate(outs, axis=-1)
    return prev, jnp.stack(h_n, axis=0)


if __name__ == "__main__":
    batch = 2
    seq_len = 8
    input_dim = 16
    hidden_dim = 32
    num_gru_layers = 2
    bidirectional = True

    key = jax.random.PRNGKey(0)
    key_x, key_p = jax.random.split(key)

    acoustic_input = jax.random.normal(key_x, (batch, seq_len, input_dim), jnp.float32)
    params = init_gru_params(key_p, input_dim, hidden_dim, num_gru_layers, bidirectional)

    D = 2 if bidirectional else 1
    ref_out, ref_hn = _gru_reference(acoustic_input, params, hidden_dim, bidirectional)
    ref_out, ref_hn = jax.block_until_ready((ref_out, ref_hn))

    # 1) auto-sized chunk (no padding needed for T=8)
    fwd = jax.jit(functools.partial(encoder_forward, hidden_dim=hidden_dim,
                                    num_layers=num_gru_layers,
                                    bidirectional=bidirectional))
    output, h_n = fwd(acoustic_input, params)
    jax.block_until_ready((output, h_n))

    assert output.shape == (batch, seq_len, D * hidden_dim), output.shape
    assert h_n.shape == (num_gru_layers * D, batch, hidden_dim), h_n.shape
    assert bool(jnp.all(jnp.isfinite(output))) and bool(jnp.all(jnp.isfinite(h_n)))
    err_o = float(jnp.max(jnp.abs(output - ref_out)))
    err_h = float(jnp.max(jnp.abs(h_n - ref_hn)))
    assert err_o < 0.1 and err_h < 0.1, ("parity (auto chunk)", err_o, err_h)

    # 2) forced small chunk -> exercises multi-chunk state carry + time padding
    fwd_pad = jax.jit(functools.partial(encoder_forward, hidden_dim=hidden_dim,
                                        num_layers=num_gru_layers,
                                        bidirectional=bidirectional,
                                        chunk_cap=3))
    output2, h_n2 = fwd_pad(acoustic_input, params)
    jax.block_until_ready((output2, h_n2))
    err_o2 = float(jnp.max(jnp.abs(output2 - ref_out)))
    err_h2 = float(jnp.max(jnp.abs(h_n2 - ref_hn)))
    assert err_o2 < 0.1 and err_h2 < 0.1, ("parity (padded chunks)", err_o2, err_h2)

    print("KERNEL_OK")
</pallas_src>

<mosaic_0001>
module attributes {stable_mosaic.version = 11 : i64} {
  func.func @_gru_recurrent_kernel(%arg0: i32, %arg1: i32, %arg2: memref<1x8x3x2x32xbf16, #tpu.memory_space<vmem>>, %arg3: memref<1x3x32x32xbf16, #tpu.memory_space<vmem>>, %arg4: memref<1x1x32xf32, #tpu.memory_space<vmem>>, %arg5: memref<1x8x2x32xbf16, #tpu.memory_space<vmem>>, %arg6: memref<1x2x32xf32, #tpu.memory_space<vmem>>, %arg7: memref<2x32xf32, #tpu.memory_space<vmem>>) attributes {dimension_semantics = [#tpu.dimension_semantics<parallel>, #tpu.dimension_semantics<arbitrary>], iteration_bounds = array<i64: 2, 1>, scalar_prefetch = 0 : i64, scratch_operands = 1 : i64, tpu.core_type = #tpu.core_type<tc>, window_params = [{transform_indices = @transform_0, window_bounds = array<i64: 1, 8, 3, 2, 32>}, {transform_indices = @transform_1, window_bounds = array<i64: 1, 3, 32, 32>}, {transform_indices = @transform_2, window_bounds = array<i64: 1, 1, 32>}, {transform_indices = @transform_3, window_bounds = array<i64: 1, 8, 2, 32>}, {transform_indices = @transform_4, window_bounds = array<i64: 1, 2, 32>}]} {
    %c0_i32 = arith.constant 0 : i32
    %0 = arith.cmpi eq, %arg1, %c0_i32 : i32
    %1 = arith.extui %0 : i1 to i32
    %c0_i32_0 = arith.constant 0 : i32
    %2 = arith.cmpi ne, %1, %c0_i32_0 : i32
    scf.if %2 {
      %cst = arith.constant 0.000000e+00 : f32
      %22 = vector.broadcast %cst : f32 to vector<2x32xf32>
      %c0_18 = arith.constant 0 : index
      %c0_19 = arith.constant 0 : index
      %23 = vector.load %arg7[%c0_18, %c0_19] : memref<2x32xf32, #tpu.memory_space<vmem>>, vector<2x32xf32>
      tpu.vector_store %arg7[%c0_18, %c0_19], %22 {strides = array<i32>} : memref<2x32xf32, #tpu.memory_space<vmem>>, vector<2x32xf32>,
    } else {
    }
    %c0 = arith.constant 0 : index
    %c0_1 = arith.constant 0 : index
    %c0_2 = arith.constant 0 : index
    %c0_3 = arith.constant 0 : index
    %3 = vector.load %arg3[%c0, %c0_1, %c0_2, %c0_3] : memref<1x3x32x32xbf16, #tpu.memory_space<vmem>>, vector<1x1x32x32xbf16>
    %4 = vector.shape_cast %3 : vector<1x1x32x32xbf16> to vector<32x32xbf16>
    %c0_4 = arith.constant 0 : index
    %c1 = arith.constant 1 : index
    %c0_5 = arith.constant 0 : index
    %c0_6 = arith.constant 0 : index
    %5 = vector.load %arg3[%c0_4, %c1, %c0_5, %c0_6] : memref<1x3x32x32xbf16, #tpu.memory_space<vmem>>, vector<1x1x32x32xbf16>
    %6 = vector.shape_cast %5 : vector<1x1x32x32xbf16> to vector<32x32xbf16>
    %c0_7 = arith.constant 0 : index
    %c2 = arith.constant 2 : index
    %c0_8 = arith.constant 0 : index
    %c0_9 = arith.constant 0 : index
    %7 = vector.load %arg3[%c0_7, %c2, %c0_8, %c0_9] : memref<1x3x32x32xbf16, #tpu.memory_space<vmem>>, vector<1x1x32x32xbf16>
    %8 = vector.shape_cast %7 : vector<1x1x32x32xbf16> to vector<32x32xbf16>
    %c0_10 = arith.constant 0 : index
    %c0_11 = arith.constant 0 : index
    %c0_12 = arith.constant 0 : index
    %9 = vector.load %arg4[%c0_10, %c0_11, %c0_12] : memref<1x1x32xf32, #tpu.memory_space<vmem>>, vector<1x1x32xf32>
    %10 = vector.shape_cast %9 : vector<1x1x32xf32> to vector<1x32xf32>
    %11 = vector.shape_cast %10 : vector<1x32xf32> to vector<1x32xf32>
    %12 = vector.broadcast %11 : vector<1x32xf32> to vector<2x32xf32>
    %c0_i32_13 = arith.constant 0 : i32
    %13 = arith.cmpi eq, %arg0, %c0_i32_13 : i32
    %14 = arith.extui %13 : i1 to i32
    %c0_i32_14 = arith.constant 0 : i32
    %15 = arith.cmpi ne, %14, %c0_i32_14 : i32
    scf.if %15 {
      %c0_18 = arith.constant 0 : index
      %c0_19 = arith.constant 0 : index
      %22 = vector.load %arg7[%c0_18, %c0_19] : memref<2x32xf32, #tpu.memory_space<vmem>>, vector<2x32xf32>
      %c0_20 = arith.constant 0 : index
      %c0_21 = arith.constant 0 : index
      %c0_22 = arith.constant 0 : index
      %c0_23 = arith.constant 0 : index
      %c0_24 = arith.constant 0 : index
      %23 = vector.load %arg2[%c0_20, %c0_21, %c0_22, %c0_23, %c0_24] : memref<1x8x3x2x32xbf16, #tpu.memory_space<vmem>>, vector<1x1x1x2x32xbf16>
      %24 = vector.shape_cast %23 : vector<1x1x1x2x32xbf16> to vector<2x32xbf16>
      %25 = arith.extf %24 : vector<2x32xbf16> to vector<2x32xf32>
      %c0_25 = arith.constant 0 : index
      %c0_26 = arith.constant 0 : index
      %c1_27 = arith.constant 1 : index
      %c0_28 = arith.constant 0 : index
      %c0_29 = arith.constant 0 : index
      %26 = vector.load %arg2[%c0_25, %c0_26, %c1_27, %c0_28, %c0_29] : memref<1x8x3x2x32xbf16, #tpu.memory_space<vmem>>, vector<1x1x1x2x32xbf16>
      %27 = vector.shape_cast %26 : vector<1x1x1x2x32xbf16> to vector<2x32xbf16>
      %28 = arith.extf %27 : vector<2x32xbf16> to vector<2x32xf32>
      %c0_30 = arith.constant 0 : index
      %c0_31 = arith.constant 0 : index
      %c2_32 = arith.constant 2 : index
      %c0_33 = arith.constant 0 : index
      %c0_34 = arith.constant 0 : index
      %29 = vector.load %arg2[%c0_30, %c0_31, %c2_32, %c0_33, %c0_34] : memref<1x8x3x2x32xbf16, #tpu.memory_space<vmem>>, vector<1x1x1x2x32xbf16>
      %30 = vector.shape_cast %29 : vector<1x1x1x2x32xbf16> to vector<2x32xbf16>
      %31 = arith.extf %30 : vector<2x32xbf16> to vector<2x32xf32>
      %32 = arith.truncf %22 : vector<2x32xf32> to vector<2x32xbf16>
      %cst = arith.constant dense<0.000000e+00> : vector<2x32xf32>
      %33 = tpu.matmul %32, %4, %cst {dimension_numbers = #tpu.dot_dimension_numbers<[1], [0], [0], [1], [0, 0, 1, 1], [], []>} : vector<2x32xbf16>, vector<32x32xbf16>, vector<2x32xf32> -> vector<2x32xf32>
      %cst_35 = arith.constant dense<0.000000e+00> : vector<2x32xf32>
      %34 = tpu.matmul %32, %6, %cst_35 {dimension_numbers = #tpu.dot_dimension_numbers<[1], [0], [0], [1], [0, 0, 1, 1], [], []>} : vector<2x32xbf16>, vector<32x32xbf16>, vector<2x32xf32> -> vector<2x32xf32>
      %cst_36 = arith.constant dense<0.000000e+00> : vector<2x32xf32>
      %35 = tpu.matmul %32, %8, %cst_36 {dimension_numbers = #tpu.dot_dimension_numbers<[1], [0], [0], [1], [0, 0, 1, 1], [], []>} : vector<2x32xbf16>, vector<32x32xbf16>, vector<2x32xf32> -> vector<2x32xf32>
      %36 = arith.addf %25, %33 : vector<2x32xf32>
      %37 = arith.negf %36 : vector<2x32xf32>
      %38 = math.exp %37 : vector<2x32xf32>
      %cst_37 = arith.constant 1.000000e+00 : f32
      %39 = vector.broadcast %cst_37 : f32 to vector<2x32xf32>
      %40 = arith.addf %39, %38 : vector<2x32xf32>
      %41 = arith.divf %39, %40 : vector<2x32xf32>
      %42 = arith.addf %28, %34 : vector<2x32xf32>
      %43 = arith.negf %42 : vector<2x32xf32>
      %44 = math.exp %43 : vector<2x32xf32>
      %cst_38 = arith.constant 1.000000e+00 : f32
      %45 = vector.broadcast %cst_38 : f32 to vector<2x32xf32>
      %46 = arith.addf %45, %44 : vector<2x32xf32>
      %47 = arith.divf %45, %46 : vector<2x32xf32>
      %48 = arith.addf %35, %12 : vector<2x32xf32>
      %49 = arith.mulf %41, %48 : vector<2x32xf32>
      %50 = arith.addf %31, %49 : vector<2x32xf32>
      %51 = math.tanh %50 : vector<2x32xf32>
      %52 = arith.subf %22, %51 : vector<2x32xf32>
      %53 = arith.mulf %47, %52 : vector<2x32xf32>
      %54 = arith.addf %51, %53 : vector<2x32xf32>
      %55 = arith.truncf %54 : vector<2x32xf32> to vector<2x32xbf16>
      %c0_39 = arith.constant 0 : index
      %c0_40 = arith.constant 0 : index
      %c0_41 = arith.constant 0 : index
      %c0_42 = arith.constant 0 : index
      %56 = vector.load %arg5[%c0_39, %c0_40, %c0_41, %c0_42] : memref<1x8x2x32xbf16, #tpu.memory_space<vmem>>, vector<1x1x2x32xbf16>
      %57 = vector.shape_cast %56 : vector<1x1x2x32xbf16> to vector<2x32xbf16>
      %58 = vector.shape_cast %55 : vector<2x32xbf16> to vector<1x1x2x32xbf16>
      tpu.vector_store %arg5[%c0_39, %c0_40, %c0_41, %c0_42], %58 {strides = array<i32>} : memref<1x8x2x32xbf16, #tpu.memory_space<vmem>>, vector<1x1x2x32xbf16>,
      %c0_43 = arith.constant 0 : index
      %c1_44 = arith.constant 1 : index
      %c0_45 = arith.constant 0 : index
      %c0_46 = arith.constant 0 : index
      %c0_47 = arith.constant 0 : index
      %59 = vector.load %arg2[%c0_43, %c1_44, %c0_45, %c0_46, %c0_47] : memref<1x8x3x2x32xbf16, #tpu.memory_space<vmem>>, vector<1x1x1x2x32xbf16>
      %60 = vector.shape_cast %59 : vector<1x1x1x2x32xbf16> to vector<2x32xbf16>
      %61 = arith.extf %60 : vector<2x32xbf16> to vector<2x32xf32>
      %c0_48 = arith.constant 0 : index
      %c1_49 = arith.constant 1 : index
      %c1_50 = arith.constant 1 : index
      %c0_51 = arith.constant 0 : index
      %c0_52 = arith.constant 0 : index
      %62 = vector.load %arg2[%c0_48, %c1_49, %c1_50, %c0_51, %c0_52] : memref<1x8x3x2x32xbf16, #tpu.memory_space<vmem>>, vector<1x1x1x2x32xbf16>
      %63 = vector.shape_cast %62 : vector<1x1x1x2x32xbf16> to vector<2x32xbf16>
      %64 = arith.extf %63 : vector<2x32xbf16> to vector<2x32xf32>
      %c0_53 = arith.constant 0 : index
      %c1_54 = arith.constant 1 : index
      %c2_55 = arith.constant 2 : index
      %c0_56 = arith.constant 0 : index
      %c0_57 = arith.constant 0 : index
      %65 = vector.load %arg2[%c0_53, %c1_54, %c2_55, %c0_56, %c0_57] : memref<1x8x3x2x32xbf16, #tpu.memory_space<vmem>>, vector<1x1x1x2x32xbf16>
      %66 = vector.shape_cast %65 : vector<1x1x1x2x32xbf16> to vector<2x32xbf16>
      %67 = arith.extf %66 : vector<2x32xbf16> to vector<2x32xf32>
      %68 = arith.truncf %54 : vector<2x32xf32> to vector<2x32xbf16>
      %cst_58 = arith.constant dense<0.000000e+00> : vector<2x32xf32>
      %69 = tpu.matmul %68, %4, %cst_58 {dimension_numbers = #tpu.dot_dimension_numbers<[1], [0], [0], [1], [0, 0, 1, 1], [], []>} : vector<2x32xbf16>, vector<32x32xbf16>, vector<2x32xf32> -> vector<2x32xf32>
      %cst_59 = arith.constant dense<0.000000e+00> : vector<2x32xf32>
      %70 = tpu.matmul %68, %6, %cst_59 {dimension_numbers = #tpu.dot_dimension_numbers<[1], [0], [0], [1], [0, 0, 1, 1], [], []>} : vector<2x32xbf16>, vector<32x32xbf16>, vector<2x32xf32> -> vector<2x32xf32>
      %cst_60 = arith.constant dense<0.000000e+00> : vector<2x32xf32>
      %71 = tpu.matmul %68, %8, %cst_60 {dimension_numbers = #tpu.dot_dimension_numbers<[1], [0], [0], [1], [0, 0, 1, 1], [], []>} : vector<2x32xbf16>, vector<32x32xbf16>, vector<2x32xf32> -> vector<2x32xf32>
      %72 = arith.addf %61, %69 : vector<2x32xf32>
      %73 = arith.negf %72 : vector<2x32xf32>
      %74 = math.exp %73 : vector<2x32xf32>
      %cst_61 = arith.constant 1.000000e+00 : f32
      %75 = vector.broadcast %cst_61 : f32 to vector<2x32xf32>
      %76 = arith.addf %75, %74 : vector<2x32xf32>
      %77 = arith.divf %75, %76 : vector<2x32xf32>
      %78 = arith.addf %64, %70 : vector<2x32xf32>
      %79 = arith.negf %78 : vector<2x32xf32>
      %80 = math.exp %79 : vector<2x32xf32>
      %cst_62 = arith.constant 1.000000e+00 : f32
      %81 = vector.broadcast %cst_62 : f32 to vector<2x32xf32>
      %82 = arith.addf %81, %80 : vector<2x32xf32>
      %83 = arith.divf %81, %82 : vector<2x32xf32>
      %84 = arith.addf %71, %12 : vector<2x32xf32>
      %85 = arith.mulf %77, %84 : vector<2x32xf32>
      %86 = arith.addf %67, %85 : vector<2x32xf32>
      %87 = math.tanh %86 : vector<2x32xf32>
      %88 = arith.subf %54, %87 : vector<2x32xf32>
      %89 = arith.mulf %83, %88 : vector<2x32xf32>
      %90 = arith.addf %87, %89 : vector<2x32xf32>
      %91 = arith.truncf %90 : vector<2x32xf32> to vector<2x32xbf16>
      %c0_63 = arith.constant 0 : index
      %c1_64 = arith.constant 1 : index
      %c0_65 = arith.constant 0 : index
      %c0_66 = arith.constant 0 : index
      %92 = vector.load %arg5[%c0_63, %c1_64, %c0_65, %c0_66] : memref<1x8x2x32xbf16, #tpu.memory_space<vmem>>, vector<1x1x2x32xbf16>
      %93 = vector.shape_cast %92 : vector<1x1x2x32xbf16> to vector<2x32xbf16>
      %94 = vector.shape_cast %91 : vector<2x32xbf16> to vector<1x1x2x32xbf16>
      tpu.vector_store %arg5[%c0_63, %c1_64, %c0_65, %c0_66], %94 {strides = array<i32>} : memref<1x8x2x32xbf16, #tpu.memory_space<vmem>>, vector<1x1x2x32xbf16>,
      %c0_67 = arith.constant 0 : index
      %c2_68 = arith.constant 2 : index
      %c0_69 = arith.constant 0 : index
      %c0_70 = arith.constant 0 : index
      %c0_71 = arith.constant 0 : index
      %95 = vector.load %arg2[%c0_67, %c2_68, %c0_69, %c0_70, %c0_71] : memref<1x8x3x2x32xbf16, #tpu.memory_space<vmem>>, vector<1x1x1x2x32xbf16>
      %96 = vector.shape_cast %95 : vector<1x1x1x2x32xbf16> to vector<2x32xbf16>
      %97 = arith.extf %96 : vector<2x32xbf16> to vector<2x32xf32>
      %c0_72 = arith.constant 0 : index
      %c2_73 = arith.constant 2 : index
      %c1_74 = arith.constant 1 : index
      %c0_75 = arith.constant 0 : index
      %c0_76 = arith.constant 0 : index
      %98 = vector.load %arg2[%c0_72, %c2_73, %c1_74, %c0_75, %c0_76] : memref<1x8x3x2x32xbf16, #tpu.memory_space<vmem>>, vector<1x1x1x2x32xbf16>
      %99 = vector.shape_cast %98 : vector<1x1x1x2x32xbf16> to vector<2x32xbf16>
      %100 = arith.extf %99 : vector<2x32xbf16> to vector<2x32xf32>
      %c0_77 = arith.constant 0 : index
      %c2_78 = arith.constant 2 : index
      %c2_79 = arith.constant 2 : index
      %c0_80 = arith.constant 0 : index
      %c0_81 = arith.constant 0 : index
      %101 = vector.load %arg2[%c0_77, %c2_78, %c2_79, %c0_80, %c0_81] : memref<1x8x3x2x32xbf16, #tpu.memory_space<vmem>>, vector<1x1x1x2x32xbf16>
      %102 = vector.shape_cast %101 : vector<1x1x1x2x32xbf16> to vector<2x32xbf16>
      %103 = arith.extf %102 : vector<2x32xbf16> to vector<2x32xf32>
      %104 = arith.truncf %90 : vector<2x32xf32> to vector<2x32xbf16>
      %cst_82 = arith.constant dense<0.000000e+00> : vector<2x32xf32>
      %105 = tpu.matmul %104, %4, %cst_82 {dimension_numbers = #tpu.dot_dimension_numbers<[1], [0], [0], [1], [0, 0, 1, 1], [], []>} : vector<2x32xbf16>, vector<32x32xbf16>, vector<2x32xf32> -> vector<2x32xf32>
      %cst_83 = arith.constant dense<0.000000e+00> : vector<2x32xf32>
      %106 = tpu.matmul %104, %6, %cst_83 {dimension_numbers = #tpu.dot_dimension_numbers<[1], [0], [0], [1], [0, 0, 1, 1], [], []>} : vector<2x32xbf16>, vector<32x32xbf16>, vector<2x32xf32> -> vector<2x32xf32>
      %cst_84 = arith.constant dense<0.000000e+00> : vector<2x32xf32>
      %107 = tpu.matmul %104, %8, %cst_84 {dimension_numbers = #tpu.dot_dimension_numbers<[1], [0], [0], [1], [0, 0, 1, 1], [], []>} : vector<2x32xbf16>, vector<32x32xbf16>, vector<2x32xf32> -> vector<2x32xf32>
      %108 = arith.addf %97, %105 : vector<2x32xf32>
      %109 = arith.negf %108 : vector<2x32xf32>
      %110 = math.exp %109 : vector<2x32xf32>
      %cst_85 = arith.constant 1.000000e+00 : f32
      %111 = vector.broadcast %cst_85 : f32 to vector<2x32xf32>
      %112 = arith.addf %111, %110 : vector<2x32xf32>
      %113 = arith.divf %111, %112 : vector<2x32xf32>
      %114 = arith.addf %100, %106 : vector<2x32xf32>
      %115 = arith.negf %114 : vector<2x32xf32>
      %116 = math.exp %115 : vector<2x32xf32>
      %cst_86 = arith.constant 1.000000e+00 : f32
      %117 = vector.broadcast %cst_86 : f32 to vector<2x32xf32>
      %118 = arith.addf %117, %116 : vector<2x32xf32>
      %119 = arith.divf %117, %118 : vector<2x32xf32>
      %120 = arith.addf %107, %12 : vector<2x32xf32>
      %121 = arith.mulf %113, %120 : vector<2x32xf32>
      %122 = arith.addf %103, %121 : vector<2x32xf32>
      %123 = math.tanh %122 : vector<2x32xf32>
      %124 = arith.subf %90, %123 : vector<2x32xf32>
      %125 = arith.mulf %119, %124 : vector<2x32xf32>
      %126 = arith.addf %123, %125 : vector<2x32xf32>
      %127 = arith.truncf %126 : vector<2x32xf32> to vector<2x32xbf16>
      %c0_87 = arith.constant 0 : index
      %c2_88 = arith.constant 2 : index
      %c0_89 = arith.constant 0 : index
      %c0_90 = arith.constant 0 : index
      %128 = vector.load %arg5[%c0_87, %c2_88, %c0_89, %c0_90] : memref<1x8x2x32xbf16, #tpu.memory_space<vmem>>, vector<1x1x2x32xbf16>
      %129 = vector.shape_cast %128 : vector<1x1x2x32xbf16> to vector<2x32xbf16>
      %130 = vector.shape_cast %127 : vector<2x32xbf16> to vector<1x1x2x32xbf16>
      tpu.vector_store %arg5[%c0_87, %c2_88, %c0_89, %c0_90], %130 {strides = array<i32>} : memref<1x8x2x32xbf16, #tpu.memory_space<vmem>>, vector<1x1x2x32xbf16>,
      %c0_91 = arith.constant 0 : index
      %c3 = arith.constant 3 : index
      %c0_92 = arith.constant 0 : index
      %c0_93 = arith.constant 0 : index
      %c0_94 = arith.constant 0 : index
      %131 = vector.load %arg2[%c0_91, %c3, %c0_92, %c0_93, %c0_94] : memref<1x8x3x2x32xbf16, #tpu.memory_space<vmem>>, vector<1x1x1x2x32xbf16>
      %132 = vector.shape_cast %131 : vector<1x1x1x2x32xbf16> to vector<2x32xbf16>
      %133 = arith.extf %132 : vector<2x32xbf16> to vector<2x32xf32>
      %c0_95 = arith.constant 0 : index
      %c3_96 = arith.constant 3 : index
      %c1_97 = arith.constant 1 : index
      %c0_98 = arith.constant 0 : index
      %c0_99 = arith.constant 0 : index
      %134 = vector.load %arg2[%c0_95, %c3_96, %c1_97, %c0_98, %c0_99] : memref<1x8x3x2x32xbf16, #tpu.memory_space<vmem>>, vector<1x1x1x2x32xbf16>
      %135 = vector.shape_cast %134 : vector<1x1x1x2x32xbf16> to vector<2x32xbf16>
      %136 = arith.extf %135 : vector<2x32xbf16> to vector<2x32xf32>
      %c0_100 = arith.constant 0 : index
      %c3_101 = arith.constant 3 : index
      %c2_102 = arith.constant 2 : index
      %c0_103 = arith.constant 0 : index
      %c0_104 = arith.constant 0 : index
      %137 = vector.load %arg2[%c0_100, %c3_101, %c2_102, %c0_103, %c0_104] : memref<1x8x3x2x32xbf16, #tpu.memory_space<vmem>>, vector<1x1x1x2x32xbf16>
      %138 = vector.shape_cast %137 : vector<1x1x1x2x32xbf16> to vector<2x32xbf16>
      %139 = arith.extf %138 : vector<2x32xbf16> to vector<2x32xf32>
      %140 = arith.truncf %126 : vector<2x32xf32> to vector<2x32xbf16>
      %cst_105 = arith.constant dense<0.000000e+00> : vector<2x32xf32>
      %141 = tpu.matmul %140, %4, %cst_105 {dimension_numbers = #tpu.dot_dimension_numbers<[1], [0], [0], [1], [0, 0, 1, 1], [], []>} : vector<2x32xbf16>, vector<32x32xbf16>, vector<2x32xf32> -> vector<2x32xf32>
      %cst_106 = arith.constant dense<0.000000e+00> : vector<2x32xf32>
      %142 = tpu.matmul %140, %6, %cst_106 {dimension_numbers = #tpu.dot_dimension_numbers<[1], [0], [0], [1], [0, 0, 1, 1], [], []>} : vector<2x32xbf16>, vector<32x32xbf16>, vector<2x32xf32> -> vector<2x32xf32>
      %cst_107 = arith.constant dense<0.000000e+00> : vector<2x32xf32>
      %143 = tpu.matmul %140, %8, %cst_107 {dimension_numbers = #tpu.dot_dimension_numbers<[1], [0], [0], [1], [0, 0, 1, 1], [], []>} : vector<2x32xbf16>, vector<32x32xbf16>, vector<2x32xf32> -> vector<2x32xf32>
      %144 = arith.addf %133, %141 : vector<2x32xf32>
      %145 = arith.negf %144 : vector<2x32xf32>
      %146 = math.exp %145 : vector<2x32xf32>
      %cst_108 = arith.constant 1.000000e+00 : f32
      %147 = vector.broadcast %cst_108 : f32 to vector<2x32xf32>
      %148 = arith.addf %147, %146 : vector<2x32xf32>
      %149 = arith.divf %147, %148 : vector<2x32xf32>
      %150 = arith.addf %136, %142 : vector<2x32xf32>
      %151 = arith.negf %150 : vector<2x32xf32>
      %152 = math.exp %151 : vector<2x32xf32>
      %cst_109 = arith.constant 1.000000e+00 : f32
      %153 = vector.broadcast %cst_109 : f32 to vector<2x32xf32>
      %154 = arith.addf %153, %152 : vector<2x32xf32>
      %155 = arith.divf %153, %154 : vector<2x32xf32>
      %156 = arith.addf %143, %12 : vector<2x32xf32>
      %157 = arith.mulf %149, %156 : vector<2x32xf32>
      %158 = arith.addf %139, %157 : vector<2x32xf32>
      %159 = math.tanh %158 : vector<2x32xf32>
      %160 = arith.subf %126, %159 : vector<2x32xf32>
      %161 = arith.mulf %155, %160 : vector<2x32xf32>
      %162 = arith.addf %159, %161 : vector<2x32xf32>
      %163 = arith.truncf %162 : vector<2x32xf32> to vector<2x32xbf16>
      %c0_110 = arith.constant 0 : index
      %c3_111 = arith.constant 3 : index
      %c0_112 = arith.constant 0 : index
      %c0_113 = arith.constant 0 : index
      %164 = vector.load %arg5[%c0_110, %c3_111, %c0_112, %c0_113] : memref<1x8x2x32xbf16, #tpu.memory_space<vmem>>, vector<1x1x2x32xbf16>
      %165 = vector.shape_cast %164 : vector<1x1x2x32xbf16> to vector<2x32xbf16>
      %166 = vector.shape_cast %163 : vector<2x32xbf16> to vector<1x1x2x32xbf16>
      tpu.vector_store %arg5[%c0_110, %c3_111, %c0_112, %c0_113], %166 {strides = array<i32>} : memref<1x8x2x32xbf16, #tpu.memory_space<vmem>>, vector<1x1x2x32xbf16>,
      %c0_114 = arith.constant 0 : index
      %c4 = arith.constant 4 : index
      %c0_115 = arith.constant 0 : index
      %c0_116 = arith.constant 0 : index
      %c0_117 = arith.constant 0 : index
      %167 = vector.load %arg2[%c0_114, %c4, %c0_115, %c0_116, %c0_117] : memref<1x8x3x2x32xbf16, #tpu.memory_space<vmem>>, vector<1x1x1x2x32xbf16>
      %168 = vector.shape_cast %167 : vector<1x1x1x2x32xbf16> to vector<2x32xbf16>
      %169 = arith.extf %168 : vector<2x32xbf16> to vector<2x32xf32>
      %c0_118 = arith.constant 0 : index
      %c4_119 = arith.constant 4 : index
      %c1_120 = arith.constant 1 : index
      %c0_121 = arith.constant 0 : index
      %c0_122 = arith.constant 0 : index
      %170 = vector.load %arg2[%c0_118, %c4_119, %c1_120, %c0_121, %c0_122] : memref<1x8x3x2x32xbf16, #tpu.memory_space<vmem>>, vector<1x1x1x2x32xbf16>
      %171 = vector.shape_cast %170 : vector<1x1x1x2x32xbf16> to vector<2x32xbf16>
      %172 = arith.extf %171 : vector<2x32xbf16> to vector<2x32xf32>
      %c0_123 = arith.constant 0 : index
      %c4_124 = arith.constant 4 : index
      %c2_125 = arith.constant 2 : index
      %c0_126 = arith.constant 0 : index
      %c0_127 = arith.constant 0 : index
      %173 = vector.load %arg2[%c0_123, %c4_124, %c2_125, %c0_126, %c0_127] : memref<1x8x3x2x32xbf16, #tpu.memory_space<vmem>>, vector<1x1x1x2x32xbf16>
      %174 = vector.shape_cast %173 : vector<1x1x1x2x32xbf16> to vector<2x32xbf16>
      %175 = arith.extf %174 : vector<2x32xbf16> to vector<2x32xf32>
      %176 = arith.truncf %162 : vector<2x32xf32> to vector<2x32xbf16>
      %cst_128 = arith.constant dense<0.000000e+00> : vector<2x32xf32>
      %177 = tpu.matmul %176, %4, %cst_128 {dimension_numbers = #tpu.dot_dimension_numbers<[1], [0], [0], [1], [0, 0, 1, 1], [], []>} : vector<2x32xbf16>, vector<32x32xbf16>, vector<2x32xf32> -> vector<2x32xf32>
      %cst_129 = arith.constant dense<0.000000e+00> : vector<2x32xf32>
      %178 = tpu.matmul %176, %6, %cst_129 {dimension_numbers = #tpu.dot_dimension_numbers<[1], [0], [0], [1], [0, 0, 1, 1], [], []>} : vector<2x32xbf16>, vector<32x32xbf16>, vector<2x32xf32> -> vector<2x32xf32>
      %cst_130 = arith.constant dense<0.000000e+00> : vector<2x32xf32>
      %179 = tpu.matmul %176, %8, %cst_130 {dimension_numbers = #tpu.dot_dimension_numbers<[1], [0], [0], [1], [0, 0, 1, 1], [], []>} : vector<2x32xbf16>, vector<32x32xbf16>, vector<2x32xf32> -> vector<2x32xf32>
      %180 = arith.addf %169, %177 : vector<2x32xf32>
      %181 = arith.negf %180 : vector<2x32xf32>
      %182 = math.exp %181 : vector<2x32xf32>
      %cst_131 = arith.constant 1.000000e+00 : f32
      %183 = vector.broadcast %cst_131 : f32 to vector<2x32xf32>
      %184 = arith.addf %183, %182 : vector<2x32xf32>
      %185 = arith.divf %183, %184 : vector<2x32xf32>
      %186 = arith.addf %172, %178 : vector<2x32xf32>
      %187 = arith.negf %186 : vector<2x32xf32>
      %188 = math.exp %187 : vector<2x32xf32>
      %cst_132 = arith.constant 1.000000e+00 : f32
      %189 = vector.broadcast %cst_132 : f32 to vector<2x32xf32>
      %190 = arith.addf %189, %188 : vector<2x32xf32>
      %191 = arith.divf %189, %190 : vector<2x32xf32>
      %192 = arith.addf %179, %12 : vector<2x32xf32>
      %193 = arith.mulf %185, %192 : vector<2x32xf32>
      %194 = arith.addf %175, %193 : vector<2x32xf32>
      %195 = math.tanh %194 : vector<2x32xf32>
      %196 = arith.subf %162, %195 : vector<2x32xf32>
      %197 = arith.mulf %191, %196 : vector<2x32xf32>
      %198 = arith.addf %195, %197 : vector<2x32xf32>
      %199 = arith.truncf %198 : vector<2x32xf32> to vector<2x32xbf16>
      %c0_133 = arith.constant 0 : index
      %c4_134 = arith.constant 4 : index
      %c0_135 = arith.constant 0 : index
      %c0_136 = arith.constant 0 : index
      %200 = vector.load %arg5[%c0_133, %c4_134, %c0_135, %c0_136] : memref<1x8x2x32xbf16, #tpu.memory_space<vmem>>, vector<1x1x2x32xbf16>
      %201 = vector.shape_cast %200 : vector<1x1x2x32xbf16> to vector<2x32xbf16>
      %202 = vector.shape_cast %199 : vector<2x32xbf16> to vector<1x1x2x32xbf16>
      tpu.vector_store %arg5[%c0_133, %c4_134, %c0_135, %c0_136], %202 {strides = array<i32>} : memref<1x8x2x32xbf16, #tpu.memory_space<vmem>>, vector<1x1x2x32xbf16>,
      %c0_137 = arith.constant 0 : index
      %c5 = arith.constant 5 : index
      %c0_138 = arith.constant 0 : index
      %c0_139 = arith.constant 0 : index
      %c0_140 = arith.constant 0 : index
      %203 = vector.load %arg2[%c0_137, %c5, %c0_138, %c0_139, %c0_140] : memref<1x8x3x2x32xbf16, #tpu.memory_space<vmem>>, vector<1x1x1x2x32xbf16>
      %204 = vector.shape_cast %203 : vector<1x1x1x2x32xbf16> to vector<2x32xbf16>
      %205 = arith.extf %204 : vector<2x32xbf16> to vector<2x32xf32>
      %c0_141 = arith.constant 0 : index
      %c5_142 = arith.constant 5 : index
      %c1_143 = arith.constant 1 : index
      %c0_144 = arith.constant 0 : index
      %c0_145 = arith.constant 0 : index
      %206 = vector.load %arg2[%c0_141, %c5_142, %c1_143, %c0_144, %c0_145] : memref<1x8x3x2x32xbf16, #tpu.memory_space<vmem>>, vector<1x1x1x2x32xbf16>
      %207 = vector.shape_cast %206 : vector<1x1x1x2x32xbf16> to vector<2x32xbf16>
      %208 = arith.extf %207 : vector<2x32xbf16> to vector<2x32xf32>
      %c0_146 = arith.constant 0 : index
      %c5_147 = arith.constant 5 : index
      %c2_148 = arith.constant 2 : index
      %c0_149 = arith.constant 0 : index
      %c0_150 = arith.constant 0 : index
      %209 = vector.load %arg2[%c0_146, %c5_147, %c2_148, %c0_149, %c0_150] : memref<1x8x3x2x32xbf16, #tpu.memory_space<vmem>>, vector<1x1x1x2x32xbf16>
      %210 = vector.shape_cast %209 : vector<1x1x1x2x32xbf16> to vector<2x32xbf16>
      %211 = arith.extf %210 : vector<2x32xbf16> to vector<2x32xf32>
      %212 = arith.truncf %198 : vector<2x32xf32> to vector<2x32xbf16>
      %cst_151 = arith.constant dense<0.000000e+00> : vector<2x32xf32>
      %213 = tpu.matmul %212, %4, %cst_151 {dimension_numbers = #tpu.dot_dimension_numbers<[1], [0], [0], [1], [0, 0, 1, 1], [], []>} : vector<2x32xbf16>, vector<32x32xbf16>, vector<2x32xf32> -> vector<2x32xf32>
      %cst_152 = arith.constant dense<0.000000e+00> : vector<2x32xf32>
      %214 = tpu.matmul %212, %6, %cst_152 {dimension_numbers = #tpu.dot_dimension_numbers<[1], [0], [0], [1], [0, 0, 1, 1], [], []>} : vector<2x32xbf16>, vector<32x32xbf16>, vector<2x32xf32> -> vector<2x32xf32>
      %cst_153 = arith.constant dense<0.000000e+00> : vector<2x32xf32>
      %215 = tpu.matmul %212, %8, %cst_153 {dimension_numbers = #tpu.dot_dimension_numbers<[1], [0], [0], [1], [0, 0, 1, 1], [], []>} : vector<2x32xbf16>, vector<32x32xbf16>, vector<2x32xf32> -> vector<2x32xf32>
      %216 = arith.addf %205, %213 : vector<2x32xf32>
      %217 = arith.negf %216 : vector<2x32xf32>
      %218 = math.exp %217 : vector<2x32xf32>
      %cst_154 = arith.constant 1.000000e+00 : f32
      %219 = vector.broadcast %cst_154 : f32 to vector<2x32xf32>
      %220 = arith.addf %219, %218 : vector<2x32xf32>
      %221 = arith.divf %219, %220 : vector<2x32xf32>
      %222 = arith.addf %208, %214 : vector<2x32xf32>
      %223 = arith.negf %222 : vector<2x32xf32>
      %224 = math.exp %223 : vector<2x32xf32>
      %cst_155 = arith.constant 1.000000e+00 : f32
      %225 = vector.broadcast %cst_155 : f32 to vector<2x32xf32>
      %226 = arith.addf %225, %224 : vector<2x32xf32>
      %227 = arith.divf %225, %226 : vector<2x32xf32>
      %228 = arith.addf %215, %12 : vector<2x32xf32>
      %229 = arith.mulf %221, %228 : vector<2x32xf32>
      %230 = arith.addf %211, %229 : vector<2x32xf32>
      %231 = math.tanh %230 : vector<2x32xf32>
      %232 = arith.subf %198, %231 : vector<2x32xf32>
      %233 = arith.mulf %227, %232 : vector<2x32xf32>
      %234 = arith.addf %231, %233 : vector<2x32xf32>
      %235 = arith.truncf %234 : vector<2x32xf32> to vector<2x32xbf16>
      %c0_156 = arith.constant 0 : index
      %c5_157 = arith.constant 5 : index
      %c0_158 = arith.constant 0 : index
      %c0_159 = arith.constant 0 : index
      %236 = vector.load %arg5[%c0_156, %c5_157, %c0_158, %c0_159] : memref<1x8x2x32xbf16, #tpu.memory_space<vmem>>, vector<1x1x2x32xbf16>
      %237 = vector.shape_cast %236 : vector<1x1x2x32xbf16> to vector<2x32xbf16>
      %238 = vector.shape_cast %235 : vector<2x32xbf16> to vector<1x1x2x32xbf16>
      tpu.vector_store %arg5[%c0_156, %c5_157, %c0_158, %c0_159], %238 {strides = array<i32>} : memref<1x8x2x32xbf16, #tpu.memory_space<vmem>>, vector<1x1x2x32xbf16>,
      %c0_160 = arith.constant 0 : index
      %c6 = arith.constant 6 : index
      %c0_161 = arith.constant 0 : index
      %c0_162 = arith.constant 0 : index
      %c0_163 = arith.constant 0 : index
      %239 = vector.load %arg2[%c0_160, %c6, %c0_161, %c0_162, %c0_163] : memref<1x8x3x2x32xbf16, #tpu.memory_space<vmem>>, vector<1x1x1x2x32xbf16>
      %240 = vector.shape_cast %239 : vector<1x1x1x2x32xbf16> to vector<2x32xbf16>
      %241 = arith.extf %240 : vector<2x32xbf16> to vector<2x32xf32>
      %c0_164 = arith.constant 0 : index
      %c6_165 = arith.constant 6 : index
      %c1_166 = arith.constant 1 : index
      %c0_167 = arith.constant 0 : index
      %c0_168 = arith.constant 0 : index
      %242 = vector.load %arg2[%c0_164, %c6_165, %c1_166, %c0_167, %c0_168] : memref<1x8x3x2x32xbf16, #tpu.memory_space<vmem>>, vector<1x1x1x2x32xbf16>
      %243 = vector.shape_cast %242 : vector<1x1x1x2x32xbf16> to vector<2x32xbf16>
      %244 = arith.extf %243 : vector<2x32xbf16> to vector<2x32xf32>
      %c0_169 = arith.constant 0 : index
      %c6_170 = arith.constant 6 : index
      %c2_171 = arith.constant 2 : index
      %c0_172 = arith.constant 0 : index
      %c0_173 = arith.constant 0 : index
      %245 = vector.load %arg2[%c0_169, %c6_170, %c2_171, %c0_172, %c0_173] : memref<1x8x3x2x32xbf16, #tpu.memory_space<vmem>>, vector<1x1x1x2x32xbf16>
      %246 = vector.shape_cast %245 : vector<1x1x1x2x32xbf16> to vector<2x32xbf16>
      %247 = arith.extf %246 : vector<2x32xbf16> to vector<2x32xf32>
      %248 = arith.truncf %234 : vector<2x32xf32> to vector<2x32xbf16>
      %cst_174 = arith.constant dense<0.000000e+00> : vector<2x32xf32>
      %249 = tpu.matmul %248, %4, %cst_174 {dimension_numbers = #tpu.dot_dimension_numbers<[1], [0], [0], [1], [0, 0, 1, 1], [], []>} : vector<2x32xbf16>, vector<32x32xbf16>, vector<2x32xf32> -> vector<2x32xf32>
      %cst_175 = arith.constant dense<0.000000e+00> : vector<2x32xf32>
      %250 = tpu.matmul %248, %6, %cst_175 {dimension_numbers = #tpu.dot_dimension_numbers<[1], [0], [0], [1], [0, 0, 1, 1], [], []>} : vector<2x32xbf16>, vector<32x32xbf16>, vector<2x32xf32> -> vector<2x32xf32>
      %cst_176 = arith.constant dense<0.000000e+00> : vector<2x32xf32>
      %251 = tpu.matmul %248, %8, %cst_176 {dimension_numbers = #tpu.dot_dimension_numbers<[1], [0], [0], [1], [0, 0, 1, 1], [], []>} : vector<2x32xbf16>, vector<32x32xbf16>, vector<2x32xf32> -> vector<2x32xf32>
      %252 = arith.addf %241, %249 : vector<2x32xf32>
      %253 = arith.negf %252 : vector<2x32xf32>
      %254 = math.exp %253 : vector<2x32xf32>
      %cst_177 = arith.constant 1.000000e+00 : f32
      %255 = vector.broadcast %cst_177 : f32 to vector<2x32xf32>
      %256 = arith.addf %255, %254 : vector<2x32xf32>
      %257 = arith.divf %255, %256 : vector<2x32xf32>
      %258 = arith.addf %244, %250 : vector<2x32xf32>
      %259 = arith.negf %258 : vector<2x32xf32>
      %260 = math.exp %259 : vector<2x32xf32>
      %cst_178 = arith.constant 1.000000e+00 : f32
      %261 = vector.broadcast %cst_178 : f32 to vector<2x32xf32>
      %262 = arith.addf %261, %260 : vector<2x32xf32>
      %263 = arith.divf %261, %262 : vector<2x32xf32>
      %264 = arith.addf %251, %12 : vector<2x32xf32>
      %265 = arith.mulf %257, %264 : vector<2x32xf32>
      %266 = arith.addf %247, %265 : vector<2x32xf32>
      %267 = math.tanh %266 : vector<2x32xf32>
      %268 = arith.subf %234, %267 : vector<2x32xf32>
      %269 = arith.mulf %263, %268 : vector<2x32xf32>
      %270 = arith.addf %267, %269 : vector<2x32xf32>
      %271 = arith.truncf %270 : vector<2x32xf32> to vector<2x32xbf16>
      %c0_179 = arith.constant 0 : index
      %c6_180 = arith.constant 6 : index
      %c0_181 = arith.constant 0 : index
      %c0_182 = arith.constant 0 : index
      %272 = vector.load %arg5[%c0_179, %c6_180, %c0_181, %c0_182] : memref<1x8x2x32xbf16, #tpu.memory_space<vmem>>, vector<1x1x2x32xbf16>
      %273 = vector.shape_cast %272 : vector<1x1x2x32xbf16> to vector<2x32xbf16>
      %274 = vector.shape_cast %271 : vector<2x32xbf16> to vector<1x1x2x32xbf16>
      tpu.vector_store %arg5[%c0_179, %c6_180, %c0_181, %c0_182], %274 {strides = array<i32>} : memref<1x8x2x32xbf16, #tpu.memory_space<vmem>>, vector<1x1x2x32xbf16>,
      %c0_183 = arith.constant 0 : index
      %c7 = arith.constant 7 : index
      %c0_184 = arith.constant 0 : index
      %c0_185 = arith.constant 0 : index
      %c0_186 = arith.constant 0 : index
      %275 = vector.load %arg2[%c0_183, %c7, %c0_184, %c0_185, %c0_186] : memref<1x8x3x2x32xbf16, #tpu.memory_space<vmem>>, vector<1x1x1x2x32xbf16>
      %276 = vector.shape_cast %275 : vector<1x1x1x2x32xbf16> to vector<2x32xbf16>
      %277 = arith.extf %276 : vector<2x32xbf16> to vector<2x32xf32>
      %c0_187 = arith.constant 0 : index
      %c7_188 = arith.constant 7 : index
      %c1_189 = arith.constant 1 : index
      %c0_190 = arith.constant 0 : index
      %c0_191 = arith.constant 0 : index
      %278 = vector.load %arg2[%c0_187, %c7_188, %c1_189, %c0_190, %c0_191] : memref<1x8x3x2x32xbf16, #tpu.memory_space<vmem>>, vector<1x1x1x2x32xbf16>
      %279 = vector.shape_cast %278 : vector<1x1x1x2x32xbf16> to vector<2x32xbf16>
      %280 = arith.extf %279 : vector<2x32xbf16> to vector<2x32xf32>
      %c0_192 = arith.constant 0 : index
      %c7_193 = arith.constant 7 : index
      %c2_194 = arith.constant 2 : index
      %c0_195 = arith.constant 0 : index
      %c0_196 = arith.constant 0 : index
      %281 = vector.load %arg2[%c0_192, %c7_193, %c2_194, %c0_195, %c0_196] : memref<1x8x3x2x32xbf16, #tpu.memory_space<vmem>>, vector<1x1x1x2x32xbf16>
      %282 = vector.shape_cast %281 : vector<1x1x1x2x32xbf16> to vector<2x32xbf16>
      %283 = arith.extf %282 : vector<2x32xbf16> to vector<2x32xf32>
      %284 = arith.truncf %270 : vector<2x32xf32> to vector<2x32xbf16>
      %cst_197 = arith.constant dense<0.000000e+00> : vector<2x32xf32>
      %285 = tpu.matmul %284, %4, %cst_197 {dimension_numbers = #tpu.dot_dimension_numbers<[1], [0], [0], [1], [0, 0, 1, 1], [], []>} : vector<2x32xbf16>, vector<32x32xbf16>, vector<2x32xf32> -> vector<2x32xf32>
      %cst_198 = arith.constant dense<0.000000e+00> : vector<2x32xf32>
      %286 = tpu.matmul %284, %6, %cst_198 {dimension_numbers = #tpu.dot_dimension_numbers<[1], [0], [0], [1], [0, 0, 1, 1], [], []>} : vector<2x32xbf16>, vector<32x32xbf16>, vector<2x32xf32> -> vector<2x32xf32>
      %cst_199 = arith.constant dense<0.000000e+00> : vector<2x32xf32>
      %287 = tpu.matmul %284, %8, %cst_199 {dimension_numbers = #tpu.dot_dimension_numbers<[1], [0], [0], [1], [0, 0, 1, 1], [], []>} : vector<2x32xbf16>, vector<32x32xbf16>, vector<2x32xf32> -> vector<2x32xf32>
      %288 = arith.addf %277, %285 : vector<2x32xf32>
      %289 = arith.negf %288 : vector<2x32xf32>
      %290 = math.exp %289 : vector<2x32xf32>
      %cst_200 = arith.constant 1.000000e+00 : f32
      %291 = vector.broadcast %cst_200 : f32 to vector<2x32xf32>
      %292 = arith.addf %291, %290 : vector<2x32xf32>
      %293 = arith.divf %291, %292 : vector<2x32xf32>
      %294 = arith.addf %280, %286 : vector<2x32xf32>
      %295 = arith.negf %294 : vector<2x32xf32>
      %296 = math.exp %295 : vector<2x32xf32>
      %cst_201 = arith.constant 1.000000e+00 : f32
      %297 = vector.broadcast %cst_201 : f32 to vector<2x32xf32>
      %298 = arith.addf %297, %296 : vector<2x32xf32>
      %299 = arith.divf %297, %298 : vector<2x32xf32>
      %300 = arith.addf %287, %12 : vector<2x32xf32>
      %301 = arith.mulf %293, %300 : vector<2x32xf32>
      %302 = arith.addf %283, %301 : vector<2x32xf32>
      %303 = math.tanh %302 : vector<2x32xf32>
      %304 = arith.subf %270, %303 : vector<2x32xf32>
      %305 = arith.mulf %299, %304 : vector<2x32xf32>
      %306 = arith.addf %303, %305 : vector<2x32xf32>
      %307 = arith.truncf %306 : vector<2x32xf32> to vector<2x32xbf16>
      %c0_202 = arith.constant 0 : index
      %c7_203 = arith.constant 7 : index
      %c0_204 = arith.constant 0 : index
      %c0_205 = arith.constant 0 : index
      %308 = vector.load %arg5[%c0_202, %c7_203, %c0_204, %c0_205] : memref<1x8x2x32xbf16, #tpu.memory_space<vmem>>, vector<1x1x2x32xbf16>
      %309 = vector.shape_cast %308 : vector<1x1x2x32xbf16> to vector<2x32xbf16>
      %310 = vector.shape_cast %307 : vector<2x32xbf16> to vector<1x1x2x32xbf16>
      tpu.vector_store %arg5[%c0_202, %c7_203, %c0_204, %c0_205], %310 {strides = array<i32>} : memref<1x8x2x32xbf16, #tpu.memory_space<vmem>>, vector<1x1x2x32xbf16>,
      %c0_206 = arith.constant 0 : index
      %c0_207 = arith.constant 0 : index
      %311 = vector.load %arg7[%c0_206, %c0_207] : memref<2x32xf32, #tpu.memory_space<vmem>>, vector<2x32xf32>
      tpu.vector_store %arg7[%c0_206, %c0_207], %306 {strides = array<i32>} : memref<2x32xf32, #tpu.memory_space<vmem>>, vector<2x32xf32>,
    } else {
    }
    %c1_i32 = arith.constant 1 : i32
    %16 = arith.cmpi eq, %arg0, %c1_i32 : i32
    %17 = arith.extui %16 : i1 to i32
    %c0_i32_15 = arith.constant 0 : i32
    %18 = arith.cmpi ne, %17, %c0_i32_15 : i32
    scf.if %18 {
      %c0_18 = arith.constant 0 : index
      %c0_19 = arith.constant 0 : index
      %22 = vector.load %arg7[%c0_18, %c0_19] : memref<2x32xf32, #tpu.memory_space<vmem>>, vector<2x32xf32>
      %c0_20 = arith.constant 0 : index
      %c7 = arith.constant 7 : index
      %c0_21 = arith.constant 0 : index
      %c0_22 = arith.constant 0 : index
      %c0_23 = arith.constant 0 : index
      %23 = vector.load %arg2[%c0_20, %c7, %c0_21, %c0_22, %c0_23] : memref<1x8x3x2x32xbf16, #tpu.memory_space<vmem>>, vector<1x1x1x2x32xbf16>
      %24 = vector.shape_cast %23 : vector<1x1x1x2x32xbf16> to vector<2x32xbf16>
      %25 = arith.extf %24 : vector<2x32xbf16> to vector<2x32xf32>
      %c0_24 = arith.constant 0 : index
      %c7_25 = arith.constant 7 : index
      %c1_26 = arith.constant 1 : index
      %c0_27 = arith.constant 0 : index
      %c0_28 = arith.constant 0 : index
      %26 = vector.load %arg2[%c0_24, %c7_25, %c1_26, %c0_27, %c0_28] : memref<1x8x3x2x32xbf16, #tpu.memory_space<vmem>>, vector<1x1x1x2x32xbf16>
      %27 = vector.shape_cast %26 : vector<1x1x1x2x32xbf16> to vector<2x32xbf16>
      %28 = arith.extf %27 : vector<2x32xbf16> to vector<2x32xf32>
      %c0_29 = arith.constant 0 : index
      %c7_30 = arith.constant 7 : index
      %c2_31 = arith.constant 2 : index
      %c0_32 = arith.constant 0 : index
      %c0_33 = arith.constant 0 : index
      %29 = vector.load %arg2[%c0_29, %c7_30, %c2_31, %c0_32, %c0_33] : memref<1x8x3x2x32xbf16, #tpu.memory_space<vmem>>, vector<1x1x1x2x32xbf16>
      %30 = vector.shape_cast %29 : vector<1x1x1x2x32xbf16> to vector<2x32xbf16>
      %31 = arith.extf %30 : vector<2x32xbf16> to vector<2x32xf32>
      %32 = arith.truncf %22 : vector<2x32xf32> to vector<2x32xbf16>
      %cst = arith.constant dense<0.000000e+00> : vector<2x32xf32>
      %33 = tpu.matmul %32, %4, %cst {dimension_numbers = #tpu.dot_dimension_numbers<[1], [0], [0], [1], [0, 0, 1, 1], [], []>} : vector<2x32xbf16>, vector<32x32xbf16>, vector<2x32xf32> -> vector<2x32xf32>
      %cst_34 = arith.constant dense<0.000000e+00> : vector<2x32xf32>
      %34 = tpu.matmul %32, %6, %cst_34 {dimension_numbers = #tpu.dot_dimension_numbers<[1], [0], [0], [1], [0, 0, 1, 1], [], []>} : vector<2x32xbf16>, vector<32x32xbf16>, vector<2x32xf32> -> vector<2x32xf32>
      %cst_35 = arith.constant dense<0.000000e+00> : vector<2x32xf32>
      %35 = tpu.matmul %32, %8, %cst_35 {dimension_numbers = #tpu.dot_dimension_numbers<[1], [0], [0], [1], [0, 0, 1, 1], [], []>} : vector<2x32xbf16>, vector<32x32xbf16>, vector<2x32xf32> -> vector<2x32xf32>
      %36 = arith.addf %25, %33 : vector<2x32xf32>
      %37 = arith.negf %36 : vector<2x32xf32>
      %38 = math.exp %37 : vector<2x32xf32>
      %cst_36 = arith.constant 1.000000e+00 : f32
      %39 = vector.broadcast %cst_36 : f32 to vector<2x32xf32>
      %40 = arith.addf %39, %38 : vector<2x32xf32>
      %41 = arith.divf %39, %40 : vector<2x32xf32>
      %42 = arith.addf %28, %34 : vector<2x32xf32>
      %43 = arith.negf %42 : vector<2x32xf32>
      %44 = math.exp %43 : vector<2x32xf32>
      %cst_37 = arith.constant 1.000000e+00 : f32
      %45 = vector.broadcast %cst_37 : f32 to vector<2x32xf32>
      %46 = arith.addf %45, %44 : vector<2x32xf32>
      %47 = arith.divf %45, %46 : vector<2x32xf32>
      %48 = arith.addf %35, %12 : vector<2x32xf32>
      %49 = arith.mulf %41, %48 : vector<2x32xf32>
      %50 = arith.addf %31, %49 : vector<2x32xf32>
      %51 = math.tanh %50 : vector<2x32xf32>
      %52 = arith.subf %22, %51 : vector<2x32xf32>
      %53 = arith.mulf %47, %52 : vector<2x32xf32>
      %54 = arith.addf %51, %53 : vector<2x32xf32>
      %55 = arith.truncf %54 : vector<2x32xf32> to vector<2x32xbf16>
      %c0_38 = arith.constant 0 : index
      %c7_39 = arith.constant 7 : index
      %c0_40 = arith.constant 0 : index
      %c0_41 = arith.constant 0 : index
      %56 = vector.load %arg5[%c0_38, %c7_39, %c0_40, %c0_41] : memref<1x8x2x32xbf16, #tpu.memory_space<vmem>>, vector<1x1x2x32xbf16>
      %57 = vector.shape_cast %56 : vector<1x1x2x32xbf16> to vector<2x32xbf16>
      %58 = vector.shape_cast %55 : vector<2x32xbf16> to vector<1x1x2x32xbf16>
      tpu.vector_store %arg5[%c0_38, %c7_39, %c0_40, %c0_41], %58 {strides = array<i32>} : memref<1x8x2x32xbf16, #tpu.memory_space<vmem>>, vector<1x1x2x32xbf16>,
      %c0_42 = arith.constant 0 : index
      %c6 = arith.constant 6 : index
      %c0_43 = arith.constant 0 : index
      %c0_44 = arith.constant 0 : index
      %c0_45 = arith.constant 0 : index
      %59 = vector.load %arg2[%c0_42, %c6, %c0_43, %c0_44, %c0_45] : memref<1x8x3x2x32xbf16, #tpu.memory_space<vmem>>, vector<1x1x1x2x32xbf16>
      %60 = vector.shape_cast %59 : vector<1x1x1x2x32xbf16> to vector<2x32xbf16>
      %61 = arith.extf %60 : vector<2x32xbf16> to vector<2x32xf32>
      %c0_46 = arith.constant 0 : index
      %c6_47 = arith.constant 6 : index
      %c1_48 = arith.constant 1 : index
      %c0_49 = arith.constant 0 : index
      %c0_50 = arith.constant 0 : index
      %62 = vector.load %arg2[%c0_46, %c6_47, %c1_48, %c0_49, %c0_50] : memref<1x8x3x2x32xbf16, #tpu.memory_space<vmem>>, vector<1x1x1x2x32xbf16>
      %63 = vector.shape_cast %62 : vector<1x1x1x2x32xbf16> to vector<2x32xbf16>
      %64 = arith.extf %63 : vector<2x32xbf16> to vector<2x32xf32>
      %c0_51 = arith.constant 0 : index
      %c6_52 = arith.constant 6 : index
      %c2_53 = arith.constant 2 : index
      %c0_54 = arith.constant 0 : index
      %c0_55 = arith.constant 0 : index
      %65 = vector.load %arg2[%c0_51, %c6_52, %c2_53, %c0_54, %c0_55] : memref<1x8x3x2x32xbf16, #tpu.memory_space<vmem>>, vector<1x1x1x2x32xbf16>
      %66 = vector.shape_cast %65 : vector<1x1x1x2x32xbf16> to vector<2x32xbf16>
      %67 = arith.extf %66 : vector<2x32xbf16> to vector<2x32xf32>
      %68 = arith.truncf %54 : vector<2x32xf32> to vector<2x32xbf16>
      %cst_56 = arith.constant dense<0.000000e+00> : vector<2x32xf32>
      %69 = tpu.matmul %68, %4, %cst_56 {dimension_numbers = #tpu.dot_dimension_numbers<[1], [0], [0], [1], [0, 0, 1, 1], [], []>} : vector<2x32xbf16>, vector<32x32xbf16>, vector<2x32xf32> -> vector<2x32xf32>
      %cst_57 = arith.constant dense<0.000000e+00> : vector<2x32xf32>
      %70 = tpu.matmul %68, %6, %cst_57 {dimension_numbers = #tpu.dot_dimension_numbers<[1], [0], [0], [1], [0, 0, 1, 1], [], []>} : vector<2x32xbf16>, vector<32x32xbf16>, vector<2x32xf32> -> vector<2x32xf32>
      %cst_58 = arith.constant dense<0.000000e+00> : vector<2x32xf32>
      %71 = tpu.matmul %68, %8, %cst_58 {dimension_numbers = #tpu.dot_dimension_numbers<[1], [0], [0], [1], [0, 0, 1, 1], [], []>} : vector<2x32xbf16>, vector<32x32xbf16>, vector<2x32xf32> -> vector<2x32xf32>
      %72 = arith.addf %61, %69 : vector<2x32xf32>
      %73 = arith.negf %72 : vector<2x32xf32>
      %74 = math.exp %73 : vector<2x32xf32>
      %cst_59 = arith.constant 1.000000e+00 : f32
      %75 = vector.broadcast %cst_59 : f32 to vector<2x32xf32>
      %76 = arith.addf %75, %74 : vector<2x32xf32>
      %77 = arith.divf %75, %76 : vector<2x32xf32>
      %78 = arith.addf %64, %70 : vector<2x32xf32>
      %79 = arith.negf %78 : vector<2x32xf32>
      %80 = math.exp %79 : vector<2x32xf32>
      %cst_60 = arith.constant 1.000000e+00 : f32
      %81 = vector.broadcast %cst_60 : f32 to vector<2x32xf32>
      %82 = arith.addf %81, %80 : vector<2x32xf32>
      %83 = arith.divf %81, %82 : vector<2x32xf32>
      %84 = arith.addf %71, %12 : vector<2x32xf32>
      %85 = arith.mulf %77, %84 : vector<2x32xf32>
      %86 = arith.addf %67, %85 : vector<2x32xf32>
      %87 = math.tanh %86 : vector<2x32xf32>
      %88 = arith.subf %54, %87 : vector<2x32xf32>
      %89 = arith.mulf %83, %88 : vector<2x32xf32>
      %90 = arith.addf %87, %89 : vector<2x32xf32>
      %91 = arith.truncf %90 : vector<2x32xf32> to vector<2x32xbf16>
      %c0_61 = arith.constant 0 : index
      %c6_62 = arith.constant 6 : index
      %c0_63 = arith.constant 0 : index
      %c0_64 = arith.constant 0 : index
      %92 = vector.load %arg5[%c0_61, %c6_62, %c0_63, %c0_64] : memref<1x8x2x32xbf16, #tpu.memory_space<vmem>>, vector<1x1x2x32xbf16>
      %93 = vector.shape_cast %92 : vector<1x1x2x32xbf16> to vector<2x32xbf16>
      %94 = vector.shape_cast %91 : vector<2x32xbf16> to vector<1x1x2x32xbf16>
      tpu.vector_store %arg5[%c0_61, %c6_62, %c0_63, %c0_64], %94 {strides = array<i32>} : memref<1x8x2x32xbf16, #tpu.memory_space<vmem>>, vector<1x1x2x32xbf16>,
      %c0_65 = arith.constant 0 : index
      %c5 = arith.constant 5 : index
      %c0_66 = arith.constant 0 : index
      %c0_67 = arith.constant 0 : index
      %c0_68 = arith.constant 0 : index
      %95 = vector.load %arg2[%c0_65, %c5, %c0_66, %c0_67, %c0_68] : memref<1x8x3x2x32xbf16, #tpu.memory_space<vmem>>, vector<1x1x1x2x32xbf16>
      %96 = vector.shape_cast %95 : vector<1x1x1x2x32xbf16> to vector<2x32xbf16>
      %97 = arith.extf %96 : vector<2x32xbf16> to vector<2x32xf32>
      %c0_69 = arith.constant 0 : index
      %c5_70 = arith.constant 5 : index
      %c1_71 = arith.constant 1 : index
      %c0_72 = arith.constant 0 : index
      %c0_73 = arith.constant 0 : index
      %98 = vector.load %arg2[%c0_69, %c5_70, %c1_71, %c0_72, %c0_73] : memref<1x8x3x2x32xbf16, #tpu.memory_space<vmem>>, vector<1x1x1x2x32xbf16>
      %99 = vector.shape_cast %98 : vector<1x1x1x2x32xbf16> to vector<2x32xbf16>
      %100 = arith.extf %99 : vector<2x32xbf16> to vector<2x32xf32>
      %c0_74 = arith.constant 0 : index
      %c5_75 = arith.constant 5 : index
      %c2_76 = arith.constant 2 : index
      %c0_77 = arith.constant 0 : index
      %c0_78 = arith.constant 0 : index
      %101 = vector.load %arg2[%c0_74, %c5_75, %c2_76, %c0_77, %c0_78] : memref<1x8x3x2x32xbf16, #tpu.memory_space<vmem>>, vector<1x1x1x2x32xbf16>
      %102 = vector.shape_cast %101 : vector<1x1x1x2x32xbf16> to vector<2x32xbf16>
      %103 = arith.extf %102 : vector<2x32xbf16> to vector<2x32xf32>
      %104 = arith.truncf %90 : vector<2x32xf32> to vector<2x32xbf16>
      %cst_79 = arith.constant dense<0.000000e+00> : vector<2x32xf32>
      %105 = tpu.matmul %104, %4, %cst_79 {dimension_numbers = #tpu.dot_dimension_numbers<[1], [0], [0], [1], [0, 0, 1, 1], [], []>} : vector<2x32xbf16>, vector<32x32xbf16>, vector<2x32xf32> -> vector<2x32xf32>
      %cst_80 = arith.constant dense<0.000000e+00> : vector<2x32xf32>
      %106 = tpu.matmul %104, %6, %cst_80 {dimension_numbers = #tpu.dot_dimension_numbers<[1], [0], [0], [1], [0, 0, 1, 1], [], []>} : vector<2x32xbf16>, vector<32x32xbf16>, vector<2x32xf32> -> vector<2x32xf32>
      %cst_81 = arith.constant dense<0.000000e+00> : vector<2x32xf32>
      %107 = tpu.matmul %104, %8, %cst_81 {dimension_numbers = #tpu.dot_dimension_numbers<[1], [0], [0], [1], [0, 0, 1, 1], [], []>} : vector<2x32xbf16>, vector<32x32xbf16>, vector<2x32xf32> -> vector<2x32xf32>
      %108 = arith.addf %97, %105 : vector<2x32xf32>
      %109 = arith.negf %108 : vector<2x32xf32>
      %110 = math.exp %109 : vector<2x32xf32>
      %cst_82 = arith.constant 1.000000e+00 : f32
      %111 = vector.broadcast %cst_82 : f32 to vector<2x32xf32>
      %112 = arith.addf %111, %110 : vector<2x32xf32>
      %113 = arith.divf %111, %112 : vector<2x32xf32>
      %114 = arith.addf %100, %106 : vector<2x32xf32>
      %115 = arith.negf %114 : vector<2x32xf32>
      %116 = math.exp %115 : vector<2x32xf32>
      %cst_83 = arith.constant 1.000000e+00 : f32
      %117 = vector.broadcast %cst_83 : f32 to vector<2x32xf32>
      %118 = arith.addf %117, %116 : vector<2x32xf32>
      %119 = arith.divf %117, %118 : vector<2x32xf32>
      %120 = arith.addf %107, %12 : vector<2x32xf32>
      %121 = arith.mulf %113, %120 : vector<2x32xf32>
      %122 = arith.addf %103, %121 : vector<2x32xf32>
      %123 = math.tanh %122 : vector<2x32xf32>
      %124 = arith.subf %90, %123 : vector<2x32xf32>
      %125 = arith.mulf %119, %124 : vector<2x32xf32>
      %126 = arith.addf %123, %125 : vector<2x32xf32>
      %127 = arith.truncf %126 : vector<2x32xf32> to vector<2x32xbf16>
      %c0_84 = arith.constant 0 : index
      %c5_85 = arith.constant 5 : index
      %c0_86 = arith.constant 0 : index
      %c0_87 = arith.constant 0 : index
      %128 = vector.load %arg5[%c0_84, %c5_85, %c0_86, %c0_87] : memref<1x8x2x32xbf16, #tpu.memory_space<vmem>>, vector<1x1x2x32xbf16>
      %129 = vector.shape_cast %128 : vector<1x1x2x32xbf16> to vector<2x32xbf16>
      %130 = vector.shape_cast %127 : vector<2x32xbf16> to vector<1x1x2x32xbf16>
      tpu.vector_store %arg5[%c0_84, %c5_85, %c0_86, %c0_87], %130 {strides = array<i32>} : memref<1x8x2x32xbf16, #tpu.memory_space<vmem>>, vector<1x1x2x32xbf16>,
      %c0_88 = arith.constant 0 : index
      %c4 = arith.constant 4 : index
      %c0_89 = arith.constant 0 : index
      %c0_90 = arith.constant 0 : index
      %c0_91 = arith.constant 0 : index
      %131 = vector.load %arg2[%c0_88, %c4, %c0_89, %c0_90, %c0_91] : memref<1x8x3x2x32xbf16, #tpu.memory_space<vmem>>, vector<1x1x1x2x32xbf16>
      %132 = vector.shape_cast %131 : vector<1x1x1x2x32xbf16> to vector<2x32xbf16>
      %133 = arith.extf %132 : vector<2x32xbf16> to vector<2x32xf32>
      %c0_92 = arith.constant 0 : index
      %c4_93 = arith.constant 4 : index
      %c1_94 = arith.constant 1 : index
      %c0_95 = arith.constant 0 : index
      %c0_96 = arith.constant 0 : index
      %134 = vector.load %arg2[%c0_92, %c4_93, %c1_94, %c0_95, %c0_96] : memref<1x8x3x2x32xbf16, #tpu.memory_space<vmem>>, vector<1x1x1x2x32xbf16>
      %135 = vector.shape_cast %134 : vector<1x1x1x2x32xbf16> to vector<2x32xbf16>
      %136 = arith.extf %135 : vector<2x32xbf16> to vector<2x32xf32>
      %c0_97 = arith.constant 0 : index
      %c4_98 = arith.constant 4 : index
      %c2_99 = arith.constant 2 : index
      %c0_100 = arith.constant 0 : index
      %c0_101 = arith.constant 0 : index
      %137 = vector.load %arg2[%c0_97, %c4_98, %c2_99, %c0_100, %c0_101] : memref<1x8x3x2x32xbf16, #tpu.memory_space<vmem>>, vector<1x1x1x2x32xbf16>
      %138 = vector.shape_cast %137 : vector<1x1x1x2x32xbf16> to vector<2x32xbf16>
      %139 = arith.extf %138 : vector<2x32xbf16> to vector<2x32xf32>
      %140 = arith.truncf %126 : vector<2x32xf32> to vector<2x32xbf16>
      %cst_102 = arith.constant dense<0.000000e+00> : vector<2x32xf32>
      %141 = tpu.matmul %140, %4, %cst_102 {dimension_numbers = #tpu.dot_dimension_numbers<[1], [0], [0], [1], [0, 0, 1, 1], [], []>} : vector<2x32xbf16>, vector<32x32xbf16>, vector<2x32xf32> -> vector<2x32xf32>
      %cst_103 = arith.constant dense<0.000000e+00> : vector<2x32xf32>
      %142 = tpu.matmul %140, %6, %cst_103 {dimension_numbers = #tpu.dot_dimension_numbers<[1], [0], [0], [1], [0, 0, 1, 1], [], []>} : vector<2x32xbf16>, vector<32x32xbf16>, vector<2x32xf32> -> vector<2x32xf32>
      %cst_104 = arith.constant dense<0.000000e+00> : vector<2x32xf32>
      %143 = tpu.matmul %140, %8, %cst_104 {dimension_numbers = #tpu.dot_dimension_numbers<[1], [0], [0], [1], [0, 0, 1, 1], [], []>} : vector<2x32xbf16>, vector<32x32xbf16>, vector<2x32xf32> -> vector<2x32xf32>
      %144 = arith.addf %133, %141 : vector<2x32xf32>
      %145 = arith.negf %144 : vector<2x32xf32>
      %146 = math.exp %145 : vector<2x32xf32>
      %cst_105 = arith.constant 1.000000e+00 : f32
      %147 = vector.broadcast %cst_105 : f32 to vector<2x32xf32>
      %148 = arith.addf %147, %146 : vector<2x32xf32>
      %149 = arith.divf %147, %148 : vector<2x32xf32>
      %150 = arith.addf %136, %142 : vector<2x32xf32>
      %151 = arith.negf %150 : vector<2x32xf32>
      %152 = math.exp %151 : vector<2x32xf32>
      %cst_106 = arith.constant 1.000000e+00 : f32
      %153 = vector.broadcast %cst_106 : f32 to vector<2x32xf32>
      %154 = arith.addf %153, %152 : vector<2x32xf32>
      %155 = arith.divf %153, %154 : vector<2x32xf32>
      %156 = arith.addf %143, %12 : vector<2x32xf32>
      %157 = arith.mulf %149, %156 : vector<2x32xf32>
      %158 = arith.addf %139, %157 : vector<2x32xf32>
      %159 = math.tanh %158 : vector<2x32xf32>
      %160 = arith.subf %126, %159 : vector<2x32xf32>
      %161 = arith.mulf %155, %160 : vector<2x32xf32>
      %162 = arith.addf %159, %161 : vector<2x32xf32>
      %163 = arith.truncf %162 : vector<2x32xf32> to vector<2x32xbf16>
      %c0_107 = arith.constant 0 : index
      %c4_108 = arith.constant 4 : index
      %c0_109 = arith.constant 0 : index
      %c0_110 = arith.constant 0 : index
      %164 = vector.load %arg5[%c0_107, %c4_108, %c0_109, %c0_110] : memref<1x8x2x32xbf16, #tpu.memory_space<vmem>>, vector<1x1x2x32xbf16>
      %165 = vector.shape_cast %164 : vector<1x1x2x32xbf16> to vector<2x32xbf16>
      %166 = vector.shape_cast %163 : vector<2x32xbf16> to vector<1x1x2x32xbf16>
      tpu.vector_store %arg5[%c0_107, %c4_108, %c0_109, %c0_110], %166 {strides = array<i32>} : memref<1x8x2x32xbf16, #tpu.memory_space<vmem>>, vector<1x1x2x32xbf16>,
      %c0_111 = arith.constant 0 : index
      %c3 = arith.constant 3 : index
      %c0_112 = arith.constant 0 : index
      %c0_113 = arith.constant 0 : index
      %c0_114 = arith.constant 0 : index
      %167 = vector.load %arg2[%c0_111, %c3, %c0_112, %c0_113, %c0_114] : memref<1x8x3x2x32xbf16, #tpu.memory_space<vmem>>, vector<1x1x1x2x32xbf16>
      %168 = vector.shape_cast %167 : vector<1x1x1x2x32xbf16> to vector<2x32xbf16>
      %169 = arith.extf %168 : vector<2x32xbf16> to vector<2x32xf32>
      %c0_115 = arith.constant 0 : index
      %c3_116 = arith.constant 3 : index
      %c1_117 = arith.constant 1 : index
      %c0_118 = arith.constant 0 : index
      %c0_119 = arith.constant 0 : index
      %170 = vector.load %arg2[%c0_115, %c3_116, %c1_117, %c0_118, %c0_119] : memref<1x8x3x2x32xbf16, #tpu.memory_space<vmem>>, vector<1x1x1x2x32xbf16>
      %171 = vector.shape_cast %170 : vector<1x1x1x2x32xbf16> to vector<2x32xbf16>
      %172 = arith.extf %171 : vector<2x32xbf16> to vector<2x32xf32>
      %c0_120 = arith.constant 0 : index
      %c3_121 = arith.constant 3 : index
      %c2_122 = arith.constant 2 : index
      %c0_123 = arith.constant 0 : index
      %c0_124 = arith.constant 0 : index
      %173 = vector.load %arg2[%c0_120, %c3_121, %c2_122, %c0_123, %c0_124] : memref<1x8x3x2x32xbf16, #tpu.memory_space<vmem>>, vector<1x1x1x2x32xbf16>
      %174 = vector.shape_cast %173 : vector<1x1x1x2x32xbf16> to vector<2x32xbf16>
      %175 = arith.extf %174 : vector<2x32xbf16> to vector<2x32xf32>
      %176 = arith.truncf %162 : vector<2x32xf32> to vector<2x32xbf16>
      %cst_125 = arith.constant dense<0.000000e+00> : vector<2x32xf32>
      %177 = tpu.matmul %176, %4, %cst_125 {dimension_numbers = #tpu.dot_dimension_numbers<[1], [0], [0], [1], [0, 0, 1, 1], [], []>} : vector<2x32xbf16>, vector<32x32xbf16>, vector<2x32xf32> -> vector<2x32xf32>
      %cst_126 = arith.constant dense<0.000000e+00> : vector<2x32xf32>
      %178 = tpu.matmul %176, %6, %cst_126 {dimension_numbers = #tpu.dot_dimension_numbers<[1], [0], [0], [1], [0, 0, 1, 1], [], []>} : vector<2x32xbf16>, vector<32x32xbf16>, vector<2x32xf32> -> vector<2x32xf32>
      %cst_127 = arith.constant dense<0.000000e+00> : vector<2x32xf32>
      %179 = tpu.matmul %176, %8, %cst_127 {dimension_numbers = #tpu.dot_dimension_numbers<[1], [0], [0], [1], [0, 0, 1, 1], [], []>} : vector<2x32xbf16>, vector<32x32xbf16>, vector<2x32xf32> -> vector<2x32xf32>
      %180 = arith.addf %169, %177 : vector<2x32xf32>
      %181 = arith.negf %180 : vector<2x32xf32>
      %182 = math.exp %181 : vector<2x32xf32>
      %cst_128 = arith.constant 1.000000e+00 : f32
      %183 = vector.broadcast %cst_128 : f32 to vector<2x32xf32>
      %184 = arith.addf %183, %182 : vector<2x32xf32>
      %185 = arith.divf %183, %184 : vector<2x32xf32>
      %186 = arith.addf %172, %178 : vector<2x32xf32>
      %187 = arith.negf %186 : vector<2x32xf32>
      %188 = math.exp %187 : vector<2x32xf32>
      %cst_129 = arith.constant 1.000000e+00 : f32
      %189 = vector.broadcast %cst_129 : f32 to vector<2x32xf32>
      %190 = arith.addf %189, %188 : vector<2x32xf32>
      %191 = arith.divf %189, %190 : vector<2x32xf32>
      %192 = arith.addf %179, %12 : vector<2x32xf32>
      %193 = arith.mulf %185, %192 : vector<2x32xf32>
      %194 = arith.addf %175, %193 : vector<2x32xf32>
      %195 = math.tanh %194 : vector<2x32xf32>
      %196 = arith.subf %162, %195 : vector<2x32xf32>
      %197 = arith.mulf %191, %196 : vector<2x32xf32>
      %198 = arith.addf %195, %197 : vector<2x32xf32>
      %199 = arith.truncf %198 : vector<2x32xf32> to vector<2x32xbf16>
      %c0_130 = arith.constant 0 : index
      %c3_131 = arith.constant 3 : index
      %c0_132 = arith.constant 0 : index
      %c0_133 = arith.constant 0 : index
      %200 = vector.load %arg5[%c0_130, %c3_131, %c0_132, %c0_133] : memref<1x8x2x32xbf16, #tpu.memory_space<vmem>>, vector<1x1x2x32xbf16>
      %201 = vector.shape_cast %200 : vector<1x1x2x32xbf16> to vector<2x32xbf16>
      %202 = vector.shape_cast %199 : vector<2x32xbf16> to vector<1x1x2x32xbf16>
      tpu.vector_store %arg5[%c0_130, %c3_131, %c0_132, %c0_133], %202 {strides = array<i32>} : memref<1x8x2x32xbf16, #tpu.memory_space<vmem>>, vector<1x1x2x32xbf16>,
      %c0_134 = arith.constant 0 : index
      %c2_135 = arith.constant 2 : index
      %c0_136 = arith.constant 0 : index
      %c0_137 = arith.constant 0 : index
      %c0_138 = arith.constant 0 : index
      %203 = vector.load %arg2[%c0_134, %c2_135, %c0_136, %c0_137, %c0_138] : memref<1x8x3x2x32xbf16, #tpu.memory_space<vmem>>, vector<1x1x1x2x32xbf16>
      %204 = vector.shape_cast %203 : vector<1x1x1x2x32xbf16> to vector<2x32xbf16>
      %205 = arith.extf %204 : vector<2x32xbf16> to vector<2x32xf32>
      %c0_139 = arith.constant 0 : index
      %c2_140 = arith.constant 2 : index
      %c1_141 = arith.constant 1 : index
      %c0_142 = arith.constant 0 : index
      %c0_143 = arith.constant 0 : index
      %206 = vector.load %arg2[%c0_139, %c2_140, %c1_141, %c0_142, %c0_143] : memref<1x8x3x2x32xbf16, #tpu.memory_space<vmem>>, vector<1x1x1x2x32xbf16>
      %207 = vector.shape_cast %206 : vector<1x1x1x2x32xbf16> to vector<2x32xbf16>
      %208 = arith.extf %207 : vector<2x32xbf16> to vector<2x32xf32>
      %c0_144 = arith.constant 0 : index
      %c2_145 = arith.constant 2 : index
      %c2_146 = arith.constant 2 : index
      %c0_147 = arith.constant 0 : index
      %c0_148 = arith.constant 0 : index
      %209 = vector.load %arg2[%c0_144, %c2_145, %c2_146, %c0_147, %c0_148] : memref<1x8x3x2x32xbf16, #tpu.memory_space<vmem>>, vector<1x1x1x2x32xbf16>
      %210 = vector.shape_cast %209 : vector<1x1x1x2x32xbf16> to vector<2x32xbf16>
      %211 = arith.extf %210 : vector<2x32xbf16> to vector<2x32xf32>
      %212 = arith.truncf %198 : vector<2x32xf32> to vector<2x32xbf16>
      %cst_149 = arith.constant dense<0.000000e+00> : vector<2x32xf32>
      %213 = tpu.matmul %212, %4, %cst_149 {dimension_numbers = #tpu.dot_dimension_numbers<[1], [0], [0], [1], [0, 0, 1, 1], [], []>} : vector<2x32xbf16>, vector<32x32xbf16>, vector<2x32xf32> -> vector<2x32xf32>
      %cst_150 = arith.constant dense<0.000000e+00> : vector<2x32xf32>
      %214 = tpu.matmul %212, %6, %cst_150 {dimension_numbers = #tpu.dot_dimension_numbers<[1], [0], [0], [1], [0, 0, 1, 1], [], []>} : vector<2x32xbf16>, vector<32x32xbf16>, vector<2x32xf32> -> vector<2x32xf32>
      %cst_151 = arith.constant dense<0.000000e+00> : vector<2x32xf32>
      %215 = tpu.matmul %212, %8, %cst_151 {dimension_numbers = #tpu.dot_dimension_numbers<[1], [0], [0], [1], [0, 0, 1, 1], [], []>} : vector<2x32xbf16>, vector<32x32xbf16>, vector<2x32xf32> -> vector<2x32xf32>
      %216 = arith.addf %205, %213 : vector<2x32xf32>
      %217 = arith.negf %216 : vector<2x32xf32>
      %218 = math.exp %217 : vector<2x32xf32>
      %cst_152 = arith.constant 1.000000e+00 : f32
      %219 = vector.broadcast %cst_152 : f32 to vector<2x32xf32>
      %220 = arith.addf %219, %218 : vector<2x32xf32>
      %221 = arith.divf %219, %220 : vector<2x32xf32>
      %222 = arith.addf %208, %214 : vector<2x32xf32>
      %223 = arith.negf %222 : vector<2x32xf32>
      %224 = math.exp %223 : vector<2x32xf32>
      %cst_153 = arith.constant 1.000000e+00 : f32
      %225 = vector.broadcast %cst_153 : f32 to vector<2x32xf32>
      %226 = arith.addf %225, %224 : vector<2x32xf32>
      %227 = arith.divf %225, %226 : vector<2x32xf32>
      %228 = arith.addf %215, %12 : vector<2x32xf32>
      %229 = arith.mulf %221, %228 : vector<2x32xf32>
      %230 = arith.addf %211, %229 : vector<2x32xf32>
      %231 = math.tanh %230 : vector<2x32xf32>
      %232 = arith.subf %198, %231 : vector<2x32xf32>
      %233 = arith.mulf %227, %232 : vector<2x32xf32>
      %234 = arith.addf %231, %233 : vector<2x32xf32>
      %235 = arith.truncf %234 : vector<2x32xf32> to vector<2x32xbf16>
      %c0_154 = arith.constant 0 : index
      %c2_155 = arith.constant 2 : index
      %c0_156 = arith.constant 0 : index
      %c0_157 = arith.constant 0 : index
      %236 = vector.load %arg5[%c0_154, %c2_155, %c0_156, %c0_157] : memref<1x8x2x32xbf16, #tpu.memory_space<vmem>>, vector<1x1x2x32xbf16>
      %237 = vector.shape_cast %236 : vector<1x1x2x32xbf16> to vector<2x32xbf16>
      %238 = vector.shape_cast %235 : vector<2x32xbf16> to vector<1x1x2x32xbf16>
      tpu.vector_store %arg5[%c0_154, %c2_155, %c0_156, %c0_157], %238 {strides = array<i32>} : memref<1x8x2x32xbf16, #tpu.memory_space<vmem>>, vector<1x1x2x32xbf16>,
      %c0_158 = arith.constant 0 : index
      %c1_159 = arith.constant 1 : index
      %c0_160 = arith.constant 0 : index
      %c0_161 = arith.constant 0 : index
      %c0_162 = arith.constant 0 : index
      %239 = vector.load %arg2[%c0_158, %c1_159, %c0_160, %c0_161, %c0_162] : memref<1x8x3x2x32xbf16, #tpu.memory_space<vmem>>, vector<1x1x1x2x32xbf16>
      %240 = vector.shape_cast %239 : vector<1x1x1x2x32xbf16> to vector<2x32xbf16>
      %241 = arith.extf %240 : vector<2x32xbf16> to vector<2x32xf32>
      %c0_163 = arith.constant 0 : index
      %c1_164 = arith.constant 1 : index
      %c1_165 = arith.constant 1 : index
      %c0_166 = arith.constant 0 : index
      %c0_167 = arith.constant 0 : index
      %242 = vector.load %arg2[%c0_163, %c1_164, %c1_165, %c0_166, %c0_167] : memref<1x8x3x2x32xbf16, #tpu.memory_space<vmem>>, vector<1x1x1x2x32xbf16>
      %243 = vector.shape_cast %242 : vector<1x1x1x2x32xbf16> to vector<2x32xbf16>
      %244 = arith.extf %243 : vector<2x32xbf16> to vector<2x32xf32>
      %c0_168 = arith.constant 0 : index
      %c1_169 = arith.constant 1 : index
      %c2_170 = arith.constant 2 : index
      %c0_171 = arith.constant 0 : index
      %c0_172 = arith.constant 0 : index
      %245 = vector.load %arg2[%c0_168, %c1_169, %c2_170, %c0_171, %c0_172] : memref<1x8x3x2x32xbf16, #tpu.memory_space<vmem>>, vector<1x1x1x2x32xbf16>
      %246 = vector.shape_cast %245 : vector<1x1x1x2x32xbf16> to vector<2x32xbf16>
      %247 = arith.extf %246 : vector<2x32xbf16> to vector<2x32xf32>
      %248 = arith.truncf %234 : vector<2x32xf32> to vector<2x32xbf16>
      %cst_173 = arith.constant dense<0.000000e+00> : vector<2x32xf32>
      %249 = tpu.matmul %248, %4, %cst_173 {dimension_numbers = #tpu.dot_dimension_numbers<[1], [0], [0], [1], [0, 0, 1, 1], [], []>} : vector<2x32xbf16>, vector<32x32xbf16>, vector<2x32xf32> -> vector<2x32xf32>
      %cst_174 = arith.constant dense<0.000000e+00> : vector<2x32xf32>
      %250 = tpu.matmul %248, %6, %cst_174 {dimension_numbers = #tpu.dot_dimension_numbers<[1], [0], [0], [1], [0, 0, 1, 1], [], []>} : vector<2x32xbf16>, vector<32x32xbf16>, vector<2x32xf32> -> vector<2x32xf32>
      %cst_175 = arith.constant dense<0.000000e+00> : vector<2x32xf32>
      %251 = tpu.matmul %248, %8, %cst_175 {dimension_numbers = #tpu.dot_dimension_numbers<[1], [0], [0], [1], [0, 0, 1, 1], [], []>} : vector<2x32xbf16>, vector<32x32xbf16>, vector<2x32xf32> -> vector<2x32xf32>
      %252 = arith.addf %241, %249 : vector<2x32xf32>
      %253 = arith.negf %252 : vector<2x32xf32>
      %254 = math.exp %253 : vector<2x32xf32>
      %cst_176 = arith.constant 1.000000e+00 : f32
      %255 = vector.broadcast %cst_176 : f32 to vector<2x32xf32>
      %256 = arith.addf %255, %254 : vector<2x32xf32>
      %257 = arith.divf %255, %256 : vector<2x32xf32>
      %258 = arith.addf %244, %250 : vector<2x32xf32>
      %259 = arith.negf %258 : vector<2x32xf32>
      %260 = math.exp %259 : vector<2x32xf32>
      %cst_177 = arith.constant 1.000000e+00 : f32
      %261 = vector.broadcast %cst_177 : f32 to vector<2x32xf32>
      %262 = arith.addf %261, %260 : vector<2x32xf32>
      %263 = arith.divf %261, %262 : vector<2x32xf32>
      %264 = arith.addf %251, %12 : vector<2x32xf32>
      %265 = arith.mulf %257, %264 : vector<2x32xf32>
      %266 = arith.addf %247, %265 : vector<2x32xf32>
      %267 = math.tanh %266 : vector<2x32xf32>
      %268 = arith.subf %234, %267 : vector<2x32xf32>
      %269 = arith.mulf %263, %268 : vector<2x32xf32>
      %270 = arith.addf %267, %269 : vector<2x32xf32>
      %271 = arith.truncf %270 : vector<2x32xf32> to vector<2x32xbf16>
      %c0_178 = arith.constant 0 : index
      %c1_179 = arith.constant 1 : index
      %c0_180 = arith.constant 0 : index
      %c0_181 = arith.constant 0 : index
      %272 = vector.load %arg5[%c0_178, %c1_179, %c0_180, %c0_181] : memref<1x8x2x32xbf16, #tpu.memory_space<vmem>>, vector<1x1x2x32xbf16>
      %273 = vector.shape_cast %272 : vector<1x1x2x32xbf16> to vector<2x32xbf16>
      %274 = vector.shape_cast %271 : vector<2x32xbf16> to vector<1x1x2x32xbf16>
      tpu.vector_store %arg5[%c0_178, %c1_179, %c0_180, %c0_181], %274 {strides = array<i32>} : memref<1x8x2x32xbf16, #tpu.memory_space<vmem>>, vector<1x1x2x32xbf16>,
      %c0_182 = arith.constant 0 : index
      %c0_183 = arith.constant 0 : index
      %c0_184 = arith.constant 0 : index
      %c0_185 = arith.constant 0 : index
      %c0_186 = arith.constant 0 : index
      %275 = vector.load %arg2[%c0_182, %c0_183, %c0_184, %c0_185, %c0_186] : memref<1x8x3x2x32xbf16, #tpu.memory_space<vmem>>, vector<1x1x1x2x32xbf16>
      %276 = vector.shape_cast %275 : vector<1x1x1x2x32xbf16> to vector<2x32xbf16>
      %277 = arith.extf %276 : vector<2x32xbf16> to vector<2x32xf32>
      %c0_187 = arith.constant 0 : index
      %c0_188 = arith.constant 0 : index
      %c1_189 = arith.constant 1 : index
      %c0_190 = arith.constant 0 : index
      %c0_191 = arith.constant 0 : index
      %278 = vector.load %arg2[%c0_187, %c0_188, %c1_189, %c0_190, %c0_191] : memref<1x8x3x2x32xbf16, #tpu.memory_space<vmem>>, vector<1x1x1x2x32xbf16>
      %279 = vector.shape_cast %278 : vector<1x1x1x2x32xbf16> to vector<2x32xbf16>
      %280 = arith.extf %279 : vector<2x32xbf16> to vector<2x32xf32>
      %c0_192 = arith.constant 0 : index
      %c0_193 = arith.constant 0 : index
      %c2_194 = arith.constant 2 : index
      %c0_195 = arith.constant 0 : index
      %c0_196 = arith.constant 0 : index
      %281 = vector.load %arg2[%c0_192, %c0_193, %c2_194, %c0_195, %c0_196] : memref<1x8x3x2x32xbf16, #tpu.memory_space<vmem>>, vector<1x1x1x2x32xbf16>
      %282 = vector.shape_cast %281 : vector<1x1x1x2x32xbf16> to vector<2x32xbf16>
      %283 = arith.extf %282 : vector<2x32xbf16> to vector<2x32xf32>
      %284 = arith.truncf %270 : vector<2x32xf32> to vector<2x32xbf16>
      %cst_197 = arith.constant dense<0.000000e+00> : vector<2x32xf32>
      %285 = tpu.matmul %284, %4, %cst_197 {dimension_numbers = #tpu.dot_dimension_numbers<[1], [0], [0], [1], [0, 0, 1, 1], [], []>} : vector<2x32xbf16>, vector<32x32xbf16>, vector<2x32xf32> -> vector<2x32xf32>
      %cst_198 = arith.constant dense<0.000000e+00> : vector<2x32xf32>
      %286 = tpu.matmul %284, %6, %cst_198 {dimension_numbers = #tpu.dot_dimension_numbers<[1], [0], [0], [1], [0, 0, 1, 1], [], []>} : vector<2x32xbf16>, vector<32x32xbf16>, vector<2x32xf32> -> vector<2x32xf32>
      %cst_199 = arith.constant dense<0.000000e+00> : vector<2x32xf32>
      %287 = tpu.matmul %284, %8, %cst_199 {dimension_numbers = #tpu.dot_dimension_numbers<[1], [0], [0], [1], [0, 0, 1, 1], [], []>} : vector<2x32xbf16>, vector<32x32xbf16>, vector<2x32xf32> -> vector<2x32xf32>
      %288 = arith.addf %277, %285 : vector<2x32xf32>
      %289 = arith.negf %288 : vector<2x32xf32>
      %290 = math.exp %289 : vector<2x32xf32>
      %cst_200 = arith.constant 1.000000e+00 : f32
      %291 = vector.broadcast %cst_200 : f32 to vector<2x32xf32>
      %292 = arith.addf %291, %290 : vector<2x32xf32>
      %293 = arith.divf %291, %292 : vector<2x32xf32>
      %294 = arith.addf %280, %286 : vector<2x32xf32>
      %295 = arith.negf %294 : vector<2x32xf32>
      %296 = math.exp %295 : vector<2x32xf32>
      %cst_201 = arith.constant 1.000000e+00 : f32
      %297 = vector.broadcast %cst_201 : f32 to vector<2x32xf32>
      %298 = arith.addf %297, %296 : vector<2x32xf32>
      %299 = arith.divf %297, %298 : vector<2x32xf32>
      %300 = arith.addf %287, %12 : vector<2x32xf32>
      %301 = arith.mulf %293, %300 : vector<2x32xf32>
      %302 = arith.addf %283, %301 : vector<2x32xf32>
      %303 = math.tanh %302 : vector<2x32xf32>
      %304 = arith.subf %270, %303 : vector<2x32xf32>
      %305 = arith.mulf %299, %304 : vector<2x32xf32>
      %306 = arith.addf %303, %305 : vector<2x32xf32>
      %307 = arith.truncf %306 : vector<2x32xf32> to vector<2x32xbf16>
      %c0_202 = arith.constant 0 : index
      %c0_203 = arith.constant 0 : index
      %c0_204 = arith.constant 0 : index
      %c0_205 = arith.constant 0 : index
      %308 = vector.load %arg5[%c0_202, %c0_203, %c0_204, %c0_205] : memref<1x8x2x32xbf16, #tpu.memory_space<vmem>>, vector<1x1x2x32xbf16>
      %309 = vector.shape_cast %308 : vector<1x1x2x32xbf16> to vector<2x32xbf16>
      %310 = vector.shape_cast %307 : vector<2x32xbf16> to vector<1x1x2x32xbf16>
      tpu.vector_store %arg5[%c0_202, %c0_203, %c0_204, %c0_205], %310 {strides = array<i32>} : memref<1x8x2x32xbf16, #tpu.memory_space<vmem>>, vector<1x1x2x32xbf16>,
      %c0_206 = arith.constant 0 : index
      %c0_207 = arith.constant 0 : index
      %311 = vector.load %arg7[%c0_206, %c0_207] : memref<2x32xf32, #tpu.memory_space<vmem>>, vector<2x32xf32>
      tpu.vector_store %arg7[%c0_206, %c0_207], %306 {strides = array<i32>} : memref<2x32xf32, #tpu.memory_space<vmem>>, vector<2x32xf32>,
    } else {
    }
    %c0_i32_16 = arith.constant 0 : i32
    %19 = arith.cmpi eq, %arg1, %c0_i32_16 : i32
    %20 = arith.extui %19 : i1 to i32
    %c0_i32_17 = arith.constant 0 : i32
    %21 = arith.cmpi ne, %20, %c0_i32_17 : i32
    scf.if %21 {
      %c0_18 = arith.constant 0 : index
      %c0_19 = arith.constant 0 : index
      %22 = vector.load %arg7[%c0_18, %c0_19] : memref<2x32xf32, #tpu.memory_space<vmem>>, vector<2x32xf32>
      %c0_20 = arith.constant 0 : index
      %c0_21 = arith.constant 0 : index
      %c0_22 = arith.constant 0 : index
      %23 = vector.load %arg6[%c0_20, %c0_21, %c0_22] : memref<1x2x32xf32, #tpu.memory_space<vmem>>, vector<1x2x32xf32>
      %24 = vector.shape_cast %23 : vector<1x2x32xf32> to vector<2x32xf32>
      %25 = vector.shape_cast %22 : vector<2x32xf32> to vector<1x2x32xf32>
      tpu.vector_store %arg6[%c0_20, %c0_21, %c0_22], %25 {strides = array<i32>} : memref<1x2x32xf32, #tpu.memory_space<vmem>>, vector<1x2x32xf32>,
    } else {
    }
    return
  }
  func.func @transform_0(%arg0: i32, %arg1: i32) -> (i32, i32, i32, i32, i32) {
    %c2_i32 = arith.constant 2 : i32
    %0 = arith.muli %c2_i32, %arg1 : i32
    %c0_i32 = arith.constant 0 : i32
    %1 = arith.subi %c0_i32, %0 : i32
    %2 = arith.muli %arg0, %1 : i32
    %3 = arith.addi %arg1, %2 : i32
    %c0_i32_0 = arith.constant 0 : i32
    %c0_i32_1 = arith.constant 0 : i32
    %c0_i32_2 = arith.constant 0 : i32
    %c0_i32_3 = arith.constant 0 : i32
    return %arg0, %3, %c0_i32_0, %c0_i32_1, %c0_i32_2 : i32, i32, i32, i32, i32
  }
  func.func @transform_1(%arg0: i32, %arg1: i32) -> (i32, i32, i32, i32) {
    %c0_i32 = arith.constant 0 : i32
    %c0_i32_0 = arith.constant 0 : i32
    %c0_i32_1 = arith.constant 0 : i32
    %c0_i32_2 = arith.constant 0 : i32
    return %arg0, %c0_i32, %c0_i32_0, %c0_i32_1 : i32, i32, i32, i32
  }
  func.func @transform_2(%arg0: i32, %arg1: i32) -> (i32, i32, i32) {
    %c0_i32 = arith.constant 0 : i32
    %c0_i32_0 = arith.constant 0 : i32
    %c0_i32_1 = arith.constant 0 : i32
    return %arg0, %c0_i32, %c0_i32_0 : i32, i32, i32
  }
  func.func @transform_3(%arg0: i32, %arg1: i32) -> (i32, i32, i32, i32) {
    %c2_i32 = arith.constant 2 : i32
    %0 = arith.muli %c2_i32, %arg1 : i32
    %c0_i32 = arith.constant 0 : i32
    %1 = arith.subi %c0_i32, %0 : i32
    %2 = arith.muli %arg0, %1 : i32
    %3 = arith.addi %arg1, %2 : i32
    %c0_i32_0 = arith.constant 0 : i32
    %c0_i32_1 = arith.constant 0 : i32
    %c0_i32_2 = arith.constant 0 : i32
    return %arg0, %3, %c0_i32_0, %c0_i32_1 : i32, i32, i32, i32
  }
  func.func @transform_4(%arg0: i32, %arg1: i32) -> (i32, i32, i32) {
    %c0_i32 = arith.constant 0 : i32
    %c0_i32_0 = arith.constant 0 : i32
    %c0_i32_1 = arith.constant 0 : i32
    return %arg0, %c0_i32, %c0_i32_0 : i32, i32, i32
  }
}

module attributes {stable_mosaic.version = 11 : i64} {
  func.func @_gru_recurrent_kernel(%arg0: i32, %arg1: i32, %arg2: memref<1x8x3x2x32xbf16, #tpu.memory_space<vmem>>, %arg3: memref<1x3x32x32xbf16, #tpu.memory_space<vmem>>, %arg4: memref<1x1x32xf32, #tpu.memory_space<vmem>>, %arg5: memref<1x8x2x32xf32, #tpu.memory_space<vmem>>, %arg6: memref<1x2x32xf32, #tpu.memory_space<vmem>>, %arg7: memref<2x32xf32, #tpu.memory_space<vmem>>) attributes {dimension_semantics = [#tpu.dimension_semantics<parallel>, #tpu.dimension_semantics<arbitrary>], iteration_bounds = array<i64: 2, 1>, scalar_prefetch = 0 : i64, scratch_operands = 1 : i64, tpu.core_type = #tpu.core_type<tc>, window_params = [{transform_indices = @transform_0, window_bounds = array<i64: 1, 8, 3, 2, 32>}, {transform_indices = @transform_1, window_bounds = array<i64: 1, 3, 32, 32>}, {transform_indices = @transform_2, window_bounds = array<i64: 1, 1, 32>}, {transform_indices = @transform_3, window_bounds = array<i64: 1, 8, 2, 32>}, {transform_indices = @transform_4, window_bounds = array<i64: 1, 2, 32>}]} {
    %c0_i32 = arith.constant 0 : i32
    %0 = arith.cmpi eq, %arg1, %c0_i32 : i32
    %1 = arith.extui %0 : i1 to i32
    %c0_i32_0 = arith.constant 0 : i32
    %2 = arith.cmpi ne, %1, %c0_i32_0 : i32
    scf.if %2 {
      %cst = arith.constant 0.000000e+00 : f32
      %22 = vector.broadcast %cst : f32 to vector<2x32xf32>
      %c0_18 = arith.constant 0 : index
      %c0_19 = arith.constant 0 : index
      %23 = vector.load %arg7[%c0_18, %c0_19] : memref<2x32xf32, #tpu.memory_space<vmem>>, vector<2x32xf32>
      tpu.vector_store %arg7[%c0_18, %c0_19], %22 {strides = array<i32>} : memref<2x32xf32, #tpu.memory_space<vmem>>, vector<2x32xf32>,
    } else {
    }
    %c0 = arith.constant 0 : index
    %c0_1 = arith.constant 0 : index
    %c0_2 = arith.constant 0 : index
    %c0_3 = arith.constant 0 : index
    %3 = vector.load %arg3[%c0, %c0_1, %c0_2, %c0_3] : memref<1x3x32x32xbf16, #tpu.memory_space<vmem>>, vector<1x1x32x32xbf16>
    %4 = vector.shape_cast %3 : vector<1x1x32x32xbf16> to vector<32x32xbf16>
    %c0_4 = arith.constant 0 : index
    %c1 = arith.constant 1 : index
    %c0_5 = arith.constant 0 : index
    %c0_6 = arith.constant 0 : index
    %5 = vector.load %arg3[%c0_4, %c1, %c0_5, %c0_6] : memref<1x3x32x32xbf16, #tpu.memory_space<vmem>>, vector<1x1x32x32xbf16>
    %6 = vector.shape_cast %5 : vector<1x1x32x32xbf16> to vector<32x32xbf16>
    %c0_7 = arith.constant 0 : index
    %c2 = arith.constant 2 : index
    %c0_8 = arith.constant 0 : index
    %c0_9 = arith.constant 0 : index
    %7 = vector.load %arg3[%c0_7, %c2, %c0_8, %c0_9] : memref<1x3x32x32xbf16, #tpu.memory_space<vmem>>, vector<1x1x32x32xbf16>
    %8 = vector.shape_cast %7 : vector<1x1x32x32xbf16> to vector<32x32xbf16>
    %c0_10 = arith.constant 0 : index
    %c0_11 = arith.constant 0 : index
    %c0_12 = arith.constant 0 : index
    %9 = vector.load %arg4[%c0_10, %c0_11, %c0_12] : memref<1x1x32xf32, #tpu.memory_space<vmem>>, vector<1x1x32xf32>
    %10 = vector.shape_cast %9 : vector<1x1x32xf32> to vector<1x32xf32>
    %11 = vector.shape_cast %10 : vector<1x32xf32> to vector<1x32xf32>
    %12 = vector.broadcast %11 : vector<1x32xf32> to vector<2x32xf32>
    %c0_i32_13 = arith.constant 0 : i32
    %13 = arith.cmpi eq, %arg0, %c0_i32_13 : i32
    %14 = arith.extui %13 : i1 to i32
    %c0_i32_14 = arith.constant 0 : i32
    %15 = arith.cmpi ne, %14, %c0_i32_14 : i32
    scf.if %15 {
      %c0_18 = arith.constant 0 : index
      %c0_19 = arith.constant 0 : index
      %22 = vector.load %arg7[%c0_18, %c0_19] : memref<2x32xf32, #tpu.memory_space<vmem>>, vector<2x32xf32>
      %c0_20 = arith.constant 0 : index
      %c0_21 = arith.constant 0 : index
      %c0_22 = arith.constant 0 : index
      %c0_23 = arith.constant 0 : index
      %c0_24 = arith.constant 0 : index
      %23 = vector.load %arg2[%c0_20, %c0_21, %c0_22, %c0_23, %c0_24] : memref<1x8x3x2x32xbf16, #tpu.memory_space<vmem>>, vector<1x1x1x2x32xbf16>
      %24 = vector.shape_cast %23 : vector<1x1x1x2x32xbf16> to vector<2x32xbf16>
      %25 = arith.extf %24 : vector<2x32xbf16> to vector<2x32xf32>
      %c0_25 = arith.constant 0 : index
      %c0_26 = arith.constant 0 : index
      %c1_27 = arith.constant 1 : index
      %c0_28 = arith.constant 0 : index
      %c0_29 = arith.constant 0 : index
      %26 = vector.load %arg2[%c0_25, %c0_26, %c1_27, %c0_28, %c0_29] : memref<1x8x3x2x32xbf16, #tpu.memory_space<vmem>>, vector<1x1x1x2x32xbf16>
      %27 = vector.shape_cast %26 : vector<1x1x1x2x32xbf16> to vector<2x32xbf16>
      %28 = arith.extf %27 : vector<2x32xbf16> to vector<2x32xf32>
      %c0_30 = arith.constant 0 : index
      %c0_31 = arith.constant 0 : index
      %c2_32 = arith.constant 2 : index
      %c0_33 = arith.constant 0 : index
      %c0_34 = arith.constant 0 : index
      %29 = vector.load %arg2[%c0_30, %c0_31, %c2_32, %c0_33, %c0_34] : memref<1x8x3x2x32xbf16, #tpu.memory_space<vmem>>, vector<1x1x1x2x32xbf16>
      %30 = vector.shape_cast %29 : vector<1x1x1x2x32xbf16> to vector<2x32xbf16>
      %31 = arith.extf %30 : vector<2x32xbf16> to vector<2x32xf32>
      %32 = arith.truncf %22 : vector<2x32xf32> to vector<2x32xbf16>
      %cst = arith.constant dense<0.000000e+00> : vector<2x32xf32>
      %33 = tpu.matmul %32, %4, %cst {dimension_numbers = #tpu.dot_dimension_numbers<[1], [0], [0], [1], [0, 0, 1, 1], [], []>} : vector<2x32xbf16>, vector<32x32xbf16>, vector<2x32xf32> -> vector<2x32xf32>
      %cst_35 = arith.constant dense<0.000000e+00> : vector<2x32xf32>
      %34 = tpu.matmul %32, %6, %cst_35 {dimension_numbers = #tpu.dot_dimension_numbers<[1], [0], [0], [1], [0, 0, 1, 1], [], []>} : vector<2x32xbf16>, vector<32x32xbf16>, vector<2x32xf32> -> vector<2x32xf32>
      %cst_36 = arith.constant dense<0.000000e+00> : vector<2x32xf32>
      %35 = tpu.matmul %32, %8, %cst_36 {dimension_numbers = #tpu.dot_dimension_numbers<[1], [0], [0], [1], [0, 0, 1, 1], [], []>} : vector<2x32xbf16>, vector<32x32xbf16>, vector<2x32xf32> -> vector<2x32xf32>
      %36 = arith.addf %25, %33 : vector<2x32xf32>
      %37 = arith.negf %36 : vector<2x32xf32>
      %38 = math.exp %37 : vector<2x32xf32>
      %cst_37 = arith.constant 1.000000e+00 : f32
      %39 = vector.broadcast %cst_37 : f32 to vector<2x32xf32>
      %40 = arith.addf %39, %38 : vector<2x32xf32>
      %41 = arith.divf %39, %40 : vector<2x32xf32>
      %42 = arith.addf %28, %34 : vector<2x32xf32>
      %43 = arith.negf %42 : vector<2x32xf32>
      %44 = math.exp %43 : vector<2x32xf32>
      %cst_38 = arith.constant 1.000000e+00 : f32
      %45 = vector.broadcast %cst_38 : f32 to vector<2x32xf32>
      %46 = arith.addf %45, %44 : vector<2x32xf32>
      %47 = arith.divf %45, %46 : vector<2x32xf32>
      %48 = arith.addf %35, %12 : vector<2x32xf32>
      %49 = arith.mulf %41, %48 : vector<2x32xf32>
      %50 = arith.addf %31, %49 : vector<2x32xf32>
      %51 = math.tanh %50 : vector<2x32xf32>
      %52 = arith.subf %22, %51 : vector<2x32xf32>
      %53 = arith.mulf %47, %52 : vector<2x32xf32>
      %54 = arith.addf %51, %53 : vector<2x32xf32>
      %c0_39 = arith.constant 0 : index
      %c0_40 = arith.constant 0 : index
      %c0_41 = arith.constant 0 : index
      %c0_42 = arith.constant 0 : index
      %55 = vector.load %arg5[%c0_39, %c0_40, %c0_41, %c0_42] : memref<1x8x2x32xf32, #tpu.memory_space<vmem>>, vector<1x1x2x32xf32>
      %56 = vector.shape_cast %55 : vector<1x1x2x32xf32> to vector<2x32xf32>
      %57 = vector.shape_cast %54 : vector<2x32xf32> to vector<1x1x2x32xf32>
      tpu.vector_store %arg5[%c0_39, %c0_40, %c0_41, %c0_42], %57 {strides = array<i32>} : memref<1x8x2x32xf32, #tpu.memory_space<vmem>>, vector<1x1x2x32xf32>,
      %c0_43 = arith.constant 0 : index
      %c1_44 = arith.constant 1 : index
      %c0_45 = arith.constant 0 : index
      %c0_46 = arith.constant 0 : index
      %c0_47 = arith.constant 0 : index
      %58 = vector.load %arg2[%c0_43, %c1_44, %c0_45, %c0_46, %c0_47] : memref<1x8x3x2x32xbf16, #tpu.memory_space<vmem>>, vector<1x1x1x2x32xbf16>
      %59 = vector.shape_cast %58 : vector<1x1x1x2x32xbf16> to vector<2x32xbf16>
      %60 = arith.extf %59 : vector<2x32xbf16> to vector<2x32xf32>
      %c0_48 = arith.constant 0 : index
      %c1_49 = arith.constant 1 : index
      %c1_50 = arith.constant 1 : index
      %c0_51 = arith.constant 0 : index
      %c0_52 = arith.constant 0 : index
      %61 = vector.load %arg2[%c0_48, %c1_49, %c1_50, %c0_51, %c0_52] : memref<1x8x3x2x32xbf16, #tpu.memory_space<vmem>>, vector<1x1x1x2x32xbf16>
      %62 = vector.shape_cast %61 : vector<1x1x1x2x32xbf16> to vector<2x32xbf16>
      %63 = arith.extf %62 : vector<2x32xbf16> to vector<2x32xf32>
      %c0_53 = arith.constant 0 : index
      %c1_54 = arith.constant 1 : index
      %c2_55 = arith.constant 2 : index
      %c0_56 = arith.constant 0 : index
      %c0_57 = arith.constant 0 : index
      %64 = vector.load %arg2[%c0_53, %c1_54, %c2_55, %c0_56, %c0_57] : memref<1x8x3x2x32xbf16, #tpu.memory_space<vmem>>, vector<1x1x1x2x32xbf16>
      %65 = vector.shape_cast %64 : vector<1x1x1x2x32xbf16> to vector<2x32xbf16>
      %66 = arith.extf %65 : vector<2x32xbf16> to vector<2x32xf32>
      %67 = arith.truncf %54 : vector<2x32xf32> to vector<2x32xbf16>
      %cst_58 = arith.constant dense<0.000000e+00> : vector<2x32xf32>
      %68 = tpu.matmul %67, %4, %cst_58 {dimension_numbers = #tpu.dot_dimension_numbers<[1], [0], [0], [1], [0, 0, 1, 1], [], []>} : vector<2x32xbf16>, vector<32x32xbf16>, vector<2x32xf32> -> vector<2x32xf32>
      %cst_59 = arith.constant dense<0.000000e+00> : vector<2x32xf32>
      %69 = tpu.matmul %67, %6, %cst_59 {dimension_numbers = #tpu.dot_dimension_numbers<[1], [0], [0], [1], [0, 0, 1, 1], [], []>} : vector<2x32xbf16>, vector<32x32xbf16>, vector<2x32xf32> -> vector<2x32xf32>
      %cst_60 = arith.constant dense<0.000000e+00> : vector<2x32xf32>
      %70 = tpu.matmul %67, %8, %cst_60 {dimension_numbers = #tpu.dot_dimension_numbers<[1], [0], [0], [1], [0, 0, 1, 1], [], []>} : vector<2x32xbf16>, vector<32x32xbf16>, vector<2x32xf32> -> vector<2x32xf32>
      %71 = arith.addf %60, %68 : vector<2x32xf32>
      %72 = arith.negf %71 : vector<2x32xf32>
      %73 = math.exp %72 : vector<2x32xf32>
      %cst_61 = arith.constant 1.000000e+00 : f32
      %74 = vector.broadcast %cst_61 : f32 to vector<2x32xf32>
      %75 = arith.addf %74, %73 : vector<2x32xf32>
      %76 = arith.divf %74, %75 : vector<2x32xf32>
      %77 = arith.addf %63, %69 : vector<2x32xf32>
      %78 = arith.negf %77 : vector<2x32xf32>
      %79 = math.exp %78 : vector<2x32xf32>
      %cst_62 = arith.constant 1.000000e+00 : f32
      %80 = vector.broadcast %cst_62 : f32 to vector<2x32xf32>
      %81 = arith.addf %80, %79 : vector<2x32xf32>
      %82 = arith.divf %80, %81 : vector<2x32xf32>
      %83 = arith.addf %70, %12 : vector<2x32xf32>
      %84 = arith.mulf %76, %83 : vector<2x32xf32>
      %85 = arith.addf %66, %84 : vector<2x32xf32>
      %86 = math.tanh %85 : vector<2x32xf32>
      %87 = arith.subf %54, %86 : vector<2x32xf32>
      %88 = arith.mulf %82, %87 : vector<2x32xf32>
      %89 = arith.addf %86, %88 : vector<2x32xf32>
      %c0_63 = arith.constant 0 : index
      %c1_64 = arith.constant 1 : index
      %c0_65 = arith.constant 0 : index
      %c0_66 = arith.constant 0 : index
      %90 = vector.load %arg5[%c0_63, %c1_64, %c0_65, %c0_66] : memref<1x8x2x32xf32, #tpu.memory_space<vmem>>, vector<1x1x2x32xf32>
      %91 = vector.shape_cast %90 : vector<1x1x2x32xf32> to vector<2x32xf32>
      %92 = vector.shape_cast %89 : vector<2x32xf32> to vector<1x1x2x32xf32>
      tpu.vector_store %arg5[%c0_63, %c1_64, %c0_65, %c0_66], %92 {strides = array<i32>} : memref<1x8x2x32xf32, #tpu.memory_space<vmem>>, vector<1x1x2x32xf32>,
      %c0_67 = arith.constant 0 : index
      %c2_68 = arith.constant 2 : index
      %c0_69 = arith.constant 0 : index
      %c0_70 = arith.constant 0 : index
      %c0_71 = arith.constant 0 : index
      %93 = vector.load %arg2[%c0_67, %c2_68, %c0_69, %c0_70, %c0_71] : memref<1x8x3x2x32xbf16, #tpu.memory_space<vmem>>, vector<1x1x1x2x32xbf16>
      %94 = vector.shape_cast %93 : vector<1x1x1x2x32xbf16> to vector<2x32xbf16>
      %95 = arith.extf %94 : vector<2x32xbf16> to vector<2x32xf32>
      %c0_72 = arith.constant 0 : index
      %c2_73 = arith.constant 2 : index
      %c1_74 = arith.constant 1 : index
      %c0_75 = arith.constant 0 : index
      %c0_76 = arith.constant 0 : index
      %96 = vector.load %arg2[%c0_72, %c2_73, %c1_74, %c0_75, %c0_76] : memref<1x8x3x2x32xbf16, #tpu.memory_space<vmem>>, vector<1x1x1x2x32xbf16>
      %97 = vector.shape_cast %96 : vector<1x1x1x2x32xbf16> to vector<2x32xbf16>
      %98 = arith.extf %97 : vector<2x32xbf16> to vector<2x32xf32>
      %c0_77 = arith.constant 0 : index
      %c2_78 = arith.constant 2 : index
      %c2_79 = arith.constant 2 : index
      %c0_80 = arith.constant 0 : index
      %c0_81 = arith.constant 0 : index
      %99 = vector.load %arg2[%c0_77, %c2_78, %c2_79, %c0_80, %c0_81] : memref<1x8x3x2x32xbf16, #tpu.memory_space<vmem>>, vector<1x1x1x2x32xbf16>
      %100 = vector.shape_cast %99 : vector<1x1x1x2x32xbf16> to vector<2x32xbf16>
      %101 = arith.extf %100 : vector<2x32xbf16> to vector<2x32xf32>
      %102 = arith.truncf %89 : vector<2x32xf32> to vector<2x32xbf16>
      %cst_82 = arith.constant dense<0.000000e+00> : vector<2x32xf32>
      %103 = tpu.matmul %102, %4, %cst_82 {dimension_numbers = #tpu.dot_dimension_numbers<[1], [0], [0], [1], [0, 0, 1, 1], [], []>} : vector<2x32xbf16>, vector<32x32xbf16>, vector<2x32xf32> -> vector<2x32xf32>
      %cst_83 = arith.constant dense<0.000000e+00> : vector<2x32xf32>
      %104 = tpu.matmul %102, %6, %cst_83 {dimension_numbers = #tpu.dot_dimension_numbers<[1], [0], [0], [1], [0, 0, 1, 1], [], []>} : vector<2x32xbf16>, vector<32x32xbf16>, vector<2x32xf32> -> vector<2x32xf32>
      %cst_84 = arith.constant dense<0.000000e+00> : vector<2x32xf32>
      %105 = tpu.matmul %102, %8, %cst_84 {dimension_numbers = #tpu.dot_dimension_numbers<[1], [0], [0], [1], [0, 0, 1, 1], [], []>} : vector<2x32xbf16>, vector<32x32xbf16>, vector<2x32xf32> -> vector<2x32xf32>
      %106 = arith.addf %95, %103 : vector<2x32xf32>
      %107 = arith.negf %106 : vector<2x32xf32>
      %108 = math.exp %107 : vector<2x32xf32>
      %cst_85 = arith.constant 1.000000e+00 : f32
      %109 = vector.broadcast %cst_85 : f32 to vector<2x32xf32>
      %110 = arith.addf %109, %108 : vector<2x32xf32>
      %111 = arith.divf %109, %110 : vector<2x32xf32>
      %112 = arith.addf %98, %104 : vector<2x32xf32>
      %113 = arith.negf %112 : vector<2x32xf32>
      %114 = math.exp %113 : vector<2x32xf32>
      %cst_86 = arith.constant 1.000000e+00 : f32
      %115 = vector.broadcast %cst_86 : f32 to vector<2x32xf32>
      %116 = arith.addf %115, %114 : vector<2x32xf32>
      %117 = arith.divf %115, %116 : vector<2x32xf32>
      %118 = arith.addf %105, %12 : vector<2x32xf32>
      %119 = arith.mulf %111, %118 : vector<2x32xf32>
      %120 = arith.addf %101, %119 : vector<2x32xf32>
      %121 = math.tanh %120 : vector<2x32xf32>
      %122 = arith.subf %89, %121 : vector<2x32xf32>
      %123 = arith.mulf %117, %122 : vector<2x32xf32>
      %124 = arith.addf %121, %123 : vector<2x32xf32>
      %c0_87 = arith.constant 0 : index
      %c2_88 = arith.constant 2 : index
      %c0_89 = arith.constant 0 : index
      %c0_90 = arith.constant 0 : index
      %125 = vector.load %arg5[%c0_87, %c2_88, %c0_89, %c0_90] : memref<1x8x2x32xf32, #tpu.memory_space<vmem>>, vector<1x1x2x32xf32>
      %126 = vector.shape_cast %125 : vector<1x1x2x32xf32> to vector<2x32xf32>
      %127 = vector.shape_cast %124 : vector<2x32xf32> to vector<1x1x2x32xf32>
      tpu.vector_store %arg5[%c0_87, %c2_88, %c0_89, %c0_90], %127 {strides = array<i32>} : memref<1x8x2x32xf32, #tpu.memory_space<vmem>>, vector<1x1x2x32xf32>,
      %c0_91 = arith.constant 0 : index
      %c3 = arith.constant 3 : index
      %c0_92 = arith.constant 0 : index
      %c0_93 = arith.constant 0 : index
      %c0_94 = arith.constant 0 : index
      %128 = vector.load %arg2[%c0_91, %c3, %c0_92, %c0_93, %c0_94] : memref<1x8x3x2x32xbf16, #tpu.memory_space<vmem>>, vector<1x1x1x2x32xbf16>
      %129 = vector.shape_cast %128 : vector<1x1x1x2x32xbf16> to vector<2x32xbf16>
      %130 = arith.extf %129 : vector<2x32xbf16> to vector<2x32xf32>
      %c0_95 = arith.constant 0 : index
      %c3_96 = arith.constant 3 : index
      %c1_97 = arith.constant 1 : index
      %c0_98 = arith.constant 0 : index
      %c0_99 = arith.constant 0 : index
      %131 = vector.load %arg2[%c0_95, %c3_96, %c1_97, %c0_98, %c0_99] : memref<1x8x3x2x32xbf16, #tpu.memory_space<vmem>>, vector<1x1x1x2x32xbf16>
      %132 = vector.shape_cast %131 : vector<1x1x1x2x32xbf16> to vector<2x32xbf16>
      %133 = arith.extf %132 : vector<2x32xbf16> to vector<2x32xf32>
      %c0_100 = arith.constant 0 : index
      %c3_101 = arith.constant 3 : index
      %c2_102 = arith.constant 2 : index
      %c0_103 = arith.constant 0 : index
      %c0_104 = arith.constant 0 : index
      %134 = vector.load %arg2[%c0_100, %c3_101, %c2_102, %c0_103, %c0_104] : memref<1x8x3x2x32xbf16, #tpu.memory_space<vmem>>, vector<1x1x1x2x32xbf16>
      %135 = vector.shape_cast %134 : vector<1x1x1x2x32xbf16> to vector<2x32xbf16>
      %136 = arith.extf %135 : vector<2x32xbf16> to vector<2x32xf32>
      %137 = arith.truncf %124 : vector<2x32xf32> to vector<2x32xbf16>
      %cst_105 = arith.constant dense<0.000000e+00> : vector<2x32xf32>
      %138 = tpu.matmul %137, %4, %cst_105 {dimension_numbers = #tpu.dot_dimension_numbers<[1], [0], [0], [1], [0, 0, 1, 1], [], []>} : vector<2x32xbf16>, vector<32x32xbf16>, vector<2x32xf32> -> vector<2x32xf32>
      %cst_106 = arith.constant dense<0.000000e+00> : vector<2x32xf32>
      %139 = tpu.matmul %137, %6, %cst_106 {dimension_numbers = #tpu.dot_dimension_numbers<[1], [0], [0], [1], [0, 0, 1, 1], [], []>} : vector<2x32xbf16>, vector<32x32xbf16>, vector<2x32xf32> -> vector<2x32xf32>
      %cst_107 = arith.constant dense<0.000000e+00> : vector<2x32xf32>
      %140 = tpu.matmul %137, %8, %cst_107 {dimension_numbers = #tpu.dot_dimension_numbers<[1], [0], [0], [1], [0, 0, 1, 1], [], []>} : vector<2x32xbf16>, vector<32x32xbf16>, vector<2x32xf32> -> vector<2x32xf32>
      %141 = arith.addf %130, %138 : vector<2x32xf32>
      %142 = arith.negf %141 : vector<2x32xf32>
      %143 = math.exp %142 : vector<2x32xf32>
      %cst_108 = arith.constant 1.000000e+00 : f32
      %144 = vector.broadcast %cst_108 : f32 to vector<2x32xf32>
      %145 = arith.addf %144, %143 : vector<2x32xf32>
      %146 = arith.divf %144, %145 : vector<2x32xf32>
      %147 = arith.addf %133, %139 : vector<2x32xf32>
      %148 = arith.negf %147 : vector<2x32xf32>
      %149 = math.exp %148 : vector<2x32xf32>
      %cst_109 = arith.constant 1.000000e+00 : f32
      %150 = vector.broadcast %cst_109 : f32 to vector<2x32xf32>
      %151 = arith.addf %150, %149 : vector<2x32xf32>
      %152 = arith.divf %150, %151 : vector<2x32xf32>
      %153 = arith.addf %140, %12 : vector<2x32xf32>
      %154 = arith.mulf %146, %153 : vector<2x32xf32>
      %155 = arith.addf %136, %154 : vector<2x32xf32>
      %156 = math.tanh %155 : vector<2x32xf32>
      %157 = arith.subf %124, %156 : vector<2x32xf32>
      %158 = arith.mulf %152, %157 : vector<2x32xf32>
      %159 = arith.addf %156, %158 : vector<2x32xf32>
      %c0_110 = arith.constant 0 : index
      %c3_111 = arith.constant 3 : index
      %c0_112 = arith.constant 0 : index
      %c0_113 = arith.constant 0 : index
      %160 = vector.load %arg5[%c0_110, %c3_111, %c0_112, %c0_113] : memref<1x8x2x32xf32, #tpu.memory_space<vmem>>, vector<1x1x2x32xf32>
      %161 = vector.shape_cast %160 : vector<1x1x2x32xf32> to vector<2x32xf32>
      %162 = vector.shape_cast %159 : vector<2x32xf32> to vector<1x1x2x32xf32>
      tpu.vector_store %arg5[%c0_110, %c3_111, %c0_112, %c0_113], %162 {strides = array<i32>} : memref<1x8x2x32xf32, #tpu.memory_space<vmem>>, vector<1x1x2x32xf32>,
      %c0_114 = arith.constant 0 : index
      %c4 = arith.constant 4 : index
      %c0_115 = arith.constant 0 : index
      %c0_116 = arith.constant 0 : index
      %c0_117 = arith.constant 0 : index
      %163 = vector.load %arg2[%c0_114, %c4, %c0_115, %c0_116, %c0_117] : memref<1x8x3x2x32xbf16, #tpu.memory_space<vmem>>, vector<1x1x1x2x32xbf16>
      %164 = vector.shape_cast %163 : vector<1x1x1x2x32xbf16> to vector<2x32xbf16>
      %165 = arith.extf %164 : vector<2x32xbf16> to vector<2x32xf32>
      %c0_118 = arith.constant 0 : index
      %c4_119 = arith.constant 4 : index
      %c1_120 = arith.constant 1 : index
      %c0_121 = arith.constant 0 : index
      %c0_122 = arith.constant 0 : index
      %166 = vector.load %arg2[%c0_118, %c4_119, %c1_120, %c0_121, %c0_122] : memref<1x8x3x2x32xbf16, #tpu.memory_space<vmem>>, vector<1x1x1x2x32xbf16>
      %167 = vector.shape_cast %166 : vector<1x1x1x2x32xbf16> to vector<2x32xbf16>
      %168 = arith.extf %167 : vector<2x32xbf16> to vector<2x32xf32>
      %c0_123 = arith.constant 0 : index
      %c4_124 = arith.constant 4 : index
      %c2_125 = arith.constant 2 : index
      %c0_126 = arith.constant 0 : index
      %c0_127 = arith.constant 0 : index
      %169 = vector.load %arg2[%c0_123, %c4_124, %c2_125, %c0_126, %c0_127] : memref<1x8x3x2x32xbf16, #tpu.memory_space<vmem>>, vector<1x1x1x2x32xbf16>
      %170 = vector.shape_cast %169 : vector<1x1x1x2x32xbf16> to vector<2x32xbf16>
      %171 = arith.extf %170 : vector<2x32xbf16> to vector<2x32xf32>
      %172 = arith.truncf %159 : vector<2x32xf32> to vector<2x32xbf16>
      %cst_128 = arith.constant dense<0.000000e+00> : vector<2x32xf32>
      %173 = tpu.matmul %172, %4, %cst_128 {dimension_numbers = #tpu.dot_dimension_numbers<[1], [0], [0], [1], [0, 0, 1, 1], [], []>} : vector<2x32xbf16>, vector<32x32xbf16>, vector<2x32xf32> -> vector<2x32xf32>
      %cst_129 = arith.constant dense<0.000000e+00> : vector<2x32xf32>
      %174 = tpu.matmul %172, %6, %cst_129 {dimension_numbers = #tpu.dot_dimension_numbers<[1], [0], [0], [1], [0, 0, 1, 1], [], []>} : vector<2x32xbf16>, vector<32x32xbf16>, vector<2x32xf32> -> vector<2x32xf32>
      %cst_130 = arith.constant dense<0.000000e+00> : vector<2x32xf32>
      %175 = tpu.matmul %172, %8, %cst_130 {dimension_numbers = #tpu.dot_dimension_numbers<[1], [0], [0], [1], [0, 0, 1, 1], [], []>} : vector<2x32xbf16>, vector<32x32xbf16>, vector<2x32xf32> -> vector<2x32xf32>
      %176 = arith.addf %165, %173 : vector<2x32xf32>
      %177 = arith.negf %176 : vector<2x32xf32>
      %178 = math.exp %177 : vector<2x32xf32>
      %cst_131 = arith.constant 1.000000e+00 : f32
      %179 = vector.broadcast %cst_131 : f32 to vector<2x32xf32>
      %180 = arith.addf %179, %178 : vector<2x32xf32>
      %181 = arith.divf %179, %180 : vector<2x32xf32>
      %182 = arith.addf %168, %174 : vector<2x32xf32>
      %183 = arith.negf %182 : vector<2x32xf32>
      %184 = math.exp %183 : vector<2x32xf32>
      %cst_132 = arith.constant 1.000000e+00 : f32
      %185 = vector.broadcast %cst_132 : f32 to vector<2x32xf32>
      %186 = arith.addf %185, %184 : vector<2x32xf32>
      %187 = arith.divf %185, %186 : vector<2x32xf32>
      %188 = arith.addf %175, %12 : vector<2x32xf32>
      %189 = arith.mulf %181, %188 : vector<2x32xf32>
      %190 = arith.addf %171, %189 : vector<2x32xf32>
      %191 = math.tanh %190 : vector<2x32xf32>
      %192 = arith.subf %159, %191 : vector<2x32xf32>
      %193 = arith.mulf %187, %192 : vector<2x32xf32>
      %194 = arith.addf %191, %193 : vector<2x32xf32>
      %c0_133 = arith.constant 0 : index
      %c4_134 = arith.constant 4 : index
      %c0_135 = arith.constant 0 : index
      %c0_136 = arith.constant 0 : index
      %195 = vector.load %arg5[%c0_133, %c4_134, %c0_135, %c0_136] : memref<1x8x2x32xf32, #tpu.memory_space<vmem>>, vector<1x1x2x32xf32>
      %196 = vector.shape_cast %195 : vector<1x1x2x32xf32> to vector<2x32xf32>
      %197 = vector.shape_cast %194 : vector<2x32xf32> to vector<1x1x2x32xf32>
      tpu.vector_store %arg5[%c0_133, %c4_134, %c0_135, %c0_136], %197 {strides = array<i32>} : memref<1x8x2x32xf32, #tpu.memory_space<vmem>>, vector<1x1x2x32xf32>,
      %c0_137 = arith.constant 0 : index
      %c5 = arith.constant 5 : index
      %c0_138 = arith.constant 0 : index
      %c0_139 = arith.constant 0 : index
      %c0_140 = arith.constant 0 : index
      %198 = vector.load %arg2[%c0_137, %c5, %c0_138, %c0_139, %c0_140] : memref<1x8x3x2x32xbf16, #tpu.memory_space<vmem>>, vector<1x1x1x2x32xbf16>
      %199 = vector.shape_cast %198 : vector<1x1x1x2x32xbf16> to vector<2x32xbf16>
      %200 = arith.extf %199 : vector<2x32xbf16> to vector<2x32xf32>
      %c0_141 = arith.constant 0 : index
      %c5_142 = arith.constant 5 : index
      %c1_143 = arith.constant 1 : index
      %c0_144 = arith.constant 0 : index
      %c0_145 = arith.constant 0 : index
      %201 = vector.load %arg2[%c0_141, %c5_142, %c1_143, %c0_144, %c0_145] : memref<1x8x3x2x32xbf16, #tpu.memory_space<vmem>>, vector<1x1x1x2x32xbf16>
      %202 = vector.shape_cast %201 : vector<1x1x1x2x32xbf16> to vector<2x32xbf16>
      %203 = arith.extf %202 : vector<2x32xbf16> to vector<2x32xf32>
      %c0_146 = arith.constant 0 : index
      %c5_147 = arith.constant 5 : index
      %c2_148 = arith.constant 2 : index
      %c0_149 = arith.constant 0 : index
      %c0_150 = arith.constant 0 : index
      %204 = vector.load %arg2[%c0_146, %c5_147, %c2_148, %c0_149, %c0_150] : memref<1x8x3x2x32xbf16, #tpu.memory_space<vmem>>, vector<1x1x1x2x32xbf16>
      %205 = vector.shape_cast %204 : vector<1x1x1x2x32xbf16> to vector<2x32xbf16>
      %206 = arith.extf %205 : vector<2x32xbf16> to vector<2x32xf32>
      %207 = arith.truncf %194 : vector<2x32xf32> to vector<2x32xbf16>
      %cst_151 = arith.constant dense<0.000000e+00> : vector<2x32xf32>
      %208 = tpu.matmul %207, %4, %cst_151 {dimension_numbers = #tpu.dot_dimension_numbers<[1], [0], [0], [1], [0, 0, 1, 1], [], []>} : vector<2x32xbf16>, vector<32x32xbf16>, vector<2x32xf32> -> vector<2x32xf32>
      %cst_152 = arith.constant dense<0.000000e+00> : vector<2x32xf32>
      %209 = tpu.matmul %207, %6, %cst_152 {dimension_numbers = #tpu.dot_dimension_numbers<[1], [0], [0], [1], [0, 0, 1, 1], [], []>} : vector<2x32xbf16>, vector<32x32xbf16>, vector<2x32xf32> -> vector<2x32xf32>
      %cst_153 = arith.constant dense<0.000000e+00> : vector<2x32xf32>
      %210 = tpu.matmul %207, %8, %cst_153 {dimension_numbers = #tpu.dot_dimension_numbers<[1], [0], [0], [1], [0, 0, 1, 1], [], []>} : vector<2x32xbf16>, vector<32x32xbf16>, vector<2x32xf32> -> vector<2x32xf32>
      %211 = arith.addf %200, %208 : vector<2x32xf32>
      %212 = arith.negf %211 : vector<2x32xf32>
      %213 = math.exp %212 : vector<2x32xf32>
      %cst_154 = arith.constant 1.000000e+00 : f32
      %214 = vector.broadcast %cst_154 : f32 to vector<2x32xf32>
      %215 = arith.addf %214, %213 : vector<2x32xf32>
      %216 = arith.divf %214, %215 : vector<2x32xf32>
      %217 = arith.addf %203, %209 : vector<2x32xf32>
      %218 = arith.negf %217 : vector<2x32xf32>
      %219 = math.exp %218 : vector<2x32xf32>
      %cst_155 = arith.constant 1.000000e+00 : f32
      %220 = vector.broadcast %cst_155 : f32 to vector<2x32xf32>
      %221 = arith.addf %220, %219 : vector<2x32xf32>
      %222 = arith.divf %220, %221 : vector<2x32xf32>
      %223 = arith.addf %210, %12 : vector<2x32xf32>
      %224 = arith.mulf %216, %223 : vector<2x32xf32>
      %225 = arith.addf %206, %224 : vector<2x32xf32>
      %226 = math.tanh %225 : vector<2x32xf32>
      %227 = arith.subf %194, %226 : vector<2x32xf32>
      %228 = arith.mulf %222, %227 : vector<2x32xf32>
      %229 = arith.addf %226, %228 : vector<2x32xf32>
      %c0_156 = arith.constant 0 : index
      %c5_157 = arith.constant 5 : index
      %c0_158 = arith.constant 0 : index
      %c0_159 = arith.constant 0 : index
      %230 = vector.load %arg5[%c0_156, %c5_157, %c0_158, %c0_159] : memref<1x8x2x32xf32, #tpu.memory_space<vmem>>, vector<1x1x2x32xf32>
      %231 = vector.shape_cast %230 : vector<1x1x2x32xf32> to vector<2x32xf32>
      %232 = vector.shape_cast %229 : vector<2x32xf32> to vector<1x1x2x32xf32>
      tpu.vector_store %arg5[%c0_156, %c5_157, %c0_158, %c0_159], %232 {strides = array<i32>} : memref<1x8x2x32xf32, #tpu.memory_space<vmem>>, vector<1x1x2x32xf32>,
      %c0_160 = arith.constant 0 : index
      %c6 = arith.constant 6 : index
      %c0_161 = arith.constant 0 : index
      %c0_162 = arith.constant 0 : index
      %c0_163 = arith.constant 0 : index
      %233 = vector.load %arg2[%c0_160, %c6, %c0_161, %c0_162, %c0_163] : memref<1x8x3x2x32xbf16, #tpu.memory_space<vmem>>, vector<1x1x1x2x32xbf16>
      %234 = vector.shape_cast %233 : vector<1x1x1x2x32xbf16> to vector<2x32xbf16>
      %235 = arith.extf %234 : vector<2x32xbf16> to vector<2x32xf32>
      %c0_164 = arith.constant 0 : index
      %c6_165 = arith.constant 6 : index
      %c1_166 = arith.constant 1 : index
      %c0_167 = arith.constant 0 : index
      %c0_168 = arith.constant 0 : index
      %236 = vector.load %arg2[%c0_164, %c6_165, %c1_166, %c0_167, %c0_168] : memref<1x8x3x2x32xbf16, #tpu.memory_space<vmem>>, vector<1x1x1x2x32xbf16>
      %237 = vector.shape_cast %236 : vector<1x1x1x2x32xbf16> to vector<2x32xbf16>
      %238 = arith.extf %237 : vector<2x32xbf16> to vector<2x32xf32>
      %c0_169 = arith.constant 0 : index
      %c6_170 = arith.constant 6 : index
      %c2_171 = arith.constant 2 : index
      %c0_172 = arith.constant 0 : index
      %c0_173 = arith.constant 0 : index
      %239 = vector.load %arg2[%c0_169, %c6_170, %c2_171, %c0_172, %c0_173] : memref<1x8x3x2x32xbf16, #tpu.memory_space<vmem>>, vector<1x1x1x2x32xbf16>
      %240 = vector.shape_cast %239 : vector<1x1x1x2x32xbf16> to vector<2x32xbf16>
      %241 = arith.extf %240 : vector<2x32xbf16> to vector<2x32xf32>
      %242 = arith.truncf %229 : vector<2x32xf32> to vector<2x32xbf16>
      %cst_174 = arith.constant dense<0.000000e+00> : vector<2x32xf32>
      %243 = tpu.matmul %242, %4, %cst_174 {dimension_numbers = #tpu.dot_dimension_numbers<[1], [0], [0], [1], [0, 0, 1, 1], [], []>} : vector<2x32xbf16>, vector<32x32xbf16>, vector<2x32xf32> -> vector<2x32xf32>
      %cst_175 = arith.constant dense<0.000000e+00> : vector<2x32xf32>
      %244 = tpu.matmul %242, %6, %cst_175 {dimension_numbers = #tpu.dot_dimension_numbers<[1], [0], [0], [1], [0, 0, 1, 1], [], []>} : vector<2x32xbf16>, vector<32x32xbf16>, vector<2x32xf32> -> vector<2x32xf32>
      %cst_176 = arith.constant dense<0.000000e+00> : vector<2x32xf32>
      %245 = tpu.matmul %242, %8, %cst_176 {dimension_numbers = #tpu.dot_dimension_numbers<[1], [0], [0], [1], [0, 0, 1, 1], [], []>} : vector<2x32xbf16>, vector<32x32xbf16>, vector<2x32xf32> -> vector<2x32xf32>
      %246 = arith.addf %235, %243 : vector<2x32xf32>
      %247 = arith.negf %246 : vector<2x32xf32>
      %248 = math.exp %247 : vector<2x32xf32>
      %cst_177 = arith.constant 1.000000e+00 : f32
      %249 = vector.broadcast %cst_177 : f32 to vector<2x32xf32>
      %250 = arith.addf %249, %248 : vector<2x32xf32>
      %251 = arith.divf %249, %250 : vector<2x32xf32>
      %252 = arith.addf %238, %244 : vector<2x32xf32>
      %253 = arith.negf %252 : vector<2x32xf32>
      %254 = math.exp %253 : vector<2x32xf32>
      %cst_178 = arith.constant 1.000000e+00 : f32
      %255 = vector.broadcast %cst_178 : f32 to vector<2x32xf32>
      %256 = arith.addf %255, %254 : vector<2x32xf32>
      %257 = arith.divf %255, %256 : vector<2x32xf32>
      %258 = arith.addf %245, %12 : vector<2x32xf32>
      %259 = arith.mulf %251, %258 : vector<2x32xf32>
      %260 = arith.addf %241, %259 : vector<2x32xf32>
      %261 = math.tanh %260 : vector<2x32xf32>
      %262 = arith.subf %229, %261 : vector<2x32xf32>
      %263 = arith.mulf %257, %262 : vector<2x32xf32>
      %264 = arith.addf %261, %263 : vector<2x32xf32>
      %c0_179 = arith.constant 0 : index
      %c6_180 = arith.constant 6 : index
      %c0_181 = arith.constant 0 : index
      %c0_182 = arith.constant 0 : index
      %265 = vector.load %arg5[%c0_179, %c6_180, %c0_181, %c0_182] : memref<1x8x2x32xf32, #tpu.memory_space<vmem>>, vector<1x1x2x32xf32>
      %266 = vector.shape_cast %265 : vector<1x1x2x32xf32> to vector<2x32xf32>
      %267 = vector.shape_cast %264 : vector<2x32xf32> to vector<1x1x2x32xf32>
      tpu.vector_store %arg5[%c0_179, %c6_180, %c0_181, %c0_182], %267 {strides = array<i32>} : memref<1x8x2x32xf32, #tpu.memory_space<vmem>>, vector<1x1x2x32xf32>,
      %c0_183 = arith.constant 0 : index
      %c7 = arith.constant 7 : index
      %c0_184 = arith.constant 0 : index
      %c0_185 = arith.constant 0 : index
      %c0_186 = arith.constant 0 : index
      %268 = vector.load %arg2[%c0_183, %c7, %c0_184, %c0_185, %c0_186] : memref<1x8x3x2x32xbf16, #tpu.memory_space<vmem>>, vector<1x1x1x2x32xbf16>
      %269 = vector.shape_cast %268 : vector<1x1x1x2x32xbf16> to vector<2x32xbf16>
      %270 = arith.extf %269 : vector<2x32xbf16> to vector<2x32xf32>
      %c0_187 = arith.constant 0 : index
      %c7_188 = arith.constant 7 : index
      %c1_189 = arith.constant 1 : index
      %c0_190 = arith.constant 0 : index
      %c0_191 = arith.constant 0 : index
      %271 = vector.load %arg2[%c0_187, %c7_188, %c1_189, %c0_190, %c0_191] : memref<1x8x3x2x32xbf16, #tpu.memory_space<vmem>>, vector<1x1x1x2x32xbf16>
      %272 = vector.shape_cast %271 : vector<1x1x1x2x32xbf16> to vector<2x32xbf16>
      %273 = arith.extf %272 : vector<2x32xbf16> to vector<2x32xf32>
      %c0_192 = arith.constant 0 : index
      %c7_193 = arith.constant 7 : index
      %c2_194 = arith.constant 2 : index
      %c0_195 = arith.constant 0 : index
      %c0_196 = arith.constant 0 : index
      %274 = vector.load %arg2[%c0_192, %c7_193, %c2_194, %c0_195, %c0_196] : memref<1x8x3x2x32xbf16, #tpu.memory_space<vmem>>, vector<1x1x1x2x32xbf16>
      %275 = vector.shape_cast %274 : vector<1x1x1x2x32xbf16> to vector<2x32xbf16>
      %276 = arith.extf %275 : vector<2x32xbf16> to vector<2x32xf32>
      %277 = arith.truncf %264 : vector<2x32xf32> to vector<2x32xbf16>
      %cst_197 = arith.constant dense<0.000000e+00> : vector<2x32xf32>
      %278 = tpu.matmul %277, %4, %cst_197 {dimension_numbers = #tpu.dot_dimension_numbers<[1], [0], [0], [1], [0, 0, 1, 1], [], []>} : vector<2x32xbf16>, vector<32x32xbf16>, vector<2x32xf32> -> vector<2x32xf32>
      %cst_198 = arith.constant dense<0.000000e+00> : vector<2x32xf32>
      %279 = tpu.matmul %277, %6, %cst_198 {dimension_numbers = #tpu.dot_dimension_numbers<[1], [0], [0], [1], [0, 0, 1, 1], [], []>} : vector<2x32xbf16>, vector<32x32xbf16>, vector<2x32xf32> -> vector<2x32xf32>
      %cst_199 = arith.constant dense<0.000000e+00> : vector<2x32xf32>
      %280 = tpu.matmul %277, %8, %cst_199 {dimension_numbers = #tpu.dot_dimension_numbers<[1], [0], [0], [1], [0, 0, 1, 1], [], []>} : vector<2x32xbf16>, vector<32x32xbf16>, vector<2x32xf32> -> vector<2x32xf32>
      %281 = arith.addf %270, %278 : vector<2x32xf32>
      %282 = arith.negf %281 : vector<2x32xf32>
      %283 = math.exp %282 : vector<2x32xf32>
      %cst_200 = arith.constant 1.000000e+00 : f32
      %284 = vector.broadcast %cst_200 : f32 to vector<2x32xf32>
      %285 = arith.addf %284, %283 : vector<2x32xf32>
      %286 = arith.divf %284, %285 : vector<2x32xf32>
      %287 = arith.addf %273, %279 : vector<2x32xf32>
      %288 = arith.negf %287 : vector<2x32xf32>
      %289 = math.exp %288 : vector<2x32xf32>
      %cst_201 = arith.constant 1.000000e+00 : f32
      %290 = vector.broadcast %cst_201 : f32 to vector<2x32xf32>
      %291 = arith.addf %290, %289 : vector<2x32xf32>
      %292 = arith.divf %290, %291 : vector<2x32xf32>
      %293 = arith.addf %280, %12 : vector<2x32xf32>
      %294 = arith.mulf %286, %293 : vector<2x32xf32>
      %295 = arith.addf %276, %294 : vector<2x32xf32>
      %296 = math.tanh %295 : vector<2x32xf32>
      %297 = arith.subf %264, %296 : vector<2x32xf32>
      %298 = arith.mulf %292, %297 : vector<2x32xf32>
      %299 = arith.addf %296, %298 : vector<2x32xf32>
      %c0_202 = arith.constant 0 : index
      %c7_203 = arith.constant 7 : index
      %c0_204 = arith.constant 0 : index
      %c0_205 = arith.constant 0 : index
      %300 = vector.load %arg5[%c0_202, %c7_203, %c0_204, %c0_205] : memref<1x8x2x32xf32, #tpu.memory_space<vmem>>, vector<1x1x2x32xf32>
      %301 = vector.shape_cast %300 : vector<1x1x2x32xf32> to vector<2x32xf32>
      %302 = vector.shape_cast %299 : vector<2x32xf32> to vector<1x1x2x32xf32>
      tpu.vector_store %arg5[%c0_202, %c7_203, %c0_204, %c0_205], %302 {strides = array<i32>} : memref<1x8x2x32xf32, #tpu.memory_space<vmem>>, vector<1x1x2x32xf32>,
      %c0_206 = arith.constant 0 : index
      %c0_207 = arith.constant 0 : index
      %303 = vector.load %arg7[%c0_206, %c0_207] : memref<2x32xf32, #tpu.memory_space<vmem>>, vector<2x32xf32>
      tpu.vector_store %arg7[%c0_206, %c0_207], %299 {strides = array<i32>} : memref<2x32xf32, #tpu.memory_space<vmem>>, vector<2x32xf32>,
    } else {
    }
    %c1_i32 = arith.constant 1 : i32
    %16 = arith.cmpi eq, %arg0, %c1_i32 : i32
    %17 = arith.extui %16 : i1 to i32
    %c0_i32_15 = arith.constant 0 : i32
    %18 = arith.cmpi ne, %17, %c0_i32_15 : i32
    scf.if %18 {
      %c0_18 = arith.constant 0 : index
      %c0_19 = arith.constant 0 : index
      %22 = vector.load %arg7[%c0_18, %c0_19] : memref<2x32xf32, #tpu.memory_space<vmem>>, vector<2x32xf32>
      %c0_20 = arith.constant 0 : index
      %c7 = arith.constant 7 : index
      %c0_21 = arith.constant 0 : index
      %c0_22 = arith.constant 0 : index
      %c0_23 = arith.constant 0 : index
      %23 = vector.load %arg2[%c0_20, %c7, %c0_21, %c0_22, %c0_23] : memref<1x8x3x2x32xbf16, #tpu.memory_space<vmem>>, vector<1x1x1x2x32xbf16>
      %24 = vector.shape_cast %23 : vector<1x1x1x2x32xbf16> to vector<2x32xbf16>
      %25 = arith.extf %24 : vector<2x32xbf16> to vector<2x32xf32>
      %c0_24 = arith.constant 0 : index
      %c7_25 = arith.constant 7 : index
      %c1_26 = arith.constant 1 : index
      %c0_27 = arith.constant 0 : index
      %c0_28 = arith.constant 0 : index
      %26 = vector.load %arg2[%c0_24, %c7_25, %c1_26, %c0_27, %c0_28] : memref<1x8x3x2x32xbf16, #tpu.memory_space<vmem>>, vector<1x1x1x2x32xbf16>
      %27 = vector.shape_cast %26 : vector<1x1x1x2x32xbf16> to vector<2x32xbf16>
      %28 = arith.extf %27 : vector<2x32xbf16> to vector<2x32xf32>
      %c0_29 = arith.constant 0 : index
      %c7_30 = arith.constant 7 : index
      %c2_31 = arith.constant 2 : index
      %c0_32 = arith.constant 0 : index
      %c0_33 = arith.constant 0 : index
      %29 = vector.load %arg2[%c0_29, %c7_30, %c2_31, %c0_32, %c0_33] : memref<1x8x3x2x32xbf16, #tpu.memory_space<vmem>>, vector<1x1x1x2x32xbf16>
      %30 = vector.shape_cast %29 : vector<1x1x1x2x32xbf16> to vector<2x32xbf16>
      %31 = arith.extf %30 : vector<2x32xbf16> to vector<2x32xf32>
      %32 = arith.truncf %22 : vector<2x32xf32> to vector<2x32xbf16>
      %cst = arith.constant dense<0.000000e+00> : vector<2x32xf32>
      %33 = tpu.matmul %32, %4, %cst {dimension_numbers = #tpu.dot_dimension_numbers<[1], [0], [0], [1], [0, 0, 1, 1], [], []>} : vector<2x32xbf16>, vector<32x32xbf16>, vector<2x32xf32> -> vector<2x32xf32>
      %cst_34 = arith.constant dense<0.000000e+00> : vector<2x32xf32>
      %34 = tpu.matmul %32, %6, %cst_34 {dimension_numbers = #tpu.dot_dimension_numbers<[1], [0], [0], [1], [0, 0, 1, 1], [], []>} : vector<2x32xbf16>, vector<32x32xbf16>, vector<2x32xf32> -> vector<2x32xf32>
      %cst_35 = arith.constant dense<0.000000e+00> : vector<2x32xf32>
      %35 = tpu.matmul %32, %8, %cst_35 {dimension_numbers = #tpu.dot_dimension_numbers<[1], [0], [0], [1], [0, 0, 1, 1], [], []>} : vector<2x32xbf16>, vector<32x32xbf16>, vector<2x32xf32> -> vector<2x32xf32>
      %36 = arith.addf %25, %33 : vector<2x32xf32>
      %37 = arith.negf %36 : vector<2x32xf32>
      %38 = math.exp %37 : vector<2x32xf32>
      %cst_36 = arith.constant 1.000000e+00 : f32
      %39 = vector.broadcast %cst_36 : f32 to vector<2x32xf32>
      %40 = arith.addf %39, %38 : vector<2x32xf32>
      %41 = arith.divf %39, %40 : vector<2x32xf32>
      %42 = arith.addf %28, %34 : vector<2x32xf32>
      %43 = arith.negf %42 : vector<2x32xf32>
      %44 = math.exp %43 : vector<2x32xf32>
      %cst_37 = arith.constant 1.000000e+00 : f32
      %45 = vector.broadcast %cst_37 : f32 to vector<2x32xf32>
      %46 = arith.addf %45, %44 : vector<2x32xf32>
      %47 = arith.divf %45, %46 : vector<2x32xf32>
      %48 = arith.addf %35, %12 : vector<2x32xf32>
      %49 = arith.mulf %41, %48 : vector<2x32xf32>
      %50 = arith.addf %31, %49 : vector<2x32xf32>
      %51 = math.tanh %50 : vector<2x32xf32>
      %52 = arith.subf %22, %51 : vector<2x32xf32>
      %53 = arith.mulf %47, %52 : vector<2x32xf32>
      %54 = arith.addf %51, %53 : vector<2x32xf32>
      %c0_38 = arith.constant 0 : index
      %c7_39 = arith.constant 7 : index
      %c0_40 = arith.constant 0 : index
      %c0_41 = arith.constant 0 : index
      %55 = vector.load %arg5[%c0_38, %c7_39, %c0_40, %c0_41] : memref<1x8x2x32xf32, #tpu.memory_space<vmem>>, vector<1x1x2x32xf32>
      %56 = vector.shape_cast %55 : vector<1x1x2x32xf32> to vector<2x32xf32>
      %57 = vector.shape_cast %54 : vector<2x32xf32> to vector<1x1x2x32xf32>
      tpu.vector_store %arg5[%c0_38, %c7_39, %c0_40, %c0_41], %57 {strides = array<i32>} : memref<1x8x2x32xf32, #tpu.memory_space<vmem>>, vector<1x1x2x32xf32>,
      %c0_42 = arith.constant 0 : index
      %c6 = arith.constant 6 : index
      %c0_43 = arith.constant 0 : index
      %c0_44 = arith.constant 0 : index
      %c0_45 = arith.constant 0 : index
      %58 = vector.load %arg2[%c0_42, %c6, %c0_43, %c0_44, %c0_45] : memref<1x8x3x2x32xbf16, #tpu.memory_space<vmem>>, vector<1x1x1x2x32xbf16>
      %59 = vector.shape_cast %58 : vector<1x1x1x2x32xbf16> to vector<2x32xbf16>
      %60 = arith.extf %59 : vector<2x32xbf16> to vector<2x32xf32>
      %c0_46 = arith.constant 0 : index
      %c6_47 = arith.constant 6 : index
      %c1_48 = arith.constant 1 : index
      %c0_49 = arith.constant 0 : index
      %c0_50 = arith.constant 0 : index
      %61 = vector.load %arg2[%c0_46, %c6_47, %c1_48, %c0_49, %c0_50] : memref<1x8x3x2x32xbf16, #tpu.memory_space<vmem>>, vector<1x1x1x2x32xbf16>
      %62 = vector.shape_cast %61 : vector<1x1x1x2x32xbf16> to vector<2x32xbf16>
      %63 = arith.extf %62 : vector<2x32xbf16> to vector<2x32xf32>
      %c0_51 = arith.constant 0 : index
      %c6_52 = arith.constant 6 : index
      %c2_53 = arith.constant 2 : index
      %c0_54 = arith.constant 0 : index
      %c0_55 = arith.constant 0 : index
      %64 = vector.load %arg2[%c0_51, %c6_52, %c2_53, %c0_54, %c0_55] : memref<1x8x3x2x32xbf16, #tpu.memory_space<vmem>>, vector<1x1x1x2x32xbf16>
      %65 = vector.shape_cast %64 : vector<1x1x1x2x32xbf16> to vector<2x32xbf16>
      %66 = arith.extf %65 : vector<2x32xbf16> to vector<2x32xf32>
      %67 = arith.truncf %54 : vector<2x32xf32> to vector<2x32xbf16>
      %cst_56 = arith.constant dense<0.000000e+00> : vector<2x32xf32>
      %68 = tpu.matmul %67, %4, %cst_56 {dimension_numbers = #tpu.dot_dimension_numbers<[1], [0], [0], [1], [0, 0, 1, 1], [], []>} : vector<2x32xbf16>, vector<32x32xbf16>, vector<2x32xf32> -> vector<2x32xf32>
      %cst_57 = arith.constant dense<0.000000e+00> : vector<2x32xf32>
      %69 = tpu.matmul %67, %6, %cst_57 {dimension_numbers = #tpu.dot_dimension_numbers<[1], [0], [0], [1], [0, 0, 1, 1], [], []>} : vector<2x32xbf16>, vector<32x32xbf16>, vector<2x32xf32> -> vector<2x32xf32>
      %cst_58 = arith.constant dense<0.000000e+00> : vector<2x32xf32>
      %70 = tpu.matmul %67, %8, %cst_58 {dimension_numbers = #tpu.dot_dimension_numbers<[1], [0], [0], [1], [0, 0, 1, 1], [], []>} : vector<2x32xbf16>, vector<32x32xbf16>, vector<2x32xf32> -> vector<2x32xf32>
      %71 = arith.addf %60, %68 : vector<2x32xf32>
      %72 = arith.negf %71 : vector<2x32xf32>
      %73 = math.exp %72 : vector<2x32xf32>
      %cst_59 = arith.constant 1.000000e+00 : f32
      %74 = vector.broadcast %cst_59 : f32 to vector<2x32xf32>
      %75 = arith.addf %74, %73 : vector<2x32xf32>
      %76 = arith.divf %74, %75 : vector<2x32xf32>
      %77 = arith.addf %63, %69 : vector<2x32xf32>
      %78 = arith.negf %77 : vector<2x32xf32>
      %79 = math.exp %78 : vector<2x32xf32>
      %cst_60 = arith.constant 1.000000e+00 : f32
      %80 = vector.broadcast %cst_60 : f32 to vector<2x32xf32>
      %81 = arith.addf %80, %79 : vector<2x32xf32>
      %82 = arith.divf %80, %81 : vector<2x32xf32>
      %83 = arith.addf %70, %12 : vector<2x32xf32>
      %84 = arith.mulf %76, %83 : vector<2x32xf32>
      %85 = arith.addf %66, %84 : vector<2x32xf32>
      %86 = math.tanh %85 : vector<2x32xf32>
      %87 = arith.subf %54, %86 : vector<2x32xf32>
      %88 = arith.mulf %82, %87 : vector<2x32xf32>
      %89 = arith.addf %86, %88 : vector<2x32xf32>
      %c0_61 = arith.constant 0 : index
      %c6_62 = arith.constant 6 : index
      %c0_63 = arith.constant 0 : index
      %c0_64 = arith.constant 0 : index
      %90 = vector.load %arg5[%c0_61, %c6_62, %c0_63, %c0_64] : memref<1x8x2x32xf32, #tpu.memory_space<vmem>>, vector<1x1x2x32xf32>
      %91 = vector.shape_cast %90 : vector<1x1x2x32xf32> to vector<2x32xf32>
      %92 = vector.shape_cast %89 : vector<2x32xf32> to vector<1x1x2x32xf32>
      tpu.vector_store %arg5[%c0_61, %c6_62, %c0_63, %c0_64], %92 {strides = array<i32>} : memref<1x8x2x32xf32, #tpu.memory_space<vmem>>, vector<1x1x2x32xf32>,
      %c0_65 = arith.constant 0 : index
      %c5 = arith.constant 5 : index
      %c0_66 = arith.constant 0 : index
      %c0_67 = arith.constant 0 : index
      %c0_68 = arith.constant 0 : index
      %93 = vector.load %arg2[%c0_65, %c5, %c0_66, %c0_67, %c0_68] : memref<1x8x3x2x32xbf16, #tpu.memory_space<vmem>>, vector<1x1x1x2x32xbf16>
      %94 = vector.shape_cast %93 : vector<1x1x1x2x32xbf16> to vector<2x32xbf16>
      %95 = arith.extf %94 : vector<2x32xbf16> to vector<2x32xf32>
      %c0_69 = arith.constant 0 : index
      %c5_70 = arith.constant 5 : index
      %c1_71 = arith.constant 1 : index
      %c0_72 = arith.constant 0 : index
      %c0_73 = arith.constant 0 : index
      %96 = vector.load %arg2[%c0_69, %c5_70, %c1_71, %c0_72, %c0_73] : memref<1x8x3x2x32xbf16, #tpu.memory_space<vmem>>, vector<1x1x1x2x32xbf16>
      %97 = vector.shape_cast %96 : vector<1x1x1x2x32xbf16> to vector<2x32xbf16>
      %98 = arith.extf %97 : vector<2x32xbf16> to vector<2x32xf32>
      %c0_74 = arith.constant 0 : index
      %c5_75 = arith.constant 5 : index
      %c2_76 = arith.constant 2 : index
      %c0_77 = arith.constant 0 : index
      %c0_78 = arith.constant 0 : index
      %99 = vector.load %arg2[%c0_74, %c5_75, %c2_76, %c0_77, %c0_78] : memref<1x8x3x2x32xbf16, #tpu.memory_space<vmem>>, vector<1x1x1x2x32xbf16>
      %100 = vector.shape_cast %99 : vector<1x1x1x2x32xbf16> to vector<2x32xbf16>
      %101 = arith.extf %100 : vector<2x32xbf16> to vector<2x32xf32>
      %102 = arith.truncf %89 : vector<2x32xf32> to vector<2x32xbf16>
      %cst_79 = arith.constant dense<0.000000e+00> : vector<2x32xf32>
      %103 = tpu.matmul %102, %4, %cst_79 {dimension_numbers = #tpu.dot_dimension_numbers<[1], [0], [0], [1], [0, 0, 1, 1], [], []>} : vector<2x32xbf16>, vector<32x32xbf16>, vector<2x32xf32> -> vector<2x32xf32>
      %cst_80 = arith.constant dense<0.000000e+00> : vector<2x32xf32>
      %104 = tpu.matmul %102, %6, %cst_80 {dimension_numbers = #tpu.dot_dimension_numbers<[1], [0], [0], [1], [0, 0, 1, 1], [], []>} : vector<2x32xbf16>, vector<32x32xbf16>, vector<2x32xf32> -> vector<2x32xf32>
      %cst_81 = arith.constant dense<0.000000e+00> : vector<2x32xf32>
      %105 = tpu.matmul %102, %8, %cst_81 {dimension_numbers = #tpu.dot_dimension_numbers<[1], [0], [0], [1], [0, 0, 1, 1], [], []>} : vector<2x32xbf16>, vector<32x32xbf16>, vector<2x32xf32> -> vector<2x32xf32>
      %106 = arith.addf %95, %103 : vector<2x32xf32>
      %107 = arith.negf %106 : vector<2x32xf32>
      %108 = math.exp %107 : vector<2x32xf32>
      %cst_82 = arith.constant 1.000000e+00 : f32
      %109 = vector.broadcast %cst_82 : f32 to vector<2x32xf32>
      %110 = arith.addf %109, %108 : vector<2x32xf32>
      %111 = arith.divf %109, %110 : vector<2x32xf32>
      %112 = arith.addf %98, %104 : vector<2x32xf32>
      %113 = arith.negf %112 : vector<2x32xf32>
      %114 = math.exp %113 : vector<2x32xf32>
      %cst_83 = arith.constant 1.000000e+00 : f32
      %115 = vector.broadcast %cst_83 : f32 to vector<2x32xf32>
      %116 = arith.addf %115, %114 : vector<2x32xf32>
      %117 = arith.divf %115, %116 : vector<2x32xf32>
      %118 = arith.addf %105, %12 : vector<2x32xf32>
      %119 = arith.mulf %111, %118 : vector<2x32xf32>
      %120 = arith.addf %101, %119 : vector<2x32xf32>
      %121 = math.tanh %120 : vector<2x32xf32>
      %122 = arith.subf %89, %121 : vector<2x32xf32>
      %123 = arith.mulf %117, %122 : vector<2x32xf32>
      %124 = arith.addf %121, %123 : vector<2x32xf32>
      %c0_84 = arith.constant 0 : index
      %c5_85 = arith.constant 5 : index
      %c0_86 = arith.constant 0 : index
      %c0_87 = arith.constant 0 : index
      %125 = vector.load %arg5[%c0_84, %c5_85, %c0_86, %c0_87] : memref<1x8x2x32xf32, #tpu.memory_space<vmem>>, vector<1x1x2x32xf32>
      %126 = vector.shape_cast %125 : vector<1x1x2x32xf32> to vector<2x32xf32>
      %127 = vector.shape_cast %124 : vector<2x32xf32> to vector<1x1x2x32xf32>
      tpu.vector_store %arg5[%c0_84, %c5_85, %c0_86, %c0_87], %127 {strides = array<i32>} : memref<1x8x2x32xf32, #tpu.memory_space<vmem>>, vector<1x1x2x32xf32>,
      %c0_88 = arith.constant 0 : index
      %c4 = arith.constant 4 : index
      %c0_89 = arith.constant 0 : index
      %c0_90 = arith.constant 0 : index
      %c0_91 = arith.constant 0 : index
      %128 = vector.load %arg2[%c0_88, %c4, %c0_89, %c0_90, %c0_91] : memref<1x8x3x2x32xbf16, #tpu.memory_space<vmem>>, vector<1x1x1x2x32xbf16>
      %129 = vector.shape_cast %128 : vector<1x1x1x2x32xbf16> to vector<2x32xbf16>
      %130 = arith.extf %129 : vector<2x32xbf16> to vector<2x32xf32>
      %c0_92 = arith.constant 0 : index
      %c4_93 = arith.constant 4 : index
      %c1_94 = arith.constant 1 : index
      %c0_95 = arith.constant 0 : index
      %c0_96 = arith.constant 0 : index
      %131 = vector.load %arg2[%c0_92, %c4_93, %c1_94, %c0_95, %c0_96] : memref<1x8x3x2x32xbf16, #tpu.memory_space<vmem>>, vector<1x1x1x2x32xbf16>
      %132 = vector.shape_cast %131 : vector<1x1x1x2x32xbf16> to vector<2x32xbf16>
      %133 = arith.extf %132 : vector<2x32xbf16> to vector<2x32xf32>
      %c0_97 = arith.constant 0 : index
      %c4_98 = arith.constant 4 : index
      %c2_99 = arith.constant 2 : index
      %c0_100 = arith.constant 0 : index
      %c0_101 = arith.constant 0 : index
      %134 = vector.load %arg2[%c0_97, %c4_98, %c2_99, %c0_100, %c0_101] : memref<1x8x3x2x32xbf16, #tpu.memory_space<vmem>>, vector<1x1x1x2x32xbf16>
      %135 = vector.shape_cast %134 : vector<1x1x1x2x32xbf16> to vector<2x32xbf16>
      %136 = arith.extf %135 : vector<2x32xbf16> to vector<2x32xf32>
      %137 = arith.truncf %124 : vector<2x32xf32> to vector<2x32xbf16>
      %cst_102 = arith.constant dense<0.000000e+00> : vector<2x32xf32>
      %138 = tpu.matmul %137, %4, %cst_102 {dimension_numbers = #tpu.dot_dimension_numbers<[1], [0], [0], [1], [0, 0, 1, 1], [], []>} : vector<2x32xbf16>, vector<32x32xbf16>, vector<2x32xf32> -> vector<2x32xf32>
      %cst_103 = arith.constant dense<0.000000e+00> : vector<2x32xf32>
      %139 = tpu.matmul %137, %6, %cst_103 {dimension_numbers = #tpu.dot_dimension_numbers<[1], [0], [0], [1], [0, 0, 1, 1], [], []>} : vector<2x32xbf16>, vector<32x32xbf16>, vector<2x32xf32> -> vector<2x32xf32>
      %cst_104 = arith.constant dense<0.000000e+00> : vector<2x32xf32>
      %140 = tpu.matmul %137, %8, %cst_104 {dimension_numbers = #tpu.dot_dimension_numbers<[1], [0], [0], [1], [0, 0, 1, 1], [], []>} : vector<2x32xbf16>, vector<32x32xbf16>, vector<2x32xf32> -> vector<2x32xf32>
      %141 = arith.addf %130, %138 : vector<2x32xf32>
      %142 = arith.negf %141 : vector<2x32xf32>
      %143 = math.exp %142 : vector<2x32xf32>
      %cst_105 = arith.constant 1.000000e+00 : f32
      %144 = vector.broadcast %cst_105 : f32 to vector<2x32xf32>
      %145 = arith.addf %144, %143 : vector<2x32xf32>
      %146 = arith.divf %144, %145 : vector<2x32xf32>
      %147 = arith.addf %133, %139 : vector<2x32xf32>
      %148 = arith.negf %147 : vector<2x32xf32>
      %149 = math.exp %148 : vector<2x32xf32>
      %cst_106 = arith.constant 1.000000e+00 : f32
      %150 = vector.broadcast %cst_106 : f32 to vector<2x32xf32>
      %151 = arith.addf %150, %149 : vector<2x32xf32>
      %152 = arith.divf %150, %151 : vector<2x32xf32>
      %153 = arith.addf %140, %12 : vector<2x32xf32>
      %154 = arith.mulf %146, %153 : vector<2x32xf32>
      %155 = arith.addf %136, %154 : vector<2x32xf32>
      %156 = math.tanh %155 : vector<2x32xf32>
      %157 = arith.subf %124, %156 : vector<2x32xf32>
      %158 = arith.mulf %152, %157 : vector<2x32xf32>
      %159 = arith.addf %156, %158 : vector<2x32xf32>
      %c0_107 = arith.constant 0 : index
      %c4_108 = arith.constant 4 : index
      %c0_109 = arith.constant 0 : index
      %c0_110 = arith.constant 0 : index
      %160 = vector.load %arg5[%c0_107, %c4_108, %c0_109, %c0_110] : memref<1x8x2x32xf32, #tpu.memory_space<vmem>>, vector<1x1x2x32xf32>
      %161 = vector.shape_cast %160 : vector<1x1x2x32xf32> to vector<2x32xf32>
      %162 = vector.shape_cast %159 : vector<2x32xf32> to vector<1x1x2x32xf32>
      tpu.vector_store %arg5[%c0_107, %c4_108, %c0_109, %c0_110], %162 {strides = array<i32>} : memref<1x8x2x32xf32, #tpu.memory_space<vmem>>, vector<1x1x2x32xf32>,
      %c0_111 = arith.constant 0 : index
      %c3 = arith.constant 3 : index
      %c0_112 = arith.constant 0 : index
      %c0_113 = arith.constant 0 : index
      %c0_114 = arith.constant 0 : index
      %163 = vector.load %arg2[%c0_111, %c3, %c0_112, %c0_113, %c0_114] : memref<1x8x3x2x32xbf16, #tpu.memory_space<vmem>>, vector<1x1x1x2x32xbf16>
      %164 = vector.shape_cast %163 : vector<1x1x1x2x32xbf16> to vector<2x32xbf16>
      %165 = arith.extf %164 : vector<2x32xbf16> to vector<2x32xf32>
      %c0_115 = arith.constant 0 : index
      %c3_116 = arith.constant 3 : index
      %c1_117 = arith.constant 1 : index
      %c0_118 = arith.constant 0 : index
      %c0_119 = arith.constant 0 : index
      %166 = vector.load %arg2[%c0_115, %c3_116, %c1_117, %c0_118, %c0_119] : memref<1x8x3x2x32xbf16, #tpu.memory_space<vmem>>, vector<1x1x1x2x32xbf16>
      %167 = vector.shape_cast %166 : vector<1x1x1x2x32xbf16> to vector<2x32xbf16>
      %168 = arith.extf %167 : vector<2x32xbf16> to vector<2x32xf32>
      %c0_120 = arith.constant 0 : index
      %c3_121 = arith.constant 3 : index
      %c2_122 = arith.constant 2 : index
      %c0_123 = arith.constant 0 : index
      %c0_124 = arith.constant 0 : index
      %169 = vector.load %arg2[%c0_120, %c3_121, %c2_122, %c0_123, %c0_124] : memref<1x8x3x2x32xbf16, #tpu.memory_space<vmem>>, vector<1x1x1x2x32xbf16>
      %170 = vector.shape_cast %169 : vector<1x1x1x2x32xbf16> to vector<2x32xbf16>
      %171 = arith.extf %170 : vector<2x32xbf16> to vector<2x32xf32>
      %172 = arith.truncf %159 : vector<2x32xf32> to vector<2x32xbf16>
      %cst_125 = arith.constant dense<0.000000e+00> : vector<2x32xf32>
      %173 = tpu.matmul %172, %4, %cst_125 {dimension_numbers = #tpu.dot_dimension_numbers<[1], [0], [0], [1], [0, 0, 1, 1], [], []>} : vector<2x32xbf16>, vector<32x32xbf16>, vector<2x32xf32> -> vector<2x32xf32>
      %cst_126 = arith.constant dense<0.000000e+00> : vector<2x32xf32>
      %174 = tpu.matmul %172, %6, %cst_126 {dimension_numbers = #tpu.dot_dimension_numbers<[1], [0], [0], [1], [0, 0, 1, 1], [], []>} : vector<2x32xbf16>, vector<32x32xbf16>, vector<2x32xf32> -> vector<2x32xf32>
      %cst_127 = arith.constant dense<0.000000e+00> : vector<2x32xf32>
      %175 = tpu.matmul %172, %8, %cst_127 {dimension_numbers = #tpu.dot_dimension_numbers<[1], [0], [0], [1], [0, 0, 1, 1], [], []>} : vector<2x32xbf16>, vector<32x32xbf16>, vector<2x32xf32> -> vector<2x32xf32>
      %176 = arith.addf %165, %173 : vector<2x32xf32>
      %177 = arith.negf %176 : vector<2x32xf32>
      %178 = math.exp %177 : vector<2x32xf32>
      %cst_128 = arith.constant 1.000000e+00 : f32
      %179 = vector.broadcast %cst_128 : f32 to vector<2x32xf32>
      %180 = arith.addf %179, %178 : vector<2x32xf32>
      %181 = arith.divf %179, %180 : vector<2x32xf32>
      %182 = arith.addf %168, %174 : vector<2x32xf32>
      %183 = arith.negf %182 : vector<2x32xf32>
      %184 = math.exp %183 : vector<2x32xf32>
      %cst_129 = arith.constant 1.000000e+00 : f32
      %185 = vector.broadcast %cst_129 : f32 to vector<2x32xf32>
      %186 = arith.addf %185, %184 : vector<2x32xf32>
      %187 = arith.divf %185, %186 : vector<2x32xf32>
      %188 = arith.addf %175, %12 : vector<2x32xf32>
      %189 = arith.mulf %181, %188 : vector<2x32xf32>
      %190 = arith.addf %171, %189 : vector<2x32xf32>
      %191 = math.tanh %190 : vector<2x32xf32>
      %192 = arith.subf %159, %191 : vector<2x32xf32>
      %193 = arith.mulf %187, %192 : vector<2x32xf32>
      %194 = arith.addf %191, %193 : vector<2x32xf32>
      %c0_130 = arith.constant 0 : index
      %c3_131 = arith.constant 3 : index
      %c0_132 = arith.constant 0 : index
      %c0_133 = arith.constant 0 : index
      %195 = vector.load %arg5[%c0_130, %c3_131, %c0_132, %c0_133] : memref<1x8x2x32xf32, #tpu.memory_space<vmem>>, vector<1x1x2x32xf32>
      %196 = vector.shape_cast %195 : vector<1x1x2x32xf32> to vector<2x32xf32>
      %197 = vector.shape_cast %194 : vector<2x32xf32> to vector<1x1x2x32xf32>
      tpu.vector_store %arg5[%c0_130, %c3_131, %c0_132, %c0_133], %197 {strides = array<i32>} : memref<1x8x2x32xf32, #tpu.memory_space<vmem>>, vector<1x1x2x32xf32>,
      %c0_134 = arith.constant 0 : index
      %c2_135 = arith.constant 2 : index
      %c0_136 = arith.constant 0 : index
      %c0_137 = arith.constant 0 : index
      %c0_138 = arith.constant 0 : index
      %198 = vector.load %arg2[%c0_134, %c2_135, %c0_136, %c0_137, %c0_138] : memref<1x8x3x2x32xbf16, #tpu.memory_space<vmem>>, vector<1x1x1x2x32xbf16>
      %199 = vector.shape_cast %198 : vector<1x1x1x2x32xbf16> to vector<2x32xbf16>
      %200 = arith.extf %199 : vector<2x32xbf16> to vector<2x32xf32>
      %c0_139 = arith.constant 0 : index
      %c2_140 = arith.constant 2 : index
      %c1_141 = arith.constant 1 : index
      %c0_142 = arith.constant 0 : index
      %c0_143 = arith.constant 0 : index
      %201 = vector.load %arg2[%c0_139, %c2_140, %c1_141, %c0_142, %c0_143] : memref<1x8x3x2x32xbf16, #tpu.memory_space<vmem>>, vector<1x1x1x2x32xbf16>
      %202 = vector.shape_cast %201 : vector<1x1x1x2x32xbf16> to vector<2x32xbf16>
      %203 = arith.extf %202 : vector<2x32xbf16> to vector<2x32xf32>
      %c0_144 = arith.constant 0 : index
      %c2_145 = arith.constant 2 : index
      %c2_146 = arith.constant 2 : index
      %c0_147 = arith.constant 0 : index
      %c0_148 = arith.constant 0 : index
      %204 = vector.load %arg2[%c0_144, %c2_145, %c2_146, %c0_147, %c0_148] : memref<1x8x3x2x32xbf16, #tpu.memory_space<vmem>>, vector<1x1x1x2x32xbf16>
      %205 = vector.shape_cast %204 : vector<1x1x1x2x32xbf16> to vector<2x32xbf16>
      %206 = arith.extf %205 : vector<2x32xbf16> to vector<2x32xf32>
      %207 = arith.truncf %194 : vector<2x32xf32> to vector<2x32xbf16>
      %cst_149 = arith.constant dense<0.000000e+00> : vector<2x32xf32>
      %208 = tpu.matmul %207, %4, %cst_149 {dimension_numbers = #tpu.dot_dimension_numbers<[1], [0], [0], [1], [0, 0, 1, 1], [], []>} : vector<2x32xbf16>, vector<32x32xbf16>, vector<2x32xf32> -> vector<2x32xf32>
      %cst_150 = arith.constant dense<0.000000e+00> : vector<2x32xf32>
      %209 = tpu.matmul %207, %6, %cst_150 {dimension_numbers = #tpu.dot_dimension_numbers<[1], [0], [0], [1], [0, 0, 1, 1], [], []>} : vector<2x32xbf16>, vector<32x32xbf16>, vector<2x32xf32> -> vector<2x32xf32>
      %cst_151 = arith.constant dense<0.000000e+00> : vector<2x32xf32>
      %210 = tpu.matmul %207, %8, %cst_151 {dimension_numbers = #tpu.dot_dimension_numbers<[1], [0], [0], [1], [0, 0, 1, 1], [], []>} : vector<2x32xbf16>, vector<32x32xbf16>, vector<2x32xf32> -> vector<2x32xf32>
      %211 = arith.addf %200, %208 : vector<2x32xf32>
      %212 = arith.negf %211 : vector<2x32xf32>
      %213 = math.exp %212 : vector<2x32xf32>
      %cst_152 = arith.constant 1.000000e+00 : f32
      %214 = vector.broadcast %cst_152 : f32 to vector<2x32xf32>
      %215 = arith.addf %214, %213 : vector<2x32xf32>
      %216 = arith.divf %214, %215 : vector<2x32xf32>
      %217 = arith.addf %203, %209 : vector<2x32xf32>
      %218 = arith.negf %217 : vector<2x32xf32>
      %219 = math.exp %218 : vector<2x32xf32>
      %cst_153 = arith.constant 1.000000e+00 : f32
      %220 = vector.broadcast %cst_153 : f32 to vector<2x32xf32>
      %221 = arith.addf %220, %219 : vector<2x32xf32>
      %222 = arith.divf %220, %221 : vector<2x32xf32>
      %223 = arith.addf %210, %12 : vector<2x32xf32>
      %224 = arith.mulf %216, %223 : vector<2x32xf32>
      %225 = arith.addf %206, %224 : vector<2x32xf32>
      %226 = math.tanh %225 : vector<2x32xf32>
      %227 = arith.subf %194, %226 : vector<2x32xf32>
      %228 = arith.mulf %222, %227 : vector<2x32xf32>
      %229 = arith.addf %226, %228 : vector<2x32xf32>
      %c0_154 = arith.constant 0 : index
      %c2_155 = arith.constant 2 : index
      %c0_156 = arith.constant 0 : index
      %c0_157 = arith.constant 0 : index
      %230 = vector.load %arg5[%c0_154, %c2_155, %c0_156, %c0_157] : memref<1x8x2x32xf32, #tpu.memory_space<vmem>>, vector<1x1x2x32xf32>
      %231 = vector.shape_cast %230 : vector<1x1x2x32xf32> to vector<2x32xf32>
      %232 = vector.shape_cast %229 : vector<2x32xf32> to vector<1x1x2x32xf32>
      tpu.vector_store %arg5[%c0_154, %c2_155, %c0_156, %c0_157], %232 {strides = array<i32>} : memref<1x8x2x32xf32, #tpu.memory_space<vmem>>, vector<1x1x2x32xf32>,
      %c0_158 = arith.constant 0 : index
      %c1_159 = arith.constant 1 : index
      %c0_160 = arith.constant 0 : index
      %c0_161 = arith.constant 0 : index
      %c0_162 = arith.constant 0 : index
      %233 = vector.load %arg2[%c0_158, %c1_159, %c0_160, %c0_161, %c0_162] : memref<1x8x3x2x32xbf16, #tpu.memory_space<vmem>>, vector<1x1x1x2x32xbf16>
      %234 = vector.shape_cast %233 : vector<1x1x1x2x32xbf16> to vector<2x32xbf16>
      %235 = arith.extf %234 : vector<2x32xbf16> to vector<2x32xf32>
      %c0_163 = arith.constant 0 : index
      %c1_164 = arith.constant 1 : index
      %c1_165 = arith.constant 1 : index
      %c0_166 = arith.constant 0 : index
      %c0_167 = arith.constant 0 : index
      %236 = vector.load %arg2[%c0_163, %c1_164, %c1_165, %c0_166, %c0_167] : memref<1x8x3x2x32xbf16, #tpu.memory_space<vmem>>, vector<1x1x1x2x32xbf16>
      %237 = vector.shape_cast %236 : vector<1x1x1x2x32xbf16> to vector<2x32xbf16>
      %238 = arith.extf %237 : vector<2x32xbf16> to vector<2x32xf32>
      %c0_168 = arith.constant 0 : index
      %c1_169 = arith.constant 1 : index
      %c2_170 = arith.constant 2 : index
      %c0_171 = arith.constant 0 : index
      %c0_172 = arith.constant 0 : index
      %239 = vector.load %arg2[%c0_168, %c1_169, %c2_170, %c0_171, %c0_172] : memref<1x8x3x2x32xbf16, #tpu.memory_space<vmem>>, vector<1x1x1x2x32xbf16>
      %240 = vector.shape_cast %239 : vector<1x1x1x2x32xbf16> to vector<2x32xbf16>
      %241 = arith.extf %240 : vector<2x32xbf16> to vector<2x32xf32>
      %242 = arith.truncf %229 : vector<2x32xf32> to vector<2x32xbf16>
      %cst_173 = arith.constant dense<0.000000e+00> : vector<2x32xf32>
      %243 = tpu.matmul %242, %4, %cst_173 {dimension_numbers = #tpu.dot_dimension_numbers<[1], [0], [0], [1], [0, 0, 1, 1], [], []>} : vector<2x32xbf16>, vector<32x32xbf16>, vector<2x32xf32> -> vector<2x32xf32>
      %cst_174 = arith.constant dense<0.000000e+00> : vector<2x32xf32>
      %244 = tpu.matmul %242, %6, %cst_174 {dimension_numbers = #tpu.dot_dimension_numbers<[1], [0], [0], [1], [0, 0, 1, 1], [], []>} : vector<2x32xbf16>, vector<32x32xbf16>, vector<2x32xf32> -> vector<2x32xf32>
      %cst_175 = arith.constant dense<0.000000e+00> : vector<2x32xf32>
      %245 = tpu.matmul %242, %8, %cst_175 {dimension_numbers = #tpu.dot_dimension_numbers<[1], [0], [0], [1], [0, 0, 1, 1], [], []>} : vector<2x32xbf16>, vector<32x32xbf16>, vector<2x32xf32> -> vector<2x32xf32>
      %246 = arith.addf %235, %243 : vector<2x32xf32>
      %247 = arith.negf %246 : vector<2x32xf32>
      %248 = math.exp %247 : vector<2x32xf32>
      %cst_176 = arith.constant 1.000000e+00 : f32
      %249 = vector.broadcast %cst_176 : f32 to vector<2x32xf32>
      %250 = arith.addf %249, %248 : vector<2x32xf32>
      %251 = arith.divf %249, %250 : vector<2x32xf32>
      %252 = arith.addf %238, %244 : vector<2x32xf32>
      %253 = arith.negf %252 : vector<2x32xf32>
      %254 = math.exp %253 : vector<2x32xf32>
      %cst_177 = arith.constant 1.000000e+00 : f32
      %255 = vector.broadcast %cst_177 : f32 to vector<2x32xf32>
      %256 = arith.addf %255, %254 : vector<2x32xf32>
      %257 = arith.divf %255, %256 : vector<2x32xf32>
      %258 = arith.addf %245, %12 : vector<2x32xf32>
      %259 = arith.mulf %251, %258 : vector<2x32xf32>
      %260 = arith.addf %241, %259 : vector<2x32xf32>
      %261 = math.tanh %260 : vector<2x32xf32>
      %262 = arith.subf %229, %261 : vector<2x32xf32>
      %263 = arith.mulf %257, %262 : vector<2x32xf32>
      %264 = arith.addf %261, %263 : vector<2x32xf32>
      %c0_178 = arith.constant 0 : index
      %c1_179 = arith.constant 1 : index
      %c0_180 = arith.constant 0 : index
      %c0_181 = arith.constant 0 : index
      %265 = vector.load %arg5[%c0_178, %c1_179, %c0_180, %c0_181] : memref<1x8x2x32xf32, #tpu.memory_space<vmem>>, vector<1x1x2x32xf32>
      %266 = vector.shape_cast %265 : vector<1x1x2x32xf32> to vector<2x32xf32>
      %267 = vector.shape_cast %264 : vector<2x32xf32> to vector<1x1x2x32xf32>
      tpu.vector_store %arg5[%c0_178, %c1_179, %c0_180, %c0_181], %267 {strides = array<i32>} : memref<1x8x2x32xf32, #tpu.memory_space<vmem>>, vector<1x1x2x32xf32>,
      %c0_182 = arith.constant 0 : index
      %c0_183 = arith.constant 0 : index
      %c0_184 = arith.constant 0 : index
      %c0_185 = arith.constant 0 : index
      %c0_186 = arith.constant 0 : index
      %268 = vector.load %arg2[%c0_182, %c0_183, %c0_184, %c0_185, %c0_186] : memref<1x8x3x2x32xbf16, #tpu.memory_space<vmem>>, vector<1x1x1x2x32xbf16>
      %269 = vector.shape_cast %268 : vector<1x1x1x2x32xbf16> to vector<2x32xbf16>
      %270 = arith.extf %269 : vector<2x32xbf16> to vector<2x32xf32>
      %c0_187 = arith.constant 0 : index
      %c0_188 = arith.constant 0 : index
      %c1_189 = arith.constant 1 : index
      %c0_190 = arith.constant 0 : index
      %c0_191 = arith.constant 0 : index
      %271 = vector.load %arg2[%c0_187, %c0_188, %c1_189, %c0_190, %c0_191] : memref<1x8x3x2x32xbf16, #tpu.memory_space<vmem>>, vector<1x1x1x2x32xbf16>
      %272 = vector.shape_cast %271 : vector<1x1x1x2x32xbf16> to vector<2x32xbf16>
      %273 = arith.extf %272 : vector<2x32xbf16> to vector<2x32xf32>
      %c0_192 = arith.constant 0 : index
      %c0_193 = arith.constant 0 : index
      %c2_194 = arith.constant 2 : index
      %c0_195 = arith.constant 0 : index
      %c0_196 = arith.constant 0 : index
      %274 = vector.load %arg2[%c0_192, %c0_193, %c2_194, %c0_195, %c0_196] : memref<1x8x3x2x32xbf16, #tpu.memory_space<vmem>>, vector<1x1x1x2x32xbf16>
      %275 = vector.shape_cast %274 : vector<1x1x1x2x32xbf16> to vector<2x32xbf16>
      %276 = arith.extf %275 : vector<2x32xbf16> to vector<2x32xf32>
      %277 = arith.truncf %264 : vector<2x32xf32> to vector<2x32xbf16>
      %cst_197 = arith.constant dense<0.000000e+00> : vector<2x32xf32>
      %278 = tpu.matmul %277, %4, %cst_197 {dimension_numbers = #tpu.dot_dimension_numbers<[1], [0], [0], [1], [0, 0, 1, 1], [], []>} : vector<2x32xbf16>, vector<32x32xbf16>, vector<2x32xf32> -> vector<2x32xf32>
      %cst_198 = arith.constant dense<0.000000e+00> : vector<2x32xf32>
      %279 = tpu.matmul %277, %6, %cst_198 {dimension_numbers = #tpu.dot_dimension_numbers<[1], [0], [0], [1], [0, 0, 1, 1], [], []>} : vector<2x32xbf16>, vector<32x32xbf16>, vector<2x32xf32> -> vector<2x32xf32>
      %cst_199 = arith.constant dense<0.000000e+00> : vector<2x32xf32>
      %280 = tpu.matmul %277, %8, %cst_199 {dimension_numbers = #tpu.dot_dimension_numbers<[1], [0], [0], [1], [0, 0, 1, 1], [], []>} : vector<2x32xbf16>, vector<32x32xbf16>, vector<2x32xf32> -> vector<2x32xf32>
      %281 = arith.addf %270, %278 : vector<2x32xf32>
      %282 = arith.negf %281 : vector<2x32xf32>
      %283 = math.exp %282 : vector<2x32xf32>
      %cst_200 = arith.constant 1.000000e+00 : f32
      %284 = vector.broadcast %cst_200 : f32 to vector<2x32xf32>
      %285 = arith.addf %284, %283 : vector<2x32xf32>
      %286 = arith.divf %284, %285 : vector<2x32xf32>
      %287 = arith.addf %273, %279 : vector<2x32xf32>
      %288 = arith.negf %287 : vector<2x32xf32>
      %289 = math.exp %288 : vector<2x32xf32>
      %cst_201 = arith.constant 1.000000e+00 : f32
      %290 = vector.broadcast %cst_201 : f32 to vector<2x32xf32>
      %291 = arith.addf %290, %289 : vector<2x32xf32>
      %292 = arith.divf %290, %291 : vector<2x32xf32>
      %293 = arith.addf %280, %12 : vector<2x32xf32>
      %294 = arith.mulf %286, %293 : vector<2x32xf32>
      %295 = arith.addf %276, %294 : vector<2x32xf32>
      %296 = math.tanh %295 : vector<2x32xf32>
      %297 = arith.subf %264, %296 : vector<2x32xf32>
      %298 = arith.mulf %292, %297 : vector<2x32xf32>
      %299 = arith.addf %296, %298 : vector<2x32xf32>
      %c0_202 = arith.constant 0 : index
      %c0_203 = arith.constant 0 : index
      %c0_204 = arith.constant 0 : index
      %c0_205 = arith.constant 0 : index
      %300 = vector.load %arg5[%c0_202, %c0_203, %c0_204, %c0_205] : memref<1x8x2x32xf32, #tpu.memory_space<vmem>>, vector<1x1x2x32xf32>
      %301 = vector.shape_cast %300 : vector<1x1x2x32xf32> to vector<2x32xf32>
      %302 = vector.shape_cast %299 : vector<2x32xf32> to vector<1x1x2x32xf32>
      tpu.vector_store %arg5[%c0_202, %c0_203, %c0_204, %c0_205], %302 {strides = array<i32>} : memref<1x8x2x32xf32, #tpu.memory_space<vmem>>, vector<1x1x2x32xf32>,
      %c0_206 = arith.constant 0 : index
      %c0_207 = arith.constant 0 : index
      %303 = vector.load %arg7[%c0_206, %c0_207] : memref<2x32xf32, #tpu.memory_space<vmem>>, vector<2x32xf32>
      tpu.vector_store %arg7[%c0_206, %c0_207], %299 {strides = array<i32>} : memref<2x32xf32, #tpu.memory_space<vmem>>, vector<2x32xf32>,
    } else {
    }
    %c0_i32_16 = arith.constant 0 : i32
    %19 = arith.cmpi eq, %arg1, %c0_i32_16 : i32
    %20 = arith.extui %19 : i1 to i32
    %c0_i32_17 = arith.constant 0 : i32
    %21 = arith.cmpi ne, %20, %c0_i32_17 : i32
    scf.if %21 {
      %c0_18 = arith.constant 0 : index
      %c0_19 = arith.constant 0 : index
      %22 = vector.load %arg7[%c0_18, %c0_19] : memref<2x32xf32, #tpu.memory_space<vmem>>, vector<2x32xf32>
      %c0_20 = arith.constant 0 : index
      %c0_21 = arith.constant 0 : index
      %c0_22 = arith.constant 0 : index
      %23 = vector.load %arg6[%c0_20, %c0_21, %c0_22] : memref<1x2x32xf32, #tpu.memory_space<vmem>>, vector<1x2x32xf32>
      %24 = vector.shape_cast %23 : vector<1x2x32xf32> to vector<2x32xf32>
      %25 = vector.shape_cast %22 : vector<2x32xf32> to vector<1x2x32xf32>
      tpu.vector_store %arg6[%c0_20, %c0_21, %c0_22], %25 {strides = array<i32>} : memref<1x2x32xf32, #tpu.memory_space<vmem>>, vector<1x2x32xf32>,
    } else {
    }
    return
  }
  func.func @transform_0(%arg0: i32, %arg1: i32) -> (i32, i32, i32, i32, i32) {
    %c2_i32 = arith.constant 2 : i32
    %0 = arith.muli %c2_i32, %arg1 : i32
    %c0_i32 = arith.constant 0 : i32
    %1 = arith.subi %c0_i32, %0 : i32
    %2 = arith.muli %arg0, %1 : i32
    %3 = arith.addi %arg1, %2 : i32
    %c0_i32_0 = arith.constant 0 : i32
    %c0_i32_1 = arith.constant 0 : i32
    %c0_i32_2 = arith.constant 0 : i32
    %c0_i32_3 = arith.constant 0 : i32
    return %arg0, %3, %c0_i32_0, %c0_i32_1, %c0_i32_2 : i32, i32, i32, i32, i32
  }
  func.func @transform_1(%arg0: i32, %arg1: i32) -> (i32, i32, i32, i32) {
    %c0_i32 = arith.constant 0 : i32
    %c0_i32_0 = arith.constant 0 : i32
    %c0_i32_1 = arith.constant 0 : i32
    %c0_i32_2 = arith.constant 0 : i32
    return %arg0, %c0_i32, %c0_i32_0, %c0_i32_1 : i32, i32, i32, i32
  }
  func.func @transform_2(%arg0: i32, %arg1: i32) -> (i32, i32, i32) {
    %c0_i32 = arith.constant 0 : i32
    %c0_i32_0 = arith.constant 0 : i32
    %c0_i32_1 = arith.constant 0 : i32
    return %arg0, %c0_i32, %c0_i32_0 : i32, i32, i32
  }
  func.func @transform_3(%arg0: i32, %arg1: i32) -> (i32, i32, i32, i32) {
    %c2_i32 = arith.constant 2 : i32
    %0 = arith.muli %c2_i32, %arg1 : i32
    %c0_i32 = arith.constant 0 : i32
    %1 = arith.subi %c0_i32, %0 : i32
    %2 = arith.muli %arg0, %1 : i32
    %3 = arith.addi %arg1, %2 : i32
    %c0_i32_0 = arith.constant 0 : i32
    %c0_i32_1 = arith.constant 0 : i32
    %c0_i32_2 = arith.constant 0 : i32
    return %arg0, %3, %c0_i32_0, %c0_i32_1 : i32, i32, i32, i32
  }
  func.func @transform_4(%arg0: i32, %arg1: i32) -> (i32, i32, i32) {
    %c0_i32 = arith.constant 0 : i32
    %c0_i32_0 = arith.constant 0 : i32
    %c0_i32_1 = arith.constant 0 : i32
    return %arg0, %c0_i32, %c0_i32_0 : i32, i32, i32
  }
}

</mosaic_0001>

<llo_original>
// kernel: encoder_forward.3
$region0: #{encoder_forward.3}
  #allocation0 [shape = 'u32[]', space=smem, size = 0x4, offset = 0x4, fixed_abs, tag = 'smem constant byte address 0x4 - core index']
  #allocation1 [shape = 'u32[72,128]{1,0:T(1,128)}', space=vmem, size = 0x9000, scoped, tag = 'internal scratch']
  #allocation2 [shape = 'f32[2,32]{1,0:T(2,128)}', space=vmem, size = 0x400, scoped, tag = 'scratch operand']
  %s0 = inlined_call_operand.vmem [shape: bf16[2,8,3,2,32], index: 0, kind: input, shape index: {}]
  %s1 = inlined_call_operand.vmem [shape: bf16[2,3,32,32], index: 1, kind: input, shape index: {}]
  %s2 = inlined_call_operand.vmem [shape: f32[2,1,32], index: 2, kind: input, shape index: {}]
  %s3 = inlined_call_operand.vmem [shape: f32[2,8,2,32], index: 3, kind: output, shape index: {0}]
  %s4 = inlined_call_operand.vmem [shape: f32[2,2,32], index: 4, kind: output, shape index: {1}]
  %5 = xla_tuple %s3, %s4
  %s6 = sld [smem:[#allocation0]]
  $region69: #{encoder_forward.3} parent=0
    _
  %s8 = ssub.s32 1, %s6
  %s9 = scalar_select 0, %s8, %s6
  loop: start=0, step=1, limit=4
  $region2: #{encoder_forward.3} parent=0 // loop_pre_header
    _
  $region3: #{encoder_forward.3} parent=0 // loop_header
    %s11 = sphi 0, %s15
    %p12 = scmp.ge.s32.totalorder %s11, 4
    %s18 = sphi 0, %s30
    %s19 = sphi 0, %s26
    %s20 = sphi 0, %s18
    %s21 = sphi 0, %s19
    %s22 = sphi 0, %s20
    %s23 = sphi 0, %s21
    %s43 = sphi 0, %s45
    %s46 = sphi 0, %s43
    %s47 = sphi 0, %s46
    %s63 = sphi 0, %s47
    %s69 = sphi 0, %s71
    %s72 = sphi 0, %s69
    %s73 = sphi 0, %s72
    %s89 = sphi 0, %s73
    %s95 = sphi 0, %s97
    %s98 = sphi 0, %s95
    %s99 = sphi 0, %s98
    %s115 = sphi 0, %s99
    %s131 = sphi 0, %s133
    %s134 = sphi 0, %s131
    %s135 = sphi 0, %s134
    %s151 = sphi 0, %s135
    %s157 = sphi 0, %s159
    %s160 = sphi 0, %s157
    %s161 = sphi 0, %s160
    %s177 = sphi 0, %s161
  $region4: #{encoder_forward.3} parent=0 // loop_header_branch
    %14 = sbr.rel (%p12) target = $region8
  $region5: #{encoder_forward.3} parent=0 // loop_body
    %s16 = ssub.s32 %s11, 1
    %s17 = ssub.s32 %s11, 2
    %s24 = sadd.s32 1, %s19
    %p25 = scmp.ge.s32.totalorder %s24, 1
    %s26 = scalar_select %p25, 0, %s24
    %s27 = sadd.s32 1, %s18
    %s28 = scalar_select %p25, %s27, %s18
    %p29 = scmp.ge.s32.totalorder %s28, 2
    %s30 = scalar_select %p29, 0, %s28
    %s31 = smul.u32 %s19, 2
    %s32 = ssub.s32 0, %s31
    %s33 = smul.u32 %s18, %s32
    %s34 = sadd.s32 %s19, %s33
    %s35 = smul.u32 %s26, 2
    %s36 = ssub.s32 0, %s35
    %s37 = smul.u32 %s30, %s36
    %s38 = sadd.s32 %s26, %s37
    %s39 = ssub.s32 %s18, %s30
    %s40 = ssub.s32 %s34, %s38
    %s41 = sor.u32 %s39, %s40
    %p42 = scmp.eq.s32.totalorder %s41, 0
    %s44 = sadd.s32 %s43, 1
    %s45 = scalar_select %p42, %s43, %s44
    %p48 = pneg %p42
    %p49 = scmp.eq.s32.totalorder %s11, 1
    %p50 = por %p48, %p49
    %p51 = scmp.ne.s32.totalorder %s43, %s46
    %p52 = scmp.eq.s32.totalorder %s11, 0
    %p53 = por %p51, %p52
    %p54 = scmp.ne.s32.totalorder %s43, %s46
    %p55 = scmp.eq.s32.totalorder %s16, 1
    %p56 = por %p54, %p55
    %p57 = scmp.ne.s32.totalorder %s46, %s47
    %p58 = scmp.eq.s32.totalorder %s16, 0
    %p59 = por %p57, %p58
    %p60 = scmp.ne.s32.totalorder %s46, %s47
    %p61 = scmp.eq.s32.totalorder %s17, 1
    %p62 = por %p60, %p61
    %p64 = scmp.ne.s32.totalorder %s47, %s63
    %p65 = scmp.eq.s32.totalorder %s17, 0
    %p66 = por %p64, %p65
    %s67 = ssub.s32 %s18, %s30
    %p68 = scmp.eq.s32.totalorder %s67, 0
    %s70 = sadd.s32 %s69, 1
    %s71 = scalar_select %p68, %s69, %s70
    %p74 = pneg %p68
    %p75 = scmp.eq.s32.totalorder %s11, 1
    %p76 = por %p74, %p75
    %p77 = scmp.ne.s32.totalorder %s69, %s72
    %p78 = scmp.eq.s32.totalorder %s11, 0
    %p79 = por %p77, %p78
    %p80 = scmp.ne.s32.totalorder %s69, %s72
    %p81 = scmp.eq.s32.totalorder %s16, 1
    %p82 = por %p80, %p81
    %p83 = scmp.ne.s32.totalorder %s72, %s73
    %p84 = scmp.eq.s32.totalorder %s16, 0
    %p85 = por %p83, %p84
    %p86 = scmp.ne.s32.totalorder %s72, %s73
    %p87 = scmp.eq.s32.totalorder %s17, 1
    %p88 = por %p86, %p87
    %p90 = scmp.ne.s32.totalorder %s73, %s89
    %p91 = scmp.eq.s32.totalorder %s17, 0
    %p92 = por %p90, %p91
    %s93 = ssub.s32 %s18, %s30
    %p94 = scmp.eq.s32.totalorder %s93, 0
    %s96 = sadd.s32 %s95, 1
    %s97 = scalar_select %p94, %s95, %s96
    %p100 = pneg %p94
    %p101 = scmp.eq.s32.totalorder %s11, 1
    %p102 = por %p100, %p101
    %p103 = scmp.ne.s32.totalorder %s95, %s98
    %p104 = scmp.eq.s32.totalorder %s11, 0
    %p105 = por %p103, %p104
    %p106 = scmp.ne.s32.totalorder %s95, %s98
    %p107 = scmp.eq.s32.totalorder %s16, 1
    %p108 = por %p106, %p107
    %p109 = scmp.ne.s32.totalorder %s98, %s99
    %p110 = scmp.eq.s32.totalorder %s16, 0
    %p111 = por %p109, %p110
    %p112 = scmp.ne.s32.totalorder %s98, %s99
    %p113 = scmp.eq.s32.totalorder %s17, 1
    %p114 = por %p112, %p113
    %p116 = scmp.ne.s32.totalorder %s99, %s115
    %p117 = scmp.eq.s32.totalorder %s17, 0
    %p118 = por %p116, %p117
    %s119 = smul.u32 %s19, 2
    %s120 = ssub.s32 0, %s119
    %s121 = smul.u32 %s18, %s120
    %s122 = sadd.s32 %s19, %s121
    %s123 = smul.u32 %s26, 2
    %s124 = ssub.s32 0, %s123
    %s125 = smul.u32 %s30, %s124
    %s126 = sadd.s32 %s26, %s125
    %s127 = ssub.s32 %s18, %s30
    %s128 = ssub.s32 %s122, %s126
    %s129 = sor.u32 %s127, %s128
    %p130 = scmp.eq.s32.totalorder %s129, 0
    %s132 = sadd.s32 %s131, 1
    %s133 = scalar_select %p130, %s131, %s132
    %p136 = pneg %p130
    %p137 = scmp.eq.s32.totalorder %s11, 1
    %p138 = por %p136, %p137
    %p139 = scmp.ne.s32.totalorder %s131, %s134
    %p140 = scmp.eq.s32.totalorder %s11, 0
    %p141 = por %p139, %p140
    %p142 = scmp.ne.s32.totalorder %s131, %s134
    %p143 = scmp.eq.s32.totalorder %s16, 1
    %p144 = por %p142, %p143
    %p145 = scmp.ne.s32.totalorder %s134, %s135
    %p146 = scmp.eq.s32.totalorder %s16, 0
    %p147 = por %p145, %p146
    %p148 = scmp.ne.s32.totalorder %s134, %s135
    %p149 = scmp.eq.s32.totalorder %s17, 1
    %p150 = por %p148, %p149
    %p152 = scmp.ne.s32.totalorder %s135, %s151
    %p153 = scmp.eq.s32.totalorder %s17, 0
    %p154 = por %p152, %p153
    %s155 = ssub.s32 %s18, %s30
    %p156 = scmp.eq.s32.totalorder %s155, 0
    %s158 = sadd.s32 %s157, 1
    %s159 = scalar_select %p156, %s157, %s158
    %p162 = pneg %p156
    %p163 = scmp.eq.s32.totalorder %s11, 1
    %p164 = por %p162, %p163
    %p165 = scmp.ne.s32.totalorder %s157, %s160
    %p166 = scmp.eq.s32.totalorder %s11, 0
    %p167 = por %p165, %p166
    %p168 = scmp.ne.s32.totalorder %s157, %s160
    %p169 = scmp.eq.s32.totalorder %s16, 1
    %p170 = por %p168, %p169
    %p171 = scmp.ne.s32.totalorder %s160, %s161
    %p172 = scmp.eq.s32.totalorder %s16, 0
    %p173 = por %p171, %p172
    %p174 = scmp.ne.s32.totalorder %s160, %s161
    %p175 = scmp.eq.s32.totalorder %s17, 1
    %p176 = por %p174, %p175
    %p178 = scmp.ne.s32.totalorder %s161, %s177
    %p179 = scmp.eq.s32.totalorder %s17, 0
    %p180 = por %p178, %p179
    %p181 = scmp.le.s32.totalorder 1, %s11
    %p182 = scmp.lt.s32.totalorder %s11, 3
    %p183 = pnand %p181, %p182
    %p184 = pneg %p183
    // Predicated region
    $region9: #{encoder_forward.3} parent=5 // pred_check
      _
    $region10: #{encoder_forward.3} parent=5 // pred_check_branch
      %186 = sbr.rel (%p183) target = $region12
    $region11: #{encoder_forward.3} parent=5 // pred_region
      %s187 = ssub.s32 %s11, 1
    $region12: #{encoder_forward.3} parent=5 // pred_fallthru
      _
    %p188 = scmp.lt.s32.totalorder %s11, 2
    // Predicated region
    $region13: #{encoder_forward.3} parent=5 // pred_check
      %p189 = pneg %p188
    $region14: #{encoder_forward.3} parent=5 // pred_check_branch
      %191 = sbr.rel (%p189) target = $region16
    $region15: #{encoder_forward.3} parent=5 // pred_region
      // Predicated region
      $region17: #{encoder_forward.3} parent=15 // pred_check
        %p192 = pneg %p53
      $region18: #{encoder_forward.3} parent=15 // pred_check_branch
        %194 = sbr.rel (%p192) target = $region20
      $region19: #{encoder_forward.3} parent=15 // pred_region
        %s195 = smul.u32 %s19, 2
        %s196 = ssub.s32 0, %s195
        %s197 = smul.u32 %s18, %s196
        %s198 = sadd.s32 %s19, %s197
        %s199 = smul.u32 8, %s198
        %p200 = scmp.lt.s32.totalorder %s18, 1
        %s201 = scalar_select %p200, %s18, 1
        %p202 = scmp.lt.s32.totalorder %s199, 7
        %s203 = scalar_select %p202, %s199, 7
        %s204 = smul.addr %s203, 3
        %s205 = smul.addr %s201, 24
        %s206 = sadd.s32 %s204, %s205
        %s207 = scalar_lea.vmem %s0, %s206
        %s208 = smul.u32 %s19, 2
        %s209 = ssub.s32 0, %s208
        %s210 = smul.u32 %s18, %s209
        %s211 = sadd.s32 %s19, %s210
        %s212 = smul.u32 8, %s211
      $region20: #{encoder_forward.3} parent=15 // pred_fallthru
        _
      // Predicated region
      $region21: #{encoder_forward.3} parent=15 // pred_check
        %p213 = pneg %p79
      $region22: #{encoder_forward.3} parent=15 // pred_check_branch
        %215 = sbr.rel (%p213) target = $region24
      $region23: #{encoder_forward.3} parent=15 // pred_region
        %p216 = scmp.lt.s32.totalorder %s18, 1
        %s217 = scalar_select %p216, %s18, 1
        %s218 = smul.addr %s217, 12
        %s219 = smul.addr %s218, 4
        %s220 = scalar_lea.vmem %s1, %s219
      $region24: #{encoder_forward.3} parent=15 // pred_fallthru
        _
      // Predicated region
      $region25: #{encoder_forward.3} parent=15 // pred_check
        %p221 = pneg %p105
      $region26: #{encoder_forward.3} parent=15 // pred_check_branch
        %223 = sbr.rel (%p221) target = $region28
      $region27: #{encoder_forward.3} parent=15 // pred_region
        %p224 = scmp.lt.s32.totalorder %s18, 1
        %s225 = scalar_select %p224, %s18, 1
        %s226 = scalar_lea.vmem %s2, %s225
      $region28: #{encoder_forward.3} parent=15 // pred_fallthru
        _
    $region16: #{encoder_forward.3} parent=5 // pred_fallthru
      _
    %p227 = scmp.le.s32.totalorder 1, %s11
    %p228 = scmp.lt.s32.totalorder %s11, 3
    %p229 = pnand %p227, %p228
    %p230 = pneg %p229
    // Predicated region
    $region29: #{encoder_forward.3} parent=5 // pred_check
      _
    $region30: #{encoder_forward.3} parent=5 // pred_check_branch
      %232 = sbr.rel (%p229) target = $region32
    $region31: #{encoder_forward.3} parent=5 // pred_region
      %s233 = ssub.s32 %s11, 1
      %s234 = smul.u32 %s21, 2
      %s235 = ssub.s32 0, %s234
      %s236 = smul.u32 %s20, %s235
      %s237 = sadd.s32 %s21, %s236
      %s238 = smul.u32 8, %s237
      %p239 = scmp.lt.s32.totalorder %s20, 1
      %s240 = scalar_select %p239, %s20, 1
      %p241 = scmp.lt.s32.totalorder %s238, 7
      %s242 = scalar_select %p241, %s238, 7
      %s243 = smul.addr %s242, 3
      %s244 = smul.addr %s240, 24
      %s245 = sadd.s32 %s243, %s244
      %s246 = scalar_lea.vmem %s0, %s245
      %p247 = pneg %p59
      %p248 = pneg %p56
      %p249 = scmp.lt.s32.totalorder %s20, 1
      %s250 = scalar_select %p249, %s20, 1
      %s251 = smul.addr %s250, 12
      %s252 = smul.addr %s251, 4
      %s253 = scalar_lea.vmem %s1, %s252
      %p254 = pneg %p85
      %p255 = pneg %p82
      %p256 = scmp.lt.s32.totalorder %s20, 1
      %s257 = scalar_select %p256, %s20, 1
      %s258 = scalar_lea.vmem %s2, %s257
      %p259 = pneg %p111
      %p260 = pneg %p108
      %p261 = pneg %p147
      %p262 = pneg %p144
      %s263 = smul.u32 %s21, 2
      %s264 = ssub.s32 0, %s263
      %s265 = smul.u32 %s20, %s264
      %s266 = sadd.s32 %s21, %s265
      %s267 = smul.u32 8, %s266
      %p268 = scmp.lt.s32.totalorder %s20, 1
      %s269 = scalar_select %p268, %s20, 1
      %p270 = scmp.lt.s32.totalorder %s267, 7
      %s271 = scalar_select %p270, %s267, 7
      %s272 = smul.addr %s269, 8
      %s273 = sadd.s32 %s271, %s272
      %s274 = smul.addr %s273, 2
      %s275 = scalar_lea.vmem %s3, %s274
      %p276 = pneg %p173
      %p277 = pneg %p170
      %p278 = scmp.lt.s32.totalorder %s20, 1
      %s279 = scalar_select %p278, %s20, 1
      %s280 = smul.addr %s279, 2
      %s281 = scalar_lea.vmem %s4, %s280
      %s282 = smul.u32 %s21, 2
      %s283 = ssub.s32 0, %s282
      %s284 = smul.u32 %s20, %s283
      %s285 = sadd.s32 %s21, %s284
      %s286 = smul.u32 8, %s285
      %p287 = scmp.lt.s32.totalorder %s20, 1
      %s288 = scalar_select %p287, %s20, 1
      %p289 = scmp.lt.s32.totalorder %s286, 7
      %s290 = scalar_select %p289, %s286, 7
      %s291 = smul.addr %s290, 3
      %s292 = smul.addr %s288, 24
      %s293 = sadd.s32 %s291, %s292
      %s294 = scalar_lea.vmem %s0, %s293
      %s295 = smul.u32 %s21, 2
      %s296 = ssub.s32 0, %s295
      %s297 = smul.u32 %s20, %s296
      %s298 = sadd.s32 %s21, %s297
      %s299 = smul.u32 8, %s298
      %p300 = scmp.lt.s32.totalorder %s20, 1
      %s301 = scalar_select %p300, %s20, 1
      %s302 = smul.addr %s301, 12
      %s303 = smul.addr %s302, 4
      %s304 = scalar_lea.vmem %s1, %s303
      %p305 = scmp.lt.s32.totalorder %s20, 1
      %s306 = scalar_select %p305, %s20, 1
      %s307 = scalar_lea.vmem %s2, %s306
      %s308 = smul.u32 %s21, 2
      %s309 = ssub.s32 0, %s308
      %s310 = smul.u32 %s20, %s309
      %s311 = sadd.s32 %s21, %s310
      %s312 = smul.u32 8, %s311
      %p313 = scmp.lt.s32.totalorder %s20, 1
      %s314 = scalar_select %p313, %s20, 1
      %p315 = scmp.lt.s32.totalorder %s312, 7
      %s316 = scalar_select %p315, %s312, 7
      %s317 = smul.addr %s314, 8
      %s318 = sadd.s32 %s316, %s317
      %s319 = smul.addr %s318, 2
      %s320 = scalar_lea.vmem %s3, %s319
      %s321 = smul.u32 %s21, 2
      %s322 = ssub.s32 0, %s321
      %s323 = smul.u32 %s20, %s322
      %s324 = sadd.s32 %s21, %s323
      %s325 = smul.u32 8, %s324
      %p326 = scmp.lt.s32.totalorder %s20, 1
      %s327 = scalar_select %p326, %s20, 1
      %s328 = smul.addr %s327, 2
      %s329 = scalar_lea.vmem %s4, %s328
      %p331 = scmp.eq.s32.totalorder %s21, 0
      // Predicated region
      $region33: #{encoder_forward.3} parent=31 // pred_check
        %p332 = pneg %p331
      $region34: #{encoder_forward.3} parent=31 // pred_check_branch
        %334 = sbr.rel (%p332) target = $region36
      $region35: #{encoder_forward.3} parent=31 // pred_region
        %vm335 = vcmask 254976
        %336 = vst.msk [vmem:[#allocation2] sm:$0x3] %vm335, 0.0
      $region36: #{encoder_forward.3} parent=31 // pred_fallthru
        _
      %v337 = vld [vmem:[%s304] sm:$0xf]
      %v338 = vld [vmem:[%s304 + $0x4] sm:$0xf]
      %v339 = vld [vmem:[%s304 + $0x8] sm:$0xf]
      %v340 = vld [vmem:[%s304 + $0xc] sm:$0xf]
      %s341 = scalar_lea.vmem %s304, 16
      %v342 = vld [vmem:[%s341] sm:$0xf]
      %v343 = vld [vmem:[%s341 + $0x4] sm:$0xf]
      %v344 = vld [vmem:[%s341 + $0x8] sm:$0xf]
      %v345 = vld [vmem:[%s341 + $0xc] sm:$0xf]
      %s346 = scalar_lea.vmem %s304, 32
      %v347 = vld [vmem:[%s346] sm:$0xf]
      %v348 = vld [vmem:[%s346 + $0x4] sm:$0xf]
      %v349 = vld [vmem:[%s346 + $0x8] sm:$0xf]
      %v350 = vld [vmem:[%s346 + $0xc] sm:$0xf]
      %v351 = vld [vmem:[%s307] sm:$0x1]
      %v353 = vperm.slane %v351, 0
      %p355 = scmp.eq.s32.totalorder %s20, 0
      // Predicated region
      $region37: #{encoder_forward.3} parent=31 // pred_check
        %p356 = pneg %p355
      $region38: #{encoder_forward.3} parent=31 // pred_check_branch
        %358 = sbr.rel (%p356) target = $region40
      $region39: #{encoder_forward.3} parent=31 // pred_region
        %v359 = vld [vmem:[#allocation2] sm:$0x3]
        %v360 = vld [vmem:[%s294] sm:$0x1]
        %v361 = vunpack.c.l.bf16 %v360
        %s362 = scalar_lea.vmem %s294, 1
        %v363 = vld [vmem:[%s362] sm:$0x1]
        %v364 = vunpack.c.l.bf16 %v363
        %s365 = scalar_lea.vmem %s294, 2
        %v366 = vld [vmem:[%s365] sm:$0x1]
        %v367 = vunpack.c.l.bf16 %v366
        %v368 = vpack.c.bf16 %v359, %v359
        %v373 = vunpack.c.l.b16 %v337
        %v374 = vunpack.c.l.b16 %v338
        %v375 = vunpack.c.l.b16 %v339
        %v376 = vunpack.c.l.b16 %v340
        %v377 = vpack.c.b16 %v374, %v373
        %v378 = vpack.c.b16 %v376, %v375
        %vm381 = vcmask 261120
        %v383 = vsel %vm381, %v368, 0
        %385 = vmatpush.bf16.msra.mxu0 0
        %386 = vmatpush.bf16.msra.mxu0 0
        %387 = vmatpush.bf16.msra.mxu0 0
        %388 = vmatpush.bf16.msra.mxu0 0
        %389 = vmatpush.bf16.msra.mxu0 0
        %390 = vmatpush.bf16.msra.mxu0 0
        %391 = vmatpush.bf16.msra.mxu0 %v378
        %392 = vmatpush.bf16.msra.mxu0 %v377
        %393 = vmatmul.bf16.gmra.mxu0 %v383
        %v394 = vpop.f32.mrf.mxu0
        %v395 = vadd.f32 0.0, %v394
        %v396 = vpop.f32.mrf.mxu0
        %397 = vdwg.mxu0
        %v402 = vunpack.c.l.b16 %v342
        %v403 = vunpack.c.l.b16 %v343
        %v404 = vunpack.c.l.b16 %v344
        %v405 = vunpack.c.l.b16 %v345
        %v406 = vpack.c.b16 %v403, %v402
        %v407 = vpack.c.b16 %v405, %v404
        %410 = vmatpush.bf16.msra.mxu0 0
        %411 = vmatpush.bf16.msra.mxu0 0
        %412 = vmatpush.bf16.msra.mxu0 0
        %413 = vmatpush.bf16.msra.mxu0 0
        %414 = vmatpush.bf16.msra.mxu0 0
        %415 = vmatpush.bf16.msra.mxu0 0
        %416 = vmatpush.bf16.msra.mxu0 %v407
        %417 = vmatpush.bf16.msra.mxu0 %v406
        %418 = vmatmul.bf16.gmra.mxu0 %v383
        %v419 = vpop.f32.mrf.mxu0
        %v420 = vadd.f32 0.0, %v419
        %v421 = vpop.f32.mrf.mxu0
        %422 = vdwg.mxu0
        %v423 = vadd.f32 %v361, %v395
        %v424 = vxor.u32 %v423, 2147483648
        %v425 = vmul.f32 %v424, 1.442695
        %v426 = vpow.pop %v425
        %v427 = vadd.f32 %v426, 1.0
        %v428 = vrcp.pop %v427
        %v429 = vmul.f32 %v427, %v428
        %v430 = vsub.f32 1.0, %v429
        %v431 = vmul.f32 %v428, %v430
        %v432 = vadd.f32 %v428, %v431
        %vm433 = vweird.f32 %v427
        %vm434 = vweird.f32 %v428
        %vm435 = vmor %vm433, %vm434
        %v436 = vsel %vm435, %v428, %v432
        %v437 = vand.u32 2147483647, %v427
        %vm438 = vcmp.eq.f32.partialorder %v437, 8.507059e+37
        %v439 = vand.u32 %v427, 2147483648
        %v440 = vor.u32 1.1754944e-38, %v439
        %v441 = vsel %vm438, %v440, %v436
        %v442 = vmul.f32 1.0, %v441
        %v443 = vadd.f32 %v364, %v420
        %v444 = vxor.u32 %v443, 2147483648
        %v445 = vmul.f32 %v444, 1.442695
        %v446 = vpow.pop %v445
        %v447 = vadd.f32 %v446, 1.0
        %v448 = vrcp.pop %v447
        %v449 = vmul.f32 %v447, %v448
        %v450 = vsub.f32 1.0, %v449
        %v451 = vmul.f32 %v448, %v450
        %v452 = vadd.f32 %v448, %v451
        %vm453 = vweird.f32 %v447
        %vm454 = vweird.f32 %v448
        %vm455 = vmor %vm453, %vm454
        %v456 = vsel %vm455, %v448, %v452
        %v457 = vand.u32 2147483647, %v447
        %vm458 = vcmp.eq.f32.partialorder %v457, 8.507059e+37
        %v459 = vand.u32 %v447, 2147483648
        %v460 = vor.u32 1.1754944e-38, %v459
        %v461 = vsel %vm458, %v460, %v456
        %v462 = vmul.f32 1.0, %v461
        %v467 = vunpack.c.l.b16 %v347
        %v468 = vunpack.c.l.b16 %v348
        %v469 = vunpack.c.l.b16 %v349
        %v470 = vunpack.c.l.b16 %v350
        %v471 = vpack.c.b16 %v468, %v467
        %v472 = vpack.c.b16 %v470, %v469
        %475 = vmatpush.bf16.msra.mxu0 0
        %476 = vmatpush.bf16.msra.mxu0 0
        %477 = vmatpush.bf16.msra.mxu0 0
        %478 = vmatpush.bf16.msra.mxu0 0
        %479 = vmatpush.bf16.msra.mxu0 0
        %480 = vmatpush.bf16.msra.mxu0 0
        %481 = vmatpush.bf16.msra.mxu0 %v472
        %482 = vmatpush.bf16.msra.mxu0 %v471
        %483 = vmatmul.bf16.gmra.mxu0 %v383
        %v484 = vpop.f32.mrf.mxu0
        %v485 = vadd.f32 %v353, %v484
        %v486 = vpop.f32.mrf.mxu0
        %487 = vdwg.mxu0
        %v488 = vmul.f32 %v442, %v485
        %v489 = vadd.f32 %v367, %v488
        %v490 = vtanh.pop %v489
        %v491 = vsub.f32 %v359, %v490
        %v492 = vmul.f32 %v462, %v491
        %v493 = vadd.f32 %v490, %v492
        %vm494 = vcmask 254976
        %495 = vst.msk [vmem:[%s320] sm:$0x3] %vm494, %v493
        %s496 = scalar_lea.vmem %s294, 3
        %v497 = vld [vmem:[%s496] sm:$0x1]
        %v498 = vunpack.c.l.bf16 %v497
        %s499 = scalar_lea.vmem %s294, 4
        %v500 = vld [vmem:[%s499] sm:$0x1]
        %v501 = vunpack.c.l.bf16 %v500
        %s502 = scalar_lea.vmem %s294, 5
        %v503 = vld [vmem:[%s502] sm:$0x1]
        %v504 = vunpack.c.l.bf16 %v503
        %v505 = vpack.c.bf16 %v493, %v493
        %v507 = vsel %vm381, %v505, 0
        %509 = vmatpush.bf16.msra.mxu0 0
        %510 = vmatpush.bf16.msra.mxu0 0
        %511 = vmatpush.bf16.msra.mxu0 0
        %512 = vmatpush.bf16.msra.mxu0 0
        %513 = vmatpush.bf16.msra.mxu0 0
        %514 = vmatpush.bf16.msra.mxu0 0
        %515 = vmatpush.bf16.msra.mxu0 %v378
        %516 = vmatpush.bf16.msra.mxu0 %v377
        %517 = vmatmul.bf16.gmra.mxu0 %v507
        %v518 = vpop.f32.mrf.mxu0
        %v519 = vadd.f32 0.0, %v518
        %v520 = vpop.f32.mrf.mxu0
        %521 = vdwg.mxu0
        %522 = vmatpush.bf16.msra.mxu0 0
        %523 = vmatpush.bf16.msra.mxu0 0
        %524 = vmatpush.bf16.msra.mxu0 0
        %525 = vmatpush.bf16.msra.mxu0 0
        %526 = vmatpush.bf16.msra.mxu0 0
        %527 = vmatpush.bf16.msra.mxu0 0
        %528 = vmatpush.bf16.msra.mxu0 %v407
        %529 = vmatpush.bf16.msra.mxu0 %v406
        %530 = vmatmul.bf16.gmra.mxu0 %v507
        %v531 = vpop.f32.mrf.mxu0
        %v532 = vadd.f32 0.0, %v531
        %v533 = vpop.f32.mrf.mxu0
        %534 = vdwg.mxu0
        %v535 = vadd.f32 %v498, %v519
        %v536 = vxor.u32 %v535, 2147483648
        %v537 = vmul.f32 %v536, 1.442695
        %v538 = vpow.pop %v537
        %v539 = vadd.f32 %v538, 1.0
        %v540 = vrcp.pop %v539
        %v541 = vmul.f32 %v539, %v540
        %v542 = vsub.f32 1.0, %v541
        %v543 = vmul.f32 %v540, %v542
        %v544 = vadd.f32 %v540, %v543
        %vm545 = vweird.f32 %v539
        %vm546 = vweird.f32 %v540
        %vm547 = vmor %vm545, %vm546
        %v548 = vsel %vm547, %v540, %v544
        %v549 = vand.u32 2147483647, %v539
        %vm550 = vcmp.eq.f32.partialorder %v549, 8.507059e+37
        %v551 = vand.u32 %v539, 2147483648
        %v552 = vor.u32 1.1754944e-38, %v551
        %v553 = vsel %vm550, %v552, %v548
        %v554 = vmul.f32 1.0, %v553
        %v555 = vadd.f32 %v501, %v532
        %v556 = vxor.u32 %v555, 2147483648
        %v557 = vmul.f32 %v556, 1.442695
        %v558 = vpow.pop %v557
        %v559 = vadd.f32 %v558, 1.0
        %v560 = vrcp.pop %v559
        %v561 = vmul.f32 %v559, %v560
        %v562 = vsub.f32 1.0, %v561
        %v563 = vmul.f32 %v560, %v562
        %v564 = vadd.f32 %v560, %v563
        %vm565 = vweird.f32 %v559
        %vm566 = vweird.f32 %v560
        %vm567 = vmor %vm565, %vm566
        %v568 = vsel %vm567, %v560, %v564
        %v569 = vand.u32 2147483647, %v559
        %vm570 = vcmp.eq.f32.partialorder %v569, 8.507059e+37
        %v571 = vand.u32 %v559, 2147483648
        %v572 = vor.u32 1.1754944e-38, %v571
        %v573 = vsel %vm570, %v572, %v568
        %v574 = vmul.f32 1.0, %v573
        %575 = vmatpush.bf16.msra.mxu0 0
        %576 = vmatpush.bf16.msra.mxu0 0
        %577 = vmatpush.bf16.msra.mxu0 0
        %578 = vmatpush.bf16.msra.mxu0 0
        %579 = vmatpush.bf16.msra.mxu0 0
        %580 = vmatpush.bf16.msra.mxu0 0
        %581 = vmatpush.bf16.msra.mxu0 %v472
        %582 = vmatpush.bf16.msra.mxu0 %v471
        %583 = vmatmul.bf16.gmra.mxu0 %v507
        %v584 = vpop.f32.mrf.mxu0
        %v585 = vadd.f32 %v353, %v584
        %v586 = vpop.f32.mrf.mxu0
        %587 = vdwg.mxu0
        %v588 = vmul.f32 %v554, %v585
        %v589 = vadd.f32 %v504, %v588
        %v590 = vtanh.pop %v589
        %v591 = vsub.f32 %v493, %v590
        %v592 = vmul.f32 %v574, %v591
        %v593 = vadd.f32 %v590, %v592
        %s594 = scalar_lea.vmem %s320, 2
        %595 = vst.msk [vmem:[%s594] sm:$0x3] %vm494, %v593
        %s596 = scalar_lea.vmem %s294, 6
        %v597 = vld [vmem:[%s596] sm:$0x1]
        %v598 = vunpack.c.l.bf16 %v597
        %s599 = scalar_lea.vmem %s294, 7
        %v600 = vld [vmem:[%s599] sm:$0x1]
        %v601 = vunpack.c.l.bf16 %v600
        %s602 = scalar_lea.vmem %s294, 8
        %v603 = vld [vmem:[%s602] sm:$0x1]
        %v604 = vunpack.c.l.bf16 %v603
        %v605 = vpack.c.bf16 %v593, %v593
        %v607 = vsel %vm381, %v605, 0
        %609 = vmatpush.bf16.msra.mxu0 0
        %610 = vmatpush.bf16.msra.mxu0 0
        %611 = vmatpush.bf16.msra.mxu0 0
        %612 = vmatpush.bf16.msra.mxu0 0
        %613 = vmatpush.bf16.msra.mxu0 0
        %614 = vmatpush.bf16.msra.mxu0 0
        %615 = vmatpush.bf16.msra.mxu0 %v378
        %616 = vmatpush.bf16.msra.mxu0 %v377
        %617 = vmatmul.bf16.gmra.mxu0 %v607
        %v618 = vpop.f32.mrf.mxu0
        %v619 = vadd.f32 0.0, %v618
        %v620 = vpop.f32.mrf.mxu0
        %621 = vdwg.mxu0
        %622 = vmatpush.bf16.msra.mxu0 0
        %623 = vmatpush.bf16.msra.mxu0 0
        %624 = vmatpush.bf16.msra.mxu0 0
        %625 = vmatpush.bf16.msra.mxu0 0
        %626 = vmatpush.bf16.msra.mxu0 0
        %627 = vmatpush.bf16.msra.mxu0 0
        %628 = vmatpush.bf16.msra.mxu0 %v407
        %629 = vmatpush.bf16.msra.mxu0 %v406
        %630 = vmatmul.bf16.gmra.mxu0 %v607
        %v631 = vpop.f32.mrf.mxu0
        %v632 = vadd.f32 0.0, %v631
        %v633 = vpop.f32.mrf.mxu0
        %634 = vdwg.mxu0
        %v635 = vadd.f32 %v598, %v619
        %v636 = vxor.u32 %v635, 2147483648
        %v637 = vmul.f32 %v636, 1.442695
        %v638 = vpow.pop %v637
        %v639 = vadd.f32 %v638, 1.0
        %v640 = vrcp.pop %v639
        %v641 = vmul.f32 %v639, %v640
        %v642 = vsub.f32 1.0, %v641
        %v643 = vmul.f32 %v640, %v642
        %v644 = vadd.f32 %v640, %v643
        %vm645 = vweird.f32 %v639
        %vm646 = vweird.f32 %v640
        %vm647 = vmor %vm645, %vm646
        %v648 = vsel %vm647, %v640, %v644
        %v649 = vand.u32 2147483647, %v639
        %vm650 = vcmp.eq.f32.partialorder %v649, 8.507059e+37
        %v651 = vand.u32 %v639, 2147483648
        %v652 = vor.u32 1.1754944e-38, %v651
        %v653 = vsel %vm650, %v652, %v648
        %v654 = vmul.f32 1.0, %v653
        %v655 = vadd.f32 %v601, %v632
        %v656 = vxor.u32 %v655, 2147483648
        %v657 = vmul.f32 %v656, 1.442695
        %v658 = vpow.pop %v657
        %v659 = vadd.f32 %v658, 1.0
        %v660 = vrcp.pop %v659
        %v661 = vmul.f32 %v659, %v660
        %v662 = vsub.f32 1.0, %v661
        %v663 = vmul.f32 %v660, %v662
        %v664 = vadd.f32 %v660, %v663
        %vm665 = vweird.f32 %v659
        %vm666 = vweird.f32 %v660
        %vm667 = vmor %vm665, %vm666
        %v668 = vsel %vm667, %v660, %v664
        %v669 = vand.u32 2147483647, %v659
        %vm670 = vcmp.eq.f32.partialorder %v669, 8.507059e+37
        %v671 = vand.u32 %v659, 2147483648
        %v672 = vor.u32 1.1754944e-38, %v671
        %v673 = vsel %vm670, %v672, %v668
        %v674 = vmul.f32 1.0, %v673
        %675 = vmatpush.bf16.msra.mxu0 0
        %676 = vmatpush.bf16.msra.mxu0 0
        %677 = vmatpush.bf16.msra.mxu0 0
        %678 = vmatpush.bf16.msra.mxu0 0
        %679 = vmatpush.bf16.msra.mxu0 0
        %680 = vmatpush.bf16.msra.mxu0 0
        %681 = vmatpush.bf16.msra.mxu0 %v472
        %682 = vmatpush.bf16.msra.mxu0 %v471
        %683 = vmatmul.bf16.gmra.mxu0 %v607
        %v684 = vpop.f32.mrf.mxu0
        %v685 = vadd.f32 %v353, %v684
        %v686 = vpop.f32.mrf.mxu0
        %687 = vdwg.mxu0
        %v688 = vmul.f32 %v654, %v685
        %v689 = vadd.f32 %v604, %v688
        %v690 = vtanh.pop %v689
        %v691 = vsub.f32 %v593, %v690
        %v692 = vmul.f32 %v674, %v691
        %v693 = vadd.f32 %v690, %v692
        %s694 = scalar_lea.vmem %s320, 4
        %695 = vst.msk [vmem:[%s694] sm:$0x3] %vm494, %v693
        %s696 = scalar_lea.vmem %s294, 9
        %v697 = vld [vmem:[%s696] sm:$0x1]
        %v698 = vunpack.c.l.bf16 %v697
        %s699 = scalar_lea.vmem %s294, 10
        %v700 = vld [vmem:[%s699] sm:$0x1]
        %v701 = vunpack.c.l.bf16 %v700
        %s702 = scalar_lea.vmem %s294, 11
        %v703 = vld [vmem:[%s702] sm:$0x1]
        %v704 = vunpack.c.l.bf16 %v703
        %v705 = vpack.c.bf16 %v693, %v693
        %v707 = vsel %vm381, %v705, 0
        %709 = vmatpush.bf16.msra.mxu0 0
        %710 = vmatpush.bf16.msra.mxu0 0
        %711 = vmatpush.bf16.msra.mxu0 0
        %712 = vmatpush.bf16.msra.mxu0 0
        %713 = vmatpush.bf16.msra.mxu0 0
        %714 = vmatpush.bf16.msra.mxu0 0
        %715 = vmatpush.bf16.msra.mxu0 %v378
        %716 = vmatpush.bf16.msra.mxu0 %v377
        %717 = vmatmul.bf16.gmra.mxu0 %v707
        %v718 = vpop.f32.mrf.mxu0
        %v719 = vadd.f32 0.0, %v718
        %v720 = vpop.f32.mrf.mxu0
        %721 = vdwg.mxu0
        %722 = vmatpush.bf16.msra.mxu0 0
        %723 = vmatpush.bf16.msra.mxu0 0
        %724 = vmatpush.bf16.msra.mxu0 0
        %725 = vmatpush.bf16.msra.mxu0 0
        %726 = vmatpush.bf16.msra.mxu0 0
        %727 = vmatpush.bf16.msra.mxu0 0
        %728 = vmatpush.bf16.msra.mxu0 %v407
        %729 = vmatpush.bf16.msra.mxu0 %v406
        %730 = vmatmul.bf16.gmra.mxu0 %v707
        %v731 = vpop.f32.mrf.mxu0
        %v732 = vadd.f32 0.0, %v731
        %v733 = vpop.f32.mrf.mxu0
        %734 = vdwg.mxu0
        %v735 = vadd.f32 %v698, %v719
        %v736 = vxor.u32 %v735, 2147483648
        %v737 = vmul.f32 %v736, 1.442695
        %v738 = vpow.pop %v737
        %v739 = vadd.f32 %v738, 1.0
        %v740 = vrcp.pop %v739
        %v741 = vmul.f32 %v739, %v740
        %v742 = vsub.f32 1.0, %v741
        %v743 = vmul.f32 %v740, %v742
        %v744 = vadd.f32 %v740, %v743
        %vm745 = vweird.f32 %v739
        %vm746 = vweird.f32 %v740
        %vm747 = vmor %vm745, %vm746
        %v748 = vsel %vm747, %v740, %v744
        %v749 = vand.u32 2147483647, %v739
        %vm750 = vcmp.eq.f32.partialorder %v749, 8.507059e+37
        %v751 = vand.u32 %v739, 2147483648
        %v752 = vor.u32 1.1754944e-38, %v751
        %v753 = vsel %vm750, %v752, %v748
        %v754 = vmul.f32 1.0, %v753
        %v755 = vadd.f32 %v701, %v732
        %v756 = vxor.u32 %v755, 2147483648
        %v757 = vmul.f32 %v756, 1.442695
        %v758 = vpow.pop %v757
        %v759 = vadd.f32 %v758, 1.0
        %v760 = vrcp.pop %v759
        %v761 = vmul.f32 %v759, %v760
        %v762 = vsub.f32 1.0, %v761
        %v763 = vmul.f32 %v760, %v762
        %v764 = vadd.f32 %v760, %v763
        %vm765 = vweird.f32 %v759
        %vm766 = vweird.f32 %v760
        %vm767 = vmor %vm765, %vm766
        %v768 = vsel %vm767, %v760, %v764
        %v769 = vand.u32 2147483647, %v759
        %vm770 = vcmp.eq.f32.partialorder %v769, 8.507059e+37
        %v771 = vand.u32 %v759, 2147483648
        %v772 = vor.u32 1.1754944e-38, %v771
        %v773 = vsel %vm770, %v772, %v768
        %v774 = vmul.f32 1.0, %v773
        %775 = vmatpush.bf16.msra.mxu0 0
        %776 = vmatpush.bf16.msra.mxu0 0
        %777 = vmatpush.bf16.msra.mxu0 0
        %778 = vmatpush.bf16.msra.mxu0 0
        %779 = vmatpush.bf16.msra.mxu0 0
        %780 = vmatpush.bf16.msra.mxu0 0
        %781 = vmatpush.bf16.msra.mxu0 %v472
        %782 = vmatpush.bf16.msra.mxu0 %v471
        %783 = vmatmul.bf16.gmra.mxu0 %v707
        %v784 = vpop.f32.mrf.mxu0
        %v785 = vadd.f32 %v353, %v784
        %v786 = vpop.f32.mrf.mxu0
        %787 = vdwg.mxu0
        %v788 = vmul.f32 %v754, %v785
        %v789 = vadd.f32 %v704, %v788
        %v790 = vtanh.pop %v789
        %v791 = vsub.f32 %v693, %v790
        %v792 = vmul.f32 %v774, %v791
        %v793 = vadd.f32 %v790, %v792
        %s794 = scalar_lea.vmem %s320, 6
        %795 = vst.msk [vmem:[%s794] sm:$0x3] %vm494, %v793
        %s796 = scalar_lea.vmem %s294, 12
        %v797 = vld [vmem:[%s796] sm:$0x1]
        %v798 = vunpack.c.l.bf16 %v797
        %s799 = scalar_lea.vmem %s294, 13
        %v800 = vld [vmem:[%s799] sm:$0x1]
        %v801 = vunpack.c.l.bf16 %v800
        %s802 = scalar_lea.vmem %s294, 14
        %v803 = vld [vmem:[%s802] sm:$0x1]
        %v804 = vunpack.c.l.bf16 %v803
        %v805 = vpack.c.bf16 %v793, %v793
        %v807 = vsel %vm381, %v805, 0
        %809 = vmatpush.bf16.msra.mxu0 0
        %810 = vmatpush.bf16.msra.mxu0 0
        %811 = vmatpush.bf16.msra.mxu0 0
        %812 = vmatpush.bf16.msra.mxu0 0
        %813 = vmatpush.bf16.msra.mxu0 0
        %814 = vmatpush.bf16.msra.mxu0 0
        %815 = vmatpush.bf16.msra.mxu0 %v378
        %816 = vmatpush.bf16.msra.mxu0 %v377
        %817 = vmatmul.bf16.gmra.mxu0 %v807
        %v818 = vpop.f32.mrf.mxu0
        %v819 = vadd.f32 0.0, %v818
        %v820 = vpop.f32.mrf.mxu0
        %821 = vdwg.mxu0
        %822 = vmatpush.bf16.msra.mxu0 0
        %823 = vmatpush.bf16.msra.mxu0 0
        %824 = vmatpush.bf16.msra.mxu0 0
        %825 = vmatpush.bf16.msra.mxu0 0
        %826 = vmatpush.bf16.msra.mxu0 0
        %827 = vmatpush.bf16.msra.mxu0 0
        %828 = vmatpush.bf16.msra.mxu0 %v407
        %829 = vmatpush.bf16.msra.mxu0 %v406
        %830 = vmatmul.bf16.gmra.mxu0 %v807
        %v831 = vpop.f32.mrf.mxu0
        %v832 = vadd.f32 0.0, %v831
        %v833 = vpop.f32.mrf.mxu0
        %834 = vdwg.mxu0
        %v835 = vadd.f32 %v798, %v819
        %v836 = vxor.u32 %v835, 2147483648
        %v837 = vmul.f32 %v836, 1.442695
        %v838 = vpow.pop %v837
        %v839 = vadd.f32 %v838, 1.0
        %v840 = vrcp.pop %v839
        %v841 = vmul.f32 %v839, %v840
        %v842 = vsub.f32 1.0, %v841
        %v843 = vmul.f32 %v840, %v842
        %v844 = vadd.f32 %v840, %v843
        %vm845 = vweird.f32 %v839
        %vm846 = vweird.f32 %v840
        %vm847 = vmor %vm845, %vm846
        %v848 = vsel %vm847, %v840, %v844
        %v849 = vand.u32 2147483647, %v839
        %vm850 = vcmp.eq.f32.partialorder %v849, 8.507059e+37
        %v851 = vand.u32 %v839, 2147483648
        %v852 = vor.u32 1.1754944e-38, %v851
        %v853 = vsel %vm850, %v852, %v848
        %v854 = vmul.f32 1.0, %v853
        %v855 = vadd.f32 %v801, %v832
        %v856 = vxor.u32 %v855, 2147483648
        %v857 = vmul.f32 %v856, 1.442695
        %v858 = vpow.pop %v857
        %v859 = vadd.f32 %v858, 1.0
        %v860 = vrcp.pop %v859
        %v861 = vmul.f32 %v859, %v860
        %v862 = vsub.f32 1.0, %v861
        %v863 = vmul.f32 %v860, %v862
        %v864 = vadd.f32 %v860, %v863
        %vm865 = vweird.f32 %v859
        %vm866 = vweird.f32 %v860
        %vm867 = vmor %vm865, %vm866
        %v868 = vsel %vm867, %v860, %v864
        %v869 = vand.u32 2147483647, %v859
        %vm870 = vcmp.eq.f32.partialorder %v869, 8.507059e+37
        %v871 = vand.u32 %v859, 2147483648
        %v872 = vor.u32 1.1754944e-38, %v871
        %v873 = vsel %vm870, %v872, %v868
        %v874 = vmul.f32 1.0, %v873
        %875 = vmatpush.bf16.msra.mxu0 0
        %876 = vmatpush.bf16.msra.mxu0 0
        %877 = vmatpush.bf16.msra.mxu0 0
        %878 = vmatpush.bf16.msra.mxu0 0
        %879 = vmatpush.bf16.msra.mxu0 0
        %880 = vmatpush.bf16.msra.mxu0 0
        %881 = vmatpush.bf16.msra.mxu0 %v472
        %882 = vmatpush.bf16.msra.mxu0 %v471
        %883 = vmatmul.bf16.gmra.mxu0 %v807
        %v884 = vpop.f32.mrf.mxu0
        %v885 = vadd.f32 %v353, %v884
        %v886 = vpop.f32.mrf.mxu0
        %887 = vdwg.mxu0
        %v888 = vmul.f32 %v854, %v885
        %v889 = vadd.f32 %v804, %v888
        %v890 = vtanh.pop %v889
        %v891 = vsub.f32 %v793, %v890
        %v892 = vmul.f32 %v874, %v891
        %v893 = vadd.f32 %v890, %v892
        %s894 = scalar_lea.vmem %s320, 8
        %895 = vst.msk [vmem:[%s894] sm:$0x3] %vm494, %v893
        %s896 = scalar_lea.vmem %s294, 15
        %v897 = vld [vmem:[%s896] sm:$0x1]
        %v898 = vunpack.c.l.bf16 %v897
        %s899 = scalar_lea.vmem %s294, 16
        %v900 = vld [vmem:[%s899] sm:$0x1]
        %v901 = vunpack.c.l.bf16 %v900
        %s902 = scalar_lea.vmem %s294, 17
        %v903 = vld [vmem:[%s902] sm:$0x1]
        %v904 = vunpack.c.l.bf16 %v903
        %v905 = vpack.c.bf16 %v893, %v893
        %v907 = vsel %vm381, %v905, 0
        %909 = vmatpush.bf16.msra.mxu0 0
        %910 = vmatpush.bf16.msra.mxu0 0
        %911 = vmatpush.bf16.msra.mxu0 0
        %912 = vmatpush.bf16.msra.mxu0 0
        %913 = vmatpush.bf16.msra.mxu0 0
        %914 = vmatpush.bf16.msra.mxu0 0
        %915 = vmatpush.bf16.msra.mxu0 %v378
        %916 = vmatpush.bf16.msra.mxu0 %v377
        %917 = vmatmul.bf16.gmra.mxu0 %v907
        %v918 = vpop.f32.mrf.mxu0
        %v919 = vadd.f32 0.0, %v918
        %v920 = vpop.f32.mrf.mxu0
        %921 = vdwg.mxu0
        %922 = vmatpush.bf16.msra.mxu0 0
        %923 = vmatpush.bf16.msra.mxu0 0
        %924 = vmatpush.bf16.msra.mxu0 0
        %925 = vmatpush.bf16.msra.mxu0 0
        %926 = vmatpush.bf16.msra.mxu0 0
        %927 = vmatpush.bf16.msra.mxu0 0
        %928 = vmatpush.bf16.msra.mxu0 %v407
        %929 = vmatpush.bf16.msra.mxu0 %v406
        %930 = vmatmul.bf16.gmra.mxu0 %v907
        %v931 = vpop.f32.mrf.mxu0
        %v932 = vadd.f32 0.0, %v931
        %v933 = vpop.f32.mrf.mxu0
        %934 = vdwg.mxu0
        %v935 = vadd.f32 %v898, %v919
        %v936 = vxor.u32 %v935, 2147483648
        %v937 = vmul.f32 %v936, 1.442695
        %v938 = vpow.pop %v937
        %v939 = vadd.f32 %v938, 1.0
        %v940 = vrcp.pop %v939
        %v941 = vmul.f32 %v939, %v940
        %v942 = vsub.f32 1.0, %v941
        %v943 = vmul.f32 %v940, %v942
        %v944 = vadd.f32 %v940, %v943
        %vm945 = vweird.f32 %v939
        %vm946 = vweird.f32 %v940
        %vm947 = vmor %vm945, %vm946
        %v948 = vsel %vm947, %v940, %v944
        %v949 = vand.u32 2147483647, %v939
        %vm950 = vcmp.eq.f32.partialorder %v949, 8.507059e+37
        %v951 = vand.u32 %v939, 2147483648
        %v952 = vor.u32 1.1754944e-38, %v951
        %v953 = vsel %vm950, %v952, %v948
        %v954 = vmul.f32 1.0, %v953
        %v955 = vadd.f32 %v901, %v932
        %v956 = vxor.u32 %v955, 2147483648
        %v957 = vmul.f32 %v956, 1.442695
        %v958 = vpow.pop %v957
        %v959 = vadd.f32 %v958, 1.0
        %v960 = vrcp.pop %v959
        %v961 = vmul.f32 %v959, %v960
        %v962 = vsub.f32 1.0, %v961
        %v963 = vmul.f32 %v960, %v962
        %v964 = vadd.f32 %v960, %v963
        %vm965 = vweird.f32 %v959
        %vm966 = vweird.f32 %v960
        %vm967 = vmor %vm965, %vm966
        %v968 = vsel %vm967, %v960, %v964
        %v969 = vand.u32 2147483647, %v959
        %vm970 = vcmp.eq.f32.partialorder %v969, 8.507059e+37
        %v971 = vand.u32 %v959, 2147483648
        %v972 = vor.u32 1.1754944e-38, %v971
        %v973 = vsel %vm970, %v972, %v968
        %v974 = vmul.f32 1.0, %v973
        %975 = vmatpush.bf16.msra.mxu0 0
        %976 = vmatpush.bf16.msra.mxu0 0
        %977 = vmatpush.bf16.msra.mxu0 0
        %978 = vmatpush.bf16.msra.mxu0 0
        %979 = vmatpush.bf16.msra.mxu0 0
        %980 = vmatpush.bf16.msra.mxu0 0
        %981 = vmatpush.bf16.msra.mxu0 %v472
        %982 = vmatpush.bf16.msra.mxu0 %v471
        %983 = vmatmul.bf16.gmra.mxu0 %v907
        %v984 = vpop.f32.mrf.mxu0
        %v985 = vadd.f32 %v353, %v984
        %v986 = vpop.f32.mrf.mxu0
        %987 = vdwg.mxu0
        %v988 = vmul.f32 %v954, %v985
        %v989 = vadd.f32 %v904, %v988
        %v990 = vtanh.pop %v989
        %v991 = vsub.f32 %v893, %v990
        %v992 = vmul.f32 %v974, %v991
        %v993 = vadd.f32 %v990, %v992
        %s994 = scalar_lea.vmem %s320, 10
        %995 = vst.msk [vmem:[%s994] sm:$0x3] %vm494, %v993
        %s996 = scalar_lea.vmem %s294, 18
        %v997 = vld [vmem:[%s996] sm:$0x1]
        %v998 = vunpack.c.l.bf16 %v997
        %s999 = scalar_lea.vmem %s294, 19
        %v1000 = vld [vmem:[%s999] sm:$0x1]
        %v1001 = vunpack.c.l.bf16 %v1000
        %s1002 = scalar_lea.vmem %s294, 20
        %v1003 = vld [vmem:[%s1002] sm:$0x1]
        %v1004 = vunpack.c.l.bf16 %v1003
        %v1005 = vpack.c.bf16 %v993, %v993
        %v1007 = vsel %vm381, %v1005, 0
        %1009 = vmatpush.bf16.msra.mxu0 0
        %1010 = vmatpush.bf16.msra.mxu0 0
        %1011 = vmatpush.bf16.msra.mxu0 0
        %1012 = vmatpush.bf16.msra.mxu0 0
        %1013 = vmatpush.bf16.msra.mxu0 0
        %1014 = vmatpush.bf16.msra.mxu0 0
        %1015 = vmatpush.bf16.msra.mxu0 %v378
        %1016 = vmatpush.bf16.msra.mxu0 %v377
        %1017 = vmatmul.bf16.gmra.mxu0 %v1007
        %v1018 = vpop.f32.mrf.mxu0
        %v1019 = vadd.f32 0.0, %v1018
        %v1020 = vpop.f32.mrf.mxu0
        %1021 = vdwg.mxu0
        %1022 = vmatpush.bf16.msra.mxu0 0
        %1023 = vmatpush.bf16.msra.mxu0 0
        %1024 = vmatpush.bf16.msra.mxu0 0
        %1025 = vmatpush.bf16.msra.mxu0 0
        %1026 = vmatpush.bf16.msra.mxu0 0
        %1027 = vmatpush.bf16.msra.mxu0 0
        %1028 = vmatpush.bf16.msra.mxu0 %v407
        %1029 = vmatpush.bf16.msra.mxu0 %v406
        %1030 = vmatmul.bf16.gmra.mxu0 %v1007
        %v1031 = vpop.f32.mrf.mxu0
        %v1032 = vadd.f32 0.0, %v1031
        %v1033 = vpop.f32.mrf.mxu0
        %1034 = vdwg.mxu0
        %v1035 = vadd.f32 %v998, %v1019
        %v1036 = vxor.u32 %v1035, 2147483648
        %v1037 = vmul.f32 %v1036, 1.442695
        %v1038 = vpow.pop %v1037
        %v1039 = vadd.f32 %v1038, 1.0
        %v1040 = vrcp.pop %v1039
        %v1041 = vmul.f32 %v1039, %v1040
        %v1042 = vsub.f32 1.0, %v1041
        %v1043 = vmul.f32 %v1040, %v1042
        %v1044 = vadd.f32 %v1040, %v1043
        %vm1045 = vweird.f32 %v1039
        %vm1046 = vweird.f32 %v1040
        %vm1047 = vmor %vm1045, %vm1046
        %v1048 = vsel %vm1047, %v1040, %v1044
        %v1049 = vand.u32 2147483647, %v1039
        %vm1050 = vcmp.eq.f32.partialorder %v1049, 8.507059e+37
        %v1051 = vand.u32 %v1039, 2147483648
        %v1052 = vor.u32 1.1754944e-38, %v1051
        %v1053 = vsel %vm1050, %v1052, %v1048
        %v1054 = vmul.f32 1.0, %v1053
        %v1055 = vadd.f32 %v1001, %v1032
        %v1056 = vxor.u32 %v1055, 2147483648
        %v1057 = vmul.f32 %v1056, 1.442695
        %v1058 = vpow.pop %v1057
        %v1059 = vadd.f32 %v1058, 1.0
        %v1060 = vrcp.pop %v1059
        %v1061 = vmul.f32 %v1059, %v1060
        %v1062 = vsub.f32 1.0, %v1061
        %v1063 = vmul.f32 %v1060, %v1062
        %v1064 = vadd.f32 %v1060, %v1063
        %vm1065 = vweird.f32 %v1059
        %vm1066 = vweird.f32 %v1060
        %vm1067 = vmor %vm1065, %vm1066
        %v1068 = vsel %vm1067, %v1060, %v1064
        %v1069 = vand.u32 2147483647, %v1059
        %vm1070 = vcmp.eq.f32.partialorder %v1069, 8.507059e+37
        %v1071 = vand.u32 %v1059, 2147483648
        %v1072 = vor.u32 1.1754944e-38, %v1071
        %v1073 = vsel %vm1070, %v1072, %v1068
        %v1074 = vmul.f32 1.0, %v1073
        %1075 = vmatpush.bf16.msra.mxu0 0
        %1076 = vmatpush.bf16.msra.mxu0 0
        %1077 = vmatpush.bf16.msra.mxu0 0
        %1078 = vmatpush.bf16.msra.mxu0 0
        %1079 = vmatpush.bf16.msra.mxu0 0
        %1080 = vmatpush.bf16.msra.mxu0 0
        %1081 = vmatpush.bf16.msra.mxu0 %v472
        %1082 = vmatpush.bf16.msra.mxu0 %v471
        %1083 = vmatmul.bf16.gmra.mxu0 %v1007
        %v1084 = vpop.f32.mrf.mxu0
        %v1085 = vadd.f32 %v353, %v1084
        %v1086 = vpop.f32.mrf.mxu0
        %1087 = vdwg.mxu0
        %v1088 = vmul.f32 %v1054, %v1085
        %v1089 = vadd.f32 %v1004, %v1088
        %v1090 = vtanh.pop %v1089
        %v1091 = vsub.f32 %v993, %v1090
        %v1092 = vmul.f32 %v1074, %v1091
        %v1093 = vadd.f32 %v1090, %v1092
        %s1094 = scalar_lea.vmem %s320, 12
        %1095 = vst.msk [vmem:[%s1094] sm:$0x3] %vm494, %v1093
        %s1096 = scalar_lea.vmem %s294, 21
        %v1097 = vld [vmem:[%s1096] sm:$0x1]
        %v1098 = vunpack.c.l.bf16 %v1097
        %s1099 = scalar_lea.vmem %s294, 22
        %v1100 = vld [vmem:[%s1099] sm:$0x1]
        %v1101 = vunpack.c.l.bf16 %v1100
        %s1102 = scalar_lea.vmem %s294, 23
        %v1103 = vld [vmem:[%s1102] sm:$0x1]
        %v1104 = vunpack.c.l.bf16 %v1103
        %v1105 = vpack.c.bf16 %v1093, %v1093
        %v1107 = vsel %vm381, %v1105, 0
        %1109 = vmatpush.bf16.msra.mxu0 0
        %1110 = vmatpush.bf16.msra.mxu0 0
        %1111 = vmatpush.bf16.msra.mxu0 0
        %1112 = vmatpush.bf16.msra.mxu0 0
        %1113 = vmatpush.bf16.msra.mxu0 0
        %1114 = vmatpush.bf16.msra.mxu0 0
        %1115 = vmatpush.bf16.msra.mxu0 %v378
        %1116 = vmatpush.bf16.msra.mxu0 %v377
        %1117 = vmatmul.bf16.gmra.mxu0 %v1107
        %v1118 = vpop.f32.mrf.mxu0
        %v1119 = vadd.f32 0.0, %v1118
        %v1120 = vpop.f32.mrf.mxu0
        %1121 = vdwg.mxu0
        %1122 = vmatpush.bf16.msra.mxu0 0
        %1123 = vmatpush.bf16.msra.mxu0 0
        %1124 = vmatpush.bf16.msra.mxu0 0
        %1125 = vmatpush.bf16.msra.mxu0 0
        %1126 = vmatpush.bf16.msra.mxu0 0
        %1127 = vmatpush.bf16.msra.mxu0 0
        %1128 = vmatpush.bf16.msra.mxu0 %v407
        %1129 = vmatpush.bf16.msra.mxu0 %v406
        %1130 = vmatmul.bf16.gmra.mxu0 %v1107
        %v1131 = vpop.f32.mrf.mxu0
        %v1132 = vadd.f32 0.0, %v1131
        %v1133 = vpop.f32.mrf.mxu0
        %1134 = vdwg.mxu0
        %v1135 = vadd.f32 %v1098, %v1119
        %v1136 = vxor.u32 %v1135, 2147483648
        %v1137 = vmul.f32 %v1136, 1.442695
        %v1138 = vpow.pop %v1137
        %v1139 = vadd.f32 %v1138, 1.0
        %v1140 = vrcp.pop %v1139
        %v1141 = vmul.f32 %v1139, %v1140
        %v1142 = vsub.f32 1.0, %v1141
        %v1143 = vmul.f32 %v1140, %v1142
        %v1144 = vadd.f32 %v1140, %v1143
        %vm1145 = vweird.f32 %v1139
        %vm1146 = vweird.f32 %v1140
        %vm1147 = vmor %vm1145, %vm1146
        %v1148 = vsel %vm1147, %v1140, %v1144
        %v1149 = vand.u32 2147483647, %v1139
        %vm1150 = vcmp.eq.f32.partialorder %v1149, 8.507059e+37
        %v1151 = vand.u32 %v1139, 2147483648
        %v1152 = vor.u32 1.1754944e-38, %v1151
        %v1153 = vsel %vm1150, %v1152, %v1148
        %v1154 = vmul.f32 1.0, %v1153
        %v1155 = vadd.f32 %v1101, %v1132
        %v1156 = vxor.u32 %v1155, 2147483648
        %v1157 = vmul.f32 %v1156, 1.442695
        %v1158 = vpow.pop %v1157
        %v1159 = vadd.f32 %v1158, 1.0
        %v1160 = vrcp.pop %v1159
        %v1161 = vmul.f32 %v1159, %v1160
        %v1162 = vsub.f32 1.0, %v1161
        %v1163 = vmul.f32 %v1160, %v1162
        %v1164 = vadd.f32 %v1160, %v1163
        %vm1165 = vweird.f32 %v1159
        %vm1166 = vweird.f32 %v1160
        %vm1167 = vmor %vm1165, %vm1166
        %v1168 = vsel %vm1167, %v1160, %v1164
        %v1169 = vand.u32 2147483647, %v1159
        %vm1170 = vcmp.eq.f32.partialorder %v1169, 8.507059e+37
        %v1171 = vand.u32 %v1159, 2147483648
        %v1172 = vor.u32 1.1754944e-38, %v1171
        %v1173 = vsel %vm1170, %v1172, %v1168
        %v1174 = vmul.f32 1.0, %v1173
        %1175 = vmatpush.bf16.msra.mxu0 0
        %1176 = vmatpush.bf16.msra.mxu0 0
        %1177 = vmatpush.bf16.msra.mxu0 0
        %1178 = vmatpush.bf16.msra.mxu0 0
        %1179 = vmatpush.bf16.msra.mxu0 0
        %1180 = vmatpush.bf16.msra.mxu0 0
        %1181 = vmatpush.bf16.msra.mxu0 %v472
        %1182 = vmatpush.bf16.msra.mxu0 %v471
        %1183 = vmatmul.bf16.gmra.mxu0 %v1107
        %v1184 = vpop.f32.mrf.mxu0
        %v1185 = vadd.f32 %v353, %v1184
        %v1186 = vpop.f32.mrf.mxu0
        %1187 = vdwg.mxu0
        %v1188 = vmul.f32 %v1154, %v1185
        %v1189 = vadd.f32 %v1104, %v1188
        %v1190 = vtanh.pop %v1189
        %v1191 = vsub.f32 %v1093, %v1190
        %v1192 = vmul.f32 %v1174, %v1191
        %v1193 = vadd.f32 %v1190, %v1192
        %s1194 = scalar_lea.vmem %s320, 14
        %1195 = vst.msk [vmem:[%s1194] sm:$0x3] %vm494, %v1193
        %1196 = vst.msk [vmem:[#allocation2] sm:$0x3] %vm494, %v1193
      $region40: #{encoder_forward.3} parent=31 // pred_fallthru
        _
      %p1197 = scmp.eq.s32.totalorder %s20, 1
      // Predicated region
      $region41: #{encoder_forward.3} parent=31 // pred_check
        %p1198 = pneg %p1197
      $region42: #{encoder_forward.3} parent=31 // pred_check_branch
        %1200 = sbr.rel (%p1198) target = $region44
      $region43: #{encoder_forward.3} parent=31 // pred_region
        %v1201 = vld [vmem:[#allocation2] sm:$0x3]
        %s1202 = scalar_lea.vmem %s294, 21
        %v1203 = vld [vmem:[%s1202] sm:$0x1]
        %v1204 = vunpack.c.l.bf16 %v1203
        %s1205 = scalar_lea.vmem %s294, 22
        %v1206 = vld [vmem:[%s1205] sm:$0x1]
        %v1207 = vunpack.c.l.bf16 %v1206
        %s1208 = scalar_lea.vmem %s294, 23
        %v1209 = vld [vmem:[%s1208] sm:$0x1]
        %v1210 = vunpack.c.l.bf16 %v1209
        %v1211 = vpack.c.bf16 %v1201, %v1201
        %v1216 = vunpack.c.l.b16 %v337
        %v1217 = vunpack.c.l.b16 %v338
        %v1218 = vunpack.c.l.b16 %v339
        %v1219 = vunpack.c.l.b16 %v340
        %v1220 = vpack.c.b16 %v1217, %v1216
        %v1221 = vpack.c.b16 %v1219, %v1218
        %vm1224 = vcmask 261120
        %v1226 = vsel %vm1224, %v1211, 0
        %1228 = vmatpush.bf16.msra.mxu0 0
        %1229 = vmatpush.bf16.msra.mxu0 0
        %1230 = vmatpush.bf16.msra.mxu0 0
        %1231 = vmatpush.bf16.msra.mxu0 0
        %1232 = vmatpush.bf16.msra.mxu0 0
        %1233 = vmatpush.bf16.msra.mxu0 0
        %1234 = vmatpush.bf16.msra.mxu0 %v1221
        %1235 = vmatpush.bf16.msra.mxu0 %v1220
        %1236 = vmatmul.bf16.gmra.mxu0 %v1226
        %v1237 = vpop.f32.mrf.mxu0
        %v1238 = vadd.f32 0.0, %v1237
        %v1239 = vpop.f32.mrf.mxu0
        %1240 = vdwg.mxu0
        %v1245 = vunpack.c.l.b16 %v342
        %v1246 = vunpack.c.l.b16 %v343
        %v1247 = vunpack.c.l.b16 %v344
        %v1248 = vunpack.c.l.b16 %v345
        %v1249 = vpack.c.b16 %v1246, %v1245
        %v1250 = vpack.c.b16 %v1248, %v1247
        %1253 = vmatpush.bf16.msra.mxu0 0
        %1254 = vmatpush.bf16.msra.mxu0 0
        %1255 = vmatpush.bf16.msra.mxu0 0
        %1256 = vmatpush.bf16.msra.mxu0 0
        %1257 = vmatpush.bf16.msra.mxu0 0
        %1258 = vmatpush.bf16.msra.mxu0 0
        %1259 = vmatpush.bf16.msra.mxu0 %v1250
        %1260 = vmatpush.bf16.msra.mxu0 %v1249
        %1261 = vmatmul.bf16.gmra.mxu0 %v1226
        %v1262 = vpop.f32.mrf.mxu0
        %v1263 = vadd.f32 0.0, %v1262
        %v1264 = vpop.f32.mrf.mxu0
        %1265 = vdwg.mxu0
        %v1266 = vadd.f32 %v1204, %v1238
        %v1267 = vxor.u32 %v1266, 2147483648
        %v1268 = vmul.f32 %v1267, 1.442695
        %v1269 = vpow.pop %v1268
        %v1270 = vadd.f32 %v1269, 1.0
        %v1271 = vrcp.pop %v1270
        %v1272 = vmul.f32 %v1270, %v1271
        %v1273 = vsub.f32 1.0, %v1272
        %v1274 = vmul.f32 %v1271, %v1273
        %v1275 = vadd.f32 %v1271, %v1274
        %vm1276 = vweird.f32 %v1270
        %vm1277 = vweird.f32 %v1271
        %vm1278 = vmor %vm1276, %vm1277
        %v1279 = vsel %vm1278, %v1271, %v1275
        %v1280 = vand.u32 2147483647, %v1270
        %vm1281 = vcmp.eq.f32.partialorder %v1280, 8.507059e+37
        %v1282 = vand.u32 %v1270, 2147483648
        %v1283 = vor.u32 1.1754944e-38, %v1282
        %v1284 = vsel %vm1281, %v1283, %v1279
        %v1285 = vmul.f32 1.0, %v1284
        %v1286 = vadd.f32 %v1207, %v1263
        %v1287 = vxor.u32 %v1286, 2147483648
        %v1288 = vmul.f32 %v1287, 1.442695
        %v1289 = vpow.pop %v1288
        %v1290 = vadd.f32 %v1289, 1.0
        %v1291 = vrcp.pop %v1290
        %v1292 = vmul.f32 %v1290, %v1291
        %v1293 = vsub.f32 1.0, %v1292
        %v1294 = vmul.f32 %v1291, %v1293
        %v1295 = vadd.f32 %v1291, %v1294
        %vm1296 = vweird.f32 %v1290
        %vm1297 = vweird.f32 %v1291
        %vm1298 = vmor %vm1296, %vm1297
        %v1299 = vsel %vm1298, %v1291, %v1295
        %v1300 = vand.u32 2147483647, %v1290
        %vm1301 = vcmp.eq.f32.partialorder %v1300, 8.507059e+37
        %v1302 = vand.u32 %v1290, 2147483648
        %v1303 = vor.u32 1.1754944e-38, %v1302
        %v1304 = vsel %vm1301, %v1303, %v1299
        %v1305 = vmul.f32 1.0, %v1304
        %v1310 = vunpack.c.l.b16 %v347
        %v1311 = vunpack.c.l.b16 %v348
        %v1312 = vunpack.c.l.b16 %v349
        %v1313 = vunpack.c.l.b16 %v350
        %v1314 = vpack.c.b16 %v1311, %v1310
        %v1315 = vpack.c.b16 %v1313, %v1312
        %1318 = vmatpush.bf16.msra.mxu0 0
        %1319 = vmatpush.bf16.msra.mxu0 0
        %1320 = vmatpush.bf16.msra.mxu0 0
        %1321 = vmatpush.bf16.msra.mxu0 0
        %1322 = vmatpush.bf16.msra.mxu0 0
        %1323 = vmatpush.bf16.msra.mxu0 0
        %1324 = vmatpush.bf16.msra.mxu0 %v1315
        %1325 = vmatpush.bf16.msra.mxu0 %v1314
        %1326 = vmatmul.bf16.gmra.mxu0 %v1226
        %v1327 = vpop.f32.mrf.mxu0
        %v1328 = vadd.f32 %v353, %v1327
        %v1329 = vpop.f32.mrf.mxu0
        %1330 = vdwg.mxu0
        %v1331 = vmul.f32 %v1285, %v1328
        %v1332 = vadd.f32 %v1210, %v1331
        %v1333 = vtanh.pop %v1332
        %v1334 = vsub.f32 %v1201, %v1333
        %v1335 = vmul.f32 %v1305, %v1334
        %v1336 = vadd.f32 %v1333, %v1335
        %s1337 = scalar_lea.vmem %s320, 14
        %vm1338 = vcmask 254976
        %1339 = vst.msk [vmem:[%s1337] sm:$0x3] %vm1338, %v1336
        %s1340 = scalar_lea.vmem %s294, 18
        %v1341 = vld [vmem:[%s1340] sm:$0x1]
        %v1342 = vunpack.c.l.bf16 %v1341
        %s1343 = scalar_lea.vmem %s294, 19
        %v1344 = vld [vmem:[%s1343] sm:$0x1]
        %v1345 = vunpack.c.l.bf16 %v1344
        %s1346 = scalar_lea.vmem %s294, 20
        %v1347 = vld [vmem:[%s1346] sm:$0x1]
        %v1348 = vunpack.c.l.bf16 %v1347
        %v1349 = vpack.c.bf16 %v1336, %v1336
        %v1351 = vsel %vm1224, %v1349, 0
        %1353 = vmatpush.bf16.msra.mxu0 0
        %1354 = vmatpush.bf16.msra.mxu0 0
        %1355 = vmatpush.bf16.msra.mxu0 0
        %1356 = vmatpush.bf16.msra.mxu0 0
        %1357 = vmatpush.bf16.msra.mxu0 0
        %1358 = vmatpush.bf16.msra.mxu0 0
        %1359 = vmatpush.bf16.msra.mxu0 %v1221
        %1360 = vmatpush.bf16.msra.mxu0 %v1220
        %1361 = vmatmul.bf16.gmra.mxu0 %v1351
        %v1362 = vpop.f32.mrf.mxu0
        %v1363 = vadd.f32 0.0, %v1362
        %v1364 = vpop.f32.mrf.mxu0
        %1365 = vdwg.mxu0
        %1366 = vmatpush.bf16.msra.mxu0 0
        %1367 = vmatpush.bf16.msra.mxu0 0
        %1368 = vmatpush.bf16.msra.mxu0 0
        %1369 = vmatpush.bf16.msra.mxu0 0
        %1370 = vmatpush.bf16.msra.mxu0 0
        %1371 = vmatpush.bf16.msra.mxu0 0
        %1372 = vmatpush.bf16.msra.mxu0 %v1250
        %1373 = vmatpush.bf16.msra.mxu0 %v1249
        %1374 = vmatmul.bf16.gmra.mxu0 %v1351
        %v1375 = vpop.f32.mrf.mxu0
        %v1376 = vadd.f32 0.0, %v1375
        %v1377 = vpop.f32.mrf.mxu0
        %1378 = vdwg.mxu0
        %v1379 = vadd.f32 %v1342, %v1363
        %v1380 = vxor.u32 %v1379, 2147483648
        %v1381 = vmul.f32 %v1380, 1.442695
        %v1382 = vpow.pop %v1381
        %v1383 = vadd.f32 %v1382, 1.0
        %v1384 = vrcp.pop %v1383
        %v1385 = vmul.f32 %v1383, %v1384
        %v1386 = vsub.f32 1.0, %v1385
        %v1387 = vmul.f32 %v1384, %v1386
        %v1388 = vadd.f32 %v1384, %v1387
        %vm1389 = vweird.f32 %v1383
        %vm1390 = vweird.f32 %v1384
        %vm1391 = vmor %vm1389, %vm1390
        %v1392 = vsel %vm1391, %v1384, %v1388
        %v1393 = vand.u32 2147483647, %v1383
        %vm1394 = vcmp.eq.f32.partialorder %v1393, 8.507059e+37
        %v1395 = vand.u32 %v1383, 2147483648
        %v1396 = vor.u32 1.1754944e-38, %v1395
        %v1397 = vsel %vm1394, %v1396, %v1392
        %v1398 = vmul.f32 1.0, %v1397
        %v1399 = vadd.f32 %v1345, %v1376
        %v1400 = vxor.u32 %v1399, 2147483648
        %v1401 = vmul.f32 %v1400, 1.442695
        %v1402 = vpow.pop %v1401
        %v1403 = vadd.f32 %v1402, 1.0
        %v1404 = vrcp.pop %v1403
        %v1405 = vmul.f32 %v1403, %v1404
        %v1406 = vsub.f32 1.0, %v1405
        %v1407 = vmul.f32 %v1404, %v1406
        %v1408 = vadd.f32 %v1404, %v1407
        %vm1409 = vweird.f32 %v1403
        %vm1410 = vweird.f32 %v1404
        %vm1411 = vmor %vm1409, %vm1410
        %v1412 = vsel %vm1411, %v1404, %v1408
        %v1413 = vand.u32 2147483647, %v1403
        %vm1414 = vcmp.eq.f32.partialorder %v1413, 8.507059e+37
        %v1415 = vand.u32 %v1403, 2147483648
        %v1416 = vor.u32 1.1754944e-38, %v1415
        %v1417 = vsel %vm1414, %v1416, %v1412
        %v1418 = vmul.f32 1.0, %v1417
        %1419 = vmatpush.bf16.msra.mxu0 0
        %1420 = vmatpush.bf16.msra.mxu0 0
        %1421 = vmatpush.bf16.msra.mxu0 0
        %1422 = vmatpush.bf16.msra.mxu0 0
        %1423 = vmatpush.bf16.msra.mxu0 0
        %1424 = vmatpush.bf16.msra.mxu0 0
        %1425 = vmatpush.bf16.msra.mxu0 %v1315
        %1426 = vmatpush.bf16.msra.mxu0 %v1314
        %1427 = vmatmul.bf16.gmra.mxu0 %v1351
        %v1428 = vpop.f32.mrf.mxu0
        %v1429 = vadd.f32 %v353, %v1428
        %v1430 = vpop.f32.mrf.mxu0
        %1431 = vdwg.mxu0
        %v1432 = vmul.f32 %v1398, %v1429
        %v1433 = vadd.f32 %v1348, %v1432
        %v1434 = vtanh.pop %v1433
        %v1435 = vsub.f32 %v1336, %v1434
        %v1436 = vmul.f32 %v1418, %v1435
        %v1437 = vadd.f32 %v1434, %v1436
        %s1438 = scalar_lea.vmem %s320, 12
        %1439 = vst.msk [vmem:[%s1438] sm:$0x3] %vm1338, %v1437
        %s1440 = scalar_lea.vmem %s294, 15
        %v1441 = vld [vmem:[%s1440] sm:$0x1]
        %v1442 = vunpack.c.l.bf16 %v1441
        %s1443 = scalar_lea.vmem %s294, 16
        %v1444 = vld [vmem:[%s1443] sm:$0x1]
        %v1445 = vunpack.c.l.bf16 %v1444
        %s1446 = scalar_lea.vmem %s294, 17
        %v1447 = vld [vmem:[%s1446] sm:$0x1]
        %v1448 = vunpack.c.l.bf16 %v1447
        %v1449 = vpack.c.bf16 %v1437, %v1437
        %v1451 = vsel %vm1224, %v1449, 0
        %1453 = vmatpush.bf16.msra.mxu0 0
        %1454 = vmatpush.bf16.msra.mxu0 0
        %1455 = vmatpush.bf16.msra.mxu0 0
        %1456 = vmatpush.bf16.msra.mxu0 0
        %1457 = vmatpush.bf16.msra.mxu0 0
        %1458 = vmatpush.bf16.msra.mxu0 0
        %1459 = vmatpush.bf16.msra.mxu0 %v1221
        %1460 = vmatpush.bf16.msra.mxu0 %v1220
        %1461 = vmatmul.bf16.gmra.mxu0 %v1451
        %v1462 = vpop.f32.mrf.mxu0
        %v1463 = vadd.f32 0.0, %v1462
        %v1464 = vpop.f32.mrf.mxu0
        %1465 = vdwg.mxu0
        %1466 = vmatpush.bf16.msra.mxu0 0
        %1467 = vmatpush.bf16.msra.mxu0 0
        %1468 = vmatpush.bf16.msra.mxu0 0
        %1469 = vmatpush.bf16.msra.mxu0 0
        %1470 = vmatpush.bf16.msra.mxu0 0
        %1471 = vmatpush.bf16.msra.mxu0 0
        %1472 = vmatpush.bf16.msra.mxu0 %v1250
        %1473 = vmatpush.bf16.msra.mxu0 %v1249
        %1474 = vmatmul.bf16.gmra.mxu0 %v1451
        %v1475 = vpop.f32.mrf.mxu0
        %v1476 = vadd.f32 0.0, %v1475
        %v1477 = vpop.f32.mrf.mxu0
        %1478 = vdwg.mxu0
        %v1479 = vadd.f32 %v1442, %v1463
        %v1480 = vxor.u32 %v1479, 2147483648
        %v1481 = vmul.f32 %v1480, 1.442695
        %v1482 = vpow.pop %v1481
        %v1483 = vadd.f32 %v1482, 1.0
        %v1484 = vrcp.pop %v1483
        %v1485 = vmul.f32 %v1483, %v1484
        %v1486 = vsub.f32 1.0, %v1485
        %v1487 = vmul.f32 %v1484, %v1486
        %v1488 = vadd.f32 %v1484, %v1487
        %vm1489 = vweird.f32 %v1483
        %vm1490 = vweird.f32 %v1484
        %vm1491 = vmor %vm1489, %vm1490
        %v1492 = vsel %vm1491, %v1484, %v1488
        %v1493 = vand.u32 2147483647, %v1483
        %vm1494 = vcmp.eq.f32.partialorder %v1493, 8.507059e+37
        %v1495 = vand.u32 %v1483, 2147483648
        %v1496 = vor.u32 1.1754944e-38, %v1495
        %v1497 = vsel %vm1494, %v1496, %v1492
        %v1498 = vmul.f32 1.0, %v1497
        %v1499 = vadd.f32 %v1445, %v1476
        %v1500 = vxor.u32 %v1499, 2147483648
        %v1501 = vmul.f32 %v1500, 1.442695
        %v1502 = vpow.pop %v1501
        %v1503 = vadd.f32 %v1502, 1.0
        %v1504 = vrcp.pop %v1503
        %v1505 = vmul.f32 %v1503, %v1504
        %v1506 = vsub.f32 1.0, %v1505
        %v1507 = vmul.f32 %v1504, %v1506
        %v1508 = vadd.f32 %v1504, %v1507
        %vm1509 = vweird.f32 %v1503
        %vm1510 = vweird.f32 %v1504
        %vm1511 = vmor %vm1509, %vm1510
        %v1512 = vsel %vm1511, %v1504, %v1508
        %v1513 = vand.u32 2147483647, %v1503
        %vm1514 = vcmp.eq.f32.partialorder %v1513, 8.507059e+37
        %v1515 = vand.u32 %v1503, 2147483648
        %v1516 = vor.u32 1.1754944e-38, %v1515
        %v1517 = vsel %vm1514, %v1516, %v1512
        %v1518 = vmul.f32 1.0, %v1517
        %1519 = vmatpush.bf16.msra.mxu0 0
        %1520 = vmatpush.bf16.msra.mxu0 0
        %1521 = vmatpush.bf16.msra.mxu0 0
        %1522 = vmatpush.bf16.msra.mxu0 0
        %1523 = vmatpush.bf16.msra.mxu0 0
        %1524 = vmatpush.bf16.msra.mxu0 0
        %1525 = vmatpush.bf16.msra.mxu0 %v1315
        %1526 = vmatpush.bf16.msra.mxu0 %v1314
        %1527 = vmatmul.bf16.gmra.mxu0 %v1451
        %v1528 = vpop.f32.mrf.mxu0
        %v1529 = vadd.f32 %v353, %v1528
        %v1530 = vpop.f32.mrf.mxu0
        %1531 = vdwg.mxu0
        %v1532 = vmul.f32 %v1498, %v1529
        %v1533 = vadd.f32 %v1448, %v1532
        %v1534 = vtanh.pop %v1533
        %v1535 = vsub.f32 %v1437, %v1534
        %v1536 = vmul.f32 %v1518, %v1535
        %v1537 = vadd.f32 %v1534, %v1536
        %s1538 = scalar_lea.vmem %s320, 10
        %1539 = vst.msk [vmem:[%s1538] sm:$0x3] %vm1338, %v1537
        %s1540 = scalar_lea.vmem %s294, 12
        %v1541 = vld [vmem:[%s1540] sm:$0x1]
        %v1542 = vunpack.c.l.bf16 %v1541
        %s1543 = scalar_lea.vmem %s294, 13
        %v1544 = vld [vmem:[%s1543] sm:$0x1]
        %v1545 = vunpack.c.l.bf16 %v1544
        %s1546 = scalar_lea.vmem %s294, 14
        %v1547 = vld [vmem:[%s1546] sm:$0x1]
        %v1548 = vunpack.c.l.bf16 %v1547
        %v1549 = vpack.c.bf16 %v1537, %v1537
        %v1551 = vsel %vm1224, %v1549, 0
        %1553 = vmatpush.bf16.msra.mxu0 0
        %1554 = vmatpush.bf16.msra.mxu0 0
        %1555 = vmatpush.bf16.msra.mxu0 0
        %1556 = vmatpush.bf16.msra.mxu0 0
        %1557 = vmatpush.bf16.msra.mxu0 0
        %1558 = vmatpush.bf16.msra.mxu0 0
        %1559 = vmatpush.bf16.msra.mxu0 %v1221
        %1560 = vmatpush.bf16.msra.mxu0 %v1220
        %1561 = vmatmul.bf16.gmra.mxu0 %v1551
        %v1562 = vpop.f32.mrf.mxu0
        %v1563 = vadd.f32 0.0, %v1562
        %v1564 = vpop.f32.mrf.mxu0
        %1565 = vdwg.mxu0
        %1566 = vmatpush.bf16.msra.mxu0 0
        %1567 = vmatpush.bf16.msra.mxu0 0
        %1568 = vmatpush.bf16.msra.mxu0 0
        %1569 = vmatpush.bf16.msra.mxu0 0
        %1570 = vmatpush.bf16.msra.mxu0 0
        %1571 = vmatpush.bf16.msra.mxu0 0
        %1572 = vmatpush.bf16.msra.mxu0 %v1250
        %1573 = vmatpush.bf16.msra.mxu0 %v1249
        %1574 = vmatmul.bf16.gmra.mxu0 %v1551
        %v1575 = vpop.f32.mrf.mxu0
        %v1576 = vadd.f32 0.0, %v1575
        %v1577 = vpop.f32.mrf.mxu0
        %1578 = vdwg.mxu0
        %v1579 = vadd.f32 %v1542, %v1563
        %v1580 = vxor.u32 %v1579, 2147483648
        %v1581 = vmul.f32 %v1580, 1.442695
        %v1582 = vpow.pop %v1581
        %v1583 = vadd.f32 %v1582, 1.0
        %v1584 = vrcp.pop %v1583
        %v1585 = vmul.f32 %v1583, %v1584
        %v1586 = vsub.f32 1.0, %v1585
        %v1587 = vmul.f32 %v1584, %v1586
        %v1588 = vadd.f32 %v1584, %v1587
        %vm1589 = vweird.f32 %v1583
        %vm1590 = vweird.f32 %v1584
        %vm1591 = vmor %vm1589, %vm1590
        %v1592 = vsel %vm1591, %v1584, %v1588
        %v1593 = vand.u32 2147483647, %v1583
        %vm1594 = vcmp.eq.f32.partialorder %v1593, 8.507059e+37
        %v1595 = vand.u32 %v1583, 2147483648
        %v1596 = vor.u32 1.1754944e-38, %v1595
        %v1597 = vsel %vm1594, %v1596, %v1592
        %v1598 = vmul.f32 1.0, %v1597
        %v1599 = vadd.f32 %v1545, %v1576
        %v1600 = vxor.u32 %v1599, 2147483648
        %v1601 = vmul.f32 %v1600, 1.442695
        %v1602 = vpow.pop %v1601
        %v1603 = vadd.f32 %v1602, 1.0
        %v1604 = vrcp.pop %v1603
        %v1605 = vmul.f32 %v1603, %v1604
        %v1606 = vsub.f32 1.0, %v1605
        %v1607 = vmul.f32 %v1604, %v1606
        %v1608 = vadd.f32 %v1604, %v1607
        %vm1609 = vweird.f32 %v1603
        %vm1610 = vweird.f32 %v1604
        %vm1611 = vmor %vm1609, %vm1610
        %v1612 = vsel %vm1611, %v1604, %v1608
        %v1613 = vand.u32 2147483647, %v1603
        %vm1614 = vcmp.eq.f32.partialorder %v1613, 8.507059e+37
        %v1615 = vand.u32 %v1603, 2147483648
        %v1616 = vor.u32 1.1754944e-38, %v1615
        %v1617 = vsel %vm1614, %v1616, %v1612
        %v1618 = vmul.f32 1.0, %v1617
        %1619 = vmatpush.bf16.msra.mxu0 0
        %1620 = vmatpush.bf16.msra.mxu0 0
        %1621 = vmatpush.bf16.msra.mxu0 0
        %1622 = vmatpush.bf16.msra.mxu0 0
        %1623 = vmatpush.bf16.msra.mxu0 0
        %1624 = vmatpush.bf16.msra.mxu0 0
        %1625 = vmatpush.bf16.msra.mxu0 %v1315
        %1626 = vmatpush.bf16.msra.mxu0 %v1314
        %1627 = vmatmul.bf16.gmra.mxu0 %v1551
        %v1628 = vpop.f32.mrf.mxu0
        %v1629 = vadd.f32 %v353, %v1628
        %v1630 = vpop.f32.mrf.mxu0
        %1631 = vdwg.mxu0
        %v1632 = vmul.f32 %v1598, %v1629
        %v1633 = vadd.f32 %v1548, %v1632
        %v1634 = vtanh.pop %v1633
        %v1635 = vsub.f32 %v1537, %v1634
        %v1636 = vmul.f32 %v1618, %v1635
        %v1637 = vadd.f32 %v1634, %v1636
        %s1638 = scalar_lea.vmem %s320, 8
        %1639 = vst.msk [vmem:[%s1638] sm:$0x3] %vm1338, %v1637
        %s1640 = scalar_lea.vmem %s294, 9
        %v1641 = vld [vmem:[%s1640] sm:$0x1]
        %v1642 = vunpack.c.l.bf16 %v1641
        %s1643 = scalar_lea.vmem %s294, 10
        %v1644 = vld [vmem:[%s1643] sm:$0x1]
        %v1645 = vunpack.c.l.bf16 %v1644
        %s1646 = scalar_lea.vmem %s294, 11
        %v1647 = vld [vmem:[%s1646] sm:$0x1]
        %v1648 = vunpack.c.l.bf16 %v1647
        %v1649 = vpack.c.bf16 %v1637, %v1637
        %v1651 = vsel %vm1224, %v1649, 0
        %1653 = vmatpush.bf16.msra.mxu0 0
        %1654 = vmatpush.bf16.msra.mxu0 0
        %1655 = vmatpush.bf16.msra.mxu0 0
        %1656 = vmatpush.bf16.msra.mxu0 0
        %1657 = vmatpush.bf16.msra.mxu0 0
        %1658 = vmatpush.bf16.msra.mxu0 0
        %1659 = vmatpush.bf16.msra.mxu0 %v1221
        %1660 = vmatpush.bf16.msra.mxu0 %v1220
        %1661 = vmatmul.bf16.gmra.mxu0 %v1651
        %v1662 = vpop.f32.mrf.mxu0
        %v1663 = vadd.f32 0.0, %v1662
        %v1664 = vpop.f32.mrf.mxu0
        %1665 = vdwg.mxu0
        %1666 = vmatpush.bf16.msra.mxu0 0
        %1667 = vmatpush.bf16.msra.mxu0 0
        %1668 = vmatpush.bf16.msra.mxu0 0
        %1669 = vmatpush.bf16.msra.mxu0 0
        %1670 = vmatpush.bf16.msra.mxu0 0
        %1671 = vmatpush.bf16.msra.mxu0 0
        %1672 = vmatpush.bf16.msra.mxu0 %v1250
        %1673 = vmatpush.bf16.msra.mxu0 %v1249
        %1674 = vmatmul.bf16.gmra.mxu0 %v1651
        %v1675 = vpop.f32.mrf.mxu0
        %v1676 = vadd.f32 0.0, %v1675
        %v1677 = vpop.f32.mrf.mxu0
        %1678 = vdwg.mxu0
        %v1679 = vadd.f32 %v1642, %v1663
        %v1680 = vxor.u32 %v1679, 2147483648
        %v1681 = vmul.f32 %v1680, 1.442695
        %v1682 = vpow.pop %v1681
        %v1683 = vadd.f32 %v1682, 1.0
        %v1684 = vrcp.pop %v1683
        %v1685 = vmul.f32 %v1683, %v1684
        %v1686 = vsub.f32 1.0, %v1685
        %v1687 = vmul.f32 %v1684, %v1686
        %v1688 = vadd.f32 %v1684, %v1687
        %vm1689 = vweird.f32 %v1683
        %vm1690 = vweird.f32 %v1684
        %vm1691 = vmor %vm1689, %vm1690
        %v1692 = vsel %vm1691, %v1684, %v1688
        %v1693 = vand.u32 2147483647, %v1683
        %vm1694 = vcmp.eq.f32.partialorder %v1693, 8.507059e+37
        %v1695 = vand.u32 %v1683, 2147483648
        %v1696 = vor.u32 1.1754944e-38, %v1695
        %v1697 = vsel %vm1694, %v1696, %v1692
        %v1698 = vmul.f32 1.0, %v1697
        %v1699 = vadd.f32 %v1645, %v1676
        %v1700 = vxor.u32 %v1699, 2147483648
        %v1701 = vmul.f32 %v1700, 1.442695
        %v1702 = vpow.pop %v1701
        %v1703 = vadd.f32 %v1702, 1.0
        %v1704 = vrcp.pop %v1703
        %v1705 = vmul.f32 %v1703, %v1704
        %v1706 = vsub.f32 1.0, %v1705
        %v1707 = vmul.f32 %v1704, %v1706
        %v1708 = vadd.f32 %v1704, %v1707
        %vm1709 = vweird.f32 %v1703
        %vm1710 = vweird.f32 %v1704
        %vm1711 = vmor %vm1709, %vm1710
        %v1712 = vsel %vm1711, %v1704, %v1708
        %v1713 = vand.u32 2147483647, %v1703
        %vm1714 = vcmp.eq.f32.partialorder %v1713, 8.507059e+37
        %v1715 = vand.u32 %v1703, 2147483648
        %v1716 = vor.u32 1.1754944e-38, %v1715
        %v1717 = vsel %vm1714, %v1716, %v1712
        %v1718 = vmul.f32 1.0, %v1717
        %1719 = vmatpush.bf16.msra.mxu0 0
        %1720 = vmatpush.bf16.msra.mxu0 0
        %1721 = vmatpush.bf16.msra.mxu0 0
        %1722 = vmatpush.bf16.msra.mxu0 0
        %1723 = vmatpush.bf16.msra.mxu0 0
        %1724 = vmatpush.bf16.msra.mxu0 0
        %1725 = vmatpush.bf16.msra.mxu0 %v1315
        %1726 = vmatpush.bf16.msra.mxu0 %v1314
        %1727 = vmatmul.bf16.gmra.mxu0 %v1651
        %v1728 = vpop.f32.mrf.mxu0
        %v1729 = vadd.f32 %v353, %v1728
        %v1730 = vpop.f32.mrf.mxu0
        %1731 = vdwg.mxu0
        %v1732 = vmul.f32 %v1698, %v1729
        %v1733 = vadd.f32 %v1648, %v1732
        %v1734 = vtanh.pop %v1733
        %v1735 = vsub.f32 %v1637, %v1734
        %v1736 = vmul.f32 %v1718, %v1735
        %v1737 = vadd.f32 %v1734, %v1736
        %s1738 = scalar_lea.vmem %s320, 6
        %1739 = vst.msk [vmem:[%s1738] sm:$0x3] %vm1338, %v1737
        %s1740 = scalar_lea.vmem %s294, 6
        %v1741 = vld [vmem:[%s1740] sm:$0x1]
        %v1742 = vunpack.c.l.bf16 %v1741
        %s1743 = scalar_lea.vmem %s294, 7
        %v1744 = vld [vmem:[%s1743] sm:$0x1]
        %v1745 = vunpack.c.l.bf16 %v1744
        %s1746 = scalar_lea.vmem %s294, 8
        %v1747 = vld [vmem:[%s1746] sm:$0x1]
        %v1748 = vunpack.c.l.bf16 %v1747
        %v1749 = vpack.c.bf16 %v1737, %v1737
        %v1751 = vsel %vm1224, %v1749, 0
        %1753 = vmatpush.bf16.msra.mxu0 0
        %1754 = vmatpush.bf16.msra.mxu0 0
        %1755 = vmatpush.bf16.msra.mxu0 0
        %1756 = vmatpush.bf16.msra.mxu0 0
        %1757 = vmatpush.bf16.msra.mxu0 0
        %1758 = vmatpush.bf16.msra.mxu0 0
        %1759 = vmatpush.bf16.msra.mxu0 %v1221
        %1760 = vmatpush.bf16.msra.mxu0 %v1220
        %1761 = vmatmul.bf16.gmra.mxu0 %v1751
        %v1762 = vpop.f32.mrf.mxu0
        %v1763 = vadd.f32 0.0, %v1762
        %v1764 = vpop.f32.mrf.mxu0
        %1765 = vdwg.mxu0
        %1766 = vmatpush.bf16.msra.mxu0 0
        %1767 = vmatpush.bf16.msra.mxu0 0
        %1768 = vmatpush.bf16.msra.mxu0 0
        %1769 = vmatpush.bf16.msra.mxu0 0
        %1770 = vmatpush.bf16.msra.mxu0 0
        %1771 = vmatpush.bf16.msra.mxu0 0
        %1772 = vmatpush.bf16.msra.mxu0 %v1250
        %1773 = vmatpush.bf16.msra.mxu0 %v1249
        %1774 = vmatmul.bf16.gmra.mxu0 %v1751
        %v1775 = vpop.f32.mrf.mxu0
        %v1776 = vadd.f32 0.0, %v1775
        %v1777 = vpop.f32.mrf.mxu0
        %1778 = vdwg.mxu0
        %v1779 = vadd.f32 %v1742, %v1763
        %v1780 = vxor.u32 %v1779, 2147483648
        %v1781 = vmul.f32 %v1780, 1.442695
        %v1782 = vpow.pop %v1781
        %v1783 = vadd.f32 %v1782, 1.0
        %v1784 = vrcp.pop %v1783
        %v1785 = vmul.f32 %v1783, %v1784
        %v1786 = vsub.f32 1.0, %v1785
        %v1787 = vmul.f32 %v1784, %v1786
        %v1788 = vadd.f32 %v1784, %v1787
        %vm1789 = vweird.f32 %v1783
        %vm1790 = vweird.f32 %v1784
        %vm1791 = vmor %vm1789, %vm1790
        %v1792 = vsel %vm1791, %v1784, %v1788
        %v1793 = vand.u32 2147483647, %v1783
        %vm1794 = vcmp.eq.f32.partialorder %v1793, 8.507059e+37
        %v1795 = vand.u32 %v1783, 2147483648
        %v1796 = vor.u32 1.1754944e-38, %v1795
        %v1797 = vsel %vm1794, %v1796, %v1792
        %v1798 = vmul.f32 1.0, %v1797
        %v1799 = vadd.f32 %v1745, %v1776
        %v1800 = vxor.u32 %v1799, 2147483648
        %v1801 = vmul.f32 %v1800, 1.442695
        %v1802 = vpow.pop %v1801
        %v1803 = vadd.f32 %v1802, 1.0
        %v1804 = vrcp.pop %v1803
        %v1805 = vmul.f32 %v1803, %v1804
        %v1806 = vsub.f32 1.0, %v1805
        %v1807 = vmul.f32 %v1804, %v1806
        %v1808 = vadd.f32 %v1804, %v1807
        %vm1809 = vweird.f32 %v1803
        %vm1810 = vweird.f32 %v1804
        %vm1811 = vmor %vm1809, %vm1810
        %v1812 = vsel %vm1811, %v1804, %v1808
        %v1813 = vand.u32 2147483647, %v1803
        %vm1814 = vcmp.eq.f32.partialorder %v1813, 8.507059e+37
        %v1815 = vand.u32 %v1803, 2147483648
        %v1816 = vor.u32 1.1754944e-38, %v1815
        %v1817 = vsel %vm1814, %v1816, %v1812
        %v1818 = vmul.f32 1.0, %v1817
        %1819 = vmatpush.bf16.msra.mxu0 0
        %1820 = vmatpush.bf16.msra.mxu0 0
        %1821 = vmatpush.bf16.msra.mxu0 0
        %1822 = vmatpush.bf16.msra.mxu0 0
        %1823 = vmatpush.bf16.msra.mxu0 0
        %1824 = vmatpush.bf16.msra.mxu0 0
        %1825 = vmatpush.bf16.msra.mxu0 %v1315
        %1826 = vmatpush.bf16.msra.mxu0 %v1314
        %1827 = vmatmul.bf16.gmra.mxu0 %v1751
        %v1828 = vpop.f32.mrf.mxu0
        %v1829 = vadd.f32 %v353, %v1828
        %v1830 = vpop.f32.mrf.mxu0
        %1831 = vdwg.mxu0
        %v1832 = vmul.f32 %v1798, %v1829
        %v1833 = vadd.f32 %v1748, %v1832
        %v1834 = vtanh.pop %v1833
        %v1835 = vsub.f32 %v1737, %v1834
        %v1836 = vmul.f32 %v1818, %v1835
        %v1837 = vadd.f32 %v1834, %v1836
        %s1838 = scalar_lea.vmem %s320, 4
        %1839 = vst.msk [vmem:[%s1838] sm:$0x3] %vm1338, %v1837
        %s1840 = scalar_lea.vmem %s294, 3
        %v1841 = vld [vmem:[%s1840] sm:$0x1]
        %v1842 = vunpack.c.l.bf16 %v1841
        %s1843 = scalar_lea.vmem %s294, 4
        %v1844 = vld [vmem:[%s1843] sm:$0x1]
        %v1845 = vunpack.c.l.bf16 %v1844
        %s1846 = scalar_lea.vmem %s294, 5
        %v1847 = vld [vmem:[%s1846] sm:$0x1]
        %v1848 = vunpack.c.l.bf16 %v1847
        %v1849 = vpack.c.bf16 %v1837, %v1837
        %v1851 = vsel %vm1224, %v1849, 0
        %1853 = vmatpush.bf16.msra.mxu0 0
        %1854 = vmatpush.bf16.msra.mxu0 0
        %1855 = vmatpush.bf16.msra.mxu0 0
        %1856 = vmatpush.bf16.msra.mxu0 0
        %1857 = vmatpush.bf16.msra.mxu0 0
        %1858 = vmatpush.bf16.msra.mxu0 0
        %1859 = vmatpush.bf16.msra.mxu0 %v1221
        %1860 = vmatpush.bf16.msra.mxu0 %v1220
        %1861 = vmatmul.bf16.gmra.mxu0 %v1851
        %v1862 = vpop.f32.mrf.mxu0
        %v1863 = vadd.f32 0.0, %v1862
        %v1864 = vpop.f32.mrf.mxu0
        %1865 = vdwg.mxu0
        %1866 = vmatpush.bf16.msra.mxu0 0
        %1867 = vmatpush.bf16.msra.mxu0 0
        %1868 = vmatpush.bf16.msra.mxu0 0
        %1869 = vmatpush.bf16.msra.mxu0 0
        %1870 = vmatpush.bf16.msra.mxu0 0
        %1871 = vmatpush.bf16.msra.mxu0 0
        %1872 = vmatpush.bf16.msra.mxu0 %v1250
        %1873 = vmatpush.bf16.msra.mxu0 %v1249
        %1874 = vmatmul.bf16.gmra.mxu0 %v1851
        %v1875 = vpop.f32.mrf.mxu0
        %v1876 = vadd.f32 0.0, %v1875
        %v1877 = vpop.f32.mrf.mxu0
        %1878 = vdwg.mxu0
        %v1879 = vadd.f32 %v1842, %v1863
        %v1880 = vxor.u32 %v1879, 2147483648
        %v1881 = vmul.f32 %v1880, 1.442695
        %v1882 = vpow.pop %v1881
        %v1883 = vadd.f32 %v1882, 1.0
        %v1884 = vrcp.pop %v1883
        %v1885 = vmul.f32 %v1883, %v1884
        %v1886 = vsub.f32 1.0, %v1885
        %v1887 = vmul.f32 %v1884, %v1886
        %v1888 = vadd.f32 %v1884, %v1887
        %vm1889 = vweird.f32 %v1883
        %vm1890 = vweird.f32 %v1884
        %vm1891 = vmor %vm1889, %vm1890
        %v1892 = vsel %vm1891, %v1884, %v1888
        %v1893 = vand.u32 2147483647, %v1883
        %vm1894 = vcmp.eq.f32.partialorder %v1893, 8.507059e+37
        %v1895 = vand.u32 %v1883, 2147483648
        %v1896 = vor.u32 1.1754944e-38, %v1895
        %v1897 = vsel %vm1894, %v1896, %v1892
        %v1898 = vmul.f32 1.0, %v1897
        %v1899 = vadd.f32 %v1845, %v1876
        %v1900 = vxor.u32 %v1899, 2147483648
        %v1901 = vmul.f32 %v1900, 1.442695
        %v1902 = vpow.pop %v1901
        %v1903 = vadd.f32 %v1902, 1.0
        %v1904 = vrcp.pop %v1903
        %v1905 = vmul.f32 %v1903, %v1904
        %v1906 = vsub.f32 1.0, %v1905
        %v1907 = vmul.f32 %v1904, %v1906
        %v1908 = vadd.f32 %v1904, %v1907
        %vm1909 = vweird.f32 %v1903
        %vm1910 = vweird.f32 %v1904
        %vm1911 = vmor %vm1909, %vm1910
        %v1912 = vsel %vm1911, %v1904, %v1908
        %v1913 = vand.u32 2147483647, %v1903
        %vm1914 = vcmp.eq.f32.partialorder %v1913, 8.507059e+37
        %v1915 = vand.u32 %v1903, 2147483648
        %v1916 = vor.u32 1.1754944e-38, %v1915
        %v1917 = vsel %vm1914, %v1916, %v1912
        %v1918 = vmul.f32 1.0, %v1917
        %1919 = vmatpush.bf16.msra.mxu0 0
        %1920 = vmatpush.bf16.msra.mxu0 0
        %1921 = vmatpush.bf16.msra.mxu0 0
        %1922 = vmatpush.bf16.msra.mxu0 0
        %1923 = vmatpush.bf16.msra.mxu0 0
        %1924 = vmatpush.bf16.msra.mxu0 0
        %1925 = vmatpush.bf16.msra.mxu0 %v1315
        %1926 = vmatpush.bf16.msra.mxu0 %v1314
        %1927 = vmatmul.bf16.gmra.mxu0 %v1851
        %v1928 = vpop.f32.mrf.mxu0
        %v1929 = vadd.f32 %v353, %v1928
        %v1930 = vpop.f32.mrf.mxu0
        %1931 = vdwg.mxu0
        %v1932 = vmul.f32 %v1898, %v1929
        %v1933 = vadd.f32 %v1848, %v1932
        %v1934 = vtanh.pop %v1933
        %v1935 = vsub.f32 %v1837, %v1934
        %v1936 = vmul.f32 %v1918, %v1935
        %v1937 = vadd.f32 %v1934, %v1936
        %s1938 = scalar_lea.vmem %s320, 2
        %1939 = vst.msk [vmem:[%s1938] sm:$0x3] %vm1338, %v1937
        %v1940 = vld [vmem:[%s294] sm:$0x1]
        %v1941 = vunpack.c.l.bf16 %v1940
        %s1942 = scalar_lea.vmem %s294, 1
        %v1943 = vld [vmem:[%s1942] sm:$0x1]
        %v1944 = vunpack.c.l.bf16 %v1943
        %s1945 = scalar_lea.vmem %s294, 2
        %v1946 = vld [vmem:[%s1945] sm:$0x1]
        %v1947 = vunpack.c.l.bf16 %v1946
        %v1948 = vpack.c.bf16 %v1937, %v1937
        %v1950 = vsel %vm1224, %v1948, 0
        %1952 = vmatpush.bf16.msra.mxu0 0
        %1953 = vmatpush.bf16.msra.mxu0 0
        %1954 = vmatpush.bf16.msra.mxu0 0
        %1955 = vmatpush.bf16.msra.mxu0 0
        %1956 = vmatpush.bf16.msra.mxu0 0
        %1957 = vmatpush.bf16.msra.mxu0 0
        %1958 = vmatpush.bf16.msra.mxu0 %v1221
        %1959 = vmatpush.bf16.msra.mxu0 %v1220
        %1960 = vmatmul.bf16.gmra.mxu0 %v1950
        %v1961 = vpop.f32.mrf.mxu0
        %v1962 = vadd.f32 0.0, %v1961
        %v1963 = vpop.f32.mrf.mxu0
        %1964 = vdwg.mxu0
        %1965 = vmatpush.bf16.msra.mxu0 0
        %1966 = vmatpush.bf16.msra.mxu0 0
        %1967 = vmatpush.bf16.msra.mxu0 0
        %1968 = vmatpush.bf16.msra.mxu0 0
        %1969 = vmatpush.bf16.msra.mxu0 0
        %1970 = vmatpush.bf16.msra.mxu0 0
        %1971 = vmatpush.bf16.msra.mxu0 %v1250
        %1972 = vmatpush.bf16.msra.mxu0 %v1249
        %1973 = vmatmul.bf16.gmra.mxu0 %v1950
        %v1974 = vpop.f32.mrf.mxu0
        %v1975 = vadd.f32 0.0, %v1974
        %v1976 = vpop.f32.mrf.mxu0
        %1977 = vdwg.mxu0
        %v1978 = vadd.f32 %v1941, %v1962
        %v1979 = vxor.u32 %v1978, 2147483648
        %v1980 = vmul.f32 %v1979, 1.442695
        %v1981 = vpow.pop %v1980
        %v1982 = vadd.f32 %v1981, 1.0
        %v1983 = vrcp.pop %v1982
        %v1984 = vmul.f32 %v1982, %v1983
        %v1985 = vsub.f32 1.0, %v1984
        %v1986 = vmul.f32 %v1983, %v1985
        %v1987 = vadd.f32 %v1983, %v1986
        %vm1988 = vweird.f32 %v1982
        %vm1989 = vweird.f32 %v1983
        %vm1990 = vmor %vm1988, %vm1989
        %v1991 = vsel %vm1990, %v1983, %v1987
        %v1992 = vand.u32 2147483647, %v1982
        %vm1993 = vcmp.eq.f32.partialorder %v1992, 8.507059e+37
        %v1994 = vand.u32 %v1982, 2147483648
        %v1995 = vor.u32 1.1754944e-38, %v1994
        %v1996 = vsel %vm1993, %v1995, %v1991
        %v1997 = vmul.f32 1.0, %v1996
        %v1998 = vadd.f32 %v1944, %v1975
        %v1999 = vxor.u32 %v1998, 2147483648
        %v2000 = vmul.f32 %v1999, 1.442695
        %v2001 = vpow.pop %v2000
        %v2002 = vadd.f32 %v2001, 1.0
        %v2003 = vrcp.pop %v2002
        %v2004 = vmul.f32 %v2002, %v2003
        %v2005 = vsub.f32 1.0, %v2004
        %v2006 = vmul.f32 %v2003, %v2005
        %v2007 = vadd.f32 %v2003, %v2006
        %vm2008 = vweird.f32 %v2002
        %vm2009 = vweird.f32 %v2003
        %vm2010 = vmor %vm2008, %vm2009
        %v2011 = vsel %vm2010, %v2003, %v2007
        %v2012 = vand.u32 2147483647, %v2002
        %vm2013 = vcmp.eq.f32.partialorder %v2012, 8.507059e+37
        %v2014 = vand.u32 %v2002, 2147483648
        %v2015 = vor.u32 1.1754944e-38, %v2014
        %v2016 = vsel %vm2013, %v2015, %v2011
        %v2017 = vmul.f32 1.0, %v2016
        %2018 = vmatpush.bf16.msra.mxu0 0
        %2019 = vmatpush.bf16.msra.mxu0 0
        %2020 = vmatpush.bf16.msra.mxu0 0
        %2021 = vmatpush.bf16.msra.mxu0 0
        %2022 = vmatpush.bf16.msra.mxu0 0
        %2023 = vmatpush.bf16.msra.mxu0 0
        %2024 = vmatpush.bf16.msra.mxu0 %v1315
        %2025 = vmatpush.bf16.msra.mxu0 %v1314
        %2026 = vmatmul.bf16.gmra.mxu0 %v1950
        %v2027 = vpop.f32.mrf.mxu0
        %v2028 = vadd.f32 %v353, %v2027
        %v2029 = vpop.f32.mrf.mxu0
        %2030 = vdwg.mxu0
        %v2031 = vmul.f32 %v1997, %v2028
        %v2032 = vadd.f32 %v1947, %v2031
        %v2033 = vtanh.pop %v2032
        %v2034 = vsub.f32 %v1937, %v2033
        %v2035 = vmul.f32 %v2017, %v2034
        %v2036 = vadd.f32 %v2033, %v2035
        %2037 = vst.msk [vmem:[%s320] sm:$0x3] %vm1338, %v2036
        %2038 = vst.msk [vmem:[#allocation2] sm:$0x3] %vm1338, %v2036
      $region44: #{encoder_forward.3} parent=31 // pred_fallthru
        _
      // Predicated region
      $region45: #{encoder_forward.3} parent=31 // pred_check
        %p2039 = pneg %p331
      $region46: #{encoder_forward.3} parent=31 // pred_check_branch
        %2041 = sbr.rel (%p2039) target = $region48
      $region47: #{encoder_forward.3} parent=31 // pred_region
        %v2042 = vld [vmem:[#allocation2] sm:$0x3]
        %vm2043 = vcmask 254976
        %2044 = vst.msk [vmem:[%s329] sm:$0x3] %vm2043, %v2042
      $region48: #{encoder_forward.3} parent=31 // pred_fallthru
        _
      %s2045 = smul.u32 %s21, 2
      %s2046 = ssub.s32 0, %s2045
      %s2047 = smul.u32 %s20, %s2046
      %s2048 = sadd.s32 %s21, %s2047
      %s2049 = smul.u32 8, %s2048
      %p2050 = scmp.lt.s32.totalorder %s20, 1
      %s2051 = scalar_select %p2050, %s20, 1
      %p2052 = scmp.lt.s32.totalorder %s2049, 7
      %s2053 = scalar_select %p2052, %s2049, 7
      %s2054 = smul.addr %s2051, 8
      %s2055 = sadd.s32 %s2053, %s2054
      %s2056 = smul.addr %s2055, 2
      %s2057 = scalar_lea.vmem %s3, %s2056
      %p2058 = scmp.lt.s32.totalorder %s20, 1
      %s2059 = scalar_select %p2058, %s20, 1
      %s2060 = smul.addr %s2059, 2
      %s2061 = scalar_lea.vmem %s4, %s2060
      // Predicated region
      $region49: #{encoder_forward.3} parent=31 // pred_check
        %p2062 = pneg %p144
      $region50: #{encoder_forward.3} parent=31 // pred_check_branch
        %2064 = sbr.rel (%p2062) target = $region52
      $region51: #{encoder_forward.3} parent=31 // pred_region
        %s2065 = smul.u32 %s21, 2
        %s2066 = ssub.s32 0, %s2065
        %s2067 = smul.u32 %s20, %s2066
        %s2068 = sadd.s32 %s21, %s2067
        %s2069 = smul.u32 8, %s2068
      $region52: #{encoder_forward.3} parent=31 // pred_fallthru
        _
      // Predicated region
      $region53: #{encoder_forward.3} parent=31 // pred_check
        %p2070 = pneg %p170
      $region54: #{encoder_forward.3} parent=31 // pred_check_branch
        %2072 = sbr.rel (%p2070) target = $region56
      $region55: #{encoder_forward.3} parent=31 // pred_region
        _
      $region56: #{encoder_forward.3} parent=31 // pred_fallthru
        _
    $region32: #{encoder_forward.3} parent=5 // pred_fallthru
      _
    %p2073 = scmp.le.s32.totalorder 2, %s11
    // Predicated region
    $region57: #{encoder_forward.3} parent=5 // pred_check
      %p2074 = pneg %p2073
    $region58: #{encoder_forward.3} parent=5 // pred_check_branch
      %2076 = sbr.rel (%p2074) target = $region60
    $region59: #{encoder_forward.3} parent=5 // pred_region
      %s2077 = ssub.s32 %s11, 2
      // Predicated region
      $region61: #{encoder_forward.3} parent=59 // pred_check
        %p2078 = pneg %p150
      $region62: #{encoder_forward.3} parent=59 // pred_check_branch
        %2080 = sbr.rel (%p2078) target = $region64
      $region63: #{encoder_forward.3} parent=59 // pred_region
        %s2081 = smul.u32 %s23, 2
        %s2082 = ssub.s32 0, %s2081
        %s2083 = smul.u32 %s22, %s2082
        %s2084 = sadd.s32 %s23, %s2083
        %s2085 = smul.u32 8, %s2084
        %p2086 = scmp.lt.s32.totalorder %s22, 1
        %s2087 = scalar_select %p2086, %s22, 1
        %p2088 = scmp.lt.s32.totalorder %s2085, 7
        %s2089 = scalar_select %p2088, %s2085, 7
        %s2090 = smul.addr %s2087, 8
        %s2091 = sadd.s32 %s2089, %s2090
        %s2092 = smul.addr %s2091, 2
        %s2093 = scalar_lea.vmem %s3, %s2092
      $region64: #{encoder_forward.3} parent=59 // pred_fallthru
        _
      // Predicated region
      $region65: #{encoder_forward.3} parent=59 // pred_check
        %p2094 = pneg %p176
      $region66: #{encoder_forward.3} parent=59 // pred_check_branch
        %2096 = sbr.rel (%p2094) target = $region68
      $region67: #{encoder_forward.3} parent=59 // pred_region
        %p2097 = scmp.lt.s32.totalorder %s22, 1
        %s2098 = scalar_select %p2097, %s22, 1
        %s2099 = smul.addr %s2098, 2
        %s2100 = scalar_lea.vmem %s4, %s2099
      $region68: #{encoder_forward.3} parent=59 // pred_fallthru
        _
    $region60: #{encoder_forward.3} parent=5 // pred_fallthru
      _
  $region6: #{encoder_forward.3} parent=0 // loop_footer
    %s15 = sadd.s32 1, %s11
  $region7: #{encoder_forward.3} parent=0 // loop_footer_branch
    %10 = sbr.rel target = $region3
  $region8: #{encoder_forward.3} parent=0 // loop_exit
    _

// kernel: encoder_forward.2
$region0: #{encoder_forward.2}
  #allocation0 [shape = 'u32[]', space=smem, size = 0x4, offset = 0x4, fixed_abs, tag = 'smem constant byte address 0x4 - core index']
  #allocation1 [shape = 'u32[72,128]{1,0:T(1,128)}', space=vmem, size = 0x9000, scoped, tag = 'internal scratch']
  #allocation2 [shape = 'f32[2,32]{1,0:T(2,128)}', space=vmem, size = 0x400, scoped, tag = 'scratch operand']
  %s0 = inlined_call_operand.vmem [shape: bf16[2,8,3,2,32], index: 0, kind: input, shape index: {}]
  %s1 = inlined_call_operand.vmem [shape: bf16[2,3,32,32], index: 1, kind: input, shape index: {}]
  %s2 = inlined_call_operand.vmem [shape: f32[2,1,32], index: 2, kind: input, shape index: {}]
  %s3 = inlined_call_operand.vmem [shape: bf16[2,8,2,32], index: 3, kind: output, shape index: {0}]
  %s4 = inlined_call_operand.vmem [shape: f32[2,2,32], index: 4, kind: output, shape index: {1}]
  %5 = xla_tuple %s3, %s4
  %s6 = sld [smem:[#allocation0]]
  $region69: #{encoder_forward.2} parent=0
    _
  %s8 = ssub.s32 1, %s6
  %s9 = scalar_select 0, %s8, %s6
  loop: start=0, step=1, limit=4
  $region2: #{encoder_forward.2} parent=0 // loop_pre_header
    _
  $region3: #{encoder_forward.2} parent=0 // loop_header
    %s11 = sphi 0, %s15
    %p12 = scmp.ge.s32.totalorder %s11, 4
    %s18 = sphi 0, %s30
    %s19 = sphi 0, %s26
    %s20 = sphi 0, %s18
    %s21 = sphi 0, %s19
    %s22 = sphi 0, %s20
    %s23 = sphi 0, %s21
    %s43 = sphi 0, %s45
    %s46 = sphi 0, %s43
    %s47 = sphi 0, %s46
    %s63 = sphi 0, %s47
    %s69 = sphi 0, %s71
    %s72 = sphi 0, %s69
    %s73 = sphi 0, %s72
    %s89 = sphi 0, %s73
    %s95 = sphi 0, %s97
    %s98 = sphi 0, %s95
    %s99 = sphi 0, %s98
    %s115 = sphi 0, %s99
    %s131 = sphi 0, %s133
    %s134 = sphi 0, %s131
    %s135 = sphi 0, %s134
    %s151 = sphi 0, %s135
    %s157 = sphi 0, %s159
    %s160 = sphi 0, %s157
    %s161 = sphi 0, %s160
    %s177 = sphi 0, %s161
  $region4: #{encoder_forward.2} parent=0 // loop_header_branch
    %14 = sbr.rel (%p12) target = $region8
  $region5: #{encoder_forward.2} parent=0 // loop_body
    %s16 = ssub.s32 %s11, 1
    %s17 = ssub.s32 %s11, 2
    %s24 = sadd.s32 1, %s19
    %p25 = scmp.ge.s32.totalorder %s24, 1
    %s26 = scalar_select %p25, 0, %s24
    %s27 = sadd.s32 1, %s18
    %s28 = scalar_select %p25, %s27, %s18
    %p29 = scmp.ge.s32.totalorder %s28, 2
    %s30 = scalar_select %p29, 0, %s28
    %s31 = smul.u32 %s19, 2
    %s32 = ssub.s32 0, %s31
    %s33 = smul.u32 %s18, %s32
    %s34 = sadd.s32 %s19, %s33
    %s35 = smul.u32 %s26, 2
    %s36 = ssub.s32 0, %s35
    %s37 = smul.u32 %s30, %s36
    %s38 = sadd.s32 %s26, %s37
    %s39 = ssub.s32 %s18, %s30
    %s40 = ssub.s32 %s34, %s38
    %s41 = sor.u32 %s39, %s40
    %p42 = scmp.eq.s32.totalorder %s41, 0
    %s44 = sadd.s32 %s43, 1
    %s45 = scalar_select %p42, %s43, %s44
    %p48 = pneg %p42
    %p49 = scmp.eq.s32.totalorder %s11, 1
    %p50 = por %p48, %p49
    %p51 = scmp.ne.s32.totalorder %s43, %s46
    %p52 = scmp.eq.s32.totalorder %s11, 0
    %p53 = por %p51, %p52
    %p54 = scmp.ne.s32.totalorder %s43, %s46
    %p55 = scmp.eq.s32.totalorder %s16, 1
    %p56 = por %p54, %p55
    %p57 = scmp.ne.s32.totalorder %s46, %s47
    %p58 = scmp.eq.s32.totalorder %s16, 0
    %p59 = por %p57, %p58
    %p60 = scmp.ne.s32.totalorder %s46, %s47
    %p61 = scmp.eq.s32.totalorder %s17, 1
    %p62 = por %p60, %p61
    %p64 = scmp.ne.s32.totalorder %s47, %s63
    %p65 = scmp.eq.s32.totalorder %s17, 0
    %p66 = por %p64, %p65
    %s67 = ssub.s32 %s18, %s30
    %p68 = scmp.eq.s32.totalorder %s67, 0
    %s70 = sadd.s32 %s69, 1
    %s71 = scalar_select %p68, %s69, %s70
    %p74 = pneg %p68
    %p75 = scmp.eq.s32.totalorder %s11, 1
    %p76 = por %p74, %p75
    %p77 = scmp.ne.s32.totalorder %s69, %s72
    %p78 = scmp.eq.s32.totalorder %s11, 0
    %p79 = por %p77, %p78
    %p80 = scmp.ne.s32.totalorder %s69, %s72
    %p81 = scmp.eq.s32.totalorder %s16, 1
    %p82 = por %p80, %p81
    %p83 = scmp.ne.s32.totalorder %s72, %s73
    %p84 = scmp.eq.s32.totalorder %s16, 0
    %p85 = por %p83, %p84
    %p86 = scmp.ne.s32.totalorder %s72, %s73
    %p87 = scmp.eq.s32.totalorder %s17, 1
    %p88 = por %p86, %p87
    %p90 = scmp.ne.s32.totalorder %s73, %s89
    %p91 = scmp.eq.s32.totalorder %s17, 0
    %p92 = por %p90, %p91
    %s93 = ssub.s32 %s18, %s30
    %p94 = scmp.eq.s32.totalorder %s93, 0
    %s96 = sadd.s32 %s95, 1
    %s97 = scalar_select %p94, %s95, %s96
    %p100 = pneg %p94
    %p101 = scmp.eq.s32.totalorder %s11, 1
    %p102 = por %p100, %p101
    %p103 = scmp.ne.s32.totalorder %s95, %s98
    %p104 = scmp.eq.s32.totalorder %s11, 0
    %p105 = por %p103, %p104
    %p106 = scmp.ne.s32.totalorder %s95, %s98
    %p107 = scmp.eq.s32.totalorder %s16, 1
    %p108 = por %p106, %p107
    %p109 = scmp.ne.s32.totalorder %s98, %s99
    %p110 = scmp.eq.s32.totalorder %s16, 0
    %p111 = por %p109, %p110
    %p112 = scmp.ne.s32.totalorder %s98, %s99
    %p113 = scmp.eq.s32.totalorder %s17, 1
    %p114 = por %p112, %p113
    %p116 = scmp.ne.s32.totalorder %s99, %s115
    %p117 = scmp.eq.s32.totalorder %s17, 0
    %p118 = por %p116, %p117
    %s119 = smul.u32 %s19, 2
    %s120 = ssub.s32 0, %s119
    %s121 = smul.u32 %s18, %s120
    %s122 = sadd.s32 %s19, %s121
    %s123 = smul.u32 %s26, 2
    %s124 = ssub.s32 0, %s123
    %s125 = smul.u32 %s30, %s124
    %s126 = sadd.s32 %s26, %s125
    %s127 = ssub.s32 %s18, %s30
    %s128 = ssub.s32 %s122, %s126
    %s129 = sor.u32 %s127, %s128
    %p130 = scmp.eq.s32.totalorder %s129, 0
    %s132 = sadd.s32 %s131, 1
    %s133 = scalar_select %p130, %s131, %s132
    %p136 = pneg %p130
    %p137 = scmp.eq.s32.totalorder %s11, 1
    %p138 = por %p136, %p137
    %p139 = scmp.ne.s32.totalorder %s131, %s134
    %p140 = scmp.eq.s32.totalorder %s11, 0
    %p141 = por %p139, %p140
    %p142 = scmp.ne.s32.totalorder %s131, %s134
    %p143 = scmp.eq.s32.totalorder %s16, 1
    %p144 = por %p142, %p143
    %p145 = scmp.ne.s32.totalorder %s134, %s135
    %p146 = scmp.eq.s32.totalorder %s16, 0
    %p147 = por %p145, %p146
    %p148 = scmp.ne.s32.totalorder %s134, %s135
    %p149 = scmp.eq.s32.totalorder %s17, 1
    %p150 = por %p148, %p149
    %p152 = scmp.ne.s32.totalorder %s135, %s151
    %p153 = scmp.eq.s32.totalorder %s17, 0
    %p154 = por %p152, %p153
    %s155 = ssub.s32 %s18, %s30
    %p156 = scmp.eq.s32.totalorder %s155, 0
    %s158 = sadd.s32 %s157, 1
    %s159 = scalar_select %p156, %s157, %s158
    %p162 = pneg %p156
    %p163 = scmp.eq.s32.totalorder %s11, 1
    %p164 = por %p162, %p163
    %p165 = scmp.ne.s32.totalorder %s157, %s160
    %p166 = scmp.eq.s32.totalorder %s11, 0
    %p167 = por %p165, %p166
    %p168 = scmp.ne.s32.totalorder %s157, %s160
    %p169 = scmp.eq.s32.totalorder %s16, 1
    %p170 = por %p168, %p169
    %p171 = scmp.ne.s32.totalorder %s160, %s161
    %p172 = scmp.eq.s32.totalorder %s16, 0
    %p173 = por %p171, %p172
    %p174 = scmp.ne.s32.totalorder %s160, %s161
    %p175 = scmp.eq.s32.totalorder %s17, 1
    %p176 = por %p174, %p175
    %p178 = scmp.ne.s32.totalorder %s161, %s177
    %p179 = scmp.eq.s32.totalorder %s17, 0
    %p180 = por %p178, %p179
    %p181 = scmp.le.s32.totalorder 1, %s11
    %p182 = scmp.lt.s32.totalorder %s11, 3
    %p183 = pnand %p181, %p182
    %p184 = pneg %p183
    // Predicated region
    $region9: #{encoder_forward.2} parent=5 // pred_check
      _
    $region10: #{encoder_forward.2} parent=5 // pred_check_branch
      %186 = sbr.rel (%p183) target = $region12
    $region11: #{encoder_forward.2} parent=5 // pred_region
      %s187 = ssub.s32 %s11, 1
    $region12: #{encoder_forward.2} parent=5 // pred_fallthru
      _
    %p188 = scmp.lt.s32.totalorder %s11, 2
    // Predicated region
    $region13: #{encoder_forward.2} parent=5 // pred_check
      %p189 = pneg %p188
    $region14: #{encoder_forward.2} parent=5 // pred_check_branch
      %191 = sbr.rel (%p189) target = $region16
    $region15: #{encoder_forward.2} parent=5 // pred_region
      // Predicated region
      $region17: #{encoder_forward.2} parent=15 // pred_check
        %p192 = pneg %p53
      $region18: #{encoder_forward.2} parent=15 // pred_check_branch
        %194 = sbr.rel (%p192) target = $region20
      $region19: #{encoder_forward.2} parent=15 // pred_region
        %s195 = smul.u32 %s19, 2
        %s196 = ssub.s32 0, %s195
        %s197 = smul.u32 %s18, %s196
        %s198 = sadd.s32 %s19, %s197
        %s199 = smul.u32 8, %s198
        %p200 = scmp.lt.s32.totalorder %s18, 1
        %s201 = scalar_select %p200, %s18, 1
        %p202 = scmp.lt.s32.totalorder %s199, 7
        %s203 = scalar_select %p202, %s199, 7
        %s204 = smul.addr %s203, 3
        %s205 = smul.addr %s201, 24
        %s206 = sadd.s32 %s204, %s205
        %s207 = scalar_lea.vmem %s0, %s206
        %s208 = smul.u32 %s19, 2
        %s209 = ssub.s32 0, %s208
        %s210 = smul.u32 %s18, %s209
        %s211 = sadd.s32 %s19, %s210
        %s212 = smul.u32 8, %s211
      $region20: #{encoder_forward.2} parent=15 // pred_fallthru
        _
      // Predicated region
      $region21: #{encoder_forward.2} parent=15 // pred_check
        %p213 = pneg %p79
      $region22: #{encoder_forward.2} parent=15 // pred_check_branch
        %215 = sbr.rel (%p213) target = $region24
      $region23: #{encoder_forward.2} parent=15 // pred_region
        %p216 = scmp.lt.s32.totalorder %s18, 1
        %s217 = scalar_select %p216, %s18, 1
        %s218 = smul.addr %s217, 12
        %s219 = smul.addr %s218, 4
        %s220 = scalar_lea.vmem %s1, %s219
      $region24: #{encoder_forward.2} parent=15 // pred_fallthru
        _
      // Predicated region
      $region25: #{encoder_forward.2} parent=15 // pred_check
        %p221 = pneg %p105
      $region26: #{encoder_forward.2} parent=15 // pred_check_branch
        %223 = sbr.rel (%p221) target = $region28
      $region27: #{encoder_forward.2} parent=15 // pred_region
        %p224 = scmp.lt.s32.totalorder %s18, 1
        %s225 = scalar_select %p224, %s18, 1
        %s226 = scalar_lea.vmem %s2, %s225
      $region28: #{encoder_forward.2} parent=15 // pred_fallthru
        _
    $region16: #{encoder_forward.2} parent=5 // pred_fallthru
      _
    %p227 = scmp.le.s32.totalorder 1, %s11
    %p228 = scmp.lt.s32.totalorder %s11, 3
    %p229 = pnand %p227, %p228
    %p230 = pneg %p229
    // Predicated region
    $region29: #{encoder_forward.2} parent=5 // pred_check
      _
    $region30: #{encoder_forward.2} parent=5 // pred_check_branch
      %232 = sbr.rel (%p229) target = $region32
    $region31: #{encoder_forward.2} parent=5 // pred_region
      %s233 = ssub.s32 %s11, 1
      %s234 = smul.u32 %s21, 2
      %s235 = ssub.s32 0, %s234
      %s236 = smul.u32 %s20, %s235
      %s237 = sadd.s32 %s21, %s236
      %s238 = smul.u32 8, %s237
      %p239 = scmp.lt.s32.totalorder %s20, 1
      %s240 = scalar_select %p239, %s20, 1
      %p241 = scmp.lt.s32.totalorder %s238, 7
      %s242 = scalar_select %p241, %s238, 7
      %s243 = smul.addr %s242, 3
      %s244 = smul.addr %s240, 24
      %s245 = sadd.s32 %s243, %s244
      %s246 = scalar_lea.vmem %s0, %s245
      %p247 = pneg %p59
      %p248 = pneg %p56
      %p249 = scmp.lt.s32.totalorder %s20, 1
      %s250 = scalar_select %p249, %s20, 1
      %s251 = smul.addr %s250, 12
      %s252 = smul.addr %s251, 4
      %s253 = scalar_lea.vmem %s1, %s252
      %p254 = pneg %p85
      %p255 = pneg %p82
      %p256 = scmp.lt.s32.totalorder %s20, 1
      %s257 = scalar_select %p256, %s20, 1
      %s258 = scalar_lea.vmem %s2, %s257
      %p259 = pneg %p111
      %p260 = pneg %p108
      %p261 = pneg %p147
      %p262 = pneg %p144
      %s263 = smul.u32 %s21, 2
      %s264 = ssub.s32 0, %s263
      %s265 = smul.u32 %s20, %s264
      %s266 = sadd.s32 %s21, %s265
      %s267 = smul.u32 8, %s266
      %p268 = scmp.lt.s32.totalorder %s20, 1
      %s269 = scalar_select %p268, %s20, 1
      %p270 = scmp.lt.s32.totalorder %s267, 7
      %s271 = scalar_select %p270, %s267, 7
      %s272 = smul.addr %s269, 8
      %s273 = sadd.s32 %s271, %s272
      %s274 = scalar_lea.vmem %s3, %s273
      %p275 = pneg %p173
      %p276 = pneg %p170
      %p277 = scmp.lt.s32.totalorder %s20, 1
      %s278 = scalar_select %p277, %s20, 1
      %s279 = smul.addr %s278, 2
      %s280 = scalar_lea.vmem %s4, %s279
      %s281 = smul.u32 %s21, 2
      %s282 = ssub.s32 0, %s281
      %s283 = smul.u32 %s20, %s282
      %s284 = sadd.s32 %s21, %s283
      %s285 = smul.u32 8, %s284
      %p286 = scmp.lt.s32.totalorder %s20, 1
      %s287 = scalar_select %p286, %s20, 1
      %p288 = scmp.lt.s32.totalorder %s285, 7
      %s289 = scalar_select %p288, %s285, 7
      %s290 = smul.addr %s289, 3
      %s291 = smul.addr %s287, 24
      %s292 = sadd.s32 %s290, %s291
      %s293 = scalar_lea.vmem %s0, %s292
      %s294 = smul.u32 %s21, 2
      %s295 = ssub.s32 0, %s294
      %s296 = smul.u32 %s20, %s295
      %s297 = sadd.s32 %s21, %s296
      %s298 = smul.u32 8, %s297
      %p299 = scmp.lt.s32.totalorder %s20, 1
      %s300 = scalar_select %p299, %s20, 1
      %s301 = smul.addr %s300, 12
      %s302 = smul.addr %s301, 4
      %s303 = scalar_lea.vmem %s1, %s302
      %p304 = scmp.lt.s32.totalorder %s20, 1
      %s305 = scalar_select %p304, %s20, 1
      %s306 = scalar_lea.vmem %s2, %s305
      %s307 = smul.u32 %s21, 2
      %s308 = ssub.s32 0, %s307
      %s309 = smul.u32 %s20, %s308
      %s310 = sadd.s32 %s21, %s309
      %s311 = smul.u32 8, %s310
      %p312 = scmp.lt.s32.totalorder %s20, 1
      %s313 = scalar_select %p312, %s20, 1
      %p314 = scmp.lt.s32.totalorder %s311, 7
      %s315 = scalar_select %p314, %s311, 7
      %s316 = smul.addr %s313, 8
      %s317 = sadd.s32 %s315, %s316
      %s318 = scalar_lea.vmem %s3, %s317
      %s319 = smul.u32 %s21, 2
      %s320 = ssub.s32 0, %s319
      %s321 = smul.u32 %s20, %s320
      %s322 = sadd.s32 %s21, %s321
      %s323 = smul.u32 8, %s322
      %p324 = scmp.lt.s32.totalorder %s20, 1
      %s325 = scalar_select %p324, %s20, 1
      %s326 = smul.addr %s325, 2
      %s327 = scalar_lea.vmem %s4, %s326
      %p329 = scmp.eq.s32.totalorder %s21, 0
      // Predicated region
      $region33: #{encoder_forward.2} parent=31 // pred_check
        %p330 = pneg %p329
      $region34: #{encoder_forward.2} parent=31 // pred_check_branch
        %332 = sbr.rel (%p330) target = $region36
      $region35: #{encoder_forward.2} parent=31 // pred_region
        %vm333 = vcmask 254976
        %334 = vst.msk [vmem:[#allocation2] sm:$0x3] %vm333, 0.0
      $region36: #{encoder_forward.2} parent=31 // pred_fallthru
        _
      %v335 = vld [vmem:[%s303] sm:$0xf]
      %v336 = vld [vmem:[%s303 + $0x4] sm:$0xf]
      %v337 = vld [vmem:[%s303 + $0x8] sm:$0xf]
      %v338 = vld [vmem:[%s303 + $0xc] sm:$0xf]
      %s339 = scalar_lea.vmem %s303, 16
      %v340 = vld [vmem:[%s339] sm:$0xf]
      %v341 = vld [vmem:[%s339 + $0x4] sm:$0xf]
      %v342 = vld [vmem:[%s339 + $0x8] sm:$0xf]
      %v343 = vld [vmem:[%s339 + $0xc] sm:$0xf]
      %s344 = scalar_lea.vmem %s303, 32
      %v345 = vld [vmem:[%s344] sm:$0xf]
      %v346 = vld [vmem:[%s344 + $0x4] sm:$0xf]
      %v347 = vld [vmem:[%s344 + $0x8] sm:$0xf]
      %v348 = vld [vmem:[%s344 + $0xc] sm:$0xf]
      %v349 = vld [vmem:[%s306] sm:$0x1]
      %v351 = vperm.slane %v349, 0
      %p353 = scmp.eq.s32.totalorder %s20, 0
      // Predicated region
      $region37: #{encoder_forward.2} parent=31 // pred_check
        %p354 = pneg %p353
      $region38: #{encoder_forward.2} parent=31 // pred_check_branch
        %356 = sbr.rel (%p354) target = $region40
      $region39: #{encoder_forward.2} parent=31 // pred_region
        %v357 = vld [vmem:[#allocation2] sm:$0x3]
        %v358 = vld [vmem:[%s293] sm:$0x1]
        %v359 = vunpack.c.l.bf16 %v358
        %s360 = scalar_lea.vmem %s293, 1
        %v361 = vld [vmem:[%s360] sm:$0x1]
        %v362 = vunpack.c.l.bf16 %v361
        %s363 = scalar_lea.vmem %s293, 2
        %v364 = vld [vmem:[%s363] sm:$0x1]
        %v365 = vunpack.c.l.bf16 %v364
        %v366 = vpack.c.bf16 %v357, %v357
        %v371 = vunpack.c.l.b16 %v335
        %v372 = vunpack.c.l.b16 %v336
        %v373 = vunpack.c.l.b16 %v337
        %v374 = vunpack.c.l.b16 %v338
        %v375 = vpack.c.b16 %v372, %v371
        %v376 = vpack.c.b16 %v374, %v373
        %vm379 = vcmask 261120
        %v381 = vsel %vm379, %v366, 0
        %383 = vmatpush.bf16.msra.mxu0 0
        %384 = vmatpush.bf16.msra.mxu0 0
        %385 = vmatpush.bf16.msra.mxu0 0
        %386 = vmatpush.bf16.msra.mxu0 0
        %387 = vmatpush.bf16.msra.mxu0 0
        %388 = vmatpush.bf16.msra.mxu0 0
        %389 = vmatpush.bf16.msra.mxu0 %v376
        %390 = vmatpush.bf16.msra.mxu0 %v375
        %391 = vmatmul.bf16.gmra.mxu0 %v381
        %v392 = vpop.f32.mrf.mxu0
        %v393 = vadd.f32 0.0, %v392
        %v394 = vpop.f32.mrf.mxu0
        %395 = vdwg.mxu0
        %v400 = vunpack.c.l.b16 %v340
        %v401 = vunpack.c.l.b16 %v341
        %v402 = vunpack.c.l.b16 %v342
        %v403 = vunpack.c.l.b16 %v343
        %v404 = vpack.c.b16 %v401, %v400
        %v405 = vpack.c.b16 %v403, %v402
        %408 = vmatpush.bf16.msra.mxu0 0
        %409 = vmatpush.bf16.msra.mxu0 0
        %410 = vmatpush.bf16.msra.mxu0 0
        %411 = vmatpush.bf16.msra.mxu0 0
        %412 = vmatpush.bf16.msra.mxu0 0
        %413 = vmatpush.bf16.msra.mxu0 0
        %414 = vmatpush.bf16.msra.mxu0 %v405
        %415 = vmatpush.bf16.msra.mxu0 %v404
        %416 = vmatmul.bf16.gmra.mxu0 %v381
        %v417 = vpop.f32.mrf.mxu0
        %v418 = vadd.f32 0.0, %v417
        %v419 = vpop.f32.mrf.mxu0
        %420 = vdwg.mxu0
        %v421 = vadd.f32 %v359, %v393
        %v422 = vxor.u32 %v421, 2147483648
        %v423 = vmul.f32 %v422, 1.442695
        %v424 = vpow.pop %v423
        %v425 = vadd.f32 %v424, 1.0
        %v426 = vrcp.pop %v425
        %v427 = vmul.f32 %v425, %v426
        %v428 = vsub.f32 1.0, %v427
        %v429 = vmul.f32 %v426, %v428
        %v430 = vadd.f32 %v426, %v429
        %vm431 = vweird.f32 %v425
        %vm432 = vweird.f32 %v426
        %vm433 = vmor %vm431, %vm432
        %v434 = vsel %vm433, %v426, %v430
        %v435 = vand.u32 2147483647, %v425
        %vm436 = vcmp.eq.f32.partialorder %v435, 8.507059e+37
        %v437 = vand.u32 %v425, 2147483648
        %v438 = vor.u32 1.1754944e-38, %v437
        %v439 = vsel %vm436, %v438, %v434
        %v440 = vmul.f32 1.0, %v439
        %v441 = vadd.f32 %v362, %v418
        %v442 = vxor.u32 %v441, 2147483648
        %v443 = vmul.f32 %v442, 1.442695
        %v444 = vpow.pop %v443
        %v445 = vadd.f32 %v444, 1.0
        %v446 = vrcp.pop %v445
        %v447 = vmul.f32 %v445, %v446
        %v448 = vsub.f32 1.0, %v447
        %v449 = vmul.f32 %v446, %v448
        %v450 = vadd.f32 %v446, %v449
        %vm451 = vweird.f32 %v445
        %vm452 = vweird.f32 %v446
        %vm453 = vmor %vm451, %vm452
        %v454 = vsel %vm453, %v446, %v450
        %v455 = vand.u32 2147483647, %v445
        %vm456 = vcmp.eq.f32.partialorder %v455, 8.507059e+37
        %v457 = vand.u32 %v445, 2147483648
        %v458 = vor.u32 1.1754944e-38, %v457
        %v459 = vsel %vm456, %v458, %v454
        %v460 = vmul.f32 1.0, %v459
        %v465 = vunpack.c.l.b16 %v345
        %v466 = vunpack.c.l.b16 %v346
        %v467 = vunpack.c.l.b16 %v347
        %v468 = vunpack.c.l.b16 %v348
        %v469 = vpack.c.b16 %v466, %v465
        %v470 = vpack.c.b16 %v468, %v467
        %473 = vmatpush.bf16.msra.mxu0 0
        %474 = vmatpush.bf16.msra.mxu0 0
        %475 = vmatpush.bf16.msra.mxu0 0
        %476 = vmatpush.bf16.msra.mxu0 0
        %477 = vmatpush.bf16.msra.mxu0 0
        %478 = vmatpush.bf16.msra.mxu0 0
        %479 = vmatpush.bf16.msra.mxu0 %v470
        %480 = vmatpush.bf16.msra.mxu0 %v469
        %481 = vmatmul.bf16.gmra.mxu0 %v381
        %v482 = vpop.f32.mrf.mxu0
        %v483 = vadd.f32 %v351, %v482
        %v484 = vpop.f32.mrf.mxu0
        %485 = vdwg.mxu0
        %v486 = vmul.f32 %v440, %v483
        %v487 = vadd.f32 %v365, %v486
        %v488 = vtanh.pop %v487
        %v489 = vsub.f32 %v357, %v488
        %v490 = vmul.f32 %v460, %v489
        %v491 = vadd.f32 %v488, %v490
        %v492 = vpack.c.bf16 %v491, %v491
        %vm493 = vcmask 253952
        %494 = vst.msk [vmem:[%s318] sm:$0x1] %vm493, %v492
        %s495 = scalar_lea.vmem %s293, 3
        %v496 = vld [vmem:[%s495] sm:$0x1]
        %v497 = vunpack.c.l.bf16 %v496
        %s498 = scalar_lea.vmem %s293, 4
        %v499 = vld [vmem:[%s498] sm:$0x1]
        %v500 = vunpack.c.l.bf16 %v499
        %s501 = scalar_lea.vmem %s293, 5
        %v502 = vld [vmem:[%s501] sm:$0x1]
        %v503 = vunpack.c.l.bf16 %v502
        %v505 = vsel %vm379, %v492, 0
        %507 = vmatpush.bf16.msra.mxu0 0
        %508 = vmatpush.bf16.msra.mxu0 0
        %509 = vmatpush.bf16.msra.mxu0 0
        %510 = vmatpush.bf16.msra.mxu0 0
        %511 = vmatpush.bf16.msra.mxu0 0
        %512 = vmatpush.bf16.msra.mxu0 0
        %513 = vmatpush.bf16.msra.mxu0 %v376
        %514 = vmatpush.bf16.msra.mxu0 %v375
        %515 = vmatmul.bf16.gmra.mxu0 %v505
        %v516 = vpop.f32.mrf.mxu0
        %v517 = vadd.f32 0.0, %v516
        %v518 = vpop.f32.mrf.mxu0
        %519 = vdwg.mxu0
        %520 = vmatpush.bf16.msra.mxu0 0
        %521 = vmatpush.bf16.msra.mxu0 0
        %522 = vmatpush.bf16.msra.mxu0 0
        %523 = vmatpush.bf16.msra.mxu0 0
        %524 = vmatpush.bf16.msra.mxu0 0
        %525 = vmatpush.bf16.msra.mxu0 0
        %526 = vmatpush.bf16.msra.mxu0 %v405
        %527 = vmatpush.bf16.msra.mxu0 %v404
        %528 = vmatmul.bf16.gmra.mxu0 %v505
        %v529 = vpop.f32.mrf.mxu0
        %v530 = vadd.f32 0.0, %v529
        %v531 = vpop.f32.mrf.mxu0
        %532 = vdwg.mxu0
        %v533 = vadd.f32 %v497, %v517
        %v534 = vxor.u32 %v533, 2147483648
        %v535 = vmul.f32 %v534, 1.442695
        %v536 = vpow.pop %v535
        %v537 = vadd.f32 %v536, 1.0
        %v538 = vrcp.pop %v537
        %v539 = vmul.f32 %v537, %v538
        %v540 = vsub.f32 1.0, %v539
        %v541 = vmul.f32 %v538, %v540
        %v542 = vadd.f32 %v538, %v541
        %vm543 = vweird.f32 %v537
        %vm544 = vweird.f32 %v538
        %vm545 = vmor %vm543, %vm544
        %v546 = vsel %vm545, %v538, %v542
        %v547 = vand.u32 2147483647, %v537
        %vm548 = vcmp.eq.f32.partialorder %v547, 8.507059e+37
        %v549 = vand.u32 %v537, 2147483648
        %v550 = vor.u32 1.1754944e-38, %v549
        %v551 = vsel %vm548, %v550, %v546
        %v552 = vmul.f32 1.0, %v551
        %v553 = vadd.f32 %v500, %v530
        %v554 = vxor.u32 %v553, 2147483648
        %v555 = vmul.f32 %v554, 1.442695
        %v556 = vpow.pop %v555
        %v557 = vadd.f32 %v556, 1.0
        %v558 = vrcp.pop %v557
        %v559 = vmul.f32 %v557, %v558
        %v560 = vsub.f32 1.0, %v559
        %v561 = vmul.f32 %v558, %v560
        %v562 = vadd.f32 %v558, %v561
        %vm563 = vweird.f32 %v557
        %vm564 = vweird.f32 %v558
        %vm565 = vmor %vm563, %vm564
        %v566 = vsel %vm565, %v558, %v562
        %v567 = vand.u32 2147483647, %v557
        %vm568 = vcmp.eq.f32.partialorder %v567, 8.507059e+37
        %v569 = vand.u32 %v557, 2147483648
        %v570 = vor.u32 1.1754944e-38, %v569
        %v571 = vsel %vm568, %v570, %v566
        %v572 = vmul.f32 1.0, %v571
        %573 = vmatpush.bf16.msra.mxu0 0
        %574 = vmatpush.bf16.msra.mxu0 0
        %575 = vmatpush.bf16.msra.mxu0 0
        %576 = vmatpush.bf16.msra.mxu0 0
        %577 = vmatpush.bf16.msra.mxu0 0
        %578 = vmatpush.bf16.msra.mxu0 0
        %579 = vmatpush.bf16.msra.mxu0 %v470
        %580 = vmatpush.bf16.msra.mxu0 %v469
        %581 = vmatmul.bf16.gmra.mxu0 %v505
        %v582 = vpop.f32.mrf.mxu0
        %v583 = vadd.f32 %v351, %v582
        %v584 = vpop.f32.mrf.mxu0
        %585 = vdwg.mxu0
        %v586 = vmul.f32 %v552, %v583
        %v587 = vadd.f32 %v503, %v586
        %v588 = vtanh.pop %v587
        %v589 = vsub.f32 %v491, %v588
        %v590 = vmul.f32 %v572, %v589
        %v591 = vadd.f32 %v588, %v590
        %v592 = vpack.c.bf16 %v591, %v591
        %s593 = scalar_lea.vmem %s318, 1
        %594 = vst.msk [vmem:[%s593] sm:$0x1] %vm493, %v592
        %s595 = scalar_lea.vmem %s293, 6
        %v596 = vld [vmem:[%s595] sm:$0x1]
        %v597 = vunpack.c.l.bf16 %v596
        %s598 = scalar_lea.vmem %s293, 7
        %v599 = vld [vmem:[%s598] sm:$0x1]
        %v600 = vunpack.c.l.bf16 %v599
        %s601 = scalar_lea.vmem %s293, 8
        %v602 = vld [vmem:[%s601] sm:$0x1]
        %v603 = vunpack.c.l.bf16 %v602
        %v605 = vsel %vm379, %v592, 0
        %607 = vmatpush.bf16.msra.mxu0 0
        %608 = vmatpush.bf16.msra.mxu0 0
        %609 = vmatpush.bf16.msra.mxu0 0
        %610 = vmatpush.bf16.msra.mxu0 0
        %611 = vmatpush.bf16.msra.mxu0 0
        %612 = vmatpush.bf16.msra.mxu0 0
        %613 = vmatpush.bf16.msra.mxu0 %v376
        %614 = vmatpush.bf16.msra.mxu0 %v375
        %615 = vmatmul.bf16.gmra.mxu0 %v605
        %v616 = vpop.f32.mrf.mxu0
        %v617 = vadd.f32 0.0, %v616
        %v618 = vpop.f32.mrf.mxu0
        %619 = vdwg.mxu0
        %620 = vmatpush.bf16.msra.mxu0 0
        %621 = vmatpush.bf16.msra.mxu0 0
        %622 = vmatpush.bf16.msra.mxu0 0
        %623 = vmatpush.bf16.msra.mxu0 0
        %624 = vmatpush.bf16.msra.mxu0 0
        %625 = vmatpush.bf16.msra.mxu0 0
        %626 = vmatpush.bf16.msra.mxu0 %v405
        %627 = vmatpush.bf16.msra.mxu0 %v404
        %628 = vmatmul.bf16.gmra.mxu0 %v605
        %v629 = vpop.f32.mrf.mxu0
        %v630 = vadd.f32 0.0, %v629
        %v631 = vpop.f32.mrf.mxu0
        %632 = vdwg.mxu0
        %v633 = vadd.f32 %v597, %v617
        %v634 = vxor.u32 %v633, 2147483648
        %v635 = vmul.f32 %v634, 1.442695
        %v636 = vpow.pop %v635
        %v637 = vadd.f32 %v636, 1.0
        %v638 = vrcp.pop %v637
        %v639 = vmul.f32 %v637, %v638
        %v640 = vsub.f32 1.0, %v639
        %v641 = vmul.f32 %v638, %v640
        %v642 = vadd.f32 %v638, %v641
        %vm643 = vweird.f32 %v637
        %vm644 = vweird.f32 %v638
        %vm645 = vmor %vm643, %vm644
        %v646 = vsel %vm645, %v638, %v642
        %v647 = vand.u32 2147483647, %v637
        %vm648 = vcmp.eq.f32.partialorder %v647, 8.507059e+37
        %v649 = vand.u32 %v637, 2147483648
        %v650 = vor.u32 1.1754944e-38, %v649
        %v651 = vsel %vm648, %v650, %v646
        %v652 = vmul.f32 1.0, %v651
        %v653 = vadd.f32 %v600, %v630
        %v654 = vxor.u32 %v653, 2147483648
        %v655 = vmul.f32 %v654, 1.442695
        %v656 = vpow.pop %v655
        %v657 = vadd.f32 %v656, 1.0
        %v658 = vrcp.pop %v657
        %v659 = vmul.f32 %v657, %v658
        %v660 = vsub.f32 1.0, %v659
        %v661 = vmul.f32 %v658, %v660
        %v662 = vadd.f32 %v658, %v661
        %vm663 = vweird.f32 %v657
        %vm664 = vweird.f32 %v658
        %vm665 = vmor %vm663, %vm664
        %v666 = vsel %vm665, %v658, %v662
        %v667 = vand.u32 2147483647, %v657
        %vm668 = vcmp.eq.f32.partialorder %v667, 8.507059e+37
        %v669 = vand.u32 %v657, 2147483648
        %v670 = vor.u32 1.1754944e-38, %v669
        %v671 = vsel %vm668, %v670, %v666
        %v672 = vmul.f32 1.0, %v671
        %673 = vmatpush.bf16.msra.mxu0 0
        %674 = vmatpush.bf16.msra.mxu0 0
        %675 = vmatpush.bf16.msra.mxu0 0
        %676 = vmatpush.bf16.msra.mxu0 0
        %677 = vmatpush.bf16.msra.mxu0 0
        %678 = vmatpush.bf16.msra.mxu0 0
        %679 = vmatpush.bf16.msra.mxu0 %v470
        %680 = vmatpush.bf16.msra.mxu0 %v469
        %681 = vmatmul.bf16.gmra.mxu0 %v605
        %v682 = vpop.f32.mrf.mxu0
        %v683 = vadd.f32 %v351, %v682
        %v684 = vpop.f32.mrf.mxu0
        %685 = vdwg.mxu0
        %v686 = vmul.f32 %v652, %v683
        %v687 = vadd.f32 %v603, %v686
        %v688 = vtanh.pop %v687
        %v689 = vsub.f32 %v591, %v688
        %v690 = vmul.f32 %v672, %v689
        %v691 = vadd.f32 %v688, %v690
        %v692 = vpack.c.bf16 %v691, %v691
        %s693 = scalar_lea.vmem %s318, 2
        %694 = vst.msk [vmem:[%s693] sm:$0x1] %vm493, %v692
        %s695 = scalar_lea.vmem %s293, 9
        %v696 = vld [vmem:[%s695] sm:$0x1]
        %v697 = vunpack.c.l.bf16 %v696
        %s698 = scalar_lea.vmem %s293, 10
        %v699 = vld [vmem:[%s698] sm:$0x1]
        %v700 = vunpack.c.l.bf16 %v699
        %s701 = scalar_lea.vmem %s293, 11
        %v702 = vld [vmem:[%s701] sm:$0x1]
        %v703 = vunpack.c.l.bf16 %v702
        %v705 = vsel %vm379, %v692, 0
        %707 = vmatpush.bf16.msra.mxu0 0
        %708 = vmatpush.bf16.msra.mxu0 0
        %709 = vmatpush.bf16.msra.mxu0 0
        %710 = vmatpush.bf16.msra.mxu0 0
        %711 = vmatpush.bf16.msra.mxu0 0
        %712 = vmatpush.bf16.msra.mxu0 0
        %713 = vmatpush.bf16.msra.mxu0 %v376
        %714 = vmatpush.bf16.msra.mxu0 %v375
        %715 = vmatmul.bf16.gmra.mxu0 %v705
        %v716 = vpop.f32.mrf.mxu0
        %v717 = vadd.f32 0.0, %v716
        %v718 = vpop.f32.mrf.mxu0
        %719 = vdwg.mxu0
        %720 = vmatpush.bf16.msra.mxu0 0
        %721 = vmatpush.bf16.msra.mxu0 0
        %722 = vmatpush.bf16.msra.mxu0 0
        %723 = vmatpush.bf16.msra.mxu0 0
        %724 = vmatpush.bf16.msra.mxu0 0
        %725 = vmatpush.bf16.msra.mxu0 0
        %726 = vmatpush.bf16.msra.mxu0 %v405
        %727 = vmatpush.bf16.msra.mxu0 %v404
        %728 = vmatmul.bf16.gmra.mxu0 %v705
        %v729 = vpop.f32.mrf.mxu0
        %v730 = vadd.f32 0.0, %v729
        %v731 = vpop.f32.mrf.mxu0
        %732 = vdwg.mxu0
        %v733 = vadd.f32 %v697, %v717
        %v734 = vxor.u32 %v733, 2147483648
        %v735 = vmul.f32 %v734, 1.442695
        %v736 = vpow.pop %v735
        %v737 = vadd.f32 %v736, 1.0
        %v738 = vrcp.pop %v737
        %v739 = vmul.f32 %v737, %v738
        %v740 = vsub.f32 1.0, %v739
        %v741 = vmul.f32 %v738, %v740
        %v742 = vadd.f32 %v738, %v741
        %vm743 = vweird.f32 %v737
        %vm744 = vweird.f32 %v738
        %vm745 = vmor %vm743, %vm744
        %v746 = vsel %vm745, %v738, %v742
        %v747 = vand.u32 2147483647, %v737
        %vm748 = vcmp.eq.f32.partialorder %v747, 8.507059e+37
        %v749 = vand.u32 %v737, 2147483648
        %v750 = vor.u32 1.1754944e-38, %v749
        %v751 = vsel %vm748, %v750, %v746
        %v752 = vmul.f32 1.0, %v751
        %v753 = vadd.f32 %v700, %v730
        %v754 = vxor.u32 %v753, 2147483648
        %v755 = vmul.f32 %v754, 1.442695
        %v756 = vpow.pop %v755
        %v757 = vadd.f32 %v756, 1.0
        %v758 = vrcp.pop %v757
        %v759 = vmul.f32 %v757, %v758
        %v760 = vsub.f32 1.0, %v759
        %v761 = vmul.f32 %v758, %v760
        %v762 = vadd.f32 %v758, %v761
        %vm763 = vweird.f32 %v757
        %vm764 = vweird.f32 %v758
        %vm765 = vmor %vm763, %vm764
        %v766 = vsel %vm765, %v758, %v762
        %v767 = vand.u32 2147483647, %v757
        %vm768 = vcmp.eq.f32.partialorder %v767, 8.507059e+37
        %v769 = vand.u32 %v757, 2147483648
        %v770 = vor.u32 1.1754944e-38, %v769
        %v771 = vsel %vm768, %v770, %v766
        %v772 = vmul.f32 1.0, %v771
        %773 = vmatpush.bf16.msra.mxu0 0
        %774 = vmatpush.bf16.msra.mxu0 0
        %775 = vmatpush.bf16.msra.mxu0 0
        %776 = vmatpush.bf16.msra.mxu0 0
        %777 = vmatpush.bf16.msra.mxu0 0
        %778 = vmatpush.bf16.msra.mxu0 0
        %779 = vmatpush.bf16.msra.mxu0 %v470
        %780 = vmatpush.bf16.msra.mxu0 %v469
        %781 = vmatmul.bf16.gmra.mxu0 %v705
        %v782 = vpop.f32.mrf.mxu0
        %v783 = vadd.f32 %v351, %v782
        %v784 = vpop.f32.mrf.mxu0
        %785 = vdwg.mxu0
        %v786 = vmul.f32 %v752, %v783
        %v787 = vadd.f32 %v703, %v786
        %v788 = vtanh.pop %v787
        %v789 = vsub.f32 %v691, %v788
        %v790 = vmul.f32 %v772, %v789
        %v791 = vadd.f32 %v788, %v790
        %v792 = vpack.c.bf16 %v791, %v791
        %s793 = scalar_lea.vmem %s318, 3
        %794 = vst.msk [vmem:[%s793] sm:$0x1] %vm493, %v792
        %s795 = scalar_lea.vmem %s293, 12
        %v796 = vld [vmem:[%s795] sm:$0x1]
        %v797 = vunpack.c.l.bf16 %v796
        %s798 = scalar_lea.vmem %s293, 13
        %v799 = vld [vmem:[%s798] sm:$0x1]
        %v800 = vunpack.c.l.bf16 %v799
        %s801 = scalar_lea.vmem %s293, 14
        %v802 = vld [vmem:[%s801] sm:$0x1]
        %v803 = vunpack.c.l.bf16 %v802
        %v805 = vsel %vm379, %v792, 0
        %807 = vmatpush.bf16.msra.mxu0 0
        %808 = vmatpush.bf16.msra.mxu0 0
        %809 = vmatpush.bf16.msra.mxu0 0
        %810 = vmatpush.bf16.msra.mxu0 0
        %811 = vmatpush.bf16.msra.mxu0 0
        %812 = vmatpush.bf16.msra.mxu0 0
        %813 = vmatpush.bf16.msra.mxu0 %v376
        %814 = vmatpush.bf16.msra.mxu0 %v375
        %815 = vmatmul.bf16.gmra.mxu0 %v805
        %v816 = vpop.f32.mrf.mxu0
        %v817 = vadd.f32 0.0, %v816
        %v818 = vpop.f32.mrf.mxu0
        %819 = vdwg.mxu0
        %820 = vmatpush.bf16.msra.mxu0 0
        %821 = vmatpush.bf16.msra.mxu0 0
        %822 = vmatpush.bf16.msra.mxu0 0
        %823 = vmatpush.bf16.msra.mxu0 0
        %824 = vmatpush.bf16.msra.mxu0 0
        %825 = vmatpush.bf16.msra.mxu0 0
        %826 = vmatpush.bf16.msra.mxu0 %v405
        %827 = vmatpush.bf16.msra.mxu0 %v404
        %828 = vmatmul.bf16.gmra.mxu0 %v805
        %v829 = vpop.f32.mrf.mxu0
        %v830 = vadd.f32 0.0, %v829
        %v831 = vpop.f32.mrf.mxu0
        %832 = vdwg.mxu0
        %v833 = vadd.f32 %v797, %v817
        %v834 = vxor.u32 %v833, 2147483648
        %v835 = vmul.f32 %v834, 1.442695
        %v836 = vpow.pop %v835
        %v837 = vadd.f32 %v836, 1.0
        %v838 = vrcp.pop %v837
        %v839 = vmul.f32 %v837, %v838
        %v840 = vsub.f32 1.0, %v839
        %v841 = vmul.f32 %v838, %v840
        %v842 = vadd.f32 %v838, %v841
        %vm843 = vweird.f32 %v837
        %vm844 = vweird.f32 %v838
        %vm845 = vmor %vm843, %vm844
        %v846 = vsel %vm845, %v838, %v842
        %v847 = vand.u32 2147483647, %v837
        %vm848 = vcmp.eq.f32.partialorder %v847, 8.507059e+37
        %v849 = vand.u32 %v837, 2147483648
        %v850 = vor.u32 1.1754944e-38, %v849
        %v851 = vsel %vm848, %v850, %v846
        %v852 = vmul.f32 1.0, %v851
        %v853 = vadd.f32 %v800, %v830
        %v854 = vxor.u32 %v853, 2147483648
        %v855 = vmul.f32 %v854, 1.442695
        %v856 = vpow.pop %v855
        %v857 = vadd.f32 %v856, 1.0
        %v858 = vrcp.pop %v857
        %v859 = vmul.f32 %v857, %v858
        %v860 = vsub.f32 1.0, %v859
        %v861 = vmul.f32 %v858, %v860
        %v862 = vadd.f32 %v858, %v861
        %vm863 = vweird.f32 %v857
        %vm864 = vweird.f32 %v858
        %vm865 = vmor %vm863, %vm864
        %v866 = vsel %vm865, %v858, %v862
        %v867 = vand.u32 2147483647, %v857
        %vm868 = vcmp.eq.f32.partialorder %v867, 8.507059e+37
        %v869 = vand.u32 %v857, 2147483648
        %v870 = vor.u32 1.1754944e-38, %v869
        %v871 = vsel %vm868, %v870, %v866
        %v872 = vmul.f32 1.0, %v871
        %873 = vmatpush.bf16.msra.mxu0 0
        %874 = vmatpush.bf16.msra.mxu0 0
        %875 = vmatpush.bf16.msra.mxu0 0
        %876 = vmatpush.bf16.msra.mxu0 0
        %877 = vmatpush.bf16.msra.mxu0 0
        %878 = vmatpush.bf16.msra.mxu0 0
        %879 = vmatpush.bf16.msra.mxu0 %v470
        %880 = vmatpush.bf16.msra.mxu0 %v469
        %881 = vmatmul.bf16.gmra.mxu0 %v805
        %v882 = vpop.f32.mrf.mxu0
        %v883 = vadd.f32 %v351, %v882
        %v884 = vpop.f32.mrf.mxu0
        %885 = vdwg.mxu0
        %v886 = vmul.f32 %v852, %v883
        %v887 = vadd.f32 %v803, %v886
        %v888 = vtanh.pop %v887
        %v889 = vsub.f32 %v791, %v888
        %v890 = vmul.f32 %v872, %v889
        %v891 = vadd.f32 %v888, %v890
        %v892 = vpack.c.bf16 %v891, %v891
        %s893 = scalar_lea.vmem %s318, 4
        %894 = vst.msk [vmem:[%s893] sm:$0x1] %vm493, %v892
        %s895 = scalar_lea.vmem %s293, 15
        %v896 = vld [vmem:[%s895] sm:$0x1]
        %v897 = vunpack.c.l.bf16 %v896
        %s898 = scalar_lea.vmem %s293, 16
        %v899 = vld [vmem:[%s898] sm:$0x1]
        %v900 = vunpack.c.l.bf16 %v899
        %s901 = scalar_lea.vmem %s293, 17
        %v902 = vld [vmem:[%s901] sm:$0x1]
        %v903 = vunpack.c.l.bf16 %v902
        %v905 = vsel %vm379, %v892, 0
        %907 = vmatpush.bf16.msra.mxu0 0
        %908 = vmatpush.bf16.msra.mxu0 0
        %909 = vmatpush.bf16.msra.mxu0 0
        %910 = vmatpush.bf16.msra.mxu0 0
        %911 = vmatpush.bf16.msra.mxu0 0
        %912 = vmatpush.bf16.msra.mxu0 0
        %913 = vmatpush.bf16.msra.mxu0 %v376
        %914 = vmatpush.bf16.msra.mxu0 %v375
        %915 = vmatmul.bf16.gmra.mxu0 %v905
        %v916 = vpop.f32.mrf.mxu0
        %v917 = vadd.f32 0.0, %v916
        %v918 = vpop.f32.mrf.mxu0
        %919 = vdwg.mxu0
        %920 = vmatpush.bf16.msra.mxu0 0
        %921 = vmatpush.bf16.msra.mxu0 0
        %922 = vmatpush.bf16.msra.mxu0 0
        %923 = vmatpush.bf16.msra.mxu0 0
        %924 = vmatpush.bf16.msra.mxu0 0
        %925 = vmatpush.bf16.msra.mxu0 0
        %926 = vmatpush.bf16.msra.mxu0 %v405
        %927 = vmatpush.bf16.msra.mxu0 %v404
        %928 = vmatmul.bf16.gmra.mxu0 %v905
        %v929 = vpop.f32.mrf.mxu0
        %v930 = vadd.f32 0.0, %v929
        %v931 = vpop.f32.mrf.mxu0
        %932 = vdwg.mxu0
        %v933 = vadd.f32 %v897, %v917
        %v934 = vxor.u32 %v933, 2147483648
        %v935 = vmul.f32 %v934, 1.442695
        %v936 = vpow.pop %v935
        %v937 = vadd.f32 %v936, 1.0
        %v938 = vrcp.pop %v937
        %v939 = vmul.f32 %v937, %v938
        %v940 = vsub.f32 1.0, %v939
        %v941 = vmul.f32 %v938, %v940
        %v942 = vadd.f32 %v938, %v941
        %vm943 = vweird.f32 %v937
        %vm944 = vweird.f32 %v938
        %vm945 = vmor %vm943, %vm944
        %v946 = vsel %vm945, %v938, %v942
        %v947 = vand.u32 2147483647, %v937
        %vm948 = vcmp.eq.f32.partialorder %v947, 8.507059e+37
        %v949 = vand.u32 %v937, 2147483648
        %v950 = vor.u32 1.1754944e-38, %v949
        %v951 = vsel %vm948, %v950, %v946
        %v952 = vmul.f32 1.0, %v951
        %v953 = vadd.f32 %v900, %v930
        %v954 = vxor.u32 %v953, 2147483648
        %v955 = vmul.f32 %v954, 1.442695
        %v956 = vpow.pop %v955
        %v957 = vadd.f32 %v956, 1.0
        %v958 = vrcp.pop %v957
        %v959 = vmul.f32 %v957, %v958
        %v960 = vsub.f32 1.0, %v959
        %v961 = vmul.f32 %v958, %v960
        %v962 = vadd.f32 %v958, %v961
        %vm963 = vweird.f32 %v957
        %vm964 = vweird.f32 %v958
        %vm965 = vmor %vm963, %vm964
        %v966 = vsel %vm965, %v958, %v962
        %v967 = vand.u32 2147483647, %v957
        %vm968 = vcmp.eq.f32.partialorder %v967, 8.507059e+37
        %v969 = vand.u32 %v957, 2147483648
        %v970 = vor.u32 1.1754944e-38, %v969
        %v971 = vsel %vm968, %v970, %v966
        %v972 = vmul.f32 1.0, %v971
        %973 = vmatpush.bf16.msra.mxu0 0
        %974 = vmatpush.bf16.msra.mxu0 0
        %975 = vmatpush.bf16.msra.mxu0 0
        %976 = vmatpush.bf16.msra.mxu0 0
        %977 = vmatpush.bf16.msra.mxu0 0
        %978 = vmatpush.bf16.msra.mxu0 0
        %979 = vmatpush.bf16.msra.mxu0 %v470
        %980 = vmatpush.bf16.msra.mxu0 %v469
        %981 = vmatmul.bf16.gmra.mxu0 %v905
        %v982 = vpop.f32.mrf.mxu0
        %v983 = vadd.f32 %v351, %v982
        %v984 = vpop.f32.mrf.mxu0
        %985 = vdwg.mxu0
        %v986 = vmul.f32 %v952, %v983
        %v987 = vadd.f32 %v903, %v986
        %v988 = vtanh.pop %v987
        %v989 = vsub.f32 %v891, %v988
        %v990 = vmul.f32 %v972, %v989
        %v991 = vadd.f32 %v988, %v990
        %v992 = vpack.c.bf16 %v991, %v991
        %s993 = scalar_lea.vmem %s318, 5
        %994 = vst.msk [vmem:[%s993] sm:$0x1] %vm493, %v992
        %s995 = scalar_lea.vmem %s293, 18
        %v996 = vld [vmem:[%s995] sm:$0x1]
        %v997 = vunpack.c.l.bf16 %v996
        %s998 = scalar_lea.vmem %s293, 19
        %v999 = vld [vmem:[%s998] sm:$0x1]
        %v1000 = vunpack.c.l.bf16 %v999
        %s1001 = scalar_lea.vmem %s293, 20
        %v1002 = vld [vmem:[%s1001] sm:$0x1]
        %v1003 = vunpack.c.l.bf16 %v1002
        %v1005 = vsel %vm379, %v992, 0
        %1007 = vmatpush.bf16.msra.mxu0 0
        %1008 = vmatpush.bf16.msra.mxu0 0
        %1009 = vmatpush.bf16.msra.mxu0 0
        %1010 = vmatpush.bf16.msra.mxu0 0
        %1011 = vmatpush.bf16.msra.mxu0 0
        %1012 = vmatpush.bf16.msra.mxu0 0
        %1013 = vmatpush.bf16.msra.mxu0 %v376
        %1014 = vmatpush.bf16.msra.mxu0 %v375
        %1015 = vmatmul.bf16.gmra.mxu0 %v1005
        %v1016 = vpop.f32.mrf.mxu0
        %v1017 = vadd.f32 0.0, %v1016
        %v1018 = vpop.f32.mrf.mxu0
        %1019 = vdwg.mxu0
        %1020 = vmatpush.bf16.msra.mxu0 0
        %1021 = vmatpush.bf16.msra.mxu0 0
        %1022 = vmatpush.bf16.msra.mxu0 0
        %1023 = vmatpush.bf16.msra.mxu0 0
        %1024 = vmatpush.bf16.msra.mxu0 0
        %1025 = vmatpush.bf16.msra.mxu0 0
        %1026 = vmatpush.bf16.msra.mxu0 %v405
        %1027 = vmatpush.bf16.msra.mxu0 %v404
        %1028 = vmatmul.bf16.gmra.mxu0 %v1005
        %v1029 = vpop.f32.mrf.mxu0
        %v1030 = vadd.f32 0.0, %v1029
        %v1031 = vpop.f32.mrf.mxu0
        %1032 = vdwg.mxu0
        %v1033 = vadd.f32 %v997, %v1017
        %v1034 = vxor.u32 %v1033, 2147483648
        %v1035 = vmul.f32 %v1034, 1.442695
        %v1036 = vpow.pop %v1035
        %v1037 = vadd.f32 %v1036, 1.0
        %v1038 = vrcp.pop %v1037
        %v1039 = vmul.f32 %v1037, %v1038
        %v1040 = vsub.f32 1.0, %v1039
        %v1041 = vmul.f32 %v1038, %v1040
        %v1042 = vadd.f32 %v1038, %v1041
        %vm1043 = vweird.f32 %v1037
        %vm1044 = vweird.f32 %v1038
        %vm1045 = vmor %vm1043, %vm1044
        %v1046 = vsel %vm1045, %v1038, %v1042
        %v1047 = vand.u32 2147483647, %v1037
        %vm1048 = vcmp.eq.f32.partialorder %v1047, 8.507059e+37
        %v1049 = vand.u32 %v1037, 2147483648
        %v1050 = vor.u32 1.1754944e-38, %v1049
        %v1051 = vsel %vm1048, %v1050, %v1046
        %v1052 = vmul.f32 1.0, %v1051
        %v1053 = vadd.f32 %v1000, %v1030
        %v1054 = vxor.u32 %v1053, 2147483648
        %v1055 = vmul.f32 %v1054, 1.442695
        %v1056 = vpow.pop %v1055
        %v1057 = vadd.f32 %v1056, 1.0
        %v1058 = vrcp.pop %v1057
        %v1059 = vmul.f32 %v1057, %v1058
        %v1060 = vsub.f32 1.0, %v1059
        %v1061 = vmul.f32 %v1058, %v1060
        %v1062 = vadd.f32 %v1058, %v1061
        %vm1063 = vweird.f32 %v1057
        %vm1064 = vweird.f32 %v1058
        %vm1065 = vmor %vm1063, %vm1064
        %v1066 = vsel %vm1065, %v1058, %v1062
        %v1067 = vand.u32 2147483647, %v1057
        %vm1068 = vcmp.eq.f32.partialorder %v1067, 8.507059e+37
        %v1069 = vand.u32 %v1057, 2147483648
        %v1070 = vor.u32 1.1754944e-38, %v1069
        %v1071 = vsel %vm1068, %v1070, %v1066
        %v1072 = vmul.f32 1.0, %v1071
        %1073 = vmatpush.bf16.msra.mxu0 0
        %1074 = vmatpush.bf16.msra.mxu0 0
        %1075 = vmatpush.bf16.msra.mxu0 0
        %1076 = vmatpush.bf16.msra.mxu0 0
        %1077 = vmatpush.bf16.msra.mxu0 0
        %1078 = vmatpush.bf16.msra.mxu0 0
        %1079 = vmatpush.bf16.msra.mxu0 %v470
        %1080 = vmatpush.bf16.msra.mxu0 %v469
        %1081 = vmatmul.bf16.gmra.mxu0 %v1005
        %v1082 = vpop.f32.mrf.mxu0
        %v1083 = vadd.f32 %v351, %v1082
        %v1084 = vpop.f32.mrf.mxu0
        %1085 = vdwg.mxu0
        %v1086 = vmul.f32 %v1052, %v1083
        %v1087 = vadd.f32 %v1003, %v1086
        %v1088 = vtanh.pop %v1087
        %v1089 = vsub.f32 %v991, %v1088
        %v1090 = vmul.f32 %v1072, %v1089
        %v1091 = vadd.f32 %v1088, %v1090
        %v1092 = vpack.c.bf16 %v1091, %v1091
        %s1093 = scalar_lea.vmem %s318, 6
        %1094 = vst.msk [vmem:[%s1093] sm:$0x1] %vm493, %v1092
        %s1095 = scalar_lea.vmem %s293, 21
        %v1096 = vld [vmem:[%s1095] sm:$0x1]
        %v1097 = vunpack.c.l.bf16 %v1096
        %s1098 = scalar_lea.vmem %s293, 22
        %v1099 = vld [vmem:[%s1098] sm:$0x1]
        %v1100 = vunpack.c.l.bf16 %v1099
        %s1101 = scalar_lea.vmem %s293, 23
        %v1102 = vld [vmem:[%s1101] sm:$0x1]
        %v1103 = vunpack.c.l.bf16 %v1102
        %v1105 = vsel %vm379, %v1092, 0
        %1107 = vmatpush.bf16.msra.mxu0 0
        %1108 = vmatpush.bf16.msra.mxu0 0
        %1109 = vmatpush.bf16.msra.mxu0 0
        %1110 = vmatpush.bf16.msra.mxu0 0
        %1111 = vmatpush.bf16.msra.mxu0 0
        %1112 = vmatpush.bf16.msra.mxu0 0
        %1113 = vmatpush.bf16.msra.mxu0 %v376
        %1114 = vmatpush.bf16.msra.mxu0 %v375
        %1115 = vmatmul.bf16.gmra.mxu0 %v1105
        %v1116 = vpop.f32.mrf.mxu0
        %v1117 = vadd.f32 0.0, %v1116
        %v1118 = vpop.f32.mrf.mxu0
        %1119 = vdwg.mxu0
        %1120 = vmatpush.bf16.msra.mxu0 0
        %1121 = vmatpush.bf16.msra.mxu0 0
        %1122 = vmatpush.bf16.msra.mxu0 0
        %1123 = vmatpush.bf16.msra.mxu0 0
        %1124 = vmatpush.bf16.msra.mxu0 0
        %1125 = vmatpush.bf16.msra.mxu0 0
        %1126 = vmatpush.bf16.msra.mxu0 %v405
        %1127 = vmatpush.bf16.msra.mxu0 %v404
        %1128 = vmatmul.bf16.gmra.mxu0 %v1105
        %v1129 = vpop.f32.mrf.mxu0
        %v1130 = vadd.f32 0.0, %v1129
        %v1131 = vpop.f32.mrf.mxu0
        %1132 = vdwg.mxu0
        %v1133 = vadd.f32 %v1097, %v1117
        %v1134 = vxor.u32 %v1133, 2147483648
        %v1135 = vmul.f32 %v1134, 1.442695
        %v1136 = vpow.pop %v1135
        %v1137 = vadd.f32 %v1136, 1.0
        %v1138 = vrcp.pop %v1137
        %v1139 = vmul.f32 %v1137, %v1138
        %v1140 = vsub.f32 1.0, %v1139
        %v1141 = vmul.f32 %v1138, %v1140
        %v1142 = vadd.f32 %v1138, %v1141
        %vm1143 = vweird.f32 %v1137
        %vm1144 = vweird.f32 %v1138
        %vm1145 = vmor %vm1143, %vm1144
        %v1146 = vsel %vm1145, %v1138, %v1142
        %v1147 = vand.u32 2147483647, %v1137
        %vm1148 = vcmp.eq.f32.partialorder %v1147, 8.507059e+37
        %v1149 = vand.u32 %v1137, 2147483648
        %v1150 = vor.u32 1.1754944e-38, %v1149
        %v1151 = vsel %vm1148, %v1150, %v1146
        %v1152 = vmul.f32 1.0, %v1151
        %v1153 = vadd.f32 %v1100, %v1130
        %v1154 = vxor.u32 %v1153, 2147483648
        %v1155 = vmul.f32 %v1154, 1.442695
        %v1156 = vpow.pop %v1155
        %v1157 = vadd.f32 %v1156, 1.0
        %v1158 = vrcp.pop %v1157
        %v1159 = vmul.f32 %v1157, %v1158
        %v1160 = vsub.f32 1.0, %v1159
        %v1161 = vmul.f32 %v1158, %v1160
        %v1162 = vadd.f32 %v1158, %v1161
        %vm1163 = vweird.f32 %v1157
        %vm1164 = vweird.f32 %v1158
        %vm1165 = vmor %vm1163, %vm1164
        %v1166 = vsel %vm1165, %v1158, %v1162
        %v1167 = vand.u32 2147483647, %v1157
        %vm1168 = vcmp.eq.f32.partialorder %v1167, 8.507059e+37
        %v1169 = vand.u32 %v1157, 2147483648
        %v1170 = vor.u32 1.1754944e-38, %v1169
        %v1171 = vsel %vm1168, %v1170, %v1166
        %v1172 = vmul.f32 1.0, %v1171
        %1173 = vmatpush.bf16.msra.mxu0 0
        %1174 = vmatpush.bf16.msra.mxu0 0
        %1175 = vmatpush.bf16.msra.mxu0 0
        %1176 = vmatpush.bf16.msra.mxu0 0
        %1177 = vmatpush.bf16.msra.mxu0 0
        %1178 = vmatpush.bf16.msra.mxu0 0
        %1179 = vmatpush.bf16.msra.mxu0 %v470
        %1180 = vmatpush.bf16.msra.mxu0 %v469
        %1181 = vmatmul.bf16.gmra.mxu0 %v1105
        %v1182 = vpop.f32.mrf.mxu0
        %v1183 = vadd.f32 %v351, %v1182
        %v1184 = vpop.f32.mrf.mxu0
        %1185 = vdwg.mxu0
        %v1186 = vmul.f32 %v1152, %v1183
        %v1187 = vadd.f32 %v1103, %v1186
        %v1188 = vtanh.pop %v1187
        %v1189 = vsub.f32 %v1091, %v1188
        %v1190 = vmul.f32 %v1172, %v1189
        %v1191 = vadd.f32 %v1188, %v1190
        %v1192 = vpack.c.bf16 %v1191, %v1191
        %s1193 = scalar_lea.vmem %s318, 7
        %1194 = vst.msk [vmem:[%s1193] sm:$0x1] %vm493, %v1192
        %vm1195 = vcmask 254976
        %1196 = vst.msk [vmem:[#allocation2] sm:$0x3] %vm1195, %v1191
      $region40: #{encoder_forward.2} parent=31 // pred_fallthru
        _
      %p1197 = scmp.eq.s32.totalorder %s20, 1
      // Predicated region
      $region41: #{encoder_forward.2} parent=31 // pred_check
        %p1198 = pneg %p1197
      $region42: #{encoder_forward.2} parent=31 // pred_check_branch
        %1200 = sbr.rel (%p1198) target = $region44
      $region43: #{encoder_forward.2} parent=31 // pred_region
        %v1201 = vld [vmem:[#allocation2] sm:$0x3]
        %s1202 = scalar_lea.vmem %s293, 21
        %v1203 = vld [vmem:[%s1202] sm:$0x1]
        %v1204 = vunpack.c.l.bf16 %v1203
        %s1205 = scalar_lea.vmem %s293, 22
        %v1206 = vld [vmem:[%s1205] sm:$0x1]
        %v1207 = vunpack.c.l.bf16 %v1206
        %s1208 = scalar_lea.vmem %s293, 23
        %v1209 = vld [vmem:[%s1208] sm:$0x1]
        %v1210 = vunpack.c.l.bf16 %v1209
        %v1211 = vpack.c.bf16 %v1201, %v1201
        %v1216 = vunpack.c.l.b16 %v335
        %v1217 = vunpack.c.l.b16 %v336
        %v1218 = vunpack.c.l.b16 %v337
        %v1219 = vunpack.c.l.b16 %v338
        %v1220 = vpack.c.b16 %v1217, %v1216
        %v1221 = vpack.c.b16 %v1219, %v1218
        %vm1224 = vcmask 261120
        %v1226 = vsel %vm1224, %v1211, 0
        %1228 = vmatpush.bf16.msra.mxu0 0
        %1229 = vmatpush.bf16.msra.mxu0 0
        %1230 = vmatpush.bf16.msra.mxu0 0
        %1231 = vmatpush.bf16.msra.mxu0 0
        %1232 = vmatpush.bf16.msra.mxu0 0
        %1233 = vmatpush.bf16.msra.mxu0 0
        %1234 = vmatpush.bf16.msra.mxu0 %v1221
        %1235 = vmatpush.bf16.msra.mxu0 %v1220
        %1236 = vmatmul.bf16.gmra.mxu0 %v1226
        %v1237 = vpop.f32.mrf.mxu0
        %v1238 = vadd.f32 0.0, %v1237
        %v1239 = vpop.f32.mrf.mxu0
        %1240 = vdwg.mxu0
        %v1245 = vunpack.c.l.b16 %v340
        %v1246 = vunpack.c.l.b16 %v341
        %v1247 = vunpack.c.l.b16 %v342
        %v1248 = vunpack.c.l.b16 %v343
        %v1249 = vpack.c.b16 %v1246, %v1245
        %v1250 = vpack.c.b16 %v1248, %v1247
        %1253 = vmatpush.bf16.msra.mxu0 0
        %1254 = vmatpush.bf16.msra.mxu0 0
        %1255 = vmatpush.bf16.msra.mxu0 0
        %1256 = vmatpush.bf16.msra.mxu0 0
        %1257 = vmatpush.bf16.msra.mxu0 0
        %1258 = vmatpush.bf16.msra.mxu0 0
        %1259 = vmatpush.bf16.msra.mxu0 %v1250
        %1260 = vmatpush.bf16.msra.mxu0 %v1249
        %1261 = vmatmul.bf16.gmra.mxu0 %v1226
        %v1262 = vpop.f32.mrf.mxu0
        %v1263 = vadd.f32 0.0, %v1262
        %v1264 = vpop.f32.mrf.mxu0
        %1265 = vdwg.mxu0
        %v1266 = vadd.f32 %v1204, %v1238
        %v1267 = vxor.u32 %v1266, 2147483648
        %v1268 = vmul.f32 %v1267, 1.442695
        %v1269 = vpow.pop %v1268
        %v1270 = vadd.f32 %v1269, 1.0
        %v1271 = vrcp.pop %v1270
        %v1272 = vmul.f32 %v1270, %v1271
        %v1273 = vsub.f32 1.0, %v1272
        %v1274 = vmul.f32 %v1271, %v1273
        %v1275 = vadd.f32 %v1271, %v1274
        %vm1276 = vweird.f32 %v1270
        %vm1277 = vweird.f32 %v1271
        %vm1278 = vmor %vm1276, %vm1277
        %v1279 = vsel %vm1278, %v1271, %v1275
        %v1280 = vand.u32 2147483647, %v1270
        %vm1281 = vcmp.eq.f32.partialorder %v1280, 8.507059e+37
        %v1282 = vand.u32 %v1270, 2147483648
        %v1283 = vor.u32 1.1754944e-38, %v1282
        %v1284 = vsel %vm1281, %v1283, %v1279
        %v1285 = vmul.f32 1.0, %v1284
        %v1286 = vadd.f32 %v1207, %v1263
        %v1287 = vxor.u32 %v1286, 2147483648
        %v1288 = vmul.f32 %v1287, 1.442695
        %v1289 = vpow.pop %v1288
        %v1290 = vadd.f32 %v1289, 1.0
        %v1291 = vrcp.pop %v1290
        %v1292 = vmul.f32 %v1290, %v1291
        %v1293 = vsub.f32 1.0, %v1292
        %v1294 = vmul.f32 %v1291, %v1293
        %v1295 = vadd.f32 %v1291, %v1294
        %vm1296 = vweird.f32 %v1290
        %vm1297 = vweird.f32 %v1291
        %vm1298 = vmor %vm1296, %vm1297
        %v1299 = vsel %vm1298, %v1291, %v1295
        %v1300 = vand.u32 2147483647, %v1290
        %vm1301 = vcmp.eq.f32.partialorder %v1300, 8.507059e+37
        %v1302 = vand.u32 %v1290, 2147483648
        %v1303 = vor.u32 1.1754944e-38, %v1302
        %v1304 = vsel %vm1301, %v1303, %v1299
        %v1305 = vmul.f32 1.0, %v1304
        %v1310 = vunpack.c.l.b16 %v345
        %v1311 = vunpack.c.l.b16 %v346
        %v1312 = vunpack.c.l.b16 %v347
        %v1313 = vunpack.c.l.b16 %v348
        %v1314 = vpack.c.b16 %v1311, %v1310
        %v1315 = vpack.c.b16 %v1313, %v1312
        %1318 = vmatpush.bf16.msra.mxu0 0
        %1319 = vmatpush.bf16.msra.mxu0 0
        %1320 = vmatpush.bf16.msra.mxu0 0
        %1321 = vmatpush.bf16.msra.mxu0 0
        %1322 = vmatpush.bf16.msra.mxu0 0
        %1323 = vmatpush.bf16.msra.mxu0 0
        %1324 = vmatpush.bf16.msra.mxu0 %v1315
        %1325 = vmatpush.bf16.msra.mxu0 %v1314
        %1326 = vmatmul.bf16.gmra.mxu0 %v1226
        %v1327 = vpop.f32.mrf.mxu0
        %v1328 = vadd.f32 %v351, %v1327
        %v1329 = vpop.f32.mrf.mxu0
        %1330 = vdwg.mxu0
        %v1331 = vmul.f32 %v1285, %v1328
        %v1332 = vadd.f32 %v1210, %v1331
        %v1333 = vtanh.pop %v1332
        %v1334 = vsub.f32 %v1201, %v1333
        %v1335 = vmul.f32 %v1305, %v1334
        %v1336 = vadd.f32 %v1333, %v1335
        %v1337 = vpack.c.bf16 %v1336, %v1336
        %s1338 = scalar_lea.vmem %s318, 7
        %vm1339 = vcmask 253952
        %1340 = vst.msk [vmem:[%s1338] sm:$0x1] %vm1339, %v1337
        %s1341 = scalar_lea.vmem %s293, 18
        %v1342 = vld [vmem:[%s1341] sm:$0x1]
        %v1343 = vunpack.c.l.bf16 %v1342
        %s1344 = scalar_lea.vmem %s293, 19
        %v1345 = vld [vmem:[%s1344] sm:$0x1]
        %v1346 = vunpack.c.l.bf16 %v1345
        %s1347 = scalar_lea.vmem %s293, 20
        %v1348 = vld [vmem:[%s1347] sm:$0x1]
        %v1349 = vunpack.c.l.bf16 %v1348
        %v1351 = vsel %vm1224, %v1337, 0
        %1353 = vmatpush.bf16.msra.mxu0 0
        %1354 = vmatpush.bf16.msra.mxu0 0
        %1355 = vmatpush.bf16.msra.mxu0 0
        %1356 = vmatpush.bf16.msra.mxu0 0
        %1357 = vmatpush.bf16.msra.mxu0 0
        %1358 = vmatpush.bf16.msra.mxu0 0
        %1359 = vmatpush.bf16.msra.mxu0 %v1221
        %1360 = vmatpush.bf16.msra.mxu0 %v1220
        %1361 = vmatmul.bf16.gmra.mxu0 %v1351
        %v1362 = vpop.f32.mrf.mxu0
        %v1363 = vadd.f32 0.0, %v1362
        %v1364 = vpop.f32.mrf.mxu0
        %1365 = vdwg.mxu0
        %1366 = vmatpush.bf16.msra.mxu0 0
        %1367 = vmatpush.bf16.msra.mxu0 0
        %1368 = vmatpush.bf16.msra.mxu0 0
        %1369 = vmatpush.bf16.msra.mxu0 0
        %1370 = vmatpush.bf16.msra.mxu0 0
        %1371 = vmatpush.bf16.msra.mxu0 0
        %1372 = vmatpush.bf16.msra.mxu0 %v1250
        %1373 = vmatpush.bf16.msra.mxu0 %v1249
        %1374 = vmatmul.bf16.gmra.mxu0 %v1351
        %v1375 = vpop.f32.mrf.mxu0
        %v1376 = vadd.f32 0.0, %v1375
        %v1377 = vpop.f32.mrf.mxu0
        %1378 = vdwg.mxu0
        %v1379 = vadd.f32 %v1343, %v1363
        %v1380 = vxor.u32 %v1379, 2147483648
        %v1381 = vmul.f32 %v1380, 1.442695
        %v1382 = vpow.pop %v1381
        %v1383 = vadd.f32 %v1382, 1.0
        %v1384 = vrcp.pop %v1383
        %v1385 = vmul.f32 %v1383, %v1384
        %v1386 = vsub.f32 1.0, %v1385
        %v1387 = vmul.f32 %v1384, %v1386
        %v1388 = vadd.f32 %v1384, %v1387
        %vm1389 = vweird.f32 %v1383
        %vm1390 = vweird.f32 %v1384
        %vm1391 = vmor %vm1389, %vm1390
        %v1392 = vsel %vm1391, %v1384, %v1388
        %v1393 = vand.u32 2147483647, %v1383
        %vm1394 = vcmp.eq.f32.partialorder %v1393, 8.507059e+37
        %v1395 = vand.u32 %v1383, 2147483648
        %v1396 = vor.u32 1.1754944e-38, %v1395
        %v1397 = vsel %vm1394, %v1396, %v1392
        %v1398 = vmul.f32 1.0, %v1397
        %v1399 = vadd.f32 %v1346, %v1376
        %v1400 = vxor.u32 %v1399, 2147483648
        %v1401 = vmul.f32 %v1400, 1.442695
        %v1402 = vpow.pop %v1401
        %v1403 = vadd.f32 %v1402, 1.0
        %v1404 = vrcp.pop %v1403
        %v1405 = vmul.f32 %v1403, %v1404
        %v1406 = vsub.f32 1.0, %v1405
        %v1407 = vmul.f32 %v1404, %v1406
        %v1408 = vadd.f32 %v1404, %v1407
        %vm1409 = vweird.f32 %v1403
        %vm1410 = vweird.f32 %v1404
        %vm1411 = vmor %vm1409, %vm1410
        %v1412 = vsel %vm1411, %v1404, %v1408
        %v1413 = vand.u32 2147483647, %v1403
        %vm1414 = vcmp.eq.f32.partialorder %v1413, 8.507059e+37
        %v1415 = vand.u32 %v1403, 2147483648
        %v1416 = vor.u32 1.1754944e-38, %v1415
        %v1417 = vsel %vm1414, %v1416, %v1412
        %v1418 = vmul.f32 1.0, %v1417
        %1419 = vmatpush.bf16.msra.mxu0 0
        %1420 = vmatpush.bf16.msra.mxu0 0
        %1421 = vmatpush.bf16.msra.mxu0 0
        %1422 = vmatpush.bf16.msra.mxu0 0
        %1423 = vmatpush.bf16.msra.mxu0 0
        %1424 = vmatpush.bf16.msra.mxu0 0
        %1425 = vmatpush.bf16.msra.mxu0 %v1315
        %1426 = vmatpush.bf16.msra.mxu0 %v1314
        %1427 = vmatmul.bf16.gmra.mxu0 %v1351
        %v1428 = vpop.f32.mrf.mxu0
        %v1429 = vadd.f32 %v351, %v1428
        %v1430 = vpop.f32.mrf.mxu0
        %1431 = vdwg.mxu0
        %v1432 = vmul.f32 %v1398, %v1429
        %v1433 = vadd.f32 %v1349, %v1432
        %v1434 = vtanh.pop %v1433
        %v1435 = vsub.f32 %v1336, %v1434
        %v1436 = vmul.f32 %v1418, %v1435
        %v1437 = vadd.f32 %v1434, %v1436
        %v1438 = vpack.c.bf16 %v1437, %v1437
        %s1439 = scalar_lea.vmem %s318, 6
        %1440 = vst.msk [vmem:[%s1439] sm:$0x1] %vm1339, %v1438
        %s1441 = scalar_lea.vmem %s293, 15
        %v1442 = vld [vmem:[%s1441] sm:$0x1]
        %v1443 = vunpack.c.l.bf16 %v1442
        %s1444 = scalar_lea.vmem %s293, 16
        %v1445 = vld [vmem:[%s1444] sm:$0x1]
        %v1446 = vunpack.c.l.bf16 %v1445
        %s1447 = scalar_lea.vmem %s293, 17
        %v1448 = vld [vmem:[%s1447] sm:$0x1]
        %v1449 = vunpack.c.l.bf16 %v1448
        %v1451 = vsel %vm1224, %v1438, 0
        %1453 = vmatpush.bf16.msra.mxu0 0
        %1454 = vmatpush.bf16.msra.mxu0 0
        %1455 = vmatpush.bf16.msra.mxu0 0
        %1456 = vmatpush.bf16.msra.mxu0 0
        %1457 = vmatpush.bf16.msra.mxu0 0
        %1458 = vmatpush.bf16.msra.mxu0 0
        %1459 = vmatpush.bf16.msra.mxu0 %v1221
        %1460 = vmatpush.bf16.msra.mxu0 %v1220
        %1461 = vmatmul.bf16.gmra.mxu0 %v1451
        %v1462 = vpop.f32.mrf.mxu0
        %v1463 = vadd.f32 0.0, %v1462
        %v1464 = vpop.f32.mrf.mxu0
        %1465 = vdwg.mxu0
        %1466 = vmatpush.bf16.msra.mxu0 0
        %1467 = vmatpush.bf16.msra.mxu0 0
        %1468 = vmatpush.bf16.msra.mxu0 0
        %1469 = vmatpush.bf16.msra.mxu0 0
        %1470 = vmatpush.bf16.msra.mxu0 0
        %1471 = vmatpush.bf16.msra.mxu0 0
        %1472 = vmatpush.bf16.msra.mxu0 %v1250
        %1473 = vmatpush.bf16.msra.mxu0 %v1249
        %1474 = vmatmul.bf16.gmra.mxu0 %v1451
        %v1475 = vpop.f32.mrf.mxu0
        %v1476 = vadd.f32 0.0, %v1475
        %v1477 = vpop.f32.mrf.mxu0
        %1478 = vdwg.mxu0
        %v1479 = vadd.f32 %v1443, %v1463
        %v1480 = vxor.u32 %v1479, 2147483648
        %v1481 = vmul.f32 %v1480, 1.442695
        %v1482 = vpow.pop %v1481
        %v1483 = vadd.f32 %v1482, 1.0
        %v1484 = vrcp.pop %v1483
        %v1485 = vmul.f32 %v1483, %v1484
        %v1486 = vsub.f32 1.0, %v1485
        %v1487 = vmul.f32 %v1484, %v1486
        %v1488 = vadd.f32 %v1484, %v1487
        %vm1489 = vweird.f32 %v1483
        %vm1490 = vweird.f32 %v1484
        %vm1491 = vmor %vm1489, %vm1490
        %v1492 = vsel %vm1491, %v1484, %v1488
        %v1493 = vand.u32 2147483647, %v1483
        %vm1494 = vcmp.eq.f32.partialorder %v1493, 8.507059e+37
        %v1495 = vand.u32 %v1483, 2147483648
        %v1496 = vor.u32 1.1754944e-38, %v1495
        %v1497 = vsel %vm1494, %v1496, %v1492
        %v1498 = vmul.f32 1.0, %v1497
        %v1499 = vadd.f32 %v1446, %v1476
        %v1500 = vxor.u32 %v1499, 2147483648
        %v1501 = vmul.f32 %v1500, 1.442695
        %v1502 = vpow.pop %v1501
        %v1503 = vadd.f32 %v1502, 1.0
        %v1504 = vrcp.pop %v1503
        %v1505 = vmul.f32 %v1503, %v1504
        %v1506 = vsub.f32 1.0, %v1505
        %v1507 = vmul.f32 %v1504, %v1506
        %v1508 = vadd.f32 %v1504, %v1507
        %vm1509 = vweird.f32 %v1503
        %vm1510 = vweird.f32 %v1504
        %vm1511 = vmor %vm1509, %vm1510
        %v1512 = vsel %vm1511, %v1504, %v1508
        %v1513 = vand.u32 2147483647, %v1503
        %vm1514 = vcmp.eq.f32.partialorder %v1513, 8.507059e+37
        %v1515 = vand.u32 %v1503, 2147483648
        %v1516 = vor.u32 1.1754944e-38, %v1515
        %v1517 = vsel %vm1514, %v1516, %v1512
        %v1518 = vmul.f32 1.0, %v1517
        %1519 = vmatpush.bf16.msra.mxu0 0
        %1520 = vmatpush.bf16.msra.mxu0 0
        %1521 = vmatpush.bf16.msra.mxu0 0
        %1522 = vmatpush.bf16.msra.mxu0 0
        %1523 = vmatpush.bf16.msra.mxu0 0
        %1524 = vmatpush.bf16.msra.mxu0 0
        %1525 = vmatpush.bf16.msra.mxu0 %v1315
        %1526 = vmatpush.bf16.msra.mxu0 %v1314
        %1527 = vmatmul.bf16.gmra.mxu0 %v1451
        %v1528 = vpop.f32.mrf.mxu0
        %v1529 = vadd.f32 %v351, %v1528
        %v1530 = vpop.f32.mrf.mxu0
        %1531 = vdwg.mxu0
        %v1532 = vmul.f32 %v1498, %v1529
        %v1533 = vadd.f32 %v1449, %v1532
        %v1534 = vtanh.pop %v1533
        %v1535 = vsub.f32 %v1437, %v1534
        %v1536 = vmul.f32 %v1518, %v1535
        %v1537 = vadd.f32 %v1534, %v1536
        %v1538 = vpack.c.bf16 %v1537, %v1537
        %s1539 = scalar_lea.vmem %s318, 5
        %1540 = vst.msk [vmem:[%s1539] sm:$0x1] %vm1339, %v1538
        %s1541 = scalar_lea.vmem %s293, 12
        %v1542 = vld [vmem:[%s1541] sm:$0x1]
        %v1543 = vunpack.c.l.bf16 %v1542
        %s1544 = scalar_lea.vmem %s293, 13
        %v1545 = vld [vmem:[%s1544] sm:$0x1]
        %v1546 = vunpack.c.l.bf16 %v1545
        %s1547 = scalar_lea.vmem %s293, 14
        %v1548 = vld [vmem:[%s1547] sm:$0x1]
        %v1549 = vunpack.c.l.bf16 %v1548
        %v1551 = vsel %vm1224, %v1538, 0
        %1553 = vmatpush.bf16.msra.mxu0 0
        %1554 = vmatpush.bf16.msra.mxu0 0
        %1555 = vmatpush.bf16.msra.mxu0 0
        %1556 = vmatpush.bf16.msra.mxu0 0
        %1557 = vmatpush.bf16.msra.mxu0 0
        %1558 = vmatpush.bf16.msra.mxu0 0
        %1559 = vmatpush.bf16.msra.mxu0 %v1221
        %1560 = vmatpush.bf16.msra.mxu0 %v1220
        %1561 = vmatmul.bf16.gmra.mxu0 %v1551
        %v1562 = vpop.f32.mrf.mxu0
        %v1563 = vadd.f32 0.0, %v1562
        %v1564 = vpop.f32.mrf.mxu0
        %1565 = vdwg.mxu0
        %1566 = vmatpush.bf16.msra.mxu0 0
        %1567 = vmatpush.bf16.msra.mxu0 0
        %1568 = vmatpush.bf16.msra.mxu0 0
        %1569 = vmatpush.bf16.msra.mxu0 0
        %1570 = vmatpush.bf16.msra.mxu0 0
        %1571 = vmatpush.bf16.msra.mxu0 0
        %1572 = vmatpush.bf16.msra.mxu0 %v1250
        %1573 = vmatpush.bf16.msra.mxu0 %v1249
        %1574 = vmatmul.bf16.gmra.mxu0 %v1551
        %v1575 = vpop.f32.mrf.mxu0
        %v1576 = vadd.f32 0.0, %v1575
        %v1577 = vpop.f32.mrf.mxu0
        %1578 = vdwg.mxu0
        %v1579 = vadd.f32 %v1543, %v1563
        %v1580 = vxor.u32 %v1579, 2147483648
        %v1581 = vmul.f32 %v1580, 1.442695
        %v1582 = vpow.pop %v1581
        %v1583 = vadd.f32 %v1582, 1.0
        %v1584 = vrcp.pop %v1583
        %v1585 = vmul.f32 %v1583, %v1584
        %v1586 = vsub.f32 1.0, %v1585
        %v1587 = vmul.f32 %v1584, %v1586
        %v1588 = vadd.f32 %v1584, %v1587
        %vm1589 = vweird.f32 %v1583
        %vm1590 = vweird.f32 %v1584
        %vm1591 = vmor %vm1589, %vm1590
        %v1592 = vsel %vm1591, %v1584, %v1588
        %v1593 = vand.u32 2147483647, %v1583
        %vm1594 = vcmp.eq.f32.partialorder %v1593, 8.507059e+37
        %v1595 = vand.u32 %v1583, 2147483648
        %v1596 = vor.u32 1.1754944e-38, %v1595
        %v1597 = vsel %vm1594, %v1596, %v1592
        %v1598 = vmul.f32 1.0, %v1597
        %v1599 = vadd.f32 %v1546, %v1576
        %v1600 = vxor.u32 %v1599, 2147483648
        %v1601 = vmul.f32 %v1600, 1.442695
        %v1602 = vpow.pop %v1601
        %v1603 = vadd.f32 %v1602, 1.0
        %v1604 = vrcp.pop %v1603
        %v1605 = vmul.f32 %v1603, %v1604
        %v1606 = vsub.f32 1.0, %v1605
        %v1607 = vmul.f32 %v1604, %v1606
        %v1608 = vadd.f32 %v1604, %v1607
        %vm1609 = vweird.f32 %v1603
        %vm1610 = vweird.f32 %v1604
        %vm1611 = vmor %vm1609, %vm1610
        %v1612 = vsel %vm1611, %v1604, %v1608
        %v1613 = vand.u32 2147483647, %v1603
        %vm1614 = vcmp.eq.f32.partialorder %v1613, 8.507059e+37
        %v1615 = vand.u32 %v1603, 2147483648
        %v1616 = vor.u32 1.1754944e-38, %v1615
        %v1617 = vsel %vm1614, %v1616, %v1612
        %v1618 = vmul.f32 1.0, %v1617
        %1619 = vmatpush.bf16.msra.mxu0 0
        %1620 = vmatpush.bf16.msra.mxu0 0
        %1621 = vmatpush.bf16.msra.mxu0 0
        %1622 = vmatpush.bf16.msra.mxu0 0
        %1623 = vmatpush.bf16.msra.mxu0 0
        %1624 = vmatpush.bf16.msra.mxu0 0
        %1625 = vmatpush.bf16.msra.mxu0 %v1315
        %1626 = vmatpush.bf16.msra.mxu0 %v1314
        %1627 = vmatmul.bf16.gmra.mxu0 %v1551
        %v1628 = vpop.f32.mrf.mxu0
        %v1629 = vadd.f32 %v351, %v1628
        %v1630 = vpop.f32.mrf.mxu0
        %1631 = vdwg.mxu0
        %v1632 = vmul.f32 %v1598, %v1629
        %v1633 = vadd.f32 %v1549, %v1632
        %v1634 = vtanh.pop %v1633
        %v1635 = vsub.f32 %v1537, %v1634
        %v1636 = vmul.f32 %v1618, %v1635
        %v1637 = vadd.f32 %v1634, %v1636
        %v1638 = vpack.c.bf16 %v1637, %v1637
        %s1639 = scalar_lea.vmem %s318, 4
        %1640 = vst.msk [vmem:[%s1639] sm:$0x1] %vm1339, %v1638
        %s1641 = scalar_lea.vmem %s293, 9
        %v1642 = vld [vmem:[%s1641] sm:$0x1]
        %v1643 = vunpack.c.l.bf16 %v1642
        %s1644 = scalar_lea.vmem %s293, 10
        %v1645 = vld [vmem:[%s1644] sm:$0x1]
        %v1646 = vunpack.c.l.bf16 %v1645
        %s1647 = scalar_lea.vmem %s293, 11
        %v1648 = vld [vmem:[%s1647] sm:$0x1]
        %v1649 = vunpack.c.l.bf16 %v1648
        %v1651 = vsel %vm1224, %v1638, 0
        %1653 = vmatpush.bf16.msra.mxu0 0
        %1654 = vmatpush.bf16.msra.mxu0 0
        %1655 = vmatpush.bf16.msra.mxu0 0
        %1656 = vmatpush.bf16.msra.mxu0 0
        %1657 = vmatpush.bf16.msra.mxu0 0
        %1658 = vmatpush.bf16.msra.mxu0 0
        %1659 = vmatpush.bf16.msra.mxu0 %v1221
        %1660 = vmatpush.bf16.msra.mxu0 %v1220
        %1661 = vmatmul.bf16.gmra.mxu0 %v1651
        %v1662 = vpop.f32.mrf.mxu0
        %v1663 = vadd.f32 0.0, %v1662
        %v1664 = vpop.f32.mrf.mxu0
        %1665 = vdwg.mxu0
        %1666 = vmatpush.bf16.msra.mxu0 0
        %1667 = vmatpush.bf16.msra.mxu0 0
        %1668 = vmatpush.bf16.msra.mxu0 0
        %1669 = vmatpush.bf16.msra.mxu0 0
        %1670 = vmatpush.bf16.msra.mxu0 0
        %1671 = vmatpush.bf16.msra.mxu0 0
        %1672 = vmatpush.bf16.msra.mxu0 %v1250
        %1673 = vmatpush.bf16.msra.mxu0 %v1249
        %1674 = vmatmul.bf16.gmra.mxu0 %v1651
        %v1675 = vpop.f32.mrf.mxu0
        %v1676 = vadd.f32 0.0, %v1675
        %v1677 = vpop.f32.mrf.mxu0
        %1678 = vdwg.mxu0
        %v1679 = vadd.f32 %v1643, %v1663
        %v1680 = vxor.u32 %v1679, 2147483648
        %v1681 = vmul.f32 %v1680, 1.442695
        %v1682 = vpow.pop %v1681
        %v1683 = vadd.f32 %v1682, 1.0
        %v1684 = vrcp.pop %v1683
        %v1685 = vmul.f32 %v1683, %v1684
        %v1686 = vsub.f32 1.0, %v1685
        %v1687 = vmul.f32 %v1684, %v1686
        %v1688 = vadd.f32 %v1684, %v1687
        %vm1689 = vweird.f32 %v1683
        %vm1690 = vweird.f32 %v1684
        %vm1691 = vmor %vm1689, %vm1690
        %v1692 = vsel %vm1691, %v1684, %v1688
        %v1693 = vand.u32 2147483647, %v1683
        %vm1694 = vcmp.eq.f32.partialorder %v1693, 8.507059e+37
        %v1695 = vand.u32 %v1683, 2147483648
        %v1696 = vor.u32 1.1754944e-38, %v1695
        %v1697 = vsel %vm1694, %v1696, %v1692
        %v1698 = vmul.f32 1.0, %v1697
        %v1699 = vadd.f32 %v1646, %v1676
        %v1700 = vxor.u32 %v1699, 2147483648
        %v1701 = vmul.f32 %v1700, 1.442695
        %v1702 = vpow.pop %v1701
        %v1703 = vadd.f32 %v1702, 1.0
        %v1704 = vrcp.pop %v1703
        %v1705 = vmul.f32 %v1703, %v1704
        %v1706 = vsub.f32 1.0, %v1705
        %v1707 = vmul.f32 %v1704, %v1706
        %v1708 = vadd.f32 %v1704, %v1707
        %vm1709 = vweird.f32 %v1703
        %vm1710 = vweird.f32 %v1704
        %vm1711 = vmor %vm1709, %vm1710
        %v1712 = vsel %vm1711, %v1704, %v1708
        %v1713 = vand.u32 2147483647, %v1703
        %vm1714 = vcmp.eq.f32.partialorder %v1713, 8.507059e+37
        %v1715 = vand.u32 %v1703, 2147483648
        %v1716 = vor.u32 1.1754944e-38, %v1715
        %v1717 = vsel %vm1714, %v1716, %v1712
        %v1718 = vmul.f32 1.0, %v1717
        %1719 = vmatpush.bf16.msra.mxu0 0
        %1720 = vmatpush.bf16.msra.mxu0 0
        %1721 = vmatpush.bf16.msra.mxu0 0
        %1722 = vmatpush.bf16.msra.mxu0 0
        %1723 = vmatpush.bf16.msra.mxu0 0
        %1724 = vmatpush.bf16.msra.mxu0 0
        %1725 = vmatpush.bf16.msra.mxu0 %v1315
        %1726 = vmatpush.bf16.msra.mxu0 %v1314
        %1727 = vmatmul.bf16.gmra.mxu0 %v1651
        %v1728 = vpop.f32.mrf.mxu0
        %v1729 = vadd.f32 %v351, %v1728
        %v1730 = vpop.f32.mrf.mxu0
        %1731 = vdwg.mxu0
        %v1732 = vmul.f32 %v1698, %v1729
        %v1733 = vadd.f32 %v1649, %v1732
        %v1734 = vtanh.pop %v1733
        %v1735 = vsub.f32 %v1637, %v1734
        %v1736 = vmul.f32 %v1718, %v1735
        %v1737 = vadd.f32 %v1734, %v1736
        %v1738 = vpack.c.bf16 %v1737, %v1737
        %s1739 = scalar_lea.vmem %s318, 3
        %1740 = vst.msk [vmem:[%s1739] sm:$0x1] %vm1339, %v1738
        %s1741 = scalar_lea.vmem %s293, 6
        %v1742 = vld [vmem:[%s1741] sm:$0x1]
        %v1743 = vunpack.c.l.bf16 %v1742
        %s1744 = scalar_lea.vmem %s293, 7
        %v1745 = vld [vmem:[%s1744] sm:$0x1]
        %v1746 = vunpack.c.l.bf16 %v1745
        %s1747 = scalar_lea.vmem %s293, 8
        %v1748 = vld [vmem:[%s1747] sm:$0x1]
        %v1749 = vunpack.c.l.bf16 %v1748
        %v1751 = vsel %vm1224, %v1738, 0
        %1753 = vmatpush.bf16.msra.mxu0 0
        %1754 = vmatpush.bf16.msra.mxu0 0
        %1755 = vmatpush.bf16.msra.mxu0 0
        %1756 = vmatpush.bf16.msra.mxu0 0
        %1757 = vmatpush.bf16.msra.mxu0 0
        %1758 = vmatpush.bf16.msra.mxu0 0
        %1759 = vmatpush.bf16.msra.mxu0 %v1221
        %1760 = vmatpush.bf16.msra.mxu0 %v1220
        %1761 = vmatmul.bf16.gmra.mxu0 %v1751
        %v1762 = vpop.f32.mrf.mxu0
        %v1763 = vadd.f32 0.0, %v1762
        %v1764 = vpop.f32.mrf.mxu0
        %1765 = vdwg.mxu0
        %1766 = vmatpush.bf16.msra.mxu0 0
        %1767 = vmatpush.bf16.msra.mxu0 0
        %1768 = vmatpush.bf16.msra.mxu0 0
        %1769 = vmatpush.bf16.msra.mxu0 0
        %1770 = vmatpush.bf16.msra.mxu0 0
        %1771 = vmatpush.bf16.msra.mxu0 0
        %1772 = vmatpush.bf16.msra.mxu0 %v1250
        %1773 = vmatpush.bf16.msra.mxu0 %v1249
        %1774 = vmatmul.bf16.gmra.mxu0 %v1751
        %v1775 = vpop.f32.mrf.mxu0
        %v1776 = vadd.f32 0.0, %v1775
        %v1777 = vpop.f32.mrf.mxu0
        %1778 = vdwg.mxu0
        %v1779 = vadd.f32 %v1743, %v1763
        %v1780 = vxor.u32 %v1779, 2147483648
        %v1781 = vmul.f32 %v1780, 1.442695
        %v1782 = vpow.pop %v1781
        %v1783 = vadd.f32 %v1782, 1.0
        %v1784 = vrcp.pop %v1783
        %v1785 = vmul.f32 %v1783, %v1784
        %v1786 = vsub.f32 1.0, %v1785
        %v1787 = vmul.f32 %v1784, %v1786
        %v1788 = vadd.f32 %v1784, %v1787
        %vm1789 = vweird.f32 %v1783
        %vm1790 = vweird.f32 %v1784
        %vm1791 = vmor %vm1789, %vm1790
        %v1792 = vsel %vm1791, %v1784, %v1788
        %v1793 = vand.u32 2147483647, %v1783
        %vm1794 = vcmp.eq.f32.partialorder %v1793, 8.507059e+37
        %v1795 = vand.u32 %v1783, 2147483648
        %v1796 = vor.u32 1.1754944e-38, %v1795
        %v1797 = vsel %vm1794, %v1796, %v1792
        %v1798 = vmul.f32 1.0, %v1797
        %v1799 = vadd.f32 %v1746, %v1776
        %v1800 = vxor.u32 %v1799, 2147483648
        %v1801 = vmul.f32 %v1800, 1.442695
        %v1802 = vpow.pop %v1801
        %v1803 = vadd.f32 %v1802, 1.0
        %v1804 = vrcp.pop %v1803
        %v1805 = vmul.f32 %v1803, %v1804
        %v1806 = vsub.f32 1.0, %v1805
        %v1807 = vmul.f32 %v1804, %v1806
        %v1808 = vadd.f32 %v1804, %v1807
        %vm1809 = vweird.f32 %v1803
        %vm1810 = vweird.f32 %v1804
        %vm1811 = vmor %vm1809, %vm1810
        %v1812 = vsel %vm1811, %v1804, %v1808
        %v1813 = vand.u32 2147483647, %v1803
        %vm1814 = vcmp.eq.f32.partialorder %v1813, 8.507059e+37
        %v1815 = vand.u32 %v1803, 2147483648
        %v1816 = vor.u32 1.1754944e-38, %v1815
        %v1817 = vsel %vm1814, %v1816, %v1812
        %v1818 = vmul.f32 1.0, %v1817
        %1819 = vmatpush.bf16.msra.mxu0 0
        %1820 = vmatpush.bf16.msra.mxu0 0
        %1821 = vmatpush.bf16.msra.mxu0 0
        %1822 = vmatpush.bf16.msra.mxu0 0
        %1823 = vmatpush.bf16.msra.mxu0 0
        %1824 = vmatpush.bf16.msra.mxu0 0
        %1825 = vmatpush.bf16.msra.mxu0 %v1315
        %1826 = vmatpush.bf16.msra.mxu0 %v1314
        %1827 = vmatmul.bf16.gmra.mxu0 %v1751
        %v1828 = vpop.f32.mrf.mxu0
        %v1829 = vadd.f32 %v351, %v1828
        %v1830 = vpop.f32.mrf.mxu0
        %1831 = vdwg.mxu0
        %v1832 = vmul.f32 %v1798, %v1829
        %v1833 = vadd.f32 %v1749, %v1832
        %v1834 = vtanh.pop %v1833
        %v1835 = vsub.f32 %v1737, %v1834
        %v1836 = vmul.f32 %v1818, %v1835
        %v1837 = vadd.f32 %v1834, %v1836
        %v1838 = vpack.c.bf16 %v1837, %v1837
        %s1839 = scalar_lea.vmem %s318, 2
        %1840 = vst.msk [vmem:[%s1839] sm:$0x1] %vm1339, %v1838
        %s1841 = scalar_lea.vmem %s293, 3
        %v1842 = vld [vmem:[%s1841] sm:$0x1]
        %v1843 = vunpack.c.l.bf16 %v1842
        %s1844 = scalar_lea.vmem %s293, 4
        %v1845 = vld [vmem:[%s1844] sm:$0x1]
        %v1846 = vunpack.c.l.bf16 %v1845
        %s1847 = scalar_lea.vmem %s293, 5
        %v1848 = vld [vmem:[%s1847] sm:$0x1]
        %v1849 = vunpack.c.l.bf16 %v1848
        %v1851 = vsel %vm1224, %v1838, 0
        %1853 = vmatpush.bf16.msra.mxu0 0
        %1854 = vmatpush.bf16.msra.mxu0 0
        %1855 = vmatpush.bf16.msra.mxu0 0
        %1856 = vmatpush.bf16.msra.mxu0 0
        %1857 = vmatpush.bf16.msra.mxu0 0
        %1858 = vmatpush.bf16.msra.mxu0 0
        %1859 = vmatpush.bf16.msra.mxu0 %v1221
        %1860 = vmatpush.bf16.msra.mxu0 %v1220
        %1861 = vmatmul.bf16.gmra.mxu0 %v1851
        %v1862 = vpop.f32.mrf.mxu0
        %v1863 = vadd.f32 0.0, %v1862
        %v1864 = vpop.f32.mrf.mxu0
        %1865 = vdwg.mxu0
        %1866 = vmatpush.bf16.msra.mxu0 0
        %1867 = vmatpush.bf16.msra.mxu0 0
        %1868 = vmatpush.bf16.msra.mxu0 0
        %1869 = vmatpush.bf16.msra.mxu0 0
        %1870 = vmatpush.bf16.msra.mxu0 0
        %1871 = vmatpush.bf16.msra.mxu0 0
        %1872 = vmatpush.bf16.msra.mxu0 %v1250
        %1873 = vmatpush.bf16.msra.mxu0 %v1249
        %1874 = vmatmul.bf16.gmra.mxu0 %v1851
        %v1875 = vpop.f32.mrf.mxu0
        %v1876 = vadd.f32 0.0, %v1875
        %v1877 = vpop.f32.mrf.mxu0
        %1878 = vdwg.mxu0
        %v1879 = vadd.f32 %v1843, %v1863
        %v1880 = vxor.u32 %v1879, 2147483648
        %v1881 = vmul.f32 %v1880, 1.442695
        %v1882 = vpow.pop %v1881
        %v1883 = vadd.f32 %v1882, 1.0
        %v1884 = vrcp.pop %v1883
        %v1885 = vmul.f32 %v1883, %v1884
        %v1886 = vsub.f32 1.0, %v1885
        %v1887 = vmul.f32 %v1884, %v1886
        %v1888 = vadd.f32 %v1884, %v1887
        %vm1889 = vweird.f32 %v1883
        %vm1890 = vweird.f32 %v1884
        %vm1891 = vmor %vm1889, %vm1890
        %v1892 = vsel %vm1891, %v1884, %v1888
        %v1893 = vand.u32 2147483647, %v1883
        %vm1894 = vcmp.eq.f32.partialorder %v1893, 8.507059e+37
        %v1895 = vand.u32 %v1883, 2147483648
        %v1896 = vor.u32 1.1754944e-38, %v1895
        %v1897 = vsel %vm1894, %v1896, %v1892
        %v1898 = vmul.f32 1.0, %v1897
        %v1899 = vadd.f32 %v1846, %v1876
        %v1900 = vxor.u32 %v1899, 2147483648
        %v1901 = vmul.f32 %v1900, 1.442695
        %v1902 = vpow.pop %v1901
        %v1903 = vadd.f32 %v1902, 1.0
        %v1904 = vrcp.pop %v1903
        %v1905 = vmul.f32 %v1903, %v1904
        %v1906 = vsub.f32 1.0, %v1905
        %v1907 = vmul.f32 %v1904, %v1906
        %v1908 = vadd.f32 %v1904, %v1907
        %vm1909 = vweird.f32 %v1903
        %vm1910 = vweird.f32 %v1904
        %vm1911 = vmor %vm1909, %vm1910
        %v1912 = vsel %vm1911, %v1904, %v1908
        %v1913 = vand.u32 2147483647, %v1903
        %vm1914 = vcmp.eq.f32.partialorder %v1913, 8.507059e+37
        %v1915 = vand.u32 %v1903, 2147483648
        %v1916 = vor.u32 1.1754944e-38, %v1915
        %v1917 = vsel %vm1914, %v1916, %v1912
        %v1918 = vmul.f32 1.0, %v1917
        %1919 = vmatpush.bf16.msra.mxu0 0
        %1920 = vmatpush.bf16.msra.mxu0 0
        %1921 = vmatpush.bf16.msra.mxu0 0
        %1922 = vmatpush.bf16.msra.mxu0 0
        %1923 = vmatpush.bf16.msra.mxu0 0
        %1924 = vmatpush.bf16.msra.mxu0 0
        %1925 = vmatpush.bf16.msra.mxu0 %v1315
        %1926 = vmatpush.bf16.msra.mxu0 %v1314
        %1927 = vmatmul.bf16.gmra.mxu0 %v1851
        %v1928 = vpop.f32.mrf.mxu0
        %v1929 = vadd.f32 %v351, %v1928
        %v1930 = vpop.f32.mrf.mxu0
        %1931 = vdwg.mxu0
        %v1932 = vmul.f32 %v1898, %v1929
        %v1933 = vadd.f32 %v1849, %v1932
        %v1934 = vtanh.pop %v1933
        %v1935 = vsub.f32 %v1837, %v1934
        %v1936 = vmul.f32 %v1918, %v1935
        %v1937 = vadd.f32 %v1934, %v1936
        %v1938 = vpack.c.bf16 %v1937, %v1937
        %s1939 = scalar_lea.vmem %s318, 1
        %1940 = vst.msk [vmem:[%s1939] sm:$0x1] %vm1339, %v1938
        %v1941 = vld [vmem:[%s293] sm:$0x1]
        %v1942 = vunpack.c.l.bf16 %v1941
        %s1943 = scalar_lea.vmem %s293, 1
        %v1944 = vld [vmem:[%s1943] sm:$0x1]
        %v1945 = vunpack.c.l.bf16 %v1944
        %s1946 = scalar_lea.vmem %s293, 2
        %v1947 = vld [vmem:[%s1946] sm:$0x1]
        %v1948 = vunpack.c.l.bf16 %v1947
        %v1950 = vsel %vm1224, %v1938, 0
        %1952 = vmatpush.bf16.msra.mxu0 0
        %1953 = vmatpush.bf16.msra.mxu0 0
        %1954 = vmatpush.bf16.msra.mxu0 0
        %1955 = vmatpush.bf16.msra.mxu0 0
        %1956 = vmatpush.bf16.msra.mxu0 0
        %1957 = vmatpush.bf16.msra.mxu0 0
        %1958 = vmatpush.bf16.msra.mxu0 %v1221
        %1959 = vmatpush.bf16.msra.mxu0 %v1220
        %1960 = vmatmul.bf16.gmra.mxu0 %v1950
        %v1961 = vpop.f32.mrf.mxu0
        %v1962 = vadd.f32 0.0, %v1961
        %v1963 = vpop.f32.mrf.mxu0
        %1964 = vdwg.mxu0
        %1965 = vmatpush.bf16.msra.mxu0 0
        %1966 = vmatpush.bf16.msra.mxu0 0
        %1967 = vmatpush.bf16.msra.mxu0 0
        %1968 = vmatpush.bf16.msra.mxu0 0
        %1969 = vmatpush.bf16.msra.mxu0 0
        %1970 = vmatpush.bf16.msra.mxu0 0
        %1971 = vmatpush.bf16.msra.mxu0 %v1250
        %1972 = vmatpush.bf16.msra.mxu0 %v1249
        %1973 = vmatmul.bf16.gmra.mxu0 %v1950
        %v1974 = vpop.f32.mrf.mxu0
        %v1975 = vadd.f32 0.0, %v1974
        %v1976 = vpop.f32.mrf.mxu0
        %1977 = vdwg.mxu0
        %v1978 = vadd.f32 %v1942, %v1962
        %v1979 = vxor.u32 %v1978, 2147483648
        %v1980 = vmul.f32 %v1979, 1.442695
        %v1981 = vpow.pop %v1980
        %v1982 = vadd.f32 %v1981, 1.0
        %v1983 = vrcp.pop %v1982
        %v1984 = vmul.f32 %v1982, %v1983
        %v1985 = vsub.f32 1.0, %v1984
        %v1986 = vmul.f32 %v1983, %v1985
        %v1987 = vadd.f32 %v1983, %v1986
        %vm1988 = vweird.f32 %v1982
        %vm1989 = vweird.f32 %v1983
        %vm1990 = vmor %vm1988, %vm1989
        %v1991 = vsel %vm1990, %v1983, %v1987
        %v1992 = vand.u32 2147483647, %v1982
        %vm1993 = vcmp.eq.f32.partialorder %v1992, 8.507059e+37
        %v1994 = vand.u32 %v1982, 2147483648
        %v1995 = vor.u32 1.1754944e-38, %v1994
        %v1996 = vsel %vm1993, %v1995, %v1991
        %v1997 = vmul.f32 1.0, %v1996
        %v1998 = vadd.f32 %v1945, %v1975
        %v1999 = vxor.u32 %v1998, 2147483648
        %v2000 = vmul.f32 %v1999, 1.442695
        %v2001 = vpow.pop %v2000
        %v2002 = vadd.f32 %v2001, 1.0
        %v2003 = vrcp.pop %v2002
        %v2004 = vmul.f32 %v2002, %v2003
        %v2005 = vsub.f32 1.0, %v2004
        %v2006 = vmul.f32 %v2003, %v2005
        %v2007 = vadd.f32 %v2003, %v2006
        %vm2008 = vweird.f32 %v2002
        %vm2009 = vweird.f32 %v2003
        %vm2010 = vmor %vm2008, %vm2009
        %v2011 = vsel %vm2010, %v2003, %v2007
        %v2012 = vand.u32 2147483647, %v2002
        %vm2013 = vcmp.eq.f32.partialorder %v2012, 8.507059e+37
        %v2014 = vand.u32 %v2002, 2147483648
        %v2015 = vor.u32 1.1754944e-38, %v2014
        %v2016 = vsel %vm2013, %v2015, %v2011
        %v2017 = vmul.f32 1.0, %v2016
        %2018 = vmatpush.bf16.msra.mxu0 0
        %2019 = vmatpush.bf16.msra.mxu0 0
        %2020 = vmatpush.bf16.msra.mxu0 0
        %2021 = vmatpush.bf16.msra.mxu0 0
        %2022 = vmatpush.bf16.msra.mxu0 0
        %2023 = vmatpush.bf16.msra.mxu0 0
        %2024 = vmatpush.bf16.msra.mxu0 %v1315
        %2025 = vmatpush.bf16.msra.mxu0 %v1314
        %2026 = vmatmul.bf16.gmra.mxu0 %v1950
        %v2027 = vpop.f32.mrf.mxu0
        %v2028 = vadd.f32 %v351, %v2027
        %v2029 = vpop.f32.mrf.mxu0
        %2030 = vdwg.mxu0
        %v2031 = vmul.f32 %v1997, %v2028
        %v2032 = vadd.f32 %v1948, %v2031
        %v2033 = vtanh.pop %v2032
        %v2034 = vsub.f32 %v1937, %v2033
        %v2035 = vmul.f32 %v2017, %v2034
        %v2036 = vadd.f32 %v2033, %v2035
        %v2037 = vpack.c.bf16 %v2036, %v2036
        %2038 = vst.msk [vmem:[%s318] sm:$0x1] %vm1339, %v2037
        %vm2039 = vcmask 254976
        %2040 = vst.msk [vmem:[#allocation2] sm:$0x3] %vm2039, %v2036
      $region44: #{encoder_forward.2} parent=31 // pred_fallthru
        _
      // Predicated region
      $region45: #{encoder_forward.2} parent=31 // pred_check
        %p2041 = pneg %p329
      $region46: #{encoder_forward.2} parent=31 // pred_check_branch
        %2043 = sbr.rel (%p2041) target = $region48
      $region47: #{encoder_forward.2} parent=31 // pred_region
        %v2044 = vld [vmem:[#allocation2] sm:$0x3]
        %vm2045 = vcmask 254976
        %2046 = vst.msk [vmem:[%s327] sm:$0x3] %vm2045, %v2044
      $region48: #{encoder_forward.2} parent=31 // pred_fallthru
        _
      %s2047 = smul.u32 %s21, 2
      %s2048 = ssub.s32 0, %s2047
      %s2049 = smul.u32 %s20, %s2048
      %s2050 = sadd.s32 %s21, %s2049
      %s2051 = smul.u32 8, %s2050
      %p2052 = scmp.lt.s32.totalorder %s20, 1
      %s2053 = scalar_select %p2052, %s20, 1
      %p2054 = scmp.lt.s32.totalorder %s2051, 7
      %s2055 = scalar_select %p2054, %s2051, 7
      %s2056 = smul.addr %s2053, 8
      %s2057 = sadd.s32 %s2055, %s2056
      %s2058 = scalar_lea.vmem %s3, %s2057
      %p2059 = scmp.lt.s32.totalorder %s20, 1
      %s2060 = scalar_select %p2059, %s20, 1
      %s2061 = smul.addr %s2060, 2
      %s2062 = scalar_lea.vmem %s4, %s2061
      // Predicated region
      $region49: #{encoder_forward.2} parent=31 // pred_check
        %p2063 = pneg %p144
      $region50: #{encoder_forward.2} parent=31 // pred_check_branch
        %2065 = sbr.rel (%p2063) target = $region52
      $region51: #{encoder_forward.2} parent=31 // pred_region
        %s2066 = smul.u32 %s21, 2
        %s2067 = ssub.s32 0, %s2066
        %s2068 = smul.u32 %s20, %s2067
        %s2069 = sadd.s32 %s21, %s2068
        %s2070 = smul.u32 8, %s2069
      $region52: #{encoder_forward.2} parent=31 // pred_fallthru
        _
      // Predicated region
      $region53: #{encoder_forward.2} parent=31 // pred_check
        %p2071 = pneg %p170
      $region54: #{encoder_forward.2} parent=31 // pred_check_branch
        %2073 = sbr.rel (%p2071) target = $region56
      $region55: #{encoder_forward.2} parent=31 // pred_region
        _
      $region56: #{encoder_forward.2} parent=31 // pred_fallthru
        _
    $region32: #{encoder_forward.2} parent=5 // pred_fallthru
      _
    %p2074 = scmp.le.s32.totalorder 2, %s11
    // Predicated region
    $region57: #{encoder_forward.2} parent=5 // pred_check
      %p2075 = pneg %p2074
    $region58: #{encoder_forward.2} parent=5 // pred_check_branch
      %2077 = sbr.rel (%p2075) target = $region60
    $region59: #{encoder_forward.2} parent=5 // pred_region
      %s2078 = ssub.s32 %s11, 2
      // Predicated region
      $region61: #{encoder_forward.2} parent=59 // pred_check
        %p2079 = pneg %p150
      $region62: #{encoder_forward.2} parent=59 // pred_check_branch
        %2081 = sbr.rel (%p2079) target = $region64
      $region63: #{encoder_forward.2} parent=59 // pred_region
        %s2082 = smul.u32 %s23, 2
        %s2083 = ssub.s32 0, %s2082
        %s2084 = smul.u32 %s22, %s2083
        %s2085 = sadd.s32 %s23, %s2084
        %s2086 = smul.u32 8, %s2085
        %p2087 = scmp.lt.s32.totalorder %s22, 1
        %s2088 = scalar_select %p2087, %s22, 1
        %p2089 = scmp.lt.s32.totalorder %s2086, 7
        %s2090 = scalar_select %p2089, %s2086, 7
        %s2091 = smul.addr %s2088, 8
        %s2092 = sadd.s32 %s2090, %s2091
        %s2093 = scalar_lea.vmem %s3, %s2092
      $region64: #{encoder_forward.2} parent=59 // pred_fallthru
        _
      // Predicated region
      $region65: #{encoder_forward.2} parent=59 // pred_check
        %p2094 = pneg %p176
      $region66: #{encoder_forward.2} parent=59 // pred_check_branch
        %2096 = sbr.rel (%p2094) target = $region68
      $region67: #{encoder_forward.2} parent=59 // pred_region
        %p2097 = scmp.lt.s32.totalorder %s22, 1
        %s2098 = scalar_select %p2097, %s22, 1
        %s2099 = smul.addr %s2098, 2
        %s2100 = scalar_lea.vmem %s4, %s2099
      $region68: #{encoder_forward.2} parent=59 // pred_fallthru
        _
    $region60: #{encoder_forward.2} parent=5 // pred_fallthru
      _
  $region6: #{encoder_forward.2} parent=0 // loop_footer
    %s15 = sadd.s32 1, %s11
  $region7: #{encoder_forward.2} parent=0 // loop_footer_branch
    %10 = sbr.rel target = $region3
  $region8: #{encoder_forward.2} parent=0 // loop_exit
    _

</llo_original>
